<compile_context>
chip_gen: v6e
topology: v6e:2x2x1
jax: 0.10.0
libtpu: 0.0.40
codegen_flags: <defaults>
</compile_context>

<pallas_src>
import jax
import jax.numpy as jnp
from jax.experimental import pallas as pl
from jax.experimental.pallas import tpu as pltpu

LANE = 128   # every output-channel / feature dim is zero-padded to a full lane width
TB1 = 8      # images per grid step, stage-1 kernel
TB2 = 16     # images per grid step, stage-2 + FC kernel (16 = one bf16 sublane tile)
BP = 16      # batch is padded to a multiple of this (lcm(TB1, TB2))
VMEM_LIMIT = 32 * 1024 * 1024  # explicit, valid on v5e/v6e/v7x; actual use is only a few MB


def _sigmoid(y):
    # tanh form: one EUP op per element (vs exp + reciprocal), stable for large |y|.
    return 0.5 * jnp.tanh(0.5 * y) + 0.5


# ---------------------------------------------------------------------------
# Kernel A: conv1 + bias + sigmoid + 2x2 avg-pool   (TB1 images per grid step)
# ---------------------------------------------------------------------------
def _conv1_pool_kernel(p_ref, w_ref, b_ref, o_ref):
    tb = p_ref.shape[0]
    p = p_ref[...].reshape(tb * 576, 32)                               # bf16 patches
    y = jnp.dot(p, w_ref[...], preferred_element_type=jnp.float32)     # (tb*576, 128)
    y = _sigmoid(y + b_ref[...])
    # rows were pre-permuted to (pw, ph, h', w'): 2x2 avg-pool = mean of 4 parity groups.
    y = y.reshape(tb, 4, 144, 128)
    a = 0.25 * (y[:, 0] + y[:, 1] + y[:, 2] + y[:, 3])                 # (tb, 144, 128)
    o_ref[...] = a.astype(jnp.bfloat16)


def _conv1_pool(p1, w1, b1):
    bp = p1.shape[0]
    return pl.pallas_call(
        _conv1_pool_kernel,
        out_shape=jax.ShapeDtypeStruct((bp, 144, LANE), jnp.bfloat16),
        grid=(bp // TB1,),
        in_specs=[
            pl.BlockSpec((TB1, 576, 32), lambda i: (i, 0, 0)),
            pl.BlockSpec((32, LANE), lambda i: (0, 0)),
            pl.BlockSpec((1, LANE), lambda i: (0, 0)),
        ],
        out_specs=pl.BlockSpec((TB1, 144, LANE), lambda i: (i, 0, 0)),
        compiler_params=pltpu.CompilerParams(
            dimension_semantics=("parallel",),
            vmem_limit_bytes=VMEM_LIMIT,
        ),
    )(p1, w1, b1)


# ---------------------------------------------------------------------------
# Kernel B: conv2 + bias + sigmoid + 2x2 avg-pool + fc1 + fc2 + fc3 (fused)
# ---------------------------------------------------------------------------
def _conv2_fc_kernel(p_ref, w2_ref, b2_ref, wf1_ref, bf1_ref,
                     wf2_ref, bf2_ref, wf3_ref, bf3_ref, o_ref):
    tb = p_ref.shape[1]
    # patches rows are ordered (pw, ph, pooled_pos, batch) so pooling / fc slicing is clean.
    p = p_ref[...].reshape(64 * tb, 160)                                # bf16
    y = jnp.dot(p, w2_ref[...], preferred_element_type=jnp.float32) + b2_ref[...]
    y = _sigmoid(y)                                                     # (64*tb, 128)
    y = y.reshape(4, 16 * tb, 128)
    a2 = 0.25 * (y[0] + y[1] + y[2] + y[3])                             # (16*tb, 128), rows (pos, b)
    a2 = a2.reshape(16, tb, 128).astype(jnp.bfloat16)
    # fc1 as a sum over the 16 pooled spatial positions (weights packed per position).
    acc = jnp.zeros((tb, LANE), jnp.float32)
    for pos in range(16):
        acc = acc + jnp.dot(a2[pos], wf1_ref[pos], preferred_element_type=jnp.float32)
    h = _sigmoid(acc + bf1_ref[...]).astype(jnp.bfloat16)
    h = _sigmoid(jnp.dot(h, wf2_ref[...], preferred_element_type=jnp.float32)
                 + bf2_ref[...]).astype(jnp.bfloat16)
    o_ref[...] = jnp.dot(h, wf3_ref[...], preferred_element_type=jnp.float32) + bf3_ref[...]


def _conv2_fc(p2, w2, b2, wf1, bf1, wf2, bf2, wf3, bf3):
    bp = p2.shape[1]
    return pl.pallas_call(
        _conv2_fc_kernel,
        out_shape=jax.ShapeDtypeStruct((bp, LANE), jnp.float32),
        grid=(bp // TB2,),
        in_specs=[
            pl.BlockSpec((64, TB2, 160), lambda i: (0, i, 0)),
            pl.BlockSpec((160, LANE), lambda i: (0, 0)),
            pl.BlockSpec((1, LANE), lambda i: (0, 0)),
            pl.BlockSpec((16, LANE, LANE), lambda i: (0, 0, 0)),
            pl.BlockSpec((1, LANE), lambda i: (0, 0)),
            pl.BlockSpec((LANE, LANE), lambda i: (0, 0)),
            pl.BlockSpec((1, LANE), lambda i: (0, 0)),
            pl.BlockSpec((LANE, LANE), lambda i: (0, 0)),
            pl.BlockSpec((1, LANE), lambda i: (0, 0)),
        ],
        out_specs=pl.BlockSpec((TB2, LANE), lambda i: (i, 0)),
        compiler_params=pltpu.CompilerParams(
            dimension_semantics=("parallel",),
            vmem_limit_bytes=VMEM_LIMIT,
        ),
    )(p2, w2, b2, wf1, bf1, wf2, bf2, wf3, bf3)


# ---------------------------------------------------------------------------
# Glue: im2col patch extraction (pure data movement, stays in XLA)
# ---------------------------------------------------------------------------
def _patches_conv1(x_nhwc):
    """(Bp,28,28,1) f32 -> (Bp,576,32) bf16; rows permuted to (pw, ph, h', w')."""
    bp = x_nhwc.shape[0]
    cols = [x_nhwc[:, i:i + 24, j:j + 24, :] for i in range(5) for j in range(5)]
    p = jnp.concatenate(cols, axis=-1)                   # (Bp, 24, 24, 25)   (b, h, w, K)
    p = p.reshape(bp, 12, 2, 12, 2, 25)                  # (b, h', ph, w', pw, K)
    p = p.transpose(0, 4, 2, 1, 3, 5).reshape(bp, 576, 25)
    p = jnp.pad(p, ((0, 0), (0, 0), (0, 7)))             # K: 25 -> 32
    return p.astype(jnp.bfloat16)


def _patches_conv2(a1):
    """(Bp,144,128) bf16 -> (64, Bp, 160) bf16; rows (pw, ph, oh', ow'), batch innermost."""
    bp = a1.shape[0]
    f = a1[:, :, :6].reshape(bp, 12, 12, 6)
    cols = [f[:, i:i + 8, j:j + 8, :] for i in range(5) for j in range(5)]
    p = jnp.concatenate(cols, axis=-1)                   # (Bp, 8, 8, 150)
    p = p.reshape(bp, 4, 2, 4, 2, 150)                   # (b, oh', ph, ow', pw, K)
    p = p.transpose(4, 2, 1, 3, 0, 5).reshape(64, bp, 150)
    p = jnp.pad(p, ((0, 0), (0, 0), (0, 10)))            # K: 150 -> 160
    return p.astype(jnp.bfloat16)


# ---------------------------------------------------------------------------
# Parameters + one-time packing (model-load time, NOT per forward call)
# ---------------------------------------------------------------------------
def init_params(key):
    ks = jax.random.split(key, 10)

    def unif(k, shape, fan_in):
        bound = 1.0 / jnp.sqrt(jnp.float32(fan_in))
        return jax.random.uniform(k, shape, jnp.float32, -bound, bound)

    return {
        "conv1_w": unif(ks[0], (6, 1, 5, 5), 25),
        "conv1_b": unif(ks[1], (6,), 25),
        "conv2_w": unif(ks[2], (16, 6, 5, 5), 150),
        "conv2_b": unif(ks[3], (16,), 150),
        "fc1_w": unif(ks[4], (120, 256), 256),
        "fc1_b": unif(ks[5], (120,), 256),
        "fc2_w": unif(ks[6], (84, 120), 120),
        "fc2_b": unif(ks[7], (84,), 120),
        "fc3_w": unif(ks[8], (10, 84), 84),
        "fc3_b": unif(ks[9], (10,), 84),
    }


def pack_params(p):
    """Run ONCE at load time: pad/transpose all weights into MXU-ready bf16 matrices."""
    f32, bf16 = jnp.float32, jnp.bfloat16
    w1 = p["conv1_w"].transpose(2, 3, 1, 0).reshape(25, 6)           # rows (kh*5+kw)
    w1 = jnp.zeros((32, LANE), f32).at[:25, :6].set(w1).astype(bf16)
    b1 = jnp.zeros((1, LANE), f32).at[0, :6].set(p["conv1_b"])
    w2 = p["conv2_w"].transpose(2, 3, 1, 0).reshape(150, 16)         # rows ((kh*5+kw)*6+c)
    w2 = jnp.zeros((160, LANE), f32).at[:150, :16].set(w2).astype(bf16)
    b2 = jnp.zeros((1, LANE), f32).at[0, :16].set(p["conv2_b"])
    # fc1 split per pooled spatial position pos = h*4+w; rows = conv2 channel (padded lanes
    # carry sigmoid(0)=0.5 but their weight rows are zero, so they contribute nothing).
    wf1 = p["fc1_w"].reshape(120, 16, 4, 4).transpose(2, 3, 1, 0).reshape(16, 16, 120)
    wf1 = jnp.zeros((16, LANE, LANE), f32).at[:, :16, :120].set(wf1).astype(bf16)
    bf1 = jnp.zeros((1, LANE), f32).at[0, :120].set(p["fc1_b"])
    wf2 = jnp.zeros((LANE, LANE), f32).at[:120, :84].set(p["fc2_w"].T).astype(bf16)
    bf2 = jnp.zeros((1, LANE), f32).at[0, :84].set(p["fc2_b"])
    wf3 = jnp.zeros((LANE, LANE), f32).at[:84, :10].set(p["fc3_w"].T).astype(bf16)
    bf3 = jnp.zeros((1, LANE), f32).at[0, :10].set(p["fc3_b"])
    return dict(w1=w1, b1=b1, w2=w2, b2=b2, wf1=wf1, bf1=bf1,
                wf2=wf2, bf2=bf2, wf3=wf3, bf3=bf3)


# ---------------------------------------------------------------------------
# Forward
# ---------------------------------------------------------------------------
@jax.jit
def lenet_forward(packed, x):
    """x: (B, 1, 28, 28) f32 NCHW -> (B, 10) f32 logits."""
    b = x.shape[0]
    bp = ((b + BP - 1) // BP) * BP
    x = x.transpose(0, 2, 3, 1)                                       # NHWC
    x = jnp.pad(x, ((0, bp - b), (0, 0), (0, 0), (0, 0)))             # pad batch
    p1 = _patches_conv1(x)                                            # (Bp, 576, 32) bf16
    a1 = _conv1_pool(p1, packed["w1"], packed["b1"])                  # (Bp, 144, 128) bf16
    p2 = _patches_conv2(a1)                                           # (64, Bp, 160) bf16
    out = _conv2_fc(p2, packed["w2"], packed["b2"],
                    packed["wf1"], packed["bf1"],
                    packed["wf2"], packed["bf2"],
                    packed["wf3"], packed["bf3"])                     # (Bp, 128) f32
    return out[:b, :10]


# Pure-JAX f32 reference (for a loose numerical sanity check of the bf16 kernels).
def lenet_reference(params, x):
    def conv(x, w, b):
        y = jax.lax.conv_general_dilated(
            x, w, window_strides=(1, 1), padding="VALID",
            dimension_numbers=("NCHW", "OIHW", "NCHW"))
        return y + b[None, :, None, None]

    def pool(x):
        n, c, h, w = x.shape
        return x.reshape(n, c, h // 2, 2, w // 2, 2).mean(axis=(3, 5))

    s = jax.nn.sigmoid
    x = pool(s(conv(x, params["conv1_w"], params["conv1_b"])))
    x = pool(s(conv(x, params["conv2_w"], params["conv2_b"])))
    x = x.reshape(x.shape[0], -1)
    x = s(x @ params["fc1_w"].T + params["fc1_b"])
    x = s(x @ params["fc2_w"].T + params["fc2_b"])
    return x @ params["fc3_w"].T + params["fc3_b"]


if __name__ == "__main__":
    key = jax.random.PRNGKey(0)
    k_param, k_input = jax.random.split(key)

    params = init_params(k_param)
    packed = pack_params(params)               # one-time, model-load-time packing
    # fc1 expects 16*4*4 features, which pins the spatial size to 28x28 (MNIST-style input).
    x = jax.random.normal(k_input, (2, 1, 28, 28), jnp.float32)

    out = lenet_forward(packed, x)
    jax.block_until_ready(out)
    assert out.shape == (2, 10) and out.dtype == jnp.float32

    ref = lenet_reference(params, x)
    assert float(jnp.max(jnp.abs(out - ref))) < 0.1, "mismatch vs f32 reference"
    print("KERNEL_OK")
</pallas_src>

<mosaic_0001>
module attributes {stable_mosaic.version = 11 : i64} {
  func.func @_conv1_pool_kernel(%arg0: i32, %arg1: memref<8x576x32xbf16, #tpu.memory_space<vmem>>, %arg2: memref<32x128xbf16, #tpu.memory_space<vmem>>, %arg3: memref<1x128xf32, #tpu.memory_space<vmem>>, %arg4: memref<8x144x128xbf16, #tpu.memory_space<vmem>>) attributes {dimension_semantics = [#tpu.dimension_semantics<parallel>], iteration_bounds = array<i64: 2>, scalar_prefetch = 0 : i64, scratch_operands = 0 : i64, tpu.core_type = #tpu.core_type<tc>, window_params = [{transform_indices = @transform_0, window_bounds = array<i64: 8, 576, 32>}, {pipeline_mode = #tpu.pipeline_mode<synchronous>, transform_indices = @transform_1, window_bounds = array<i64: 32, 128>}, {pipeline_mode = #tpu.pipeline_mode<synchronous>, transform_indices = @transform_2, window_bounds = array<i64: 1, 128>}, {transform_indices = @transform_3, window_bounds = array<i64: 8, 144, 128>}]} {
    %c0 = arith.constant 0 : index
    %c0_0 = arith.constant 0 : index
    %c0_1 = arith.constant 0 : index
    %0 = vector.load %arg1[%c0, %c0_0, %c0_1] : memref<8x576x32xbf16, #tpu.memory_space<vmem>>, vector<8x576x32xbf16>
    %1 = vector.shape_cast %0 : vector<8x576x32xbf16> to vector<4608x32xbf16>
    %c0_2 = arith.constant 0 : index
    %c0_3 = arith.constant 0 : index
    %2 = vector.load %arg2[%c0_2, %c0_3] : memref<32x128xbf16, #tpu.memory_space<vmem>>, vector<32x128xbf16>
    %cst = arith.constant dense<0.000000e+00> : vector<4608x128xf32>
    %3 = tpu.matmul %1, %2, %cst {dimension_numbers = #tpu.dot_dimension_numbers<[1], [0], [0], [1], [0, 0, 1, 1], [], []>} : vector<4608x32xbf16>, vector<32x128xbf16>, vector<4608x128xf32> -> vector<4608x128xf32>
    %c0_4 = arith.constant 0 : index
    %c0_5 = arith.constant 0 : index
    %4 = vector.load %arg3[%c0_4, %c0_5] : memref<1x128xf32, #tpu.memory_space<vmem>>, vector<1x128xf32>
    %5 = vector.broadcast %4 : vector<1x128xf32> to vector<4608x128xf32>
    %6 = arith.addf %3, %5 : vector<4608x128xf32>
    %cst_6 = arith.constant 5.000000e-01 : f32
    %7 = vector.broadcast %cst_6 : f32 to vector<4608x128xf32>
    %8 = arith.mulf %7, %6 : vector<4608x128xf32>
    %9 = math.tanh %8 : vector<4608x128xf32>
    %cst_7 = arith.constant 5.000000e-01 : f32
    %10 = vector.broadcast %cst_7 : f32 to vector<4608x128xf32>
    %11 = arith.mulf %10, %9 : vector<4608x128xf32>
    %cst_8 = arith.constant 5.000000e-01 : f32
    %12 = vector.broadcast %cst_8 : f32 to vector<4608x128xf32>
    %13 = arith.addf %11, %12 : vector<4608x128xf32>
    %14 = vector.shape_cast %13 : vector<4608x128xf32> to vector<8x4x144x128xf32>
    %15 = vector.extract_strided_slice %14 {offsets = [0, 0, 0, 0], sizes = [8, 1, 144, 128], strides = [1, 1, 1, 1]} : vector<8x4x144x128xf32> to vector<8x1x144x128xf32>
    %16 = vector.shape_cast %15 : vector<8x1x144x128xf32> to vector<8x144x128xf32>
    %17 = vector.extract_strided_slice %14 {offsets = [0, 1, 0, 0], sizes = [8, 1, 144, 128], strides = [1, 1, 1, 1]} : vector<8x4x144x128xf32> to vector<8x1x144x128xf32>
    %18 = vector.shape_cast %17 : vector<8x1x144x128xf32> to vector<8x144x128xf32>
    %19 = arith.addf %16, %18 : vector<8x144x128xf32>
    %20 = vector.extract_strided_slice %14 {offsets = [0, 2, 0, 0], sizes = [8, 1, 144, 128], strides = [1, 1, 1, 1]} : vector<8x4x144x128xf32> to vector<8x1x144x128xf32>
    %21 = vector.shape_cast %20 : vector<8x1x144x128xf32> to vector<8x144x128xf32>
    %22 = arith.addf %19, %21 : vector<8x144x128xf32>
    %23 = vector.extract_strided_slice %14 {offsets = [0, 3, 0, 0], sizes = [8, 1, 144, 128], strides = [1, 1, 1, 1]} : vector<8x4x144x128xf32> to vector<8x1x144x128xf32>
    %24 = vector.shape_cast %23 : vector<8x1x144x128xf32> to vector<8x144x128xf32>
    %25 = arith.addf %22, %24 : vector<8x144x128xf32>
    %cst_9 = arith.constant 2.500000e-01 : f32
    %26 = vector.broadcast %cst_9 : f32 to vector<8x144x128xf32>
    %27 = arith.mulf %26, %25 : vector<8x144x128xf32>
    %28 = arith.truncf %27 : vector<8x144x128xf32> to vector<8x144x128xbf16>
    %c0_10 = arith.constant 0 : index
    %c0_11 = arith.constant 0 : index
    %c0_12 = arith.constant 0 : index
    %29 = vector.load %arg4[%c0_10, %c0_11, %c0_12] : memref<8x144x128xbf16, #tpu.memory_space<vmem>>, vector<8x144x128xbf16>
    tpu.vector_store %arg4[%c0_10, %c0_11, %c0_12], %28 {strides = array<i32>} : memref<8x144x128xbf16, #tpu.memory_space<vmem>>, vector<8x144x128xbf16>,
    return
  }
  func.func @transform_0(%arg0: i32) -> (i32, i32, i32) {
    %c0_i32 = arith.constant 0 : i32
    %c0_i32_0 = arith.constant 0 : i32
    %c0_i32_1 = arith.constant 0 : i32
    return %arg0, %c0_i32, %c0_i32_0 : i32, i32, i32
  }
  func.func @transform_1(%arg0: i32) -> (i32, i32) {
    %c0_i32 = arith.constant 0 : i32
    %c0_i32_0 = arith.constant 0 : i32
    %c0_i32_1 = arith.constant 0 : i32
    return %c0_i32, %c0_i32_0 : i32, i32
  }
  func.func @transform_2(%arg0: i32) -> (i32, i32) {
    %c0_i32 = arith.constant 0 : i32
    %c0_i32_0 = arith.constant 0 : i32
    %c0_i32_1 = arith.constant 0 : i32
    return %c0_i32, %c0_i32_0 : i32, i32
  }
  func.func @transform_3(%arg0: i32) -> (i32, i32, i32) {
    %c0_i32 = arith.constant 0 : i32
    %c0_i32_0 = arith.constant 0 : i32
    %c0_i32_1 = arith.constant 0 : i32
    return %arg0, %c0_i32, %c0_i32_0 : i32, i32, i32
  }
}

module attributes {stable_mosaic.version = 11 : i64} {
  func.func @_conv2_fc_kernel(%arg0: i32, %arg1: memref<64x16x160xbf16, #tpu.memory_space<vmem>>, %arg2: memref<160x128xbf16, #tpu.memory_space<vmem>>, %arg3: memref<1x128xf32, #tpu.memory_space<vmem>>, %arg4: memref<16x128x128xbf16, #tpu.memory_space<vmem>>, %arg5: memref<1x128xf32, #tpu.memory_space<vmem>>, %arg6: memref<128x128xbf16, #tpu.memory_space<vmem>>, %arg7: memref<1x128xf32, #tpu.memory_space<vmem>>, %arg8: memref<128x128xbf16, #tpu.memory_space<vmem>>, %arg9: memref<1x128xf32, #tpu.memory_space<vmem>>, %arg10: memref<16x128xf32, #tpu.memory_space<vmem>>) attributes {dimension_semantics = [#tpu.dimension_semantics<parallel>], iteration_bounds = array<i64: 1>, scalar_prefetch = 0 : i64, scratch_operands = 0 : i64, tpu.core_type = #tpu.core_type<tc>, window_params = [{transform_indices = @transform_0, window_bounds = array<i64: 64, 16, 160>}, {pipeline_mode = #tpu.pipeline_mode<synchronous>, transform_indices = @transform_1, window_bounds = array<i64: 160, 128>}, {pipeline_mode = #tpu.pipeline_mode<synchronous>, transform_indices = @transform_2, window_bounds = array<i64: 1, 128>}, {pipeline_mode = #tpu.pipeline_mode<synchronous>, transform_indices = @transform_3, window_bounds = array<i64: 16, 128, 128>}, {pipeline_mode = #tpu.pipeline_mode<synchronous>, transform_indices = @transform_4, window_bounds = array<i64: 1, 128>}, {pipeline_mode = #tpu.pipeline_mode<synchronous>, transform_indices = @transform_5, window_bounds = array<i64: 128, 128>}, {pipeline_mode = #tpu.pipeline_mode<synchronous>, transform_indices = @transform_6, window_bounds = array<i64: 1, 128>}, {pipeline_mode = #tpu.pipeline_mode<synchronous>, transform_indices = @transform_7, window_bounds = array<i64: 128, 128>}, {pipeline_mode = #tpu.pipeline_mode<synchronous>, transform_indices = @transform_8, window_bounds = array<i64: 1, 128>}, {transform_indices = @transform_9, window_bounds = array<i64: 16, 128>}]} {
    %c0 = arith.constant 0 : index
    %c0_0 = arith.constant 0 : index
    %c0_1 = arith.constant 0 : index
    %0 = vector.load %arg1[%c0, %c0_0, %c0_1] : memref<64x16x160xbf16, #tpu.memory_space<vmem>>, vector<64x16x160xbf16>
    %1 = vector.shape_cast %0 : vector<64x16x160xbf16> to vector<1024x160xbf16>
    %c0_2 = arith.constant 0 : index
    %c0_3 = arith.constant 0 : index
    %2 = vector.load %arg2[%c0_2, %c0_3] : memref<160x128xbf16, #tpu.memory_space<vmem>>, vector<160x128xbf16>
    %cst = arith.constant dense<0.000000e+00> : vector<1024x128xf32>
    %3 = tpu.matmul %1, %2, %cst {dimension_numbers = #tpu.dot_dimension_numbers<[1], [0], [0], [1], [0, 0, 1, 1], [], []>} : vector<1024x160xbf16>, vector<160x128xbf16>, vector<1024x128xf32> -> vector<1024x128xf32>
    %c0_4 = arith.constant 0 : index
    %c0_5 = arith.constant 0 : index
    %4 = vector.load %arg3[%c0_4, %c0_5] : memref<1x128xf32, #tpu.memory_space<vmem>>, vector<1x128xf32>
    %5 = vector.broadcast %4 : vector<1x128xf32> to vector<1024x128xf32>
    %6 = arith.addf %3, %5 : vector<1024x128xf32>
    %cst_6 = arith.constant 5.000000e-01 : f32
    %7 = vector.broadcast %cst_6 : f32 to vector<1024x128xf32>
    %8 = arith.mulf %7, %6 : vector<1024x128xf32>
    %9 = math.tanh %8 : vector<1024x128xf32>
    %cst_7 = arith.constant 5.000000e-01 : f32
    %10 = vector.broadcast %cst_7 : f32 to vector<1024x128xf32>
    %11 = arith.mulf %10, %9 : vector<1024x128xf32>
    %cst_8 = arith.constant 5.000000e-01 : f32
    %12 = vector.broadcast %cst_8 : f32 to vector<1024x128xf32>
    %13 = arith.addf %11, %12 : vector<1024x128xf32>
    %14 = vector.shape_cast %13 : vector<1024x128xf32> to vector<4x256x128xf32>
    %15 = vector.extract_strided_slice %14 {offsets = [0, 0, 0], sizes = [1, 256, 128], strides = [1, 1, 1]} : vector<4x256x128xf32> to vector<1x256x128xf32>
    %16 = vector.shape_cast %15 : vector<1x256x128xf32> to vector<256x128xf32>
    %17 = vector.extract_strided_slice %14 {offsets = [1, 0, 0], sizes = [1, 256, 128], strides = [1, 1, 1]} : vector<4x256x128xf32> to vector<1x256x128xf32>
    %18 = vector.shape_cast %17 : vector<1x256x128xf32> to vector<256x128xf32>
    %19 = arith.addf %16, %18 : vector<256x128xf32>
    %20 = vector.extract_strided_slice %14 {offsets = [2, 0, 0], sizes = [1, 256, 128], strides = [1, 1, 1]} : vector<4x256x128xf32> to vector<1x256x128xf32>
    %21 = vector.shape_cast %20 : vector<1x256x128xf32> to vector<256x128xf32>
    %22 = arith.addf %19, %21 : vector<256x128xf32>
    %23 = vector.extract_strided_slice %14 {offsets = [3, 0, 0], sizes = [1, 256, 128], strides = [1, 1, 1]} : vector<4x256x128xf32> to vector<1x256x128xf32>
    %24 = vector.shape_cast %23 : vector<1x256x128xf32> to vector<256x128xf32>
    %25 = arith.addf %22, %24 : vector<256x128xf32>
    %cst_9 = arith.constant 2.500000e-01 : f32
    %26 = vector.broadcast %cst_9 : f32 to vector<256x128xf32>
    %27 = arith.mulf %26, %25 : vector<256x128xf32>
    %28 = vector.shape_cast %27 : vector<256x128xf32> to vector<16x16x128xf32>
    %29 = arith.truncf %28 : vector<16x16x128xf32> to vector<16x16x128xbf16>
    %cst_10 = arith.constant 0.000000e+00 : f32
    %30 = vector.broadcast %cst_10 : f32 to vector<16x128xf32>
    %31 = vector.extract_strided_slice %29 {offsets = [0, 0, 0], sizes = [1, 16, 128], strides = [1, 1, 1]} : vector<16x16x128xbf16> to vector<1x16x128xbf16>
    %32 = vector.shape_cast %31 : vector<1x16x128xbf16> to vector<16x128xbf16>
    %c0_11 = arith.constant 0 : index
    %c0_12 = arith.constant 0 : index
    %c0_13 = arith.constant 0 : index
    %33 = vector.load %arg4[%c0_11, %c0_12, %c0_13] : memref<16x128x128xbf16, #tpu.memory_space<vmem>>, vector<1x128x128xbf16>
    %34 = vector.shape_cast %33 : vector<1x128x128xbf16> to vector<128x128xbf16>
    %cst_14 = arith.constant dense<0.000000e+00> : vector<16x128xf32>
    %35 = tpu.matmul %32, %34, %cst_14 {dimension_numbers = #tpu.dot_dimension_numbers<[1], [0], [0], [1], [0, 0, 1, 1], [], []>} : vector<16x128xbf16>, vector<128x128xbf16>, vector<16x128xf32> -> vector<16x128xf32>
    %36 = arith.addf %30, %35 : vector<16x128xf32>
    %37 = vector.extract_strided_slice %29 {offsets = [1, 0, 0], sizes = [1, 16, 128], strides = [1, 1, 1]} : vector<16x16x128xbf16> to vector<1x16x128xbf16>
    %38 = vector.shape_cast %37 : vector<1x16x128xbf16> to vector<16x128xbf16>
    %c1 = arith.constant 1 : index
    %c0_15 = arith.constant 0 : index
    %c0_16 = arith.constant 0 : index
    %39 = vector.load %arg4[%c1, %c0_15, %c0_16] : memref<16x128x128xbf16, #tpu.memory_space<vmem>>, vector<1x128x128xbf16>
    %40 = vector.shape_cast %39 : vector<1x128x128xbf16> to vector<128x128xbf16>
    %cst_17 = arith.constant dense<0.000000e+00> : vector<16x128xf32>
    %41 = tpu.matmul %38, %40, %cst_17 {dimension_numbers = #tpu.dot_dimension_numbers<[1], [0], [0], [1], [0, 0, 1, 1], [], []>} : vector<16x128xbf16>, vector<128x128xbf16>, vector<16x128xf32> -> vector<16x128xf32>
    %42 = arith.addf %36, %41 : vector<16x128xf32>
    %43 = vector.extract_strided_slice %29 {offsets = [2, 0, 0], sizes = [1, 16, 128], strides = [1, 1, 1]} : vector<16x16x128xbf16> to vector<1x16x128xbf16>
    %44 = vector.shape_cast %43 : vector<1x16x128xbf16> to vector<16x128xbf16>
    %c2 = arith.constant 2 : index
    %c0_18 = arith.constant 0 : index
    %c0_19 = arith.constant 0 : index
    %45 = vector.load %arg4[%c2, %c0_18, %c0_19] : memref<16x128x128xbf16, #tpu.memory_space<vmem>>, vector<1x128x128xbf16>
    %46 = vector.shape_cast %45 : vector<1x128x128xbf16> to vector<128x128xbf16>
    %cst_20 = arith.constant dense<0.000000e+00> : vector<16x128xf32>
    %47 = tpu.matmul %44, %46, %cst_20 {dimension_numbers = #tpu.dot_dimension_numbers<[1], [0], [0], [1], [0, 0, 1, 1], [], []>} : vector<16x128xbf16>, vector<128x128xbf16>, vector<16x128xf32> -> vector<16x128xf32>
    %48 = arith.addf %42, %47 : vector<16x128xf32>
    %49 = vector.extract_strided_slice %29 {offsets = [3, 0, 0], sizes = [1, 16, 128], strides = [1, 1, 1]} : vector<16x16x128xbf16> to vector<1x16x128xbf16>
    %50 = vector.shape_cast %49 : vector<1x16x128xbf16> to vector<16x128xbf16>
    %c3 = arith.constant 3 : index
    %c0_21 = arith.constant 0 : index
    %c0_22 = arith.constant 0 : index
    %51 = vector.load %arg4[%c3, %c0_21, %c0_22] : memref<16x128x128xbf16, #tpu.memory_space<vmem>>, vector<1x128x128xbf16>
    %52 = vector.shape_cast %51 : vector<1x128x128xbf16> to vector<128x128xbf16>
    %cst_23 = arith.constant dense<0.000000e+00> : vector<16x128xf32>
    %53 = tpu.matmul %50, %52, %cst_23 {dimension_numbers = #tpu.dot_dimension_numbers<[1], [0], [0], [1], [0, 0, 1, 1], [], []>} : vector<16x128xbf16>, vector<128x128xbf16>, vector<16x128xf32> -> vector<16x128xf32>
    %54 = arith.addf %48, %53 : vector<16x128xf32>
    %55 = vector.extract_strided_slice %29 {offsets = [4, 0, 0], sizes = [1, 16, 128], strides = [1, 1, 1]} : vector<16x16x128xbf16> to vector<1x16x128xbf16>
    %56 = vector.shape_cast %55 : vector<1x16x128xbf16> to vector<16x128xbf16>
    %c4 = arith.constant 4 : index
    %c0_24 = arith.constant 0 : index
    %c0_25 = arith.constant 0 : index
    %57 = vector.load %arg4[%c4, %c0_24, %c0_25] : memref<16x128x128xbf16, #tpu.memory_space<vmem>>, vector<1x128x128xbf16>
    %58 = vector.shape_cast %57 : vector<1x128x128xbf16> to vector<128x128xbf16>
    %cst_26 = arith.constant dense<0.000000e+00> : vector<16x128xf32>
    %59 = tpu.matmul %56, %58, %cst_26 {dimension_numbers = #tpu.dot_dimension_numbers<[1], [0], [0], [1], [0, 0, 1, 1], [], []>} : vector<16x128xbf16>, vector<128x128xbf16>, vector<16x128xf32> -> vector<16x128xf32>
    %60 = arith.addf %54, %59 : vector<16x128xf32>
    %61 = vector.extract_strided_slice %29 {offsets = [5, 0, 0], sizes = [1, 16, 128], strides = [1, 1, 1]} : vector<16x16x128xbf16> to vector<1x16x128xbf16>
    %62 = vector.shape_cast %61 : vector<1x16x128xbf16> to vector<16x128xbf16>
    %c5 = arith.constant 5 : index
    %c0_27 = arith.constant 0 : index
    %c0_28 = arith.constant 0 : index
    %63 = vector.load %arg4[%c5, %c0_27, %c0_28] : memref<16x128x128xbf16, #tpu.memory_space<vmem>>, vector<1x128x128xbf16>
    %64 = vector.shape_cast %63 : vector<1x128x128xbf16> to vector<128x128xbf16>
    %cst_29 = arith.constant dense<0.000000e+00> : vector<16x128xf32>
    %65 = tpu.matmul %62, %64, %cst_29 {dimension_numbers = #tpu.dot_dimension_numbers<[1], [0], [0], [1], [0, 0, 1, 1], [], []>} : vector<16x128xbf16>, vector<128x128xbf16>, vector<16x128xf32> -> vector<16x128xf32>
    %66 = arith.addf %60, %65 : vector<16x128xf32>
    %67 = vector.extract_strided_slice %29 {offsets = [6, 0, 0], sizes = [1, 16, 128], strides = [1, 1, 1]} : vector<16x16x128xbf16> to vector<1x16x128xbf16>
    %68 = vector.shape_cast %67 : vector<1x16x128xbf16> to vector<16x128xbf16>
    %c6 = arith.constant 6 : index
    %c0_30 = arith.constant 0 : index
    %c0_31 = arith.constant 0 : index
    %69 = vector.load %arg4[%c6, %c0_30, %c0_31] : memref<16x128x128xbf16, #tpu.memory_space<vmem>>, vector<1x128x128xbf16>
    %70 = vector.shape_cast %69 : vector<1x128x128xbf16> to vector<128x128xbf16>
    %cst_32 = arith.constant dense<0.000000e+00> : vector<16x128xf32>
    %71 = tpu.matmul %68, %70, %cst_32 {dimension_numbers = #tpu.dot_dimension_numbers<[1], [0], [0], [1], [0, 0, 1, 1], [], []>} : vector<16x128xbf16>, vector<128x128xbf16>, vector<16x128xf32> -> vector<16x128xf32>
    %72 = arith.addf %66, %71 : vector<16x128xf32>
    %73 = vector.extract_strided_slice %29 {offsets = [7, 0, 0], sizes = [1, 16, 128], strides = [1, 1, 1]} : vector<16x16x128xbf16> to vector<1x16x128xbf16>
    %74 = vector.shape_cast %73 : vector<1x16x128xbf16> to vector<16x128xbf16>
    %c7 = arith.constant 7 : index
    %c0_33 = arith.constant 0 : index
    %c0_34 = arith.constant 0 : index
    %75 = vector.load %arg4[%c7, %c0_33, %c0_34] : memref<16x128x128xbf16, #tpu.memory_space<vmem>>, vector<1x128x128xbf16>
    %76 = vector.shape_cast %75 : vector<1x128x128xbf16> to vector<128x128xbf16>
    %cst_35 = arith.constant dense<0.000000e+00> : vector<16x128xf32>
    %77 = tpu.matmul %74, %76, %cst_35 {dimension_numbers = #tpu.dot_dimension_numbers<[1], [0], [0], [1], [0, 0, 1, 1], [], []>} : vector<16x128xbf16>, vector<128x128xbf16>, vector<16x128xf32> -> vector<16x128xf32>
    %78 = arith.addf %72, %77 : vector<16x128xf32>
    %79 = vector.extract_strided_slice %29 {offsets = [8, 0, 0], sizes = [1, 16, 128], strides = [1, 1, 1]} : vector<16x16x128xbf16> to vector<1x16x128xbf16>
    %80 = vector.shape_cast %79 : vector<1x16x128xbf16> to vector<16x128xbf16>
    %c8 = arith.constant 8 : index
    %c0_36 = arith.constant 0 : index
    %c0_37 = arith.constant 0 : index
    %81 = vector.load %arg4[%c8, %c0_36, %c0_37] : memref<16x128x128xbf16, #tpu.memory_space<vmem>>, vector<1x128x128xbf16>
    %82 = vector.shape_cast %81 : vector<1x128x128xbf16> to vector<128x128xbf16>
    %cst_38 = arith.constant dense<0.000000e+00> : vector<16x128xf32>
    %83 = tpu.matmul %80, %82, %cst_38 {dimension_numbers = #tpu.dot_dimension_numbers<[1], [0], [0], [1], [0, 0, 1, 1], [], []>} : vector<16x128xbf16>, vector<128x128xbf16>, vector<16x128xf32> -> vector<16x128xf32>
    %84 = arith.addf %78, %83 : vector<16x128xf32>
    %85 = vector.extract_strided_slice %29 {offsets = [9, 0, 0], sizes = [1, 16, 128], strides = [1, 1, 1]} : vector<16x16x128xbf16> to vector<1x16x128xbf16>
    %86 = vector.shape_cast %85 : vector<1x16x128xbf16> to vector<16x128xbf16>
    %c9 = arith.constant 9 : index
    %c0_39 = arith.constant 0 : index
    %c0_40 = arith.constant 0 : index
    %87 = vector.load %arg4[%c9, %c0_39, %c0_40] : memref<16x128x128xbf16, #tpu.memory_space<vmem>>, vector<1x128x128xbf16>
    %88 = vector.shape_cast %87 : vector<1x128x128xbf16> to vector<128x128xbf16>
    %cst_41 = arith.constant dense<0.000000e+00> : vector<16x128xf32>
    %89 = tpu.matmul %86, %88, %cst_41 {dimension_numbers = #tpu.dot_dimension_numbers<[1], [0], [0], [1], [0, 0, 1, 1], [], []>} : vector<16x128xbf16>, vector<128x128xbf16>, vector<16x128xf32> -> vector<16x128xf32>
    %90 = arith.addf %84, %89 : vector<16x128xf32>
    %91 = vector.extract_strided_slice %29 {offsets = [10, 0, 0], sizes = [1, 16, 128], strides = [1, 1, 1]} : vector<16x16x128xbf16> to vector<1x16x128xbf16>
    %92 = vector.shape_cast %91 : vector<1x16x128xbf16> to vector<16x128xbf16>
    %c10 = arith.constant 10 : index
    %c0_42 = arith.constant 0 : index
    %c0_43 = arith.constant 0 : index
    %93 = vector.load %arg4[%c10, %c0_42, %c0_43] : memref<16x128x128xbf16, #tpu.memory_space<vmem>>, vector<1x128x128xbf16>
    %94 = vector.shape_cast %93 : vector<1x128x128xbf16> to vector<128x128xbf16>
    %cst_44 = arith.constant dense<0.000000e+00> : vector<16x128xf32>
    %95 = tpu.matmul %92, %94, %cst_44 {dimension_numbers = #tpu.dot_dimension_numbers<[1], [0], [0], [1], [0, 0, 1, 1], [], []>} : vector<16x128xbf16>, vector<128x128xbf16>, vector<16x128xf32> -> vector<16x128xf32>
    %96 = arith.addf %90, %95 : vector<16x128xf32>
    %97 = vector.extract_strided_slice %29 {offsets = [11, 0, 0], sizes = [1, 16, 128], strides = [1, 1, 1]} : vector<16x16x128xbf16> to vector<1x16x128xbf16>
    %98 = vector.shape_cast %97 : vector<1x16x128xbf16> to vector<16x128xbf16>
    %c11 = arith.constant 11 : index
    %c0_45 = arith.constant 0 : index
    %c0_46 = arith.constant 0 : index
    %99 = vector.load %arg4[%c11, %c0_45, %c0_46] : memref<16x128x128xbf16, #tpu.memory_space<vmem>>, vector<1x128x128xbf16>
    %100 = vector.shape_cast %99 : vector<1x128x128xbf16> to vector<128x128xbf16>
    %cst_47 = arith.constant dense<0.000000e+00> : vector<16x128xf32>
    %101 = tpu.matmul %98, %100, %cst_47 {dimension_numbers = #tpu.dot_dimension_numbers<[1], [0], [0], [1], [0, 0, 1, 1], [], []>} : vector<16x128xbf16>, vector<128x128xbf16>, vector<16x128xf32> -> vector<16x128xf32>
    %102 = arith.addf %96, %101 : vector<16x128xf32>
    %103 = vector.extract_strided_slice %29 {offsets = [12, 0, 0], sizes = [1, 16, 128], strides = [1, 1, 1]} : vector<16x16x128xbf16> to vector<1x16x128xbf16>
    %104 = vector.shape_cast %103 : vector<1x16x128xbf16> to vector<16x128xbf16>
    %c12 = arith.constant 12 : index
    %c0_48 = arith.constant 0 : index
    %c0_49 = arith.constant 0 : index
    %105 = vector.load %arg4[%c12, %c0_48, %c0_49] : memref<16x128x128xbf16, #tpu.memory_space<vmem>>, vector<1x128x128xbf16>
    %106 = vector.shape_cast %105 : vector<1x128x128xbf16> to vector<128x128xbf16>
    %cst_50 = arith.constant dense<0.000000e+00> : vector<16x128xf32>
    %107 = tpu.matmul %104, %106, %cst_50 {dimension_numbers = #tpu.dot_dimension_numbers<[1], [0], [0], [1], [0, 0, 1, 1], [], []>} : vector<16x128xbf16>, vector<128x128xbf16>, vector<16x128xf32> -> vector<16x128xf32>
    %108 = arith.addf %102, %107 : vector<16x128xf32>
    %109 = vector.extract_strided_slice %29 {offsets = [13, 0, 0], sizes = [1, 16, 128], strides = [1, 1, 1]} : vector<16x16x128xbf16> to vector<1x16x128xbf16>
    %110 = vector.shape_cast %109 : vector<1x16x128xbf16> to vector<16x128xbf16>
    %c13 = arith.constant 13 : index
    %c0_51 = arith.constant 0 : index
    %c0_52 = arith.constant 0 : index
    %111 = vector.load %arg4[%c13, %c0_51, %c0_52] : memref<16x128x128xbf16, #tpu.memory_space<vmem>>, vector<1x128x128xbf16>
    %112 = vector.shape_cast %111 : vector<1x128x128xbf16> to vector<128x128xbf16>
    %cst_53 = arith.constant dense<0.000000e+00> : vector<16x128xf32>
    %113 = tpu.matmul %110, %112, %cst_53 {dimension_numbers = #tpu.dot_dimension_numbers<[1], [0], [0], [1], [0, 0, 1, 1], [], []>} : vector<16x128xbf16>, vector<128x128xbf16>, vector<16x128xf32> -> vector<16x128xf32>
    %114 = arith.addf %108, %113 : vector<16x128xf32>
    %115 = vector.extract_strided_slice %29 {offsets = [14, 0, 0], sizes = [1, 16, 128], strides = [1, 1, 1]} : vector<16x16x128xbf16> to vector<1x16x128xbf16>
    %116 = vector.shape_cast %115 : vector<1x16x128xbf16> to vector<16x128xbf16>
    %c14 = arith.constant 14 : index
    %c0_54 = arith.constant 0 : index
    %c0_55 = arith.constant 0 : index
    %117 = vector.load %arg4[%c14, %c0_54, %c0_55] : memref<16x128x128xbf16, #tpu.memory_space<vmem>>, vector<1x128x128xbf16>
    %118 = vector.shape_cast %117 : vector<1x128x128xbf16> to vector<128x128xbf16>
    %cst_56 = arith.constant dense<0.000000e+00> : vector<16x128xf32>
    %119 = tpu.matmul %116, %118, %cst_56 {dimension_numbers = #tpu.dot_dimension_numbers<[1], [0], [0], [1], [0, 0, 1, 1], [], []>} : vector<16x128xbf16>, vector<128x128xbf16>, vector<16x128xf32> -> vector<16x128xf32>
    %120 = arith.addf %114, %119 : vector<16x128xf32>
    %121 = vector.extract_strided_slice %29 {offsets = [15, 0, 0], sizes = [1, 16, 128], strides = [1, 1, 1]} : vector<16x16x128xbf16> to vector<1x16x128xbf16>
    %122 = vector.shape_cast %121 : vector<1x16x128xbf16> to vector<16x128xbf16>
    %c15 = arith.constant 15 : index
    %c0_57 = arith.constant 0 : index
    %c0_58 = arith.constant 0 : index
    %123 = vector.load %arg4[%c15, %c0_57, %c0_58] : memref<16x128x128xbf16, #tpu.memory_space<vmem>>, vector<1x128x128xbf16>
    %124 = vector.shape_cast %123 : vector<1x128x128xbf16> to vector<128x128xbf16>
    %cst_59 = arith.constant dense<0.000000e+00> : vector<16x128xf32>
    %125 = tpu.matmul %122, %124, %cst_59 {dimension_numbers = #tpu.dot_dimension_numbers<[1], [0], [0], [1], [0, 0, 1, 1], [], []>} : vector<16x128xbf16>, vector<128x128xbf16>, vector<16x128xf32> -> vector<16x128xf32>
    %126 = arith.addf %120, %125 : vector<16x128xf32>
    %c0_60 = arith.constant 0 : index
    %c0_61 = arith.constant 0 : index
    %127 = vector.load %arg5[%c0_60, %c0_61] : memref<1x128xf32, #tpu.memory_space<vmem>>, vector<1x128xf32>
    %128 = vector.broadcast %127 : vector<1x128xf32> to vector<16x128xf32>
    %129 = arith.addf %126, %128 : vector<16x128xf32>
    %cst_62 = arith.constant 5.000000e-01 : f32
    %130 = vector.broadcast %cst_62 : f32 to vector<16x128xf32>
    %131 = arith.mulf %130, %129 : vector<16x128xf32>
    %132 = math.tanh %131 : vector<16x128xf32>
    %cst_63 = arith.constant 5.000000e-01 : f32
    %133 = vector.broadcast %cst_63 : f32 to vector<16x128xf32>
    %134 = arith.mulf %133, %132 : vector<16x128xf32>
    %cst_64 = arith.constant 5.000000e-01 : f32
    %135 = vector.broadcast %cst_64 : f32 to vector<16x128xf32>
    %136 = arith.addf %134, %135 : vector<16x128xf32>
    %137 = arith.truncf %136 : vector<16x128xf32> to vector<16x128xbf16>
    %c0_65 = arith.constant 0 : index
    %c0_66 = arith.constant 0 : index
    %138 = vector.load %arg6[%c0_65, %c0_66] : memref<128x128xbf16, #tpu.memory_space<vmem>>, vector<128x128xbf16>
    %cst_67 = arith.constant dense<0.000000e+00> : vector<16x128xf32>
    %139 = tpu.matmul %137, %138, %cst_67 {dimension_numbers = #tpu.dot_dimension_numbers<[1], [0], [0], [1], [0, 0, 1, 1], [], []>} : vector<16x128xbf16>, vector<128x128xbf16>, vector<16x128xf32> -> vector<16x128xf32>
    %c0_68 = arith.constant 0 : index
    %c0_69 = arith.constant 0 : index
    %140 = vector.load %arg7[%c0_68, %c0_69] : memref<1x128xf32, #tpu.memory_space<vmem>>, vector<1x128xf32>
    %141 = vector.broadcast %140 : vector<1x128xf32> to vector<16x128xf32>
    %142 = arith.addf %139, %141 : vector<16x128xf32>
    %cst_70 = arith.constant 5.000000e-01 : f32
    %143 = vector.broadcast %cst_70 : f32 to vector<16x128xf32>
    %144 = arith.mulf %143, %142 : vector<16x128xf32>
    %145 = math.tanh %144 : vector<16x128xf32>
    %cst_71 = arith.constant 5.000000e-01 : f32
    %146 = vector.broadcast %cst_71 : f32 to vector<16x128xf32>
    %147 = arith.mulf %146, %145 : vector<16x128xf32>
    %cst_72 = arith.constant 5.000000e-01 : f32
    %148 = vector.broadcast %cst_72 : f32 to vector<16x128xf32>
    %149 = arith.addf %147, %148 : vector<16x128xf32>
    %150 = arith.truncf %149 : vector<16x128xf32> to vector<16x128xbf16>
    %c0_73 = arith.constant 0 : index
    %c0_74 = arith.constant 0 : index
    %151 = vector.load %arg8[%c0_73, %c0_74] : memref<128x128xbf16, #tpu.memory_space<vmem>>, vector<128x128xbf16>
    %cst_75 = arith.constant dense<0.000000e+00> : vector<16x128xf32>
    %152 = tpu.matmul %150, %151, %cst_75 {dimension_numbers = #tpu.dot_dimension_numbers<[1], [0], [0], [1], [0, 0, 1, 1], [], []>} : vector<16x128xbf16>, vector<128x128xbf16>, vector<16x128xf32> -> vector<16x128xf32>
    %c0_76 = arith.constant 0 : index
    %c0_77 = arith.constant 0 : index
    %153 = vector.load %arg9[%c0_76, %c0_77] : memref<1x128xf32, #tpu.memory_space<vmem>>, vector<1x128xf32>
    %154 = vector.broadcast %153 : vector<1x128xf32> to vector<16x128xf32>
    %155 = arith.addf %152, %154 : vector<16x128xf32>
    %c0_78 = arith.constant 0 : index
    %c0_79 = arith.constant 0 : index
    %156 = vector.load %arg10[%c0_78, %c0_79] : memref<16x128xf32, #tpu.memory_space<vmem>>, vector<16x128xf32>
    tpu.vector_store %arg10[%c0_78, %c0_79], %155 {strides = array<i32>} : memref<16x128xf32, #tpu.memory_space<vmem>>, vector<16x128xf32>,
    return
  }
  func.func @transform_0(%arg0: i32) -> (i32, i32, i32) {
    %c0_i32 = arith.constant 0 : i32
    %c0_i32_0 = arith.constant 0 : i32
    %c0_i32_1 = arith.constant 0 : i32
    return %c0_i32, %arg0, %c0_i32_0 : i32, i32, i32
  }
  func.func @transform_1(%arg0: i32) -> (i32, i32) {
    %c0_i32 = arith.constant 0 : i32
    %c0_i32_0 = arith.constant 0 : i32
    %c0_i32_1 = arith.constant 0 : i32
    return %c0_i32, %c0_i32_0 : i32, i32
  }
  func.func @transform_2(%arg0: i32) -> (i32, i32) {
    %c0_i32 = arith.constant 0 : i32
    %c0_i32_0 = arith.constant 0 : i32
    %c0_i32_1 = arith.constant 0 : i32
    return %c0_i32, %c0_i32_0 : i32, i32
  }
  func.func @transform_3(%arg0: i32) -> (i32, i32, i32) {
    %c0_i32 = arith.constant 0 : i32
    %c0_i32_0 = arith.constant 0 : i32
    %c0_i32_1 = arith.constant 0 : i32
    %c0_i32_2 = arith.constant 0 : i32
    return %c0_i32, %c0_i32_0, %c0_i32_1 : i32, i32, i32
  }
  func.func @transform_4(%arg0: i32) -> (i32, i32) {
    %c0_i32 = arith.constant 0 : i32
    %c0_i32_0 = arith.constant 0 : i32
    %c0_i32_1 = arith.constant 0 : i32
    return %c0_i32, %c0_i32_0 : i32, i32
  }
  func.func @transform_5(%arg0: i32) -> (i32, i32) {
    %c0_i32 = arith.constant 0 : i32
    %c0_i32_0 = arith.constant 0 : i32
    %c0_i32_1 = arith.constant 0 : i32
    return %c0_i32, %c0_i32_0 : i32, i32
  }
  func.func @transform_6(%arg0: i32) -> (i32, i32) {
    %c0_i32 = arith.constant 0 : i32
    %c0_i32_0 = arith.constant 0 : i32
    %c0_i32_1 = arith.constant 0 : i32
    return %c0_i32, %c0_i32_0 : i32, i32
  }
  func.func @transform_7(%arg0: i32) -> (i32, i32) {
    %c0_i32 = arith.constant 0 : i32
    %c0_i32_0 = arith.constant 0 : i32
    %c0_i32_1 = arith.constant 0 : i32
    return %c0_i32, %c0_i32_0 : i32, i32
  }
  func.func @transform_8(%arg0: i32) -> (i32, i32) {
    %c0_i32 = arith.constant 0 : i32
    %c0_i32_0 = arith.constant 0 : i32
    %c0_i32_1 = arith.constant 0 : i32
    return %c0_i32, %c0_i32_0 : i32, i32
  }
  func.func @transform_9(%arg0: i32) -> (i32, i32) {
    %c0_i32 = arith.constant 0 : i32
    %c0_i32_0 = arith.constant 0 : i32
    return %arg0, %c0_i32 : i32, i32
  }
}

</mosaic_0001>

<llo_original>
// kernel: lenet_forward.2
$region0: #{lenet_forward.2}
  #allocation0 [shape = 'u32[]', space=smem, size = 0x4, offset = 0x4, fixed_abs, tag = 'smem constant byte address 0x4 - core index']
  #allocation1 [shape = 'u32[144,128]{1,0:T(1,128)}', space=vmem, size = 0x12000, scoped, tag = 'internal scratch']
  %s0 = inlined_call_operand.vmem [shape: bf16[16,576,32], index: 0, kind: input, shape index: {}]
  %s1 = inlined_call_operand.vmem [shape: bf16[32,128], index: 1, kind: input, shape index: {}]
  %s2 = inlined_call_operand.vmem [shape: f32[1,128], index: 2, kind: input, shape index: {}]
  %s3 = inlined_call_operand.vmem [shape: bf16[16,144,128], index: 3, kind: output, shape index: {}]
  %s4 = sld [smem:[#allocation0]]
  $region45: #{lenet_forward.2} parent=0
    _
  %s6 = ssub.s32 1, %s4
  %s7 = scalar_select 0, %s6, %s4
  loop: start=0, step=1, limit=4
  $region2: #{lenet_forward.2} parent=0 // loop_pre_header
    _
  $region3: #{lenet_forward.2} parent=0 // loop_header
    %s9 = sphi 0, %s13
    %p10 = scmp.ge.s32.totalorder %s9, 4
    %s19 = sphi 0, %s21
    %s22 = sphi 0, %s19
    %s23 = sphi 0, %s22
    %s39 = sphi 0, %s23
    %s43 = sphi 0, %s43
    %s45 = sphi 0, %s43
    %s46 = sphi 0, %s45
    %s60 = sphi 0, %s46
    %s64 = sphi 0, %s64
    %s66 = sphi 0, %s64
    %s67 = sphi 0, %s66
    %s81 = sphi 0, %s67
    %s87 = sphi 0, %s89
    %s90 = sphi 0, %s87
    %s91 = sphi 0, %s90
    %s107 = sphi 0, %s91
  $region4: #{lenet_forward.2} parent=0 // loop_header_branch
    %12 = sbr.rel (%p10) target = $region8
  $region5: #{lenet_forward.2} parent=0 // loop_body
    %s14 = ssub.s32 %s9, 1
    %s15 = ssub.s32 %s9, 2
    %s16 = sadd.s32 %s9, 1
    %s17 = ssub.s32 %s9, %s16
    %p18 = scmp.eq.s32.totalorder %s17, 0
    %s20 = sadd.s32 %s19, 1
    %s21 = scalar_select %p18, %s19, %s20
    %p24 = pneg %p18
    %p25 = scmp.eq.s32.totalorder %s9, 1
    %p26 = por %p24, %p25
    %p27 = scmp.ne.s32.totalorder %s19, %s22
    %p28 = scmp.eq.s32.totalorder %s9, 0
    %p29 = por %p27, %p28
    %p30 = scmp.ne.s32.totalorder %s19, %s22
    %p31 = scmp.eq.s32.totalorder %s14, 1
    %p32 = por %p30, %p31
    %p33 = scmp.ne.s32.totalorder %s22, %s23
    %p34 = scmp.eq.s32.totalorder %s14, 0
    %p35 = por %p33, %p34
    %p36 = scmp.ne.s32.totalorder %s22, %s23
    %p37 = scmp.eq.s32.totalorder %s15, 1
    %p38 = por %p36, %p37
    %p40 = scmp.ne.s32.totalorder %s23, %s39
    %p41 = scmp.eq.s32.totalorder %s15, 0
    %p42 = por %p40, %p41
    %s44 = sadd.s32 %s43, 1
    %p47 = scmp.eq.s32.totalorder %s9, 1
    %p48 = scmp.ne.s32.totalorder %s43, %s45
    %p49 = scmp.eq.s32.totalorder %s9, 0
    %p50 = por %p48, %p49
    %p51 = scmp.ne.s32.totalorder %s43, %s45
    %p52 = scmp.eq.s32.totalorder %s14, 1
    %p53 = por %p51, %p52
    %p54 = scmp.ne.s32.totalorder %s45, %s46
    %p55 = scmp.eq.s32.totalorder %s14, 0
    %p56 = por %p54, %p55
    %p57 = scmp.ne.s32.totalorder %s45, %s46
    %p58 = scmp.eq.s32.totalorder %s15, 1
    %p59 = por %p57, %p58
    %p61 = scmp.ne.s32.totalorder %s46, %s60
    %p62 = scmp.eq.s32.totalorder %s15, 0
    %p63 = por %p61, %p62
    %s65 = sadd.s32 %s64, 1
    %p68 = scmp.eq.s32.totalorder %s9, 1
    %p69 = scmp.ne.s32.totalorder %s64, %s66
    %p70 = scmp.eq.s32.totalorder %s9, 0
    %p71 = por %p69, %p70
    %p72 = scmp.ne.s32.totalorder %s64, %s66
    %p73 = scmp.eq.s32.totalorder %s14, 1
    %p74 = por %p72, %p73
    %p75 = scmp.ne.s32.totalorder %s66, %s67
    %p76 = scmp.eq.s32.totalorder %s14, 0
    %p77 = por %p75, %p76
    %p78 = scmp.ne.s32.totalorder %s66, %s67
    %p79 = scmp.eq.s32.totalorder %s15, 1
    %p80 = por %p78, %p79
    %p82 = scmp.ne.s32.totalorder %s67, %s81
    %p83 = scmp.eq.s32.totalorder %s15, 0
    %p84 = por %p82, %p83
    %s85 = ssub.s32 %s9, %s16
    %p86 = scmp.eq.s32.totalorder %s85, 0
    %s88 = sadd.s32 %s87, 1
    %s89 = scalar_select %p86, %s87, %s88
    %p92 = pneg %p86
    %p93 = scmp.eq.s32.totalorder %s9, 1
    %p94 = por %p92, %p93
    %p95 = scmp.ne.s32.totalorder %s87, %s90
    %p96 = scmp.eq.s32.totalorder %s9, 0
    %p97 = por %p95, %p96
    %p98 = scmp.ne.s32.totalorder %s87, %s90
    %p99 = scmp.eq.s32.totalorder %s14, 1
    %p100 = por %p98, %p99
    %p101 = scmp.ne.s32.totalorder %s90, %s91
    %p102 = scmp.eq.s32.totalorder %s14, 0
    %p103 = por %p101, %p102
    %p104 = scmp.ne.s32.totalorder %s90, %s91
    %p105 = scmp.eq.s32.totalorder %s15, 1
    %p106 = por %p104, %p105
    %p108 = scmp.ne.s32.totalorder %s91, %s107
    %p109 = scmp.eq.s32.totalorder %s15, 0
    %p110 = por %p108, %p109
    %p111 = scmp.le.s32.totalorder 1, %s9
    %p112 = scmp.lt.s32.totalorder %s9, 3
    %p113 = pnand %p111, %p112
    %p114 = pneg %p113
    // Predicated region
    $region9: #{lenet_forward.2} parent=5 // pred_check
      _
    $region10: #{lenet_forward.2} parent=5 // pred_check_branch
      %116 = sbr.rel (%p113) target = $region12
    $region11: #{lenet_forward.2} parent=5 // pred_region
      %s117 = ssub.s32 %s9, 1
      // Predicated region
      $region13: #{lenet_forward.2} parent=11 // pred_check
        %p118 = pneg %p56
      $region14: #{lenet_forward.2} parent=11 // pred_check_branch
        %120 = sbr.rel (%p118) target = $region16
      $region15: #{lenet_forward.2} parent=11 // pred_region
        _
      $region16: #{lenet_forward.2} parent=11 // pred_fallthru
        _
      // Predicated region
      $region17: #{lenet_forward.2} parent=11 // pred_check
        %p121 = pneg %p77
      $region18: #{lenet_forward.2} parent=11 // pred_check_branch
        %123 = sbr.rel (%p121) target = $region20
      $region19: #{lenet_forward.2} parent=11 // pred_region
        _
      $region20: #{lenet_forward.2} parent=11 // pred_fallthru
        _
    $region12: #{lenet_forward.2} parent=5 // pred_fallthru
      _
    %p124 = scmp.lt.s32.totalorder %s9, 2
    // Predicated region
    $region21: #{lenet_forward.2} parent=5 // pred_check
      %p125 = pneg %p124
    $region22: #{lenet_forward.2} parent=5 // pred_check_branch
      %127 = sbr.rel (%p125) target = $region24
    $region23: #{lenet_forward.2} parent=5 // pred_region
      // Predicated region
      $region25: #{lenet_forward.2} parent=23 // pred_check
        %p128 = pneg %p29
      $region26: #{lenet_forward.2} parent=23 // pred_check_branch
        %130 = sbr.rel (%p128) target = $region28
      $region27: #{lenet_forward.2} parent=23 // pred_region
        %s131 = smul.u32 8, %s9
        %p132 = scmp.lt.s32.totalorder %s131, 15
        %s133 = scalar_select %p132, %s131, 15
        %s134 = smul.addr %s133, 72
        %s135 = smul.addr %s134, 4
        %s136 = scalar_lea.vmem %s0, %s135
        %s137 = smul.u32 8, %s9
      $region28: #{lenet_forward.2} parent=23 // pred_fallthru
        _
    $region24: #{lenet_forward.2} parent=5 // pred_fallthru
      _
    %p138 = scmp.le.s32.totalorder 1, %s9
    %p139 = scmp.lt.s32.totalorder %s9, 3
    %p140 = pnand %p138, %p139
    %p141 = pneg %p140
    // Predicated region
    $region29: #{lenet_forward.2} parent=5 // pred_check
      _
    $region30: #{lenet_forward.2} parent=5 // pred_check_branch
      %143 = sbr.rel (%p140) target = $region32
    $region31: #{lenet_forward.2} parent=5 // pred_region
      %s144 = ssub.s32 %s9, 1
      %s145 = smul.u32 8, %s14
      %p146 = scmp.lt.s32.totalorder %s145, 15
      %s147 = scalar_select %p146, %s145, 15
      %s148 = smul.addr %s147, 72
      %s149 = smul.addr %s148, 4
      %s150 = scalar_lea.vmem %s0, %s149
      %p151 = pneg %p35
      %p152 = pneg %p32
      %p153 = pneg %p56
      %p154 = pneg %p53
      %p155 = pneg %p77
      %p156 = pneg %p74
      %p157 = pneg %p103
      %p158 = pneg %p100
      %s159 = smul.u32 8, %s14
      %p160 = scmp.lt.s32.totalorder %s159, 15
      %s161 = scalar_select %p160, %s159, 15
      %s162 = smul.addr %s161, 18
      %s163 = smul.addr %s162, 4
      %s164 = scalar_lea.vmem %s3, %s163
      %s165 = smul.u32 8, %s14
      %p166 = scmp.lt.s32.totalorder %s165, 15
      %s167 = scalar_select %p166, %s165, 15
      %s168 = smul.addr %s167, 72
      %s169 = smul.addr %s168, 4
      %s170 = scalar_lea.vmem %s0, %s169
      %s171 = smul.u32 8, %s14
      %s172 = smul.u32 8, %s14
      %p173 = scmp.lt.s32.totalorder %s172, 15
      %s174 = scalar_select %p173, %s172, 15
      %s175 = smul.addr %s174, 18
      %s176 = smul.addr %s175, 4
      %s177 = scalar_lea.vmem %s3, %s176
      %s178 = smul.u32 8, %s14
      %v180 = vld [vmem:[%s170] sm:$0xf]
      %v181 = vld [vmem:[%s170 + $0x4] sm:$0xf]
      %v182 = vld [vmem:[%s170 + $0x8] sm:$0xf]
      %v183 = vld [vmem:[%s170 + $0xc] sm:$0xf]
      %v184 = vld [vmem:[%s170 + $0x10] sm:$0xf]
      %v185 = vld [vmem:[%s170 + $0x14] sm:$0xf]
      %v186 = vld [vmem:[%s170 + $0x18] sm:$0xf]
      %v187 = vld [vmem:[%s170 + $0x1c] sm:$0xf]
      %v188 = vld [vmem:[%s170 + $0x20] sm:$0xf]
      %v189 = vld [vmem:[%s170 + $0x24] sm:$0xf]
      %v190 = vld [vmem:[%s170 + $0x28] sm:$0xf]
      %v191 = vld [vmem:[%s170 + $0x2c] sm:$0xf]
      %v192 = vld [vmem:[%s170 + $0x30] sm:$0xf]
      %v193 = vld [vmem:[%s170 + $0x34] sm:$0xf]
      %v194 = vld [vmem:[%s170 + $0x38] sm:$0xf]
      %v195 = vld [vmem:[%s170 + $0x3c] sm:$0xf]
      %v196 = vld [vmem:[%s170 + $0x40] sm:$0xf]
      %v197 = vld [vmem:[%s170 + $0x44] sm:$0xf]
      %v198 = vld [vmem:[%s170 + $0x48] sm:$0xf]
      %v199 = vld [vmem:[%s170 + $0x4c] sm:$0xf]
      %v200 = vld [vmem:[%s170 + $0x50] sm:$0xf]
      %v201 = vld [vmem:[%s170 + $0x54] sm:$0xf]
      %v202 = vld [vmem:[%s170 + $0x58] sm:$0xf]
      %v203 = vld [vmem:[%s170 + $0x5c] sm:$0xf]
      %v204 = vld [vmem:[%s170 + $0x60] sm:$0xf]
      %v205 = vld [vmem:[%s170 + $0x64] sm:$0xf]
      %v206 = vld [vmem:[%s170 + $0x68] sm:$0xf]
      %v207 = vld [vmem:[%s170 + $0x6c] sm:$0xf]
      %v208 = vld [vmem:[%s170 + $0x70] sm:$0xf]
      %v209 = vld [vmem:[%s170 + $0x74] sm:$0xf]
      %v210 = vld [vmem:[%s170 + $0x78] sm:$0xf]
      %v211 = vld [vmem:[%s170 + $0x7c] sm:$0xf]
      %v212 = vld [vmem:[%s170 + $0x80] sm:$0xf]
      %v213 = vld [vmem:[%s170 + $0x84] sm:$0xf]
      %v214 = vld [vmem:[%s170 + $0x88] sm:$0xf]
      %v215 = vld [vmem:[%s170 + $0x8c] sm:$0xf]
      %v216 = vld [vmem:[%s170 + $0x90] sm:$0xf]
      %v217 = vld [vmem:[%s170 + $0x94] sm:$0xf]
      %v218 = vld [vmem:[%s170 + $0x98] sm:$0xf]
      %v219 = vld [vmem:[%s170 + $0x9c] sm:$0xf]
      %v220 = vld [vmem:[%s170 + $0xa0] sm:$0xf]
      %v221 = vld [vmem:[%s170 + $0xa4] sm:$0xf]
      %v222 = vld [vmem:[%s170 + $0xa8] sm:$0xf]
      %v223 = vld [vmem:[%s170 + $0xac] sm:$0xf]
      %v224 = vld [vmem:[%s170 + $0xb0] sm:$0xf]
      %v225 = vld [vmem:[%s170 + $0xb4] sm:$0xf]
      %v226 = vld [vmem:[%s170 + $0xb8] sm:$0xf]
      %v227 = vld [vmem:[%s170 + $0xbc] sm:$0xf]
      %v228 = vld [vmem:[%s170 + $0xc0] sm:$0xf]
      %v229 = vld [vmem:[%s170 + $0xc4] sm:$0xf]
      %v230 = vld [vmem:[%s170 + $0xc8] sm:$0xf]
      %v231 = vld [vmem:[%s170 + $0xcc] sm:$0xf]
      %v232 = vld [vmem:[%s170 + $0xd0] sm:$0xf]
      %v233 = vld [vmem:[%s170 + $0xd4] sm:$0xf]
      %v234 = vld [vmem:[%s170 + $0xd8] sm:$0xf]
      %v235 = vld [vmem:[%s170 + $0xdc] sm:$0xf]
      %v236 = vld [vmem:[%s170 + $0xe0] sm:$0xf]
      %v237 = vld [vmem:[%s170 + $0xe4] sm:$0xf]
      %v238 = vld [vmem:[%s170 + $0xe8] sm:$0xf]
      %v239 = vld [vmem:[%s170 + $0xec] sm:$0xf]
      %v240 = vld [vmem:[%s170 + $0xf0] sm:$0xf]
      %v241 = vld [vmem:[%s170 + $0xf4] sm:$0xf]
      %v242 = vld [vmem:[%s170 + $0xf8] sm:$0xf]
      %v243 = vld [vmem:[%s170 + $0xfc] sm:$0xf]
      %v244 = vld [vmem:[%s170 + $0x100] sm:$0xf]
      %v245 = vld [vmem:[%s170 + $0x104] sm:$0xf]
      %v246 = vld [vmem:[%s170 + $0x108] sm:$0xf]
      %v247 = vld [vmem:[%s170 + $0x10c] sm:$0xf]
      %v248 = vld [vmem:[%s170 + $0x110] sm:$0xf]
      %v249 = vld [vmem:[%s170 + $0x114] sm:$0xf]
      %v250 = vld [vmem:[%s170 + $0x118] sm:$0xf]
      %v251 = vld [vmem:[%s170 + $0x11c] sm:$0xf]
      %v252 = vld [vmem:[%s170 + $0x120] sm:$0xf]
      %v253 = vld [vmem:[%s170 + $0x124] sm:$0xf]
      %v254 = vld [vmem:[%s170 + $0x128] sm:$0xf]
      %v255 = vld [vmem:[%s170 + $0x12c] sm:$0xf]
      %v256 = vld [vmem:[%s170 + $0x130] sm:$0xf]
      %v257 = vld [vmem:[%s170 + $0x134] sm:$0xf]
      %v258 = vld [vmem:[%s170 + $0x138] sm:$0xf]
      %v259 = vld [vmem:[%s170 + $0x13c] sm:$0xf]
      %v260 = vld [vmem:[%s170 + $0x140] sm:$0xf]
      %v261 = vld [vmem:[%s170 + $0x144] sm:$0xf]
      %v262 = vld [vmem:[%s170 + $0x148] sm:$0xf]
      %v263 = vld [vmem:[%s170 + $0x14c] sm:$0xf]
      %v264 = vld [vmem:[%s170 + $0x150] sm:$0xf]
      %v265 = vld [vmem:[%s170 + $0x154] sm:$0xf]
      %v266 = vld [vmem:[%s170 + $0x158] sm:$0xf]
      %v267 = vld [vmem:[%s170 + $0x15c] sm:$0xf]
      %v268 = vld [vmem:[%s170 + $0x160] sm:$0xf]
      %v269 = vld [vmem:[%s170 + $0x164] sm:$0xf]
      %v270 = vld [vmem:[%s170 + $0x168] sm:$0xf]
      %v271 = vld [vmem:[%s170 + $0x16c] sm:$0xf]
      %v272 = vld [vmem:[%s170 + $0x170] sm:$0xf]
      %v273 = vld [vmem:[%s170 + $0x174] sm:$0xf]
      %v274 = vld [vmem:[%s170 + $0x178] sm:$0xf]
      %v275 = vld [vmem:[%s170 + $0x17c] sm:$0xf]
      %v276 = vld [vmem:[%s170 + $0x180] sm:$0xf]
      %v277 = vld [vmem:[%s170 + $0x184] sm:$0xf]
      %v278 = vld [vmem:[%s170 + $0x188] sm:$0xf]
      %v279 = vld [vmem:[%s170 + $0x18c] sm:$0xf]
      %v280 = vld [vmem:[%s170 + $0x190] sm:$0xf]
      %v281 = vld [vmem:[%s170 + $0x194] sm:$0xf]
      %v282 = vld [vmem:[%s170 + $0x198] sm:$0xf]
      %v283 = vld [vmem:[%s170 + $0x19c] sm:$0xf]
      %v284 = vld [vmem:[%s170 + $0x1a0] sm:$0xf]
      %v285 = vld [vmem:[%s170 + $0x1a4] sm:$0xf]
      %v286 = vld [vmem:[%s170 + $0x1a8] sm:$0xf]
      %v287 = vld [vmem:[%s170 + $0x1ac] sm:$0xf]
      %v288 = vld [vmem:[%s170 + $0x1b0] sm:$0xf]
      %v289 = vld [vmem:[%s170 + $0x1b4] sm:$0xf]
      %v290 = vld [vmem:[%s170 + $0x1b8] sm:$0xf]
      %v291 = vld [vmem:[%s170 + $0x1bc] sm:$0xf]
      %v292 = vld [vmem:[%s170 + $0x1c0] sm:$0xf]
      %v293 = vld [vmem:[%s170 + $0x1c4] sm:$0xf]
      %v294 = vld [vmem:[%s170 + $0x1c8] sm:$0xf]
      %v295 = vld [vmem:[%s170 + $0x1cc] sm:$0xf]
      %v296 = vld [vmem:[%s170 + $0x1d0] sm:$0xf]
      %v297 = vld [vmem:[%s170 + $0x1d4] sm:$0xf]
      %v298 = vld [vmem:[%s170 + $0x1d8] sm:$0xf]
      %v299 = vld [vmem:[%s170 + $0x1dc] sm:$0xf]
      %v300 = vld [vmem:[%s170 + $0x1e0] sm:$0xf]
      %v301 = vld [vmem:[%s170 + $0x1e4] sm:$0xf]
      %v302 = vld [vmem:[%s170 + $0x1e8] sm:$0xf]
      %v303 = vld [vmem:[%s170 + $0x1ec] sm:$0xf]
      %v304 = vld [vmem:[%s170 + $0x1f0] sm:$0xf]
      %v305 = vld [vmem:[%s170 + $0x1f4] sm:$0xf]
      %v306 = vld [vmem:[%s170 + $0x1f8] sm:$0xf]
      %v307 = vld [vmem:[%s170 + $0x1fc] sm:$0xf]
      %v308 = vld [vmem:[%s170 + $0x200] sm:$0xf]
      %v309 = vld [vmem:[%s170 + $0x204] sm:$0xf]
      %v310 = vld [vmem:[%s170 + $0x208] sm:$0xf]
      %v311 = vld [vmem:[%s170 + $0x20c] sm:$0xf]
      %v312 = vld [vmem:[%s170 + $0x210] sm:$0xf]
      %v313 = vld [vmem:[%s170 + $0x214] sm:$0xf]
      %v314 = vld [vmem:[%s170 + $0x218] sm:$0xf]
      %v315 = vld [vmem:[%s170 + $0x21c] sm:$0xf]
      %v316 = vld [vmem:[%s170 + $0x220] sm:$0xf]
      %v317 = vld [vmem:[%s170 + $0x224] sm:$0xf]
      %v318 = vld [vmem:[%s170 + $0x228] sm:$0xf]
      %v319 = vld [vmem:[%s170 + $0x22c] sm:$0xf]
      %v320 = vld [vmem:[%s170 + $0x230] sm:$0xf]
      %v321 = vld [vmem:[%s170 + $0x234] sm:$0xf]
      %v322 = vld [vmem:[%s170 + $0x238] sm:$0xf]
      %v323 = vld [vmem:[%s170 + $0x23c] sm:$0xf]
      %v324 = vld [vmem:[%s170 + $0x240] sm:$0xf]
      %v325 = vld [vmem:[%s170 + $0x244] sm:$0xf]
      %v326 = vld [vmem:[%s170 + $0x248] sm:$0xf]
      %v327 = vld [vmem:[%s170 + $0x24c] sm:$0xf]
      %v328 = vld [vmem:[%s170 + $0x250] sm:$0xf]
      %v329 = vld [vmem:[%s170 + $0x254] sm:$0xf]
      %v330 = vld [vmem:[%s170 + $0x258] sm:$0xf]
      %v331 = vld [vmem:[%s170 + $0x25c] sm:$0xf]
      %v332 = vld [vmem:[%s170 + $0x260] sm:$0xf]
      %v333 = vld [vmem:[%s170 + $0x264] sm:$0xf]
      %v334 = vld [vmem:[%s170 + $0x268] sm:$0xf]
      %v335 = vld [vmem:[%s170 + $0x26c] sm:$0xf]
      %v336 = vld [vmem:[%s170 + $0x270] sm:$0xf]
      %v337 = vld [vmem:[%s170 + $0x274] sm:$0xf]
      %v338 = vld [vmem:[%s170 + $0x278] sm:$0xf]
      %v339 = vld [vmem:[%s170 + $0x27c] sm:$0xf]
      %v340 = vld [vmem:[%s170 + $0x280] sm:$0xf]
      %v341 = vld [vmem:[%s170 + $0x284] sm:$0xf]
      %v342 = vld [vmem:[%s170 + $0x288] sm:$0xf]
      %v343 = vld [vmem:[%s170 + $0x28c] sm:$0xf]
      %v344 = vld [vmem:[%s170 + $0x290] sm:$0xf]
      %v345 = vld [vmem:[%s170 + $0x294] sm:$0xf]
      %v346 = vld [vmem:[%s170 + $0x298] sm:$0xf]
      %v347 = vld [vmem:[%s170 + $0x29c] sm:$0xf]
      %v348 = vld [vmem:[%s170 + $0x2a0] sm:$0xf]
      %v349 = vld [vmem:[%s170 + $0x2a4] sm:$0xf]
      %v350 = vld [vmem:[%s170 + $0x2a8] sm:$0xf]
      %v351 = vld [vmem:[%s170 + $0x2ac] sm:$0xf]
      %v352 = vld [vmem:[%s170 + $0x2b0] sm:$0xf]
      %v353 = vld [vmem:[%s170 + $0x2b4] sm:$0xf]
      %v354 = vld [vmem:[%s170 + $0x2b8] sm:$0xf]
      %v355 = vld [vmem:[%s170 + $0x2bc] sm:$0xf]
      %v356 = vld [vmem:[%s170 + $0x2c0] sm:$0xf]
      %v357 = vld [vmem:[%s170 + $0x2c4] sm:$0xf]
      %v358 = vld [vmem:[%s170 + $0x2c8] sm:$0xf]
      %v359 = vld [vmem:[%s170 + $0x2cc] sm:$0xf]
      %v360 = vld [vmem:[%s170 + $0x2d0] sm:$0xf]
      %v361 = vld [vmem:[%s170 + $0x2d4] sm:$0xf]
      %v362 = vld [vmem:[%s170 + $0x2d8] sm:$0xf]
      %v363 = vld [vmem:[%s170 + $0x2dc] sm:$0xf]
      %v364 = vld [vmem:[%s170 + $0x2e0] sm:$0xf]
      %v365 = vld [vmem:[%s170 + $0x2e4] sm:$0xf]
      %v366 = vld [vmem:[%s170 + $0x2e8] sm:$0xf]
      %v367 = vld [vmem:[%s170 + $0x2ec] sm:$0xf]
      %v368 = vld [vmem:[%s170 + $0x2f0] sm:$0xf]
      %v369 = vld [vmem:[%s170 + $0x2f4] sm:$0xf]
      %v370 = vld [vmem:[%s170 + $0x2f8] sm:$0xf]
      %v371 = vld [vmem:[%s170 + $0x2fc] sm:$0xf]
      %v372 = vld [vmem:[%s170 + $0x300] sm:$0xf]
      %v373 = vld [vmem:[%s170 + $0x304] sm:$0xf]
      %v374 = vld [vmem:[%s170 + $0x308] sm:$0xf]
      %v375 = vld [vmem:[%s170 + $0x30c] sm:$0xf]
      %v376 = vld [vmem:[%s170 + $0x310] sm:$0xf]
      %v377 = vld [vmem:[%s170 + $0x314] sm:$0xf]
      %v378 = vld [vmem:[%s170 + $0x318] sm:$0xf]
      %v379 = vld [vmem:[%s170 + $0x31c] sm:$0xf]
      %v380 = vld [vmem:[%s170 + $0x320] sm:$0xf]
      %v381 = vld [vmem:[%s170 + $0x324] sm:$0xf]
      %v382 = vld [vmem:[%s170 + $0x328] sm:$0xf]
      %v383 = vld [vmem:[%s170 + $0x32c] sm:$0xf]
      %v384 = vld [vmem:[%s170 + $0x330] sm:$0xf]
      %v385 = vld [vmem:[%s170 + $0x334] sm:$0xf]
      %v386 = vld [vmem:[%s170 + $0x338] sm:$0xf]
      %v387 = vld [vmem:[%s170 + $0x33c] sm:$0xf]
      %v388 = vld [vmem:[%s170 + $0x340] sm:$0xf]
      %v389 = vld [vmem:[%s170 + $0x344] sm:$0xf]
      %v390 = vld [vmem:[%s170 + $0x348] sm:$0xf]
      %v391 = vld [vmem:[%s170 + $0x34c] sm:$0xf]
      %v392 = vld [vmem:[%s170 + $0x350] sm:$0xf]
      %v393 = vld [vmem:[%s170 + $0x354] sm:$0xf]
      %v394 = vld [vmem:[%s170 + $0x358] sm:$0xf]
      %v395 = vld [vmem:[%s170 + $0x35c] sm:$0xf]
      %v396 = vld [vmem:[%s170 + $0x360] sm:$0xf]
      %v397 = vld [vmem:[%s170 + $0x364] sm:$0xf]
      %v398 = vld [vmem:[%s170 + $0x368] sm:$0xf]
      %v399 = vld [vmem:[%s170 + $0x36c] sm:$0xf]
      %v400 = vld [vmem:[%s170 + $0x370] sm:$0xf]
      %v401 = vld [vmem:[%s170 + $0x374] sm:$0xf]
      %v402 = vld [vmem:[%s170 + $0x378] sm:$0xf]
      %v403 = vld [vmem:[%s170 + $0x37c] sm:$0xf]
      %v404 = vld [vmem:[%s170 + $0x380] sm:$0xf]
      %v405 = vld [vmem:[%s170 + $0x384] sm:$0xf]
      %v406 = vld [vmem:[%s170 + $0x388] sm:$0xf]
      %v407 = vld [vmem:[%s170 + $0x38c] sm:$0xf]
      %v408 = vld [vmem:[%s170 + $0x390] sm:$0xf]
      %v409 = vld [vmem:[%s170 + $0x394] sm:$0xf]
      %v410 = vld [vmem:[%s170 + $0x398] sm:$0xf]
      %v411 = vld [vmem:[%s170 + $0x39c] sm:$0xf]
      %v412 = vld [vmem:[%s170 + $0x3a0] sm:$0xf]
      %v413 = vld [vmem:[%s170 + $0x3a4] sm:$0xf]
      %v414 = vld [vmem:[%s170 + $0x3a8] sm:$0xf]
      %v415 = vld [vmem:[%s170 + $0x3ac] sm:$0xf]
      %v416 = vld [vmem:[%s170 + $0x3b0] sm:$0xf]
      %v417 = vld [vmem:[%s170 + $0x3b4] sm:$0xf]
      %v418 = vld [vmem:[%s170 + $0x3b8] sm:$0xf]
      %v419 = vld [vmem:[%s170 + $0x3bc] sm:$0xf]
      %v420 = vld [vmem:[%s170 + $0x3c0] sm:$0xf]
      %v421 = vld [vmem:[%s170 + $0x3c4] sm:$0xf]
      %v422 = vld [vmem:[%s170 + $0x3c8] sm:$0xf]
      %v423 = vld [vmem:[%s170 + $0x3cc] sm:$0xf]
      %v424 = vld [vmem:[%s170 + $0x3d0] sm:$0xf]
      %v425 = vld [vmem:[%s170 + $0x3d4] sm:$0xf]
      %v426 = vld [vmem:[%s170 + $0x3d8] sm:$0xf]
      %v427 = vld [vmem:[%s170 + $0x3dc] sm:$0xf]
      %v428 = vld [vmem:[%s170 + $0x3e0] sm:$0xf]
      %v429 = vld [vmem:[%s170 + $0x3e4] sm:$0xf]
      %v430 = vld [vmem:[%s170 + $0x3e8] sm:$0xf]
      %v431 = vld [vmem:[%s170 + $0x3ec] sm:$0xf]
      %v432 = vld [vmem:[%s170 + $0x3f0] sm:$0xf]
      %v433 = vld [vmem:[%s170 + $0x3f4] sm:$0xf]
      %v434 = vld [vmem:[%s170 + $0x3f8] sm:$0xf]
      %v435 = vld [vmem:[%s170 + $0x3fc] sm:$0xf]
      %v436 = vld [vmem:[%s170 + $0x400] sm:$0xf]
      %v437 = vld [vmem:[%s170 + $0x404] sm:$0xf]
      %v438 = vld [vmem:[%s170 + $0x408] sm:$0xf]
      %v439 = vld [vmem:[%s170 + $0x40c] sm:$0xf]
      %v440 = vld [vmem:[%s170 + $0x410] sm:$0xf]
      %v441 = vld [vmem:[%s170 + $0x414] sm:$0xf]
      %v442 = vld [vmem:[%s170 + $0x418] sm:$0xf]
      %v443 = vld [vmem:[%s170 + $0x41c] sm:$0xf]
      %v444 = vld [vmem:[%s170 + $0x420] sm:$0xf]
      %v445 = vld [vmem:[%s170 + $0x424] sm:$0xf]
      %v446 = vld [vmem:[%s170 + $0x428] sm:$0xf]
      %v447 = vld [vmem:[%s170 + $0x42c] sm:$0xf]
      %v448 = vld [vmem:[%s170 + $0x430] sm:$0xf]
      %v449 = vld [vmem:[%s170 + $0x434] sm:$0xf]
      %v450 = vld [vmem:[%s170 + $0x438] sm:$0xf]
      %v451 = vld [vmem:[%s170 + $0x43c] sm:$0xf]
      %v452 = vld [vmem:[%s170 + $0x440] sm:$0xf]
      %v453 = vld [vmem:[%s170 + $0x444] sm:$0xf]
      %v454 = vld [vmem:[%s170 + $0x448] sm:$0xf]
      %v455 = vld [vmem:[%s170 + $0x44c] sm:$0xf]
      %v456 = vld [vmem:[%s170 + $0x450] sm:$0xf]
      %v457 = vld [vmem:[%s170 + $0x454] sm:$0xf]
      %v458 = vld [vmem:[%s170 + $0x458] sm:$0xf]
      %v459 = vld [vmem:[%s170 + $0x45c] sm:$0xf]
      %v460 = vld [vmem:[%s170 + $0x460] sm:$0xf]
      %v461 = vld [vmem:[%s170 + $0x464] sm:$0xf]
      %v462 = vld [vmem:[%s170 + $0x468] sm:$0xf]
      %v463 = vld [vmem:[%s170 + $0x46c] sm:$0xf]
      %v464 = vld [vmem:[%s170 + $0x470] sm:$0xf]
      %v465 = vld [vmem:[%s170 + $0x474] sm:$0xf]
      %v466 = vld [vmem:[%s170 + $0x478] sm:$0xf]
      %v467 = vld [vmem:[%s170 + $0x47c] sm:$0xf]
      %v468 = vld [vmem:[%s170 + $0x480] sm:$0xf]
      %v469 = vld [vmem:[%s170 + $0x484] sm:$0xf]
      %v470 = vld [vmem:[%s170 + $0x488] sm:$0xf]
      %v471 = vld [vmem:[%s170 + $0x48c] sm:$0xf]
      %v472 = vld [vmem:[%s170 + $0x490] sm:$0xf]
      %v473 = vld [vmem:[%s170 + $0x494] sm:$0xf]
      %v474 = vld [vmem:[%s170 + $0x498] sm:$0xf]
      %v475 = vld [vmem:[%s170 + $0x49c] sm:$0xf]
      %v476 = vld [vmem:[%s170 + $0x4a0] sm:$0xf]
      %v477 = vld [vmem:[%s170 + $0x4a4] sm:$0xf]
      %v478 = vld [vmem:[%s170 + $0x4a8] sm:$0xf]
      %v479 = vld [vmem:[%s170 + $0x4ac] sm:$0xf]
      %v480 = vld [vmem:[%s170 + $0x4b0] sm:$0xf]
      %v481 = vld [vmem:[%s170 + $0x4b4] sm:$0xf]
      %v482 = vld [vmem:[%s170 + $0x4b8] sm:$0xf]
      %v483 = vld [vmem:[%s170 + $0x4bc] sm:$0xf]
      %v484 = vld [vmem:[%s170 + $0x4c0] sm:$0xf]
      %v485 = vld [vmem:[%s170 + $0x4c4] sm:$0xf]
      %v486 = vld [vmem:[%s170 + $0x4c8] sm:$0xf]
      %v487 = vld [vmem:[%s170 + $0x4cc] sm:$0xf]
      %v488 = vld [vmem:[%s170 + $0x4d0] sm:$0xf]
      %v489 = vld [vmem:[%s170 + $0x4d4] sm:$0xf]
      %v490 = vld [vmem:[%s170 + $0x4d8] sm:$0xf]
      %v491 = vld [vmem:[%s170 + $0x4dc] sm:$0xf]
      %v492 = vld [vmem:[%s170 + $0x4e0] sm:$0xf]
      %v493 = vld [vmem:[%s170 + $0x4e4] sm:$0xf]
      %v494 = vld [vmem:[%s170 + $0x4e8] sm:$0xf]
      %v495 = vld [vmem:[%s170 + $0x4ec] sm:$0xf]
      %v496 = vld [vmem:[%s170 + $0x4f0] sm:$0xf]
      %v497 = vld [vmem:[%s170 + $0x4f4] sm:$0xf]
      %v498 = vld [vmem:[%s170 + $0x4f8] sm:$0xf]
      %v499 = vld [vmem:[%s170 + $0x4fc] sm:$0xf]
      %v500 = vld [vmem:[%s170 + $0x500] sm:$0xf]
      %v501 = vld [vmem:[%s170 + $0x504] sm:$0xf]
      %v502 = vld [vmem:[%s170 + $0x508] sm:$0xf]
      %v503 = vld [vmem:[%s170 + $0x50c] sm:$0xf]
      %v504 = vld [vmem:[%s170 + $0x510] sm:$0xf]
      %v505 = vld [vmem:[%s170 + $0x514] sm:$0xf]
      %v506 = vld [vmem:[%s170 + $0x518] sm:$0xf]
      %v507 = vld [vmem:[%s170 + $0x51c] sm:$0xf]
      %v508 = vld [vmem:[%s170 + $0x520] sm:$0xf]
      %v509 = vld [vmem:[%s170 + $0x524] sm:$0xf]
      %v510 = vld [vmem:[%s170 + $0x528] sm:$0xf]
      %v511 = vld [vmem:[%s170 + $0x52c] sm:$0xf]
      %v512 = vld [vmem:[%s170 + $0x530] sm:$0xf]
      %v513 = vld [vmem:[%s170 + $0x534] sm:$0xf]
      %v514 = vld [vmem:[%s170 + $0x538] sm:$0xf]
      %v515 = vld [vmem:[%s170 + $0x53c] sm:$0xf]
      %v516 = vld [vmem:[%s170 + $0x540] sm:$0xf]
      %v517 = vld [vmem:[%s170 + $0x544] sm:$0xf]
      %v518 = vld [vmem:[%s170 + $0x548] sm:$0xf]
      %v519 = vld [vmem:[%s170 + $0x54c] sm:$0xf]
      %v520 = vld [vmem:[%s170 + $0x550] sm:$0xf]
      %v521 = vld [vmem:[%s170 + $0x554] sm:$0xf]
      %v522 = vld [vmem:[%s170 + $0x558] sm:$0xf]
      %v523 = vld [vmem:[%s170 + $0x55c] sm:$0xf]
      %v524 = vld [vmem:[%s170 + $0x560] sm:$0xf]
      %v525 = vld [vmem:[%s170 + $0x564] sm:$0xf]
      %v526 = vld [vmem:[%s170 + $0x568] sm:$0xf]
      %v527 = vld [vmem:[%s170 + $0x56c] sm:$0xf]
      %v528 = vld [vmem:[%s170 + $0x570] sm:$0xf]
      %v529 = vld [vmem:[%s170 + $0x574] sm:$0xf]
      %v530 = vld [vmem:[%s170 + $0x578] sm:$0xf]
      %v531 = vld [vmem:[%s170 + $0x57c] sm:$0xf]
      %v532 = vld [vmem:[%s170 + $0x580] sm:$0xf]
      %v533 = vld [vmem:[%s170 + $0x584] sm:$0xf]
      %v534 = vld [vmem:[%s170 + $0x588] sm:$0xf]
      %v535 = vld [vmem:[%s170 + $0x58c] sm:$0xf]
      %v536 = vld [vmem:[%s170 + $0x590] sm:$0xf]
      %v537 = vld [vmem:[%s170 + $0x594] sm:$0xf]
      %v538 = vld [vmem:[%s170 + $0x598] sm:$0xf]
      %v539 = vld [vmem:[%s170 + $0x59c] sm:$0xf]
      %v540 = vld [vmem:[%s170 + $0x5a0] sm:$0xf]
      %v541 = vld [vmem:[%s170 + $0x5a4] sm:$0xf]
      %v542 = vld [vmem:[%s170 + $0x5a8] sm:$0xf]
      %v543 = vld [vmem:[%s170 + $0x5ac] sm:$0xf]
      %v544 = vld [vmem:[%s170 + $0x5b0] sm:$0xf]
      %v545 = vld [vmem:[%s170 + $0x5b4] sm:$0xf]
      %v546 = vld [vmem:[%s170 + $0x5b8] sm:$0xf]
      %v547 = vld [vmem:[%s170 + $0x5bc] sm:$0xf]
      %v548 = vld [vmem:[%s170 + $0x5c0] sm:$0xf]
      %v549 = vld [vmem:[%s170 + $0x5c4] sm:$0xf]
      %v550 = vld [vmem:[%s170 + $0x5c8] sm:$0xf]
      %v551 = vld [vmem:[%s170 + $0x5cc] sm:$0xf]
      %v552 = vld [vmem:[%s170 + $0x5d0] sm:$0xf]
      %v553 = vld [vmem:[%s170 + $0x5d4] sm:$0xf]
      %v554 = vld [vmem:[%s170 + $0x5d8] sm:$0xf]
      %v555 = vld [vmem:[%s170 + $0x5dc] sm:$0xf]
      %v556 = vld [vmem:[%s170 + $0x5e0] sm:$0xf]
      %v557 = vld [vmem:[%s170 + $0x5e4] sm:$0xf]
      %v558 = vld [vmem:[%s170 + $0x5e8] sm:$0xf]
      %v559 = vld [vmem:[%s170 + $0x5ec] sm:$0xf]
      %v560 = vld [vmem:[%s170 + $0x5f0] sm:$0xf]
      %v561 = vld [vmem:[%s170 + $0x5f4] sm:$0xf]
      %v562 = vld [vmem:[%s170 + $0x5f8] sm:$0xf]
      %v563 = vld [vmem:[%s170 + $0x5fc] sm:$0xf]
      %v564 = vld [vmem:[%s170 + $0x600] sm:$0xf]
      %v565 = vld [vmem:[%s170 + $0x604] sm:$0xf]
      %v566 = vld [vmem:[%s170 + $0x608] sm:$0xf]
      %v567 = vld [vmem:[%s170 + $0x60c] sm:$0xf]
      %v568 = vld [vmem:[%s170 + $0x610] sm:$0xf]
      %v569 = vld [vmem:[%s170 + $0x614] sm:$0xf]
      %v570 = vld [vmem:[%s170 + $0x618] sm:$0xf]
      %v571 = vld [vmem:[%s170 + $0x61c] sm:$0xf]
      %v572 = vld [vmem:[%s170 + $0x620] sm:$0xf]
      %v573 = vld [vmem:[%s170 + $0x624] sm:$0xf]
      %v574 = vld [vmem:[%s170 + $0x628] sm:$0xf]
      %v575 = vld [vmem:[%s170 + $0x62c] sm:$0xf]
      %v576 = vld [vmem:[%s170 + $0x630] sm:$0xf]
      %v577 = vld [vmem:[%s170 + $0x634] sm:$0xf]
      %v578 = vld [vmem:[%s170 + $0x638] sm:$0xf]
      %v579 = vld [vmem:[%s170 + $0x63c] sm:$0xf]
      %v580 = vld [vmem:[%s170 + $0x640] sm:$0xf]
      %v581 = vld [vmem:[%s170 + $0x644] sm:$0xf]
      %v582 = vld [vmem:[%s170 + $0x648] sm:$0xf]
      %v583 = vld [vmem:[%s170 + $0x64c] sm:$0xf]
      %v584 = vld [vmem:[%s170 + $0x650] sm:$0xf]
      %v585 = vld [vmem:[%s170 + $0x654] sm:$0xf]
      %v586 = vld [vmem:[%s170 + $0x658] sm:$0xf]
      %v587 = vld [vmem:[%s170 + $0x65c] sm:$0xf]
      %v588 = vld [vmem:[%s170 + $0x660] sm:$0xf]
      %v589 = vld [vmem:[%s170 + $0x664] sm:$0xf]
      %v590 = vld [vmem:[%s170 + $0x668] sm:$0xf]
      %v591 = vld [vmem:[%s170 + $0x66c] sm:$0xf]
      %v592 = vld [vmem:[%s170 + $0x670] sm:$0xf]
      %v593 = vld [vmem:[%s170 + $0x674] sm:$0xf]
      %v594 = vld [vmem:[%s170 + $0x678] sm:$0xf]
      %v595 = vld [vmem:[%s170 + $0x67c] sm:$0xf]
      %v596 = vld [vmem:[%s170 + $0x680] sm:$0xf]
      %v597 = vld [vmem:[%s170 + $0x684] sm:$0xf]
      %v598 = vld [vmem:[%s170 + $0x688] sm:$0xf]
      %v599 = vld [vmem:[%s170 + $0x68c] sm:$0xf]
      %v600 = vld [vmem:[%s170 + $0x690] sm:$0xf]
      %v601 = vld [vmem:[%s170 + $0x694] sm:$0xf]
      %v602 = vld [vmem:[%s170 + $0x698] sm:$0xf]
      %v603 = vld [vmem:[%s170 + $0x69c] sm:$0xf]
      %v604 = vld [vmem:[%s170 + $0x6a0] sm:$0xf]
      %v605 = vld [vmem:[%s170 + $0x6a4] sm:$0xf]
      %v606 = vld [vmem:[%s170 + $0x6a8] sm:$0xf]
      %v607 = vld [vmem:[%s170 + $0x6ac] sm:$0xf]
      %v608 = vld [vmem:[%s170 + $0x6b0] sm:$0xf]
      %v609 = vld [vmem:[%s170 + $0x6b4] sm:$0xf]
      %v610 = vld [vmem:[%s170 + $0x6b8] sm:$0xf]
      %v611 = vld [vmem:[%s170 + $0x6bc] sm:$0xf]
      %v612 = vld [vmem:[%s170 + $0x6c0] sm:$0xf]
      %v613 = vld [vmem:[%s170 + $0x6c4] sm:$0xf]
      %v614 = vld [vmem:[%s170 + $0x6c8] sm:$0xf]
      %v615 = vld [vmem:[%s170 + $0x6cc] sm:$0xf]
      %v616 = vld [vmem:[%s170 + $0x6d0] sm:$0xf]
      %v617 = vld [vmem:[%s170 + $0x6d4] sm:$0xf]
      %v618 = vld [vmem:[%s170 + $0x6d8] sm:$0xf]
      %v619 = vld [vmem:[%s170 + $0x6dc] sm:$0xf]
      %v620 = vld [vmem:[%s170 + $0x6e0] sm:$0xf]
      %v621 = vld [vmem:[%s170 + $0x6e4] sm:$0xf]
      %v622 = vld [vmem:[%s170 + $0x6e8] sm:$0xf]
      %v623 = vld [vmem:[%s170 + $0x6ec] sm:$0xf]
      %v624 = vld [vmem:[%s170 + $0x6f0] sm:$0xf]
      %v625 = vld [vmem:[%s170 + $0x6f4] sm:$0xf]
      %v626 = vld [vmem:[%s170 + $0x6f8] sm:$0xf]
      %v627 = vld [vmem:[%s170 + $0x6fc] sm:$0xf]
      %v628 = vld [vmem:[%s170 + $0x700] sm:$0xf]
      %v629 = vld [vmem:[%s170 + $0x704] sm:$0xf]
      %v630 = vld [vmem:[%s170 + $0x708] sm:$0xf]
      %v631 = vld [vmem:[%s170 + $0x70c] sm:$0xf]
      %v632 = vld [vmem:[%s170 + $0x710] sm:$0xf]
      %v633 = vld [vmem:[%s170 + $0x714] sm:$0xf]
      %v634 = vld [vmem:[%s170 + $0x718] sm:$0xf]
      %v635 = vld [vmem:[%s170 + $0x71c] sm:$0xf]
      %v636 = vld [vmem:[%s170 + $0x720] sm:$0xf]
      %v637 = vld [vmem:[%s170 + $0x724] sm:$0xf]
      %v638 = vld [vmem:[%s170 + $0x728] sm:$0xf]
      %v639 = vld [vmem:[%s170 + $0x72c] sm:$0xf]
      %v640 = vld [vmem:[%s170 + $0x730] sm:$0xf]
      %v641 = vld [vmem:[%s170 + $0x734] sm:$0xf]
      %v642 = vld [vmem:[%s170 + $0x738] sm:$0xf]
      %v643 = vld [vmem:[%s170 + $0x73c] sm:$0xf]
      %v644 = vld [vmem:[%s170 + $0x740] sm:$0xf]
      %v645 = vld [vmem:[%s170 + $0x744] sm:$0xf]
      %v646 = vld [vmem:[%s170 + $0x748] sm:$0xf]
      %v647 = vld [vmem:[%s170 + $0x74c] sm:$0xf]
      %v648 = vld [vmem:[%s170 + $0x750] sm:$0xf]
      %v649 = vld [vmem:[%s170 + $0x754] sm:$0xf]
      %v650 = vld [vmem:[%s170 + $0x758] sm:$0xf]
      %v651 = vld [vmem:[%s170 + $0x75c] sm:$0xf]
      %v652 = vld [vmem:[%s170 + $0x760] sm:$0xf]
      %v653 = vld [vmem:[%s170 + $0x764] sm:$0xf]
      %v654 = vld [vmem:[%s170 + $0x768] sm:$0xf]
      %v655 = vld [vmem:[%s170 + $0x76c] sm:$0xf]
      %v656 = vld [vmem:[%s170 + $0x770] sm:$0xf]
      %v657 = vld [vmem:[%s170 + $0x774] sm:$0xf]
      %v658 = vld [vmem:[%s170 + $0x778] sm:$0xf]
      %v659 = vld [vmem:[%s170 + $0x77c] sm:$0xf]
      %v660 = vld [vmem:[%s170 + $0x780] sm:$0xf]
      %v661 = vld [vmem:[%s170 + $0x784] sm:$0xf]
      %v662 = vld [vmem:[%s170 + $0x788] sm:$0xf]
      %v663 = vld [vmem:[%s170 + $0x78c] sm:$0xf]
      %v664 = vld [vmem:[%s170 + $0x790] sm:$0xf]
      %v665 = vld [vmem:[%s170 + $0x794] sm:$0xf]
      %v666 = vld [vmem:[%s170 + $0x798] sm:$0xf]
      %v667 = vld [vmem:[%s170 + $0x79c] sm:$0xf]
      %v668 = vld [vmem:[%s170 + $0x7a0] sm:$0xf]
      %v669 = vld [vmem:[%s170 + $0x7a4] sm:$0xf]
      %v670 = vld [vmem:[%s170 + $0x7a8] sm:$0xf]
      %v671 = vld [vmem:[%s170 + $0x7ac] sm:$0xf]
      %v672 = vld [vmem:[%s170 + $0x7b0] sm:$0xf]
      %v673 = vld [vmem:[%s170 + $0x7b4] sm:$0xf]
      %v674 = vld [vmem:[%s170 + $0x7b8] sm:$0xf]
      %v675 = vld [vmem:[%s170 + $0x7bc] sm:$0xf]
      %v676 = vld [vmem:[%s170 + $0x7c0] sm:$0xf]
      %v677 = vld [vmem:[%s170 + $0x7c4] sm:$0xf]
      %v678 = vld [vmem:[%s170 + $0x7c8] sm:$0xf]
      %v679 = vld [vmem:[%s170 + $0x7cc] sm:$0xf]
      %v680 = vld [vmem:[%s170 + $0x7d0] sm:$0xf]
      %v681 = vld [vmem:[%s170 + $0x7d4] sm:$0xf]
      %v682 = vld [vmem:[%s170 + $0x7d8] sm:$0xf]
      %v683 = vld [vmem:[%s170 + $0x7dc] sm:$0xf]
      %v684 = vld [vmem:[%s170 + $0x7e0] sm:$0xf]
      %v685 = vld [vmem:[%s170 + $0x7e4] sm:$0xf]
      %v686 = vld [vmem:[%s170 + $0x7e8] sm:$0xf]
      %v687 = vld [vmem:[%s170 + $0x7ec] sm:$0xf]
      %v688 = vld [vmem:[%s170 + $0x7f0] sm:$0xf]
      %v689 = vld [vmem:[%s170 + $0x7f4] sm:$0xf]
      %v690 = vld [vmem:[%s170 + $0x7f8] sm:$0xf]
      %v691 = vld [vmem:[%s170 + $0x7fc] sm:$0xf]
      %v692 = vld [vmem:[%s170 + $0x800] sm:$0xf]
      %v693 = vld [vmem:[%s170 + $0x804] sm:$0xf]
      %v694 = vld [vmem:[%s170 + $0x808] sm:$0xf]
      %v695 = vld [vmem:[%s170 + $0x80c] sm:$0xf]
      %v696 = vld [vmem:[%s170 + $0x810] sm:$0xf]
      %v697 = vld [vmem:[%s170 + $0x814] sm:$0xf]
      %v698 = vld [vmem:[%s170 + $0x818] sm:$0xf]
      %v699 = vld [vmem:[%s170 + $0x81c] sm:$0xf]
      %v700 = vld [vmem:[%s170 + $0x820] sm:$0xf]
      %v701 = vld [vmem:[%s170 + $0x824] sm:$0xf]
      %v702 = vld [vmem:[%s170 + $0x828] sm:$0xf]
      %v703 = vld [vmem:[%s170 + $0x82c] sm:$0xf]
      %v704 = vld [vmem:[%s170 + $0x830] sm:$0xf]
      %v705 = vld [vmem:[%s170 + $0x834] sm:$0xf]
      %v706 = vld [vmem:[%s170 + $0x838] sm:$0xf]
      %v707 = vld [vmem:[%s170 + $0x83c] sm:$0xf]
      %v708 = vld [vmem:[%s170 + $0x840] sm:$0xf]
      %v709 = vld [vmem:[%s170 + $0x844] sm:$0xf]
      %v710 = vld [vmem:[%s170 + $0x848] sm:$0xf]
      %v711 = vld [vmem:[%s170 + $0x84c] sm:$0xf]
      %v712 = vld [vmem:[%s170 + $0x850] sm:$0xf]
      %v713 = vld [vmem:[%s170 + $0x854] sm:$0xf]
      %v714 = vld [vmem:[%s170 + $0x858] sm:$0xf]
      %v715 = vld [vmem:[%s170 + $0x85c] sm:$0xf]
      %v716 = vld [vmem:[%s170 + $0x860] sm:$0xf]
      %v717 = vld [vmem:[%s170 + $0x864] sm:$0xf]
      %v718 = vld [vmem:[%s170 + $0x868] sm:$0xf]
      %v719 = vld [vmem:[%s170 + $0x86c] sm:$0xf]
      %v720 = vld [vmem:[%s170 + $0x870] sm:$0xf]
      %v721 = vld [vmem:[%s170 + $0x874] sm:$0xf]
      %v722 = vld [vmem:[%s170 + $0x878] sm:$0xf]
      %v723 = vld [vmem:[%s170 + $0x87c] sm:$0xf]
      %v724 = vld [vmem:[%s170 + $0x880] sm:$0xf]
      %v725 = vld [vmem:[%s170 + $0x884] sm:$0xf]
      %v726 = vld [vmem:[%s170 + $0x888] sm:$0xf]
      %v727 = vld [vmem:[%s170 + $0x88c] sm:$0xf]
      %v728 = vld [vmem:[%s170 + $0x890] sm:$0xf]
      %v729 = vld [vmem:[%s170 + $0x894] sm:$0xf]
      %v730 = vld [vmem:[%s170 + $0x898] sm:$0xf]
      %v731 = vld [vmem:[%s170 + $0x89c] sm:$0xf]
      %v732 = vld [vmem:[%s170 + $0x8a0] sm:$0xf]
      %v733 = vld [vmem:[%s170 + $0x8a4] sm:$0xf]
      %v734 = vld [vmem:[%s170 + $0x8a8] sm:$0xf]
      %v735 = vld [vmem:[%s170 + $0x8ac] sm:$0xf]
      %v736 = vld [vmem:[%s170 + $0x8b0] sm:$0xf]
      %v737 = vld [vmem:[%s170 + $0x8b4] sm:$0xf]
      %v738 = vld [vmem:[%s170 + $0x8b8] sm:$0xf]
      %v739 = vld [vmem:[%s170 + $0x8bc] sm:$0xf]
      %v740 = vld [vmem:[%s170 + $0x8c0] sm:$0xf]
      %v741 = vld [vmem:[%s170 + $0x8c4] sm:$0xf]
      %v742 = vld [vmem:[%s170 + $0x8c8] sm:$0xf]
      %v743 = vld [vmem:[%s170 + $0x8cc] sm:$0xf]
      %v744 = vld [vmem:[%s170 + $0x8d0] sm:$0xf]
      %v745 = vld [vmem:[%s170 + $0x8d4] sm:$0xf]
      %v746 = vld [vmem:[%s170 + $0x8d8] sm:$0xf]
      %v747 = vld [vmem:[%s170 + $0x8dc] sm:$0xf]
      %v748 = vld [vmem:[%s170 + $0x8e0] sm:$0xf]
      %v749 = vld [vmem:[%s170 + $0x8e4] sm:$0xf]
      %v750 = vld [vmem:[%s170 + $0x8e8] sm:$0xf]
      %v751 = vld [vmem:[%s170 + $0x8ec] sm:$0xf]
      %v752 = vld [vmem:[%s170 + $0x8f0] sm:$0xf]
      %v753 = vld [vmem:[%s170 + $0x8f4] sm:$0xf]
      %v754 = vld [vmem:[%s170 + $0x8f8] sm:$0xf]
      %v755 = vld [vmem:[%s170 + $0x8fc] sm:$0xf]
      %v756 = vld [vmem:[%s1] sm:$0xf]
      %v757 = vld [vmem:[%s1 + $0x4] sm:$0xf]
      %v758 = vld [vmem:[%s1 + $0x8] sm:$0xf]
      %v759 = vld [vmem:[%s1 + $0xc] sm:$0xf]
      %v760 = vld [vmem:[%s2] sm:$0x1]
      %v762 = vlaneseq
      %v763 = vshrl.u32 %v762, 7
      %v764 = vsub.s32 0, %v763
      %v765 = vrot.slane %v760, %v764
      %v1343 = vunpack.c.l.b16 %v180
      %v1344 = vunpack.c.l.b16 %v181
      %v1345 = vunpack.c.l.b16 %v182
      %v1346 = vunpack.c.l.b16 %v183
      %v1347 = vunpack.c.l.b16 %v184
      %v1348 = vunpack.c.l.b16 %v185
      %v1349 = vunpack.c.l.b16 %v186
      %v1350 = vunpack.c.l.b16 %v187
      %v1351 = vunpack.c.l.b16 %v188
      %v1352 = vunpack.c.l.b16 %v189
      %v1353 = vunpack.c.l.b16 %v190
      %v1354 = vunpack.c.l.b16 %v191
      %v1355 = vunpack.c.l.b16 %v192
      %v1356 = vunpack.c.l.b16 %v193
      %v1357 = vunpack.c.l.b16 %v194
      %v1358 = vunpack.c.l.b16 %v195
      %v1359 = vunpack.c.l.b16 %v196
      %v1360 = vunpack.c.l.b16 %v197
      %v1361 = vunpack.c.l.b16 %v198
      %v1362 = vunpack.c.l.b16 %v199
      %v1363 = vunpack.c.l.b16 %v200
      %v1364 = vunpack.c.l.b16 %v201
      %v1365 = vunpack.c.l.b16 %v202
      %v1366 = vunpack.c.l.b16 %v203
      %v1367 = vunpack.c.l.b16 %v204
      %v1368 = vunpack.c.l.b16 %v205
      %v1369 = vunpack.c.l.b16 %v206
      %v1370 = vunpack.c.l.b16 %v207
      %v1371 = vunpack.c.l.b16 %v208
      %v1372 = vunpack.c.l.b16 %v209
      %v1373 = vunpack.c.l.b16 %v210
      %v1374 = vunpack.c.l.b16 %v211
      %v1375 = vunpack.c.l.b16 %v212
      %v1376 = vunpack.c.l.b16 %v213
      %v1377 = vunpack.c.l.b16 %v214
      %v1378 = vunpack.c.l.b16 %v215
      %v1379 = vunpack.c.l.b16 %v216
      %v1380 = vunpack.c.l.b16 %v217
      %v1381 = vunpack.c.l.b16 %v218
      %v1382 = vunpack.c.l.b16 %v219
      %v1383 = vunpack.c.l.b16 %v220
      %v1384 = vunpack.c.l.b16 %v221
      %v1385 = vunpack.c.l.b16 %v222
      %v1386 = vunpack.c.l.b16 %v223
      %v1387 = vunpack.c.l.b16 %v224
      %v1388 = vunpack.c.l.b16 %v225
      %v1389 = vunpack.c.l.b16 %v226
      %v1390 = vunpack.c.l.b16 %v227
      %v1391 = vunpack.c.l.b16 %v228
      %v1392 = vunpack.c.l.b16 %v229
      %v1393 = vunpack.c.l.b16 %v230
      %v1394 = vunpack.c.l.b16 %v231
      %v1395 = vunpack.c.l.b16 %v232
      %v1396 = vunpack.c.l.b16 %v233
      %v1397 = vunpack.c.l.b16 %v234
      %v1398 = vunpack.c.l.b16 %v235
      %v1399 = vunpack.c.l.b16 %v236
      %v1400 = vunpack.c.l.b16 %v237
      %v1401 = vunpack.c.l.b16 %v238
      %v1402 = vunpack.c.l.b16 %v239
      %v1403 = vunpack.c.l.b16 %v240
      %v1404 = vunpack.c.l.b16 %v241
      %v1405 = vunpack.c.l.b16 %v242
      %v1406 = vunpack.c.l.b16 %v243
      %v1407 = vunpack.c.l.b16 %v244
      %v1408 = vunpack.c.l.b16 %v245
      %v1409 = vunpack.c.l.b16 %v246
      %v1410 = vunpack.c.l.b16 %v247
      %v1411 = vunpack.c.l.b16 %v248
      %v1412 = vunpack.c.l.b16 %v249
      %v1413 = vunpack.c.l.b16 %v250
      %v1414 = vunpack.c.l.b16 %v251
      %v1415 = vunpack.c.l.b16 %v252
      %v1416 = vunpack.c.l.b16 %v253
      %v1417 = vunpack.c.l.b16 %v254
      %v1418 = vunpack.c.l.b16 %v255
      %v1419 = vunpack.c.l.b16 %v256
      %v1420 = vunpack.c.l.b16 %v257
      %v1421 = vunpack.c.l.b16 %v258
      %v1422 = vunpack.c.l.b16 %v259
      %v1423 = vunpack.c.l.b16 %v260
      %v1424 = vunpack.c.l.b16 %v261
      %v1425 = vunpack.c.l.b16 %v262
      %v1426 = vunpack.c.l.b16 %v263
      %v1427 = vunpack.c.l.b16 %v264
      %v1428 = vunpack.c.l.b16 %v265
      %v1429 = vunpack.c.l.b16 %v266
      %v1430 = vunpack.c.l.b16 %v267
      %v1431 = vunpack.c.l.b16 %v268
      %v1432 = vunpack.c.l.b16 %v269
      %v1433 = vunpack.c.l.b16 %v270
      %v1434 = vunpack.c.l.b16 %v271
      %v1435 = vunpack.c.l.b16 %v272
      %v1436 = vunpack.c.l.b16 %v273
      %v1437 = vunpack.c.l.b16 %v274
      %v1438 = vunpack.c.l.b16 %v275
      %v1439 = vunpack.c.l.b16 %v276
      %v1440 = vunpack.c.l.b16 %v277
      %v1441 = vunpack.c.l.b16 %v278
      %v1442 = vunpack.c.l.b16 %v279
      %v1443 = vunpack.c.l.b16 %v280
      %v1444 = vunpack.c.l.b16 %v281
      %v1445 = vunpack.c.l.b16 %v282
      %v1446 = vunpack.c.l.b16 %v283
      %v1447 = vunpack.c.l.b16 %v284
      %v1448 = vunpack.c.l.b16 %v285
      %v1449 = vunpack.c.l.b16 %v286
      %v1450 = vunpack.c.l.b16 %v287
      %v1451 = vunpack.c.l.b16 %v288
      %v1452 = vunpack.c.l.b16 %v289
      %v1453 = vunpack.c.l.b16 %v290
      %v1454 = vunpack.c.l.b16 %v291
      %v1455 = vunpack.c.l.b16 %v292
      %v1456 = vunpack.c.l.b16 %v293
      %v1457 = vunpack.c.l.b16 %v294
      %v1458 = vunpack.c.l.b16 %v295
      %v1459 = vunpack.c.l.b16 %v296
      %v1460 = vunpack.c.l.b16 %v297
      %v1461 = vunpack.c.l.b16 %v298
      %v1462 = vunpack.c.l.b16 %v299
      %v1463 = vunpack.c.l.b16 %v300
      %v1464 = vunpack.c.l.b16 %v301
      %v1465 = vunpack.c.l.b16 %v302
      %v1466 = vunpack.c.l.b16 %v303
      %v1467 = vunpack.c.l.b16 %v304
      %v1468 = vunpack.c.l.b16 %v305
      %v1469 = vunpack.c.l.b16 %v306
      %v1470 = vunpack.c.l.b16 %v307
      %v1471 = vunpack.c.l.b16 %v308
      %v1472 = vunpack.c.l.b16 %v309
      %v1473 = vunpack.c.l.b16 %v310
      %v1474 = vunpack.c.l.b16 %v311
      %v1475 = vunpack.c.l.b16 %v312
      %v1476 = vunpack.c.l.b16 %v313
      %v1477 = vunpack.c.l.b16 %v314
      %v1478 = vunpack.c.l.b16 %v315
      %v1479 = vunpack.c.l.b16 %v316
      %v1480 = vunpack.c.l.b16 %v317
      %v1481 = vunpack.c.l.b16 %v318
      %v1482 = vunpack.c.l.b16 %v319
      %v1483 = vunpack.c.l.b16 %v320
      %v1484 = vunpack.c.l.b16 %v321
      %v1485 = vunpack.c.l.b16 %v322
      %v1486 = vunpack.c.l.b16 %v323
      %v1487 = vunpack.c.l.b16 %v324
      %v1488 = vunpack.c.l.b16 %v325
      %v1489 = vunpack.c.l.b16 %v326
      %v1490 = vunpack.c.l.b16 %v327
      %v1491 = vunpack.c.l.b16 %v328
      %v1492 = vunpack.c.l.b16 %v329
      %v1493 = vunpack.c.l.b16 %v330
      %v1494 = vunpack.c.l.b16 %v331
      %v1495 = vunpack.c.l.b16 %v332
      %v1496 = vunpack.c.l.b16 %v333
      %v1497 = vunpack.c.l.b16 %v334
      %v1498 = vunpack.c.l.b16 %v335
      %v1499 = vunpack.c.l.b16 %v336
      %v1500 = vunpack.c.l.b16 %v337
      %v1501 = vunpack.c.l.b16 %v338
      %v1502 = vunpack.c.l.b16 %v339
      %v1503 = vunpack.c.l.b16 %v340
      %v1504 = vunpack.c.l.b16 %v341
      %v1505 = vunpack.c.l.b16 %v342
      %v1506 = vunpack.c.l.b16 %v343
      %v1507 = vunpack.c.l.b16 %v344
      %v1508 = vunpack.c.l.b16 %v345
      %v1509 = vunpack.c.l.b16 %v346
      %v1510 = vunpack.c.l.b16 %v347
      %v1511 = vunpack.c.l.b16 %v348
      %v1512 = vunpack.c.l.b16 %v349
      %v1513 = vunpack.c.l.b16 %v350
      %v1514 = vunpack.c.l.b16 %v351
      %v1515 = vunpack.c.l.b16 %v352
      %v1516 = vunpack.c.l.b16 %v353
      %v1517 = vunpack.c.l.b16 %v354
      %v1518 = vunpack.c.l.b16 %v355
      %v1519 = vunpack.c.l.b16 %v356
      %v1520 = vunpack.c.l.b16 %v357
      %v1521 = vunpack.c.l.b16 %v358
      %v1522 = vunpack.c.l.b16 %v359
      %v1523 = vunpack.c.l.b16 %v360
      %v1524 = vunpack.c.l.b16 %v361
      %v1525 = vunpack.c.l.b16 %v362
      %v1526 = vunpack.c.l.b16 %v363
      %v1527 = vunpack.c.l.b16 %v364
      %v1528 = vunpack.c.l.b16 %v365
      %v1529 = vunpack.c.l.b16 %v366
      %v1530 = vunpack.c.l.b16 %v367
      %v1531 = vunpack.c.l.b16 %v368
      %v1532 = vunpack.c.l.b16 %v369
      %v1533 = vunpack.c.l.b16 %v370
      %v1534 = vunpack.c.l.b16 %v371
      %v1535 = vunpack.c.l.b16 %v372
      %v1536 = vunpack.c.l.b16 %v373
      %v1537 = vunpack.c.l.b16 %v374
      %v1538 = vunpack.c.l.b16 %v375
      %v1539 = vunpack.c.l.b16 %v376
      %v1540 = vunpack.c.l.b16 %v377
      %v1541 = vunpack.c.l.b16 %v378
      %v1542 = vunpack.c.l.b16 %v379
      %v1543 = vunpack.c.l.b16 %v380
      %v1544 = vunpack.c.l.b16 %v381
      %v1545 = vunpack.c.l.b16 %v382
      %v1546 = vunpack.c.l.b16 %v383
      %v1547 = vunpack.c.l.b16 %v384
      %v1548 = vunpack.c.l.b16 %v385
      %v1549 = vunpack.c.l.b16 %v386
      %v1550 = vunpack.c.l.b16 %v387
      %v1551 = vunpack.c.l.b16 %v388
      %v1552 = vunpack.c.l.b16 %v389
      %v1553 = vunpack.c.l.b16 %v390
      %v1554 = vunpack.c.l.b16 %v391
      %v1555 = vunpack.c.l.b16 %v392
      %v1556 = vunpack.c.l.b16 %v393
      %v1557 = vunpack.c.l.b16 %v394
      %v1558 = vunpack.c.l.b16 %v395
      %v1559 = vunpack.c.l.b16 %v396
      %v1560 = vunpack.c.l.b16 %v397
      %v1561 = vunpack.c.l.b16 %v398
      %v1562 = vunpack.c.l.b16 %v399
      %v1563 = vunpack.c.l.b16 %v400
      %v1564 = vunpack.c.l.b16 %v401
      %v1565 = vunpack.c.l.b16 %v402
      %v1566 = vunpack.c.l.b16 %v403
      %v1567 = vunpack.c.l.b16 %v404
      %v1568 = vunpack.c.l.b16 %v405
      %v1569 = vunpack.c.l.b16 %v406
      %v1570 = vunpack.c.l.b16 %v407
      %v1571 = vunpack.c.l.b16 %v408
      %v1572 = vunpack.c.l.b16 %v409
      %v1573 = vunpack.c.l.b16 %v410
      %v1574 = vunpack.c.l.b16 %v411
      %v1575 = vunpack.c.l.b16 %v412
      %v1576 = vunpack.c.l.b16 %v413
      %v1577 = vunpack.c.l.b16 %v414
      %v1578 = vunpack.c.l.b16 %v415
      %v1579 = vunpack.c.l.b16 %v416
      %v1580 = vunpack.c.l.b16 %v417
      %v1581 = vunpack.c.l.b16 %v418
      %v1582 = vunpack.c.l.b16 %v419
      %v1583 = vunpack.c.l.b16 %v420
      %v1584 = vunpack.c.l.b16 %v421
      %v1585 = vunpack.c.l.b16 %v422
      %v1586 = vunpack.c.l.b16 %v423
      %v1587 = vunpack.c.l.b16 %v424
      %v1588 = vunpack.c.l.b16 %v425
      %v1589 = vunpack.c.l.b16 %v426
      %v1590 = vunpack.c.l.b16 %v427
      %v1591 = vunpack.c.l.b16 %v428
      %v1592 = vunpack.c.l.b16 %v429
      %v1593 = vunpack.c.l.b16 %v430
      %v1594 = vunpack.c.l.b16 %v431
      %v1595 = vunpack.c.l.b16 %v432
      %v1596 = vunpack.c.l.b16 %v433
      %v1597 = vunpack.c.l.b16 %v434
      %v1598 = vunpack.c.l.b16 %v435
      %v1599 = vunpack.c.l.b16 %v436
      %v1600 = vunpack.c.l.b16 %v437
      %v1601 = vunpack.c.l.b16 %v438
      %v1602 = vunpack.c.l.b16 %v439
      %v1603 = vunpack.c.l.b16 %v440
      %v1604 = vunpack.c.l.b16 %v441
      %v1605 = vunpack.c.l.b16 %v442
      %v1606 = vunpack.c.l.b16 %v443
      %v1607 = vunpack.c.l.b16 %v444
      %v1608 = vunpack.c.l.b16 %v445
      %v1609 = vunpack.c.l.b16 %v446
      %v1610 = vunpack.c.l.b16 %v447
      %v1611 = vunpack.c.l.b16 %v448
      %v1612 = vunpack.c.l.b16 %v449
      %v1613 = vunpack.c.l.b16 %v450
      %v1614 = vunpack.c.l.b16 %v451
      %v1615 = vunpack.c.l.b16 %v452
      %v1616 = vunpack.c.l.b16 %v453
      %v1617 = vunpack.c.l.b16 %v454
      %v1618 = vunpack.c.l.b16 %v455
      %v1619 = vunpack.c.l.b16 %v456
      %v1620 = vunpack.c.l.b16 %v457
      %v1621 = vunpack.c.l.b16 %v458
      %v1622 = vunpack.c.l.b16 %v459
      %v1623 = vunpack.c.l.b16 %v460
      %v1624 = vunpack.c.l.b16 %v461
      %v1625 = vunpack.c.l.b16 %v462
      %v1626 = vunpack.c.l.b16 %v463
      %v1627 = vunpack.c.l.b16 %v464
      %v1628 = vunpack.c.l.b16 %v465
      %v1629 = vunpack.c.l.b16 %v466
      %v1630 = vunpack.c.l.b16 %v467
      %v1631 = vunpack.c.l.b16 %v468
      %v1632 = vunpack.c.l.b16 %v469
      %v1633 = vunpack.c.l.b16 %v470
      %v1634 = vunpack.c.l.b16 %v471
      %v1635 = vunpack.c.l.b16 %v472
      %v1636 = vunpack.c.l.b16 %v473
      %v1637 = vunpack.c.l.b16 %v474
      %v1638 = vunpack.c.l.b16 %v475
      %v1639 = vunpack.c.l.b16 %v476
      %v1640 = vunpack.c.l.b16 %v477
      %v1641 = vunpack.c.l.b16 %v478
      %v1642 = vunpack.c.l.b16 %v479
      %v1643 = vunpack.c.l.b16 %v480
      %v1644 = vunpack.c.l.b16 %v481
      %v1645 = vunpack.c.l.b16 %v482
      %v1646 = vunpack.c.l.b16 %v483
      %v1647 = vunpack.c.l.b16 %v484
      %v1648 = vunpack.c.l.b16 %v485
      %v1649 = vunpack.c.l.b16 %v486
      %v1650 = vunpack.c.l.b16 %v487
      %v1651 = vunpack.c.l.b16 %v488
      %v1652 = vunpack.c.l.b16 %v489
      %v1653 = vunpack.c.l.b16 %v490
      %v1654 = vunpack.c.l.b16 %v491
      %v1655 = vunpack.c.l.b16 %v492
      %v1656 = vunpack.c.l.b16 %v493
      %v1657 = vunpack.c.l.b16 %v494
      %v1658 = vunpack.c.l.b16 %v495
      %v1659 = vunpack.c.l.b16 %v496
      %v1660 = vunpack.c.l.b16 %v497
      %v1661 = vunpack.c.l.b16 %v498
      %v1662 = vunpack.c.l.b16 %v499
      %v1663 = vunpack.c.l.b16 %v500
      %v1664 = vunpack.c.l.b16 %v501
      %v1665 = vunpack.c.l.b16 %v502
      %v1666 = vunpack.c.l.b16 %v503
      %v1667 = vunpack.c.l.b16 %v504
      %v1668 = vunpack.c.l.b16 %v505
      %v1669 = vunpack.c.l.b16 %v506
      %v1670 = vunpack.c.l.b16 %v507
      %v1671 = vunpack.c.l.b16 %v508
      %v1672 = vunpack.c.l.b16 %v509
      %v1673 = vunpack.c.l.b16 %v510
      %v1674 = vunpack.c.l.b16 %v511
      %v1675 = vunpack.c.l.b16 %v512
      %v1676 = vunpack.c.l.b16 %v513
      %v1677 = vunpack.c.l.b16 %v514
      %v1678 = vunpack.c.l.b16 %v515
      %v1679 = vunpack.c.l.b16 %v516
      %v1680 = vunpack.c.l.b16 %v517
      %v1681 = vunpack.c.l.b16 %v518
      %v1682 = vunpack.c.l.b16 %v519
      %v1683 = vunpack.c.l.b16 %v520
      %v1684 = vunpack.c.l.b16 %v521
      %v1685 = vunpack.c.l.b16 %v522
      %v1686 = vunpack.c.l.b16 %v523
      %v1687 = vunpack.c.l.b16 %v524
      %v1688 = vunpack.c.l.b16 %v525
      %v1689 = vunpack.c.l.b16 %v526
      %v1690 = vunpack.c.l.b16 %v527
      %v1691 = vunpack.c.l.b16 %v528
      %v1692 = vunpack.c.l.b16 %v529
      %v1693 = vunpack.c.l.b16 %v530
      %v1694 = vunpack.c.l.b16 %v531
      %v1695 = vunpack.c.l.b16 %v532
      %v1696 = vunpack.c.l.b16 %v533
      %v1697 = vunpack.c.l.b16 %v534
      %v1698 = vunpack.c.l.b16 %v535
      %v1699 = vunpack.c.l.b16 %v536
      %v1700 = vunpack.c.l.b16 %v537
      %v1701 = vunpack.c.l.b16 %v538
      %v1702 = vunpack.c.l.b16 %v539
      %v1703 = vunpack.c.l.b16 %v540
      %v1704 = vunpack.c.l.b16 %v541
      %v1705 = vunpack.c.l.b16 %v542
      %v1706 = vunpack.c.l.b16 %v543
      %v1707 = vunpack.c.l.b16 %v544
      %v1708 = vunpack.c.l.b16 %v545
      %v1709 = vunpack.c.l.b16 %v546
      %v1710 = vunpack.c.l.b16 %v547
      %v1711 = vunpack.c.l.b16 %v548
      %v1712 = vunpack.c.l.b16 %v549
      %v1713 = vunpack.c.l.b16 %v550
      %v1714 = vunpack.c.l.b16 %v551
      %v1715 = vunpack.c.l.b16 %v552
      %v1716 = vunpack.c.l.b16 %v553
      %v1717 = vunpack.c.l.b16 %v554
      %v1718 = vunpack.c.l.b16 %v555
      %v1719 = vunpack.c.l.b16 %v556
      %v1720 = vunpack.c.l.b16 %v557
      %v1721 = vunpack.c.l.b16 %v558
      %v1722 = vunpack.c.l.b16 %v559
      %v1723 = vunpack.c.l.b16 %v560
      %v1724 = vunpack.c.l.b16 %v561
      %v1725 = vunpack.c.l.b16 %v562
      %v1726 = vunpack.c.l.b16 %v563
      %v1727 = vunpack.c.l.b16 %v564
      %v1728 = vunpack.c.l.b16 %v565
      %v1729 = vunpack.c.l.b16 %v566
      %v1730 = vunpack.c.l.b16 %v567
      %v1731 = vunpack.c.l.b16 %v568
      %v1732 = vunpack.c.l.b16 %v569
      %v1733 = vunpack.c.l.b16 %v570
      %v1734 = vunpack.c.l.b16 %v571
      %v1735 = vunpack.c.l.b16 %v572
      %v1736 = vunpack.c.l.b16 %v573
      %v1737 = vunpack.c.l.b16 %v574
      %v1738 = vunpack.c.l.b16 %v575
      %v1739 = vunpack.c.l.b16 %v576
      %v1740 = vunpack.c.l.b16 %v577
      %v1741 = vunpack.c.l.b16 %v578
      %v1742 = vunpack.c.l.b16 %v579
      %v1743 = vunpack.c.l.b16 %v580
      %v1744 = vunpack.c.l.b16 %v581
      %v1745 = vunpack.c.l.b16 %v582
      %v1746 = vunpack.c.l.b16 %v583
      %v1747 = vunpack.c.l.b16 %v584
      %v1748 = vunpack.c.l.b16 %v585
      %v1749 = vunpack.c.l.b16 %v586
      %v1750 = vunpack.c.l.b16 %v587
      %v1751 = vunpack.c.l.b16 %v588
      %v1752 = vunpack.c.l.b16 %v589
      %v1753 = vunpack.c.l.b16 %v590
      %v1754 = vunpack.c.l.b16 %v591
      %v1755 = vunpack.c.l.b16 %v592
      %v1756 = vunpack.c.l.b16 %v593
      %v1757 = vunpack.c.l.b16 %v594
      %v1758 = vunpack.c.l.b16 %v595
      %v1759 = vunpack.c.l.b16 %v596
      %v1760 = vunpack.c.l.b16 %v597
      %v1761 = vunpack.c.l.b16 %v598
      %v1762 = vunpack.c.l.b16 %v599
      %v1763 = vunpack.c.l.b16 %v600
      %v1764 = vunpack.c.l.b16 %v601
      %v1765 = vunpack.c.l.b16 %v602
      %v1766 = vunpack.c.l.b16 %v603
      %v1767 = vunpack.c.l.b16 %v604
      %v1768 = vunpack.c.l.b16 %v605
      %v1769 = vunpack.c.l.b16 %v606
      %v1770 = vunpack.c.l.b16 %v607
      %v1771 = vunpack.c.l.b16 %v608
      %v1772 = vunpack.c.l.b16 %v609
      %v1773 = vunpack.c.l.b16 %v610
      %v1774 = vunpack.c.l.b16 %v611
      %v1775 = vunpack.c.l.b16 %v612
      %v1776 = vunpack.c.l.b16 %v613
      %v1777 = vunpack.c.l.b16 %v614
      %v1778 = vunpack.c.l.b16 %v615
      %v1779 = vunpack.c.l.b16 %v616
      %v1780 = vunpack.c.l.b16 %v617
      %v1781 = vunpack.c.l.b16 %v618
      %v1782 = vunpack.c.l.b16 %v619
      %v1783 = vunpack.c.l.b16 %v620
      %v1784 = vunpack.c.l.b16 %v621
      %v1785 = vunpack.c.l.b16 %v622
      %v1786 = vunpack.c.l.b16 %v623
      %v1787 = vunpack.c.l.b16 %v624
      %v1788 = vunpack.c.l.b16 %v625
      %v1789 = vunpack.c.l.b16 %v626
      %v1790 = vunpack.c.l.b16 %v627
      %v1791 = vunpack.c.l.b16 %v628
      %v1792 = vunpack.c.l.b16 %v629
      %v1793 = vunpack.c.l.b16 %v630
      %v1794 = vunpack.c.l.b16 %v631
      %v1795 = vunpack.c.l.b16 %v632
      %v1796 = vunpack.c.l.b16 %v633
      %v1797 = vunpack.c.l.b16 %v634
      %v1798 = vunpack.c.l.b16 %v635
      %v1799 = vunpack.c.l.b16 %v636
      %v1800 = vunpack.c.l.b16 %v637
      %v1801 = vunpack.c.l.b16 %v638
      %v1802 = vunpack.c.l.b16 %v639
      %v1803 = vunpack.c.l.b16 %v640
      %v1804 = vunpack.c.l.b16 %v641
      %v1805 = vunpack.c.l.b16 %v642
      %v1806 = vunpack.c.l.b16 %v643
      %v1807 = vunpack.c.l.b16 %v644
      %v1808 = vunpack.c.l.b16 %v645
      %v1809 = vunpack.c.l.b16 %v646
      %v1810 = vunpack.c.l.b16 %v647
      %v1811 = vunpack.c.l.b16 %v648
      %v1812 = vunpack.c.l.b16 %v649
      %v1813 = vunpack.c.l.b16 %v650
      %v1814 = vunpack.c.l.b16 %v651
      %v1815 = vunpack.c.l.b16 %v652
      %v1816 = vunpack.c.l.b16 %v653
      %v1817 = vunpack.c.l.b16 %v654
      %v1818 = vunpack.c.l.b16 %v655
      %v1819 = vunpack.c.l.b16 %v656
      %v1820 = vunpack.c.l.b16 %v657
      %v1821 = vunpack.c.l.b16 %v658
      %v1822 = vunpack.c.l.b16 %v659
      %v1823 = vunpack.c.l.b16 %v660
      %v1824 = vunpack.c.l.b16 %v661
      %v1825 = vunpack.c.l.b16 %v662
      %v1826 = vunpack.c.l.b16 %v663
      %v1827 = vunpack.c.l.b16 %v664
      %v1828 = vunpack.c.l.b16 %v665
      %v1829 = vunpack.c.l.b16 %v666
      %v1830 = vunpack.c.l.b16 %v667
      %v1831 = vunpack.c.l.b16 %v668
      %v1832 = vunpack.c.l.b16 %v669
      %v1833 = vunpack.c.l.b16 %v670
      %v1834 = vunpack.c.l.b16 %v671
      %v1835 = vunpack.c.l.b16 %v672
      %v1836 = vunpack.c.l.b16 %v673
      %v1837 = vunpack.c.l.b16 %v674
      %v1838 = vunpack.c.l.b16 %v675
      %v1839 = vunpack.c.l.b16 %v676
      %v1840 = vunpack.c.l.b16 %v677
      %v1841 = vunpack.c.l.b16 %v678
      %v1842 = vunpack.c.l.b16 %v679
      %v1843 = vunpack.c.l.b16 %v680
      %v1844 = vunpack.c.l.b16 %v681
      %v1845 = vunpack.c.l.b16 %v682
      %v1846 = vunpack.c.l.b16 %v683
      %v1847 = vunpack.c.l.b16 %v684
      %v1848 = vunpack.c.l.b16 %v685
      %v1849 = vunpack.c.l.b16 %v686
      %v1850 = vunpack.c.l.b16 %v687
      %v1851 = vunpack.c.l.b16 %v688
      %v1852 = vunpack.c.l.b16 %v689
      %v1853 = vunpack.c.l.b16 %v690
      %v1854 = vunpack.c.l.b16 %v691
      %v1855 = vunpack.c.l.b16 %v692
      %v1856 = vunpack.c.l.b16 %v693
      %v1857 = vunpack.c.l.b16 %v694
      %v1858 = vunpack.c.l.b16 %v695
      %v1859 = vunpack.c.l.b16 %v696
      %v1860 = vunpack.c.l.b16 %v697
      %v1861 = vunpack.c.l.b16 %v698
      %v1862 = vunpack.c.l.b16 %v699
      %v1863 = vunpack.c.l.b16 %v700
      %v1864 = vunpack.c.l.b16 %v701
      %v1865 = vunpack.c.l.b16 %v702
      %v1866 = vunpack.c.l.b16 %v703
      %v1867 = vunpack.c.l.b16 %v704
      %v1868 = vunpack.c.l.b16 %v705
      %v1869 = vunpack.c.l.b16 %v706
      %v1870 = vunpack.c.l.b16 %v707
      %v1871 = vunpack.c.l.b16 %v708
      %v1872 = vunpack.c.l.b16 %v709
      %v1873 = vunpack.c.l.b16 %v710
      %v1874 = vunpack.c.l.b16 %v711
      %v1875 = vunpack.c.l.b16 %v712
      %v1876 = vunpack.c.l.b16 %v713
      %v1877 = vunpack.c.l.b16 %v714
      %v1878 = vunpack.c.l.b16 %v715
      %v1879 = vunpack.c.l.b16 %v716
      %v1880 = vunpack.c.l.b16 %v717
      %v1881 = vunpack.c.l.b16 %v718
      %v1882 = vunpack.c.l.b16 %v719
      %v1883 = vunpack.c.l.b16 %v720
      %v1884 = vunpack.c.l.b16 %v721
      %v1885 = vunpack.c.l.b16 %v722
      %v1886 = vunpack.c.l.b16 %v723
      %v1887 = vunpack.c.l.b16 %v724
      %v1888 = vunpack.c.l.b16 %v725
      %v1889 = vunpack.c.l.b16 %v726
      %v1890 = vunpack.c.l.b16 %v727
      %v1891 = vunpack.c.l.b16 %v728
      %v1892 = vunpack.c.l.b16 %v729
      %v1893 = vunpack.c.l.b16 %v730
      %v1894 = vunpack.c.l.b16 %v731
      %v1895 = vunpack.c.l.b16 %v732
      %v1896 = vunpack.c.l.b16 %v733
      %v1897 = vunpack.c.l.b16 %v734
      %v1898 = vunpack.c.l.b16 %v735
      %v1899 = vunpack.c.l.b16 %v736
      %v1900 = vunpack.c.l.b16 %v737
      %v1901 = vunpack.c.l.b16 %v738
      %v1902 = vunpack.c.l.b16 %v739
      %v1903 = vunpack.c.l.b16 %v740
      %v1904 = vunpack.c.l.b16 %v741
      %v1905 = vunpack.c.l.b16 %v742
      %v1906 = vunpack.c.l.b16 %v743
      %v1907 = vunpack.c.l.b16 %v744
      %v1908 = vunpack.c.l.b16 %v745
      %v1909 = vunpack.c.l.b16 %v746
      %v1910 = vunpack.c.l.b16 %v747
      %v1911 = vunpack.c.l.b16 %v748
      %v1912 = vunpack.c.l.b16 %v749
      %v1913 = vunpack.c.l.b16 %v750
      %v1914 = vunpack.c.l.b16 %v751
      %v1915 = vunpack.c.l.b16 %v752
      %v1916 = vunpack.c.l.b16 %v753
      %v1917 = vunpack.c.l.b16 %v754
      %v1918 = vunpack.c.l.b16 %v755
      %v1919 = vpack.c.b16 %v1344, %v1343
      %v1920 = vpack.c.b16 %v1346, %v1345
      %v1921 = vpack.c.b16 %v1348, %v1347
      %v1922 = vpack.c.b16 %v1350, %v1349
      %v1923 = vpack.c.b16 %v1352, %v1351
      %v1924 = vpack.c.b16 %v1354, %v1353
      %v1925 = vpack.c.b16 %v1356, %v1355
      %v1926 = vpack.c.b16 %v1358, %v1357
      %v1927 = vpack.c.b16 %v1360, %v1359
      %v1928 = vpack.c.b16 %v1362, %v1361
      %v1929 = vpack.c.b16 %v1364, %v1363
      %v1930 = vpack.c.b16 %v1366, %v1365
      %v1931 = vpack.c.b16 %v1368, %v1367
      %v1932 = vpack.c.b16 %v1370, %v1369
      %v1933 = vpack.c.b16 %v1372, %v1371
      %v1934 = vpack.c.b16 %v1374, %v1373
      %v1935 = vpack.c.b16 %v1376, %v1375
      %v1936 = vpack.c.b16 %v1378, %v1377
      %v1937 = vpack.c.b16 %v1380, %v1379
      %v1938 = vpack.c.b16 %v1382, %v1381
      %v1939 = vpack.c.b16 %v1384, %v1383
      %v1940 = vpack.c.b16 %v1386, %v1385
      %v1941 = vpack.c.b16 %v1388, %v1387
      %v1942 = vpack.c.b16 %v1390, %v1389
      %v1943 = vpack.c.b16 %v1392, %v1391
      %v1944 = vpack.c.b16 %v1394, %v1393
      %v1945 = vpack.c.b16 %v1396, %v1395
      %v1946 = vpack.c.b16 %v1398, %v1397
      %v1947 = vpack.c.b16 %v1400, %v1399
      %v1948 = vpack.c.b16 %v1402, %v1401
      %v1949 = vpack.c.b16 %v1404, %v1403
      %v1950 = vpack.c.b16 %v1406, %v1405
      %v1951 = vpack.c.b16 %v1408, %v1407
      %v1952 = vpack.c.b16 %v1410, %v1409
      %v1953 = vpack.c.b16 %v1412, %v1411
      %v1954 = vpack.c.b16 %v1414, %v1413
      %v1955 = vpack.c.b16 %v1416, %v1415
      %v1956 = vpack.c.b16 %v1418, %v1417
      %v1957 = vpack.c.b16 %v1420, %v1419
      %v1958 = vpack.c.b16 %v1422, %v1421
      %v1959 = vpack.c.b16 %v1424, %v1423
      %v1960 = vpack.c.b16 %v1426, %v1425
      %v1961 = vpack.c.b16 %v1428, %v1427
      %v1962 = vpack.c.b16 %v1430, %v1429
      %v1963 = vpack.c.b16 %v1432, %v1431
      %v1964 = vpack.c.b16 %v1434, %v1433
      %v1965 = vpack.c.b16 %v1436, %v1435
      %v1966 = vpack.c.b16 %v1438, %v1437
      %v1967 = vpack.c.b16 %v1440, %v1439
      %v1968 = vpack.c.b16 %v1442, %v1441
      %v1969 = vpack.c.b16 %v1444, %v1443
      %v1970 = vpack.c.b16 %v1446, %v1445
      %v1971 = vpack.c.b16 %v1448, %v1447
      %v1972 = vpack.c.b16 %v1450, %v1449
      %v1973 = vpack.c.b16 %v1452, %v1451
      %v1974 = vpack.c.b16 %v1454, %v1453
      %v1975 = vpack.c.b16 %v1456, %v1455
      %v1976 = vpack.c.b16 %v1458, %v1457
      %v1977 = vpack.c.b16 %v1460, %v1459
      %v1978 = vpack.c.b16 %v1462, %v1461
      %v1979 = vpack.c.b16 %v1464, %v1463
      %v1980 = vpack.c.b16 %v1466, %v1465
      %v1981 = vpack.c.b16 %v1468, %v1467
      %v1982 = vpack.c.b16 %v1470, %v1469
      %v1983 = vpack.c.b16 %v1472, %v1471
      %v1984 = vpack.c.b16 %v1474, %v1473
      %v1985 = vpack.c.b16 %v1476, %v1475
      %v1986 = vpack.c.b16 %v1478, %v1477
      %v1987 = vpack.c.b16 %v1480, %v1479
      %v1988 = vpack.c.b16 %v1482, %v1481
      %v1989 = vpack.c.b16 %v1484, %v1483
      %v1990 = vpack.c.b16 %v1486, %v1485
      %v1991 = vpack.c.b16 %v1488, %v1487
      %v1992 = vpack.c.b16 %v1490, %v1489
      %v1993 = vpack.c.b16 %v1492, %v1491
      %v1994 = vpack.c.b16 %v1494, %v1493
      %v1995 = vpack.c.b16 %v1496, %v1495
      %v1996 = vpack.c.b16 %v1498, %v1497
      %v1997 = vpack.c.b16 %v1500, %v1499
      %v1998 = vpack.c.b16 %v1502, %v1501
      %v1999 = vpack.c.b16 %v1504, %v1503
      %v2000 = vpack.c.b16 %v1506, %v1505
      %v2001 = vpack.c.b16 %v1508, %v1507
      %v2002 = vpack.c.b16 %v1510, %v1509
      %v2003 = vpack.c.b16 %v1512, %v1511
      %v2004 = vpack.c.b16 %v1514, %v1513
      %v2005 = vpack.c.b16 %v1516, %v1515
      %v2006 = vpack.c.b16 %v1518, %v1517
      %v2007 = vpack.c.b16 %v1520, %v1519
      %v2008 = vpack.c.b16 %v1522, %v1521
      %v2009 = vpack.c.b16 %v1524, %v1523
      %v2010 = vpack.c.b16 %v1526, %v1525
      %v2011 = vpack.c.b16 %v1528, %v1527
      %v2012 = vpack.c.b16 %v1530, %v1529
      %v2013 = vpack.c.b16 %v1532, %v1531
      %v2014 = vpack.c.b16 %v1534, %v1533
      %v2015 = vpack.c.b16 %v1536, %v1535
      %v2016 = vpack.c.b16 %v1538, %v1537
      %v2017 = vpack.c.b16 %v1540, %v1539
      %v2018 = vpack.c.b16 %v1542, %v1541
      %v2019 = vpack.c.b16 %v1544, %v1543
      %v2020 = vpack.c.b16 %v1546, %v1545
      %v2021 = vpack.c.b16 %v1548, %v1547
      %v2022 = vpack.c.b16 %v1550, %v1549
      %v2023 = vpack.c.b16 %v1552, %v1551
      %v2024 = vpack.c.b16 %v1554, %v1553
      %v2025 = vpack.c.b16 %v1556, %v1555
      %v2026 = vpack.c.b16 %v1558, %v1557
      %v2027 = vpack.c.b16 %v1560, %v1559
      %v2028 = vpack.c.b16 %v1562, %v1561
      %v2029 = vpack.c.b16 %v1564, %v1563
      %v2030 = vpack.c.b16 %v1566, %v1565
      %v2031 = vpack.c.b16 %v1568, %v1567
      %v2032 = vpack.c.b16 %v1570, %v1569
      %v2033 = vpack.c.b16 %v1572, %v1571
      %v2034 = vpack.c.b16 %v1574, %v1573
      %v2035 = vpack.c.b16 %v1576, %v1575
      %v2036 = vpack.c.b16 %v1578, %v1577
      %v2037 = vpack.c.b16 %v1580, %v1579
      %v2038 = vpack.c.b16 %v1582, %v1581
      %v2039 = vpack.c.b16 %v1584, %v1583
      %v2040 = vpack.c.b16 %v1586, %v1585
      %v2041 = vpack.c.b16 %v1588, %v1587
      %v2042 = vpack.c.b16 %v1590, %v1589
      %v2043 = vpack.c.b16 %v1592, %v1591
      %v2044 = vpack.c.b16 %v1594, %v1593
      %v2045 = vpack.c.b16 %v1596, %v1595
      %v2046 = vpack.c.b16 %v1598, %v1597
      %v2047 = vpack.c.b16 %v1600, %v1599
      %v2048 = vpack.c.b16 %v1602, %v1601
      %v2049 = vpack.c.b16 %v1604, %v1603
      %v2050 = vpack.c.b16 %v1606, %v1605
      %v2051 = vpack.c.b16 %v1608, %v1607
      %v2052 = vpack.c.b16 %v1610, %v1609
      %v2053 = vpack.c.b16 %v1612, %v1611
      %v2054 = vpack.c.b16 %v1614, %v1613
      %v2055 = vpack.c.b16 %v1616, %v1615
      %v2056 = vpack.c.b16 %v1618, %v1617
      %v2057 = vpack.c.b16 %v1620, %v1619
      %v2058 = vpack.c.b16 %v1622, %v1621
      %v2059 = vpack.c.b16 %v1624, %v1623
      %v2060 = vpack.c.b16 %v1626, %v1625
      %v2061 = vpack.c.b16 %v1628, %v1627
      %v2062 = vpack.c.b16 %v1630, %v1629
      %v2063 = vpack.c.b16 %v1632, %v1631
      %v2064 = vpack.c.b16 %v1634, %v1633
      %v2065 = vpack.c.b16 %v1636, %v1635
      %v2066 = vpack.c.b16 %v1638, %v1637
      %v2067 = vpack.c.b16 %v1640, %v1639
      %v2068 = vpack.c.b16 %v1642, %v1641
      %v2069 = vpack.c.b16 %v1644, %v1643
      %v2070 = vpack.c.b16 %v1646, %v1645
      %v2071 = vpack.c.b16 %v1648, %v1647
      %v2072 = vpack.c.b16 %v1650, %v1649
      %v2073 = vpack.c.b16 %v1652, %v1651
      %v2074 = vpack.c.b16 %v1654, %v1653
      %v2075 = vpack.c.b16 %v1656, %v1655
      %v2076 = vpack.c.b16 %v1658, %v1657
      %v2077 = vpack.c.b16 %v1660, %v1659
      %v2078 = vpack.c.b16 %v1662, %v1661
      %v2079 = vpack.c.b16 %v1664, %v1663
      %v2080 = vpack.c.b16 %v1666, %v1665
      %v2081 = vpack.c.b16 %v1668, %v1667
      %v2082 = vpack.c.b16 %v1670, %v1669
      %v2083 = vpack.c.b16 %v1672, %v1671
      %v2084 = vpack.c.b16 %v1674, %v1673
      %v2085 = vpack.c.b16 %v1676, %v1675
      %v2086 = vpack.c.b16 %v1678, %v1677
      %v2087 = vpack.c.b16 %v1680, %v1679
      %v2088 = vpack.c.b16 %v1682, %v1681
      %v2089 = vpack.c.b16 %v1684, %v1683
      %v2090 = vpack.c.b16 %v1686, %v1685
      %v2091 = vpack.c.b16 %v1688, %v1687
      %v2092 = vpack.c.b16 %v1690, %v1689
      %v2093 = vpack.c.b16 %v1692, %v1691
      %v2094 = vpack.c.b16 %v1694, %v1693
      %v2095 = vpack.c.b16 %v1696, %v1695
      %v2096 = vpack.c.b16 %v1698, %v1697
      %v2097 = vpack.c.b16 %v1700, %v1699
      %v2098 = vpack.c.b16 %v1702, %v1701
      %v2099 = vpack.c.b16 %v1704, %v1703
      %v2100 = vpack.c.b16 %v1706, %v1705
      %v2101 = vpack.c.b16 %v1708, %v1707
      %v2102 = vpack.c.b16 %v1710, %v1709
      %v2103 = vpack.c.b16 %v1712, %v1711
      %v2104 = vpack.c.b16 %v1714, %v1713
      %v2105 = vpack.c.b16 %v1716, %v1715
      %v2106 = vpack.c.b16 %v1718, %v1717
      %v2107 = vpack.c.b16 %v1720, %v1719
      %v2108 = vpack.c.b16 %v1722, %v1721
      %v2109 = vpack.c.b16 %v1724, %v1723
      %v2110 = vpack.c.b16 %v1726, %v1725
      %v2111 = vpack.c.b16 %v1728, %v1727
      %v2112 = vpack.c.b16 %v1730, %v1729
      %v2113 = vpack.c.b16 %v1732, %v1731
      %v2114 = vpack.c.b16 %v1734, %v1733
      %v2115 = vpack.c.b16 %v1736, %v1735
      %v2116 = vpack.c.b16 %v1738, %v1737
      %v2117 = vpack.c.b16 %v1740, %v1739
      %v2118 = vpack.c.b16 %v1742, %v1741
      %v2119 = vpack.c.b16 %v1744, %v1743
      %v2120 = vpack.c.b16 %v1746, %v1745
      %v2121 = vpack.c.b16 %v1748, %v1747
      %v2122 = vpack.c.b16 %v1750, %v1749
      %v2123 = vpack.c.b16 %v1752, %v1751
      %v2124 = vpack.c.b16 %v1754, %v1753
      %v2125 = vpack.c.b16 %v1756, %v1755
      %v2126 = vpack.c.b16 %v1758, %v1757
      %v2127 = vpack.c.b16 %v1760, %v1759
      %v2128 = vpack.c.b16 %v1762, %v1761
      %v2129 = vpack.c.b16 %v1764, %v1763
      %v2130 = vpack.c.b16 %v1766, %v1765
      %v2131 = vpack.c.b16 %v1768, %v1767
      %v2132 = vpack.c.b16 %v1770, %v1769
      %v2133 = vpack.c.b16 %v1772, %v1771
      %v2134 = vpack.c.b16 %v1774, %v1773
      %v2135 = vpack.c.b16 %v1776, %v1775
      %v2136 = vpack.c.b16 %v1778, %v1777
      %v2137 = vpack.c.b16 %v1780, %v1779
      %v2138 = vpack.c.b16 %v1782, %v1781
      %v2139 = vpack.c.b16 %v1784, %v1783
      %v2140 = vpack.c.b16 %v1786, %v1785
      %v2141 = vpack.c.b16 %v1788, %v1787
      %v2142 = vpack.c.b16 %v1790, %v1789
      %v2143 = vpack.c.b16 %v1792, %v1791
      %v2144 = vpack.c.b16 %v1794, %v1793
      %v2145 = vpack.c.b16 %v1796, %v1795
      %v2146 = vpack.c.b16 %v1798, %v1797
      %v2147 = vpack.c.b16 %v1800, %v1799
      %v2148 = vpack.c.b16 %v1802, %v1801
      %v2149 = vpack.c.b16 %v1804, %v1803
      %v2150 = vpack.c.b16 %v1806, %v1805
      %v2151 = vpack.c.b16 %v1808, %v1807
      %v2152 = vpack.c.b16 %v1810, %v1809
      %v2153 = vpack.c.b16 %v1812, %v1811
      %v2154 = vpack.c.b16 %v1814, %v1813
      %v2155 = vpack.c.b16 %v1816, %v1815
      %v2156 = vpack.c.b16 %v1818, %v1817
      %v2157 = vpack.c.b16 %v1820, %v1819
      %v2158 = vpack.c.b16 %v1822, %v1821
      %v2159 = vpack.c.b16 %v1824, %v1823
      %v2160 = vpack.c.b16 %v1826, %v1825
      %v2161 = vpack.c.b16 %v1828, %v1827
      %v2162 = vpack.c.b16 %v1830, %v1829
      %v2163 = vpack.c.b16 %v1832, %v1831
      %v2164 = vpack.c.b16 %v1834, %v1833
      %v2165 = vpack.c.b16 %v1836, %v1835
      %v2166 = vpack.c.b16 %v1838, %v1837
      %v2167 = vpack.c.b16 %v1840, %v1839
      %v2168 = vpack.c.b16 %v1842, %v1841
      %v2169 = vpack.c.b16 %v1844, %v1843
      %v2170 = vpack.c.b16 %v1846, %v1845
      %v2171 = vpack.c.b16 %v1848, %v1847
      %v2172 = vpack.c.b16 %v1850, %v1849
      %v2173 = vpack.c.b16 %v1852, %v1851
      %v2174 = vpack.c.b16 %v1854, %v1853
      %v2175 = vpack.c.b16 %v1856, %v1855
      %v2176 = vpack.c.b16 %v1858, %v1857
      %v2177 = vpack.c.b16 %v1860, %v1859
      %v2178 = vpack.c.b16 %v1862, %v1861
      %v2179 = vpack.c.b16 %v1864, %v1863
      %v2180 = vpack.c.b16 %v1866, %v1865
      %v2181 = vpack.c.b16 %v1868, %v1867
      %v2182 = vpack.c.b16 %v1870, %v1869
      %v2183 = vpack.c.b16 %v1872, %v1871
      %v2184 = vpack.c.b16 %v1874, %v1873
      %v2185 = vpack.c.b16 %v1876, %v1875
      %v2186 = vpack.c.b16 %v1878, %v1877
      %v2187 = vpack.c.b16 %v1880, %v1879
      %v2188 = vpack.c.b16 %v1882, %v1881
      %v2189 = vpack.c.b16 %v1884, %v1883
      %v2190 = vpack.c.b16 %v1886, %v1885
      %v2191 = vpack.c.b16 %v1888, %v1887
      %v2192 = vpack.c.b16 %v1890, %v1889
      %v2193 = vpack.c.b16 %v1892, %v1891
      %v2194 = vpack.c.b16 %v1894, %v1893
      %v2195 = vpack.c.b16 %v1896, %v1895
      %v2196 = vpack.c.b16 %v1898, %v1897
      %v2197 = vpack.c.b16 %v1900, %v1899
      %v2198 = vpack.c.b16 %v1902, %v1901
      %v2199 = vpack.c.b16 %v1904, %v1903
      %v2200 = vpack.c.b16 %v1906, %v1905
      %v2201 = vpack.c.b16 %v1908, %v1907
      %v2202 = vpack.c.b16 %v1910, %v1909
      %v2203 = vpack.c.b16 %v1912, %v1911
      %v2204 = vpack.c.b16 %v1914, %v1913
      %v2205 = vpack.c.b16 %v1916, %v1915
      %v2206 = vpack.c.b16 %v1918, %v1917
      %v2211 = vunpack.c.l.b16 %v756
      %v2212 = vunpack.c.l.b16 %v757
      %v2213 = vunpack.c.l.b16 %v758
      %v2214 = vunpack.c.l.b16 %v759
      %v2215 = vpack.c.b16 %v2212, %v2211
      %v2216 = vpack.c.b16 %v2214, %v2213
      %vm2219 = vcmask 261120
      %v2221 = vsel %vm2219, %v1919, 0
      %v2224 = vsel %vm2219, %v1920, 0
      %v2227 = vsel %vm2219, %v1921, 0
      %v2230 = vsel %vm2219, %v1922, 0
      %v2233 = vsel %vm2219, %v1923, 0
      %v2236 = vsel %vm2219, %v1924, 0
      %v2239 = vsel %vm2219, %v1925, 0
      %v2242 = vsel %vm2219, %v1926, 0
      %v2245 = vsel %vm2219, %v1927, 0
      %v2248 = vsel %vm2219, %v1928, 0
      %v2251 = vsel %vm2219, %v1929, 0
      %v2254 = vsel %vm2219, %v1930, 0
      %v2257 = vsel %vm2219, %v1931, 0
      %v2260 = vsel %vm2219, %v1932, 0
      %v2263 = vsel %vm2219, %v1933, 0
      %v2266 = vsel %vm2219, %v1934, 0
      %v2269 = vsel %vm2219, %v1935, 0
      %v2272 = vsel %vm2219, %v1936, 0
      %v2275 = vsel %vm2219, %v1937, 0
      %v2278 = vsel %vm2219, %v1938, 0
      %v2281 = vsel %vm2219, %v1939, 0
      %v2284 = vsel %vm2219, %v1940, 0
      %v2287 = vsel %vm2219, %v1941, 0
      %v2290 = vsel %vm2219, %v1942, 0
      %v2293 = vsel %vm2219, %v1943, 0
      %v2296 = vsel %vm2219, %v1944, 0
      %v2299 = vsel %vm2219, %v1945, 0
      %v2302 = vsel %vm2219, %v1946, 0
      %v2305 = vsel %vm2219, %v1947, 0
      %v2308 = vsel %vm2219, %v1948, 0
      %v2311 = vsel %vm2219, %v1949, 0
      %v2314 = vsel %vm2219, %v1950, 0
      %v2317 = vsel %vm2219, %v1951, 0
      %v2320 = vsel %vm2219, %v1952, 0
      %v2323 = vsel %vm2219, %v1953, 0
      %v2326 = vsel %vm2219, %v1954, 0
      %v2329 = vsel %vm2219, %v1955, 0
      %v2332 = vsel %vm2219, %v1956, 0
      %v2335 = vsel %vm2219, %v1957, 0
      %v2338 = vsel %vm2219, %v1958, 0
      %v2341 = vsel %vm2219, %v1959, 0
      %v2344 = vsel %vm2219, %v1960, 0
      %v2347 = vsel %vm2219, %v1961, 0
      %v2350 = vsel %vm2219, %v1962, 0
      %v2353 = vsel %vm2219, %v1963, 0
      %v2356 = vsel %vm2219, %v1964, 0
      %v2359 = vsel %vm2219, %v1965, 0
      %v2362 = vsel %vm2219, %v1966, 0
      %v2365 = vsel %vm2219, %v1967, 0
      %v2368 = vsel %vm2219, %v1968, 0
      %v2371 = vsel %vm2219, %v1969, 0
      %v2374 = vsel %vm2219, %v1970, 0
      %v2377 = vsel %vm2219, %v1971, 0
      %v2380 = vsel %vm2219, %v1972, 0
      %v2383 = vsel %vm2219, %v1973, 0
      %v2386 = vsel %vm2219, %v1974, 0
      %v2389 = vsel %vm2219, %v1975, 0
      %v2392 = vsel %vm2219, %v1976, 0
      %v2395 = vsel %vm2219, %v1977, 0
      %v2398 = vsel %vm2219, %v1978, 0
      %v2401 = vsel %vm2219, %v1979, 0
      %v2404 = vsel %vm2219, %v1980, 0
      %v2407 = vsel %vm2219, %v1981, 0
      %v2410 = vsel %vm2219, %v1982, 0
      %v2413 = vsel %vm2219, %v1983, 0
      %v2416 = vsel %vm2219, %v1984, 0
      %v2419 = vsel %vm2219, %v1985, 0
      %v2422 = vsel %vm2219, %v1986, 0
      %v2425 = vsel %vm2219, %v1987, 0
      %v2428 = vsel %vm2219, %v1988, 0
      %v2431 = vsel %vm2219, %v1989, 0
      %v2434 = vsel %vm2219, %v1990, 0
      %v2437 = vsel %vm2219, %v1991, 0
      %v2440 = vsel %vm2219, %v1992, 0
      %v2443 = vsel %vm2219, %v1993, 0
      %v2446 = vsel %vm2219, %v1994, 0
      %v2449 = vsel %vm2219, %v1995, 0
      %v2452 = vsel %vm2219, %v1996, 0
      %v2455 = vsel %vm2219, %v1997, 0
      %v2458 = vsel %vm2219, %v1998, 0
      %v2461 = vsel %vm2219, %v1999, 0
      %v2464 = vsel %vm2219, %v2000, 0
      %v2467 = vsel %vm2219, %v2001, 0
      %v2470 = vsel %vm2219, %v2002, 0
      %v2473 = vsel %vm2219, %v2003, 0
      %v2476 = vsel %vm2219, %v2004, 0
      %v2479 = vsel %vm2219, %v2005, 0
      %v2482 = vsel %vm2219, %v2006, 0
      %v2485 = vsel %vm2219, %v2007, 0
      %v2488 = vsel %vm2219, %v2008, 0
      %v2491 = vsel %vm2219, %v2009, 0
      %v2494 = vsel %vm2219, %v2010, 0
      %v2497 = vsel %vm2219, %v2011, 0
      %v2500 = vsel %vm2219, %v2012, 0
      %v2503 = vsel %vm2219, %v2013, 0
      %v2506 = vsel %vm2219, %v2014, 0
      %v2509 = vsel %vm2219, %v2015, 0
      %v2512 = vsel %vm2219, %v2016, 0
      %v2515 = vsel %vm2219, %v2017, 0
      %v2518 = vsel %vm2219, %v2018, 0
      %v2521 = vsel %vm2219, %v2019, 0
      %v2524 = vsel %vm2219, %v2020, 0
      %v2527 = vsel %vm2219, %v2021, 0
      %v2530 = vsel %vm2219, %v2022, 0
      %v2533 = vsel %vm2219, %v2023, 0
      %v2536 = vsel %vm2219, %v2024, 0
      %v2539 = vsel %vm2219, %v2025, 0
      %v2542 = vsel %vm2219, %v2026, 0
      %v2545 = vsel %vm2219, %v2027, 0
      %v2548 = vsel %vm2219, %v2028, 0
      %v2551 = vsel %vm2219, %v2029, 0
      %v2554 = vsel %vm2219, %v2030, 0
      %v2557 = vsel %vm2219, %v2031, 0
      %v2560 = vsel %vm2219, %v2032, 0
      %v2563 = vsel %vm2219, %v2033, 0
      %v2566 = vsel %vm2219, %v2034, 0
      %v2569 = vsel %vm2219, %v2035, 0
      %v2572 = vsel %vm2219, %v2036, 0
      %v2575 = vsel %vm2219, %v2037, 0
      %v2578 = vsel %vm2219, %v2038, 0
      %v2581 = vsel %vm2219, %v2039, 0
      %v2584 = vsel %vm2219, %v2040, 0
      %v2587 = vsel %vm2219, %v2041, 0
      %v2590 = vsel %vm2219, %v2042, 0
      %v2593 = vsel %vm2219, %v2043, 0
      %v2596 = vsel %vm2219, %v2044, 0
      %v2599 = vsel %vm2219, %v2045, 0
      %v2602 = vsel %vm2219, %v2046, 0
      %v2605 = vsel %vm2219, %v2047, 0
      %v2608 = vsel %vm2219, %v2048, 0
      %v2611 = vsel %vm2219, %v2049, 0
      %v2614 = vsel %vm2219, %v2050, 0
      %v2617 = vsel %vm2219, %v2051, 0
      %v2620 = vsel %vm2219, %v2052, 0
      %v2623 = vsel %vm2219, %v2053, 0
      %v2626 = vsel %vm2219, %v2054, 0
      %v2629 = vsel %vm2219, %v2055, 0
      %v2632 = vsel %vm2219, %v2056, 0
      %v2635 = vsel %vm2219, %v2057, 0
      %v2638 = vsel %vm2219, %v2058, 0
      %v2641 = vsel %vm2219, %v2059, 0
      %v2644 = vsel %vm2219, %v2060, 0
      %v2647 = vsel %vm2219, %v2061, 0
      %v2650 = vsel %vm2219, %v2062, 0
      %v2653 = vsel %vm2219, %v2063, 0
      %v2656 = vsel %vm2219, %v2064, 0
      %v2659 = vsel %vm2219, %v2065, 0
      %v2662 = vsel %vm2219, %v2066, 0
      %v2665 = vsel %vm2219, %v2067, 0
      %v2668 = vsel %vm2219, %v2068, 0
      %v2671 = vsel %vm2219, %v2069, 0
      %v2674 = vsel %vm2219, %v2070, 0
      %v2677 = vsel %vm2219, %v2071, 0
      %v2680 = vsel %vm2219, %v2072, 0
      %v2683 = vsel %vm2219, %v2073, 0
      %v2686 = vsel %vm2219, %v2074, 0
      %v2689 = vsel %vm2219, %v2075, 0
      %v2692 = vsel %vm2219, %v2076, 0
      %v2695 = vsel %vm2219, %v2077, 0
      %v2698 = vsel %vm2219, %v2078, 0
      %v2701 = vsel %vm2219, %v2079, 0
      %v2704 = vsel %vm2219, %v2080, 0
      %v2707 = vsel %vm2219, %v2081, 0
      %v2710 = vsel %vm2219, %v2082, 0
      %v2713 = vsel %vm2219, %v2083, 0
      %v2716 = vsel %vm2219, %v2084, 0
      %v2719 = vsel %vm2219, %v2085, 0
      %v2722 = vsel %vm2219, %v2086, 0
      %v2725 = vsel %vm2219, %v2087, 0
      %v2728 = vsel %vm2219, %v2088, 0
      %v2731 = vsel %vm2219, %v2089, 0
      %v2734 = vsel %vm2219, %v2090, 0
      %v2737 = vsel %vm2219, %v2091, 0
      %v2740 = vsel %vm2219, %v2092, 0
      %v2743 = vsel %vm2219, %v2093, 0
      %v2746 = vsel %vm2219, %v2094, 0
      %v2749 = vsel %vm2219, %v2095, 0
      %v2752 = vsel %vm2219, %v2096, 0
      %v2755 = vsel %vm2219, %v2097, 0
      %v2758 = vsel %vm2219, %v2098, 0
      %v2761 = vsel %vm2219, %v2099, 0
      %v2764 = vsel %vm2219, %v2100, 0
      %v2767 = vsel %vm2219, %v2101, 0
      %v2770 = vsel %vm2219, %v2102, 0
      %v2773 = vsel %vm2219, %v2103, 0
      %v2776 = vsel %vm2219, %v2104, 0
      %v2779 = vsel %vm2219, %v2105, 0
      %v2782 = vsel %vm2219, %v2106, 0
      %v2785 = vsel %vm2219, %v2107, 0
      %v2788 = vsel %vm2219, %v2108, 0
      %v2791 = vsel %vm2219, %v2109, 0
      %v2794 = vsel %vm2219, %v2110, 0
      %v2797 = vsel %vm2219, %v2111, 0
      %v2800 = vsel %vm2219, %v2112, 0
      %v2803 = vsel %vm2219, %v2113, 0
      %v2806 = vsel %vm2219, %v2114, 0
      %v2809 = vsel %vm2219, %v2115, 0
      %v2812 = vsel %vm2219, %v2116, 0
      %v2815 = vsel %vm2219, %v2117, 0
      %v2818 = vsel %vm2219, %v2118, 0
      %v2821 = vsel %vm2219, %v2119, 0
      %v2824 = vsel %vm2219, %v2120, 0
      %v2827 = vsel %vm2219, %v2121, 0
      %v2830 = vsel %vm2219, %v2122, 0
      %v2833 = vsel %vm2219, %v2123, 0
      %v2836 = vsel %vm2219, %v2124, 0
      %v2839 = vsel %vm2219, %v2125, 0
      %v2842 = vsel %vm2219, %v2126, 0
      %v2845 = vsel %vm2219, %v2127, 0
      %v2848 = vsel %vm2219, %v2128, 0
      %v2851 = vsel %vm2219, %v2129, 0
      %v2854 = vsel %vm2219, %v2130, 0
      %v2857 = vsel %vm2219, %v2131, 0
      %v2860 = vsel %vm2219, %v2132, 0
      %v2863 = vsel %vm2219, %v2133, 0
      %v2866 = vsel %vm2219, %v2134, 0
      %v2869 = vsel %vm2219, %v2135, 0
      %v2872 = vsel %vm2219, %v2136, 0
      %v2875 = vsel %vm2219, %v2137, 0
      %v2878 = vsel %vm2219, %v2138, 0
      %v2881 = vsel %vm2219, %v2139, 0
      %v2884 = vsel %vm2219, %v2140, 0
      %v2887 = vsel %vm2219, %v2141, 0
      %v2890 = vsel %vm2219, %v2142, 0
      %v2893 = vsel %vm2219, %v2143, 0
      %v2896 = vsel %vm2219, %v2144, 0
      %v2899 = vsel %vm2219, %v2145, 0
      %v2902 = vsel %vm2219, %v2146, 0
      %v2905 = vsel %vm2219, %v2147, 0
      %v2908 = vsel %vm2219, %v2148, 0
      %v2911 = vsel %vm2219, %v2149, 0
      %v2914 = vsel %vm2219, %v2150, 0
      %v2917 = vsel %vm2219, %v2151, 0
      %v2920 = vsel %vm2219, %v2152, 0
      %v2923 = vsel %vm2219, %v2153, 0
      %v2926 = vsel %vm2219, %v2154, 0
      %v2929 = vsel %vm2219, %v2155, 0
      %v2932 = vsel %vm2219, %v2156, 0
      %v2935 = vsel %vm2219, %v2157, 0
      %v2938 = vsel %vm2219, %v2158, 0
      %v2941 = vsel %vm2219, %v2159, 0
      %v2944 = vsel %vm2219, %v2160, 0
      %v2947 = vsel %vm2219, %v2161, 0
      %v2950 = vsel %vm2219, %v2162, 0
      %v2953 = vsel %vm2219, %v2163, 0
      %v2956 = vsel %vm2219, %v2164, 0
      %v2959 = vsel %vm2219, %v2165, 0
      %v2962 = vsel %vm2219, %v2166, 0
      %v2965 = vsel %vm2219, %v2167, 0
      %v2968 = vsel %vm2219, %v2168, 0
      %v2971 = vsel %vm2219, %v2169, 0
      %v2974 = vsel %vm2219, %v2170, 0
      %v2977 = vsel %vm2219, %v2171, 0
      %v2980 = vsel %vm2219, %v2172, 0
      %v2983 = vsel %vm2219, %v2173, 0
      %v2986 = vsel %vm2219, %v2174, 0
      %v2989 = vsel %vm2219, %v2175, 0
      %v2992 = vsel %vm2219, %v2176, 0
      %v2995 = vsel %vm2219, %v2177, 0
      %v2998 = vsel %vm2219, %v2178, 0
      %v3001 = vsel %vm2219, %v2179, 0
      %v3004 = vsel %vm2219, %v2180, 0
      %v3007 = vsel %vm2219, %v2181, 0
      %v3010 = vsel %vm2219, %v2182, 0
      %v3013 = vsel %vm2219, %v2183, 0
      %v3016 = vsel %vm2219, %v2184, 0
      %v3019 = vsel %vm2219, %v2185, 0
      %v3022 = vsel %vm2219, %v2186, 0
      %v3025 = vsel %vm2219, %v2187, 0
      %v3028 = vsel %vm2219, %v2188, 0
      %v3031 = vsel %vm2219, %v2189, 0
      %v3034 = vsel %vm2219, %v2190, 0
      %v3037 = vsel %vm2219, %v2191, 0
      %v3040 = vsel %vm2219, %v2192, 0
      %v3043 = vsel %vm2219, %v2193, 0
      %v3046 = vsel %vm2219, %v2194, 0
      %v3049 = vsel %vm2219, %v2195, 0
      %v3052 = vsel %vm2219, %v2196, 0
      %v3055 = vsel %vm2219, %v2197, 0
      %v3058 = vsel %vm2219, %v2198, 0
      %v3061 = vsel %vm2219, %v2199, 0
      %v3064 = vsel %vm2219, %v2200, 0
      %v3067 = vsel %vm2219, %v2201, 0
      %v3070 = vsel %vm2219, %v2202, 0
      %v3073 = vsel %vm2219, %v2203, 0
      %v3076 = vsel %vm2219, %v2204, 0
      %v3079 = vsel %vm2219, %v2205, 0
      %v3082 = vsel %vm2219, %v2206, 0
      %3084 = vmatprep.subr.bf16.mxu0 0
      %3085 = vmatpush1.bf16.msra.mxu0 0
      %3086 = vmatprep.subr.bf16.mxu0 0
      %3087 = vmatpush1.bf16.msra.mxu0 0
      %3088 = vmatprep.subr.bf16.mxu0 0
      %3089 = vmatpush1.bf16.msra.mxu0 0
      %3090 = vmatprep.subr.bf16.mxu0 0
      %3091 = vmatpush1.bf16.msra.mxu0 0
      %3092 = vmatprep.subr.bf16.mxu0 0
      %3093 = vmatpush1.bf16.msra.mxu0 0
      %3094 = vmatprep.subr.bf16.mxu0 0
      %3095 = vmatpush1.bf16.msra.mxu0 0
      %3096 = vmatprep.subr.bf16.mxu0 0
      %3097 = vmatpush1.bf16.msra.mxu0 %v2216
      %3098 = vmatprep.subr.bf16.mxu0 0
      %3099 = vmatpush1.bf16.msra.mxu0 %v2215
      %3100 = vmatprep.subr.bf16.mxu0 0
      %3101 = vmatpush2.bf16.msra.mxu0 0
      %3102 = vmatprep.subr.bf16.mxu0 0
      %3103 = vmatpush2.bf16.msra.mxu0 0
      %3104 = vmatprep.subr.bf16.mxu0 0
      %3105 = vmatpush2.bf16.msra.mxu0 0
      %3106 = vmatprep.subr.bf16.mxu0 0
      %3107 = vmatpush2.bf16.msra.mxu0 0
      %3108 = vmatprep.subr.bf16.mxu0 0
      %3109 = vmatpush2.bf16.msra.mxu0 0
      %3110 = vmatprep.subr.bf16.mxu0 0
      %3111 = vmatpush2.bf16.msra.mxu0 0
      %3112 = vmatprep.subr.bf16.mxu0 0
      %3113 = vmatpush2.bf16.msra.mxu0 0
      %3114 = vmatprep.subr.bf16.mxu0 0
      %3115 = vmatpush2.bf16.msra.mxu0 0
      %3116 = vmatprep.mubr.bf16.mxu0 0
      %3117 = vmatmul.mubr.bf16.gmra.mxu0 %v2221
      %v3118 = vpop.f32.mrf.mxu0
      %v3119 = vadd.f32 %v765, %v3118
      %v3120 = vpop.f32.mrf.mxu0
      %v3121 = vpop.f32.mrf.mxu0
      %v3122 = vadd.f32 %v765, %v3121
      %v3123 = vpop.f32.mrf.mxu0
      %3124 = vmatprep.mubr.bf16.mxu0 0
      %3125 = vmatmul.mubr.bf16.gmra.mxu0 %v2224
      %v3126 = vpop.f32.mrf.mxu0
      %v3127 = vadd.f32 %v765, %v3126
      %v3128 = vpop.f32.mrf.mxu0
      %v3129 = vpop.f32.mrf.mxu0
      %v3130 = vadd.f32 %v765, %v3129
      %v3131 = vpop.f32.mrf.mxu0
      %3132 = vmatprep.mubr.bf16.mxu0 0
      %3133 = vmatmul.mubr.bf16.gmra.mxu0 %v2227
      %v3134 = vpop.f32.mrf.mxu0
      %v3135 = vadd.f32 %v765, %v3134
      %v3136 = vpop.f32.mrf.mxu0
      %v3137 = vpop.f32.mrf.mxu0
      %v3138 = vadd.f32 %v765, %v3137
      %v3139 = vpop.f32.mrf.mxu0
      %3140 = vmatprep.mubr.bf16.mxu0 0
      %3141 = vmatmul.mubr.bf16.gmra.mxu0 %v2230
      %v3142 = vpop.f32.mrf.mxu0
      %v3143 = vadd.f32 %v765, %v3142
      %v3144 = vpop.f32.mrf.mxu0
      %v3145 = vpop.f32.mrf.mxu0
      %v3146 = vadd.f32 %v765, %v3145
      %v3147 = vpop.f32.mrf.mxu0
      %3148 = vmatprep.mubr.bf16.mxu0 0
      %3149 = vmatmul.mubr.bf16.gmra.mxu0 %v2233
      %v3150 = vpop.f32.mrf.mxu0
      %v3151 = vadd.f32 %v765, %v3150
      %v3152 = vpop.f32.mrf.mxu0
      %v3153 = vpop.f32.mrf.mxu0
      %v3154 = vadd.f32 %v765, %v3153
      %v3155 = vpop.f32.mrf.mxu0
      %3156 = vmatprep.mubr.bf16.mxu0 0
      %3157 = vmatmul.mubr.bf16.gmra.mxu0 %v2236
      %v3158 = vpop.f32.mrf.mxu0
      %v3159 = vadd.f32 %v765, %v3158
      %v3160 = vpop.f32.mrf.mxu0
      %v3161 = vpop.f32.mrf.mxu0
      %v3162 = vadd.f32 %v765, %v3161
      %v3163 = vpop.f32.mrf.mxu0
      %3164 = vmatprep.mubr.bf16.mxu0 0
      %3165 = vmatmul.mubr.bf16.gmra.mxu0 %v2239
      %v3166 = vpop.f32.mrf.mxu0
      %v3167 = vadd.f32 %v765, %v3166
      %v3168 = vpop.f32.mrf.mxu0
      %v3169 = vpop.f32.mrf.mxu0
      %v3170 = vadd.f32 %v765, %v3169
      %v3171 = vpop.f32.mrf.mxu0
      %3172 = vmatprep.mubr.bf16.mxu0 0
      %3173 = vmatmul.mubr.bf16.gmra.mxu0 %v2242
      %v3174 = vpop.f32.mrf.mxu0
      %v3175 = vadd.f32 %v765, %v3174
      %v3176 = vpop.f32.mrf.mxu0
      %v3177 = vpop.f32.mrf.mxu0
      %v3178 = vadd.f32 %v765, %v3177
      %v3179 = vpop.f32.mrf.mxu0
      %3180 = vmatprep.mubr.bf16.mxu0 0
      %3181 = vmatmul.mubr.bf16.gmra.mxu0 %v2245
      %v3182 = vpop.f32.mrf.mxu0
      %v3183 = vadd.f32 %v765, %v3182
      %v3184 = vpop.f32.mrf.mxu0
      %v3185 = vpop.f32.mrf.mxu0
      %v3186 = vadd.f32 %v765, %v3185
      %v3187 = vpop.f32.mrf.mxu0
      %3188 = vmatprep.mubr.bf16.mxu0 0
      %3189 = vmatmul.mubr.bf16.gmra.mxu0 %v2248
      %v3190 = vpop.f32.mrf.mxu0
      %v3191 = vadd.f32 %v765, %v3190
      %v3192 = vpop.f32.mrf.mxu0
      %v3193 = vpop.f32.mrf.mxu0
      %v3194 = vadd.f32 %v765, %v3193
      %v3195 = vpop.f32.mrf.mxu0
      %3196 = vmatprep.mubr.bf16.mxu0 0
      %3197 = vmatmul.mubr.bf16.gmra.mxu0 %v2251
      %v3198 = vpop.f32.mrf.mxu0
      %v3199 = vadd.f32 %v765, %v3198
      %v3200 = vpop.f32.mrf.mxu0
      %v3201 = vpop.f32.mrf.mxu0
      %v3202 = vadd.f32 %v765, %v3201
      %v3203 = vpop.f32.mrf.mxu0
      %3204 = vmatprep.mubr.bf16.mxu0 0
      %3205 = vmatmul.mubr.bf16.gmra.mxu0 %v2254
      %v3206 = vpop.f32.mrf.mxu0
      %v3207 = vadd.f32 %v765, %v3206
      %v3208 = vpop.f32.mrf.mxu0
      %v3209 = vpop.f32.mrf.mxu0
      %v3210 = vadd.f32 %v765, %v3209
      %v3211 = vpop.f32.mrf.mxu0
      %3212 = vmatprep.mubr.bf16.mxu0 0
      %3213 = vmatmul.mubr.bf16.gmra.mxu0 %v2257
      %v3214 = vpop.f32.mrf.mxu0
      %v3215 = vadd.f32 %v765, %v3214
      %v3216 = vpop.f32.mrf.mxu0
      %v3217 = vpop.f32.mrf.mxu0
      %v3218 = vadd.f32 %v765, %v3217
      %v3219 = vpop.f32.mrf.mxu0
      %3220 = vmatprep.mubr.bf16.mxu0 0
      %3221 = vmatmul.mubr.bf16.gmra.mxu0 %v2260
      %v3222 = vpop.f32.mrf.mxu0
      %v3223 = vadd.f32 %v765, %v3222
      %v3224 = vpop.f32.mrf.mxu0
      %v3225 = vpop.f32.mrf.mxu0
      %v3226 = vadd.f32 %v765, %v3225
      %v3227 = vpop.f32.mrf.mxu0
      %3228 = vmatprep.mubr.bf16.mxu0 0
      %3229 = vmatmul.mubr.bf16.gmra.mxu0 %v2263
      %v3230 = vpop.f32.mrf.mxu0
      %v3231 = vadd.f32 %v765, %v3230
      %v3232 = vpop.f32.mrf.mxu0
      %v3233 = vpop.f32.mrf.mxu0
      %v3234 = vadd.f32 %v765, %v3233
      %v3235 = vpop.f32.mrf.mxu0
      %3236 = vmatprep.mubr.bf16.mxu0 0
      %3237 = vmatmul.mubr.bf16.gmra.mxu0 %v2266
      %v3238 = vpop.f32.mrf.mxu0
      %v3239 = vadd.f32 %v765, %v3238
      %v3240 = vpop.f32.mrf.mxu0
      %v3241 = vpop.f32.mrf.mxu0
      %v3242 = vadd.f32 %v765, %v3241
      %v3243 = vpop.f32.mrf.mxu0
      %3244 = vmatprep.mubr.bf16.mxu0 0
      %3245 = vmatmul.mubr.bf16.gmra.mxu0 %v2269
      %v3246 = vpop.f32.mrf.mxu0
      %v3247 = vadd.f32 %v765, %v3246
      %v3248 = vpop.f32.mrf.mxu0
      %v3249 = vpop.f32.mrf.mxu0
      %v3250 = vadd.f32 %v765, %v3249
      %v3251 = vpop.f32.mrf.mxu0
      %3252 = vmatprep.mubr.bf16.mxu0 0
      %3253 = vmatmul.mubr.bf16.gmra.mxu0 %v2272
      %v3254 = vpop.f32.mrf.mxu0
      %v3255 = vadd.f32 %v765, %v3254
      %v3256 = vpop.f32.mrf.mxu0
      %v3257 = vpop.f32.mrf.mxu0
      %v3258 = vadd.f32 %v765, %v3257
      %v3259 = vpop.f32.mrf.mxu0
      %3260 = vmatprep.mubr.bf16.mxu0 0
      %3261 = vmatmul.mubr.bf16.gmra.mxu0 %v2275
      %v3262 = vpop.f32.mrf.mxu0
      %v3263 = vadd.f32 %v765, %v3262
      %v3264 = vpop.f32.mrf.mxu0
      %v3265 = vpop.f32.mrf.mxu0
      %v3266 = vadd.f32 %v765, %v3265
      %v3267 = vpop.f32.mrf.mxu0
      %3268 = vmatprep.mubr.bf16.mxu0 0
      %3269 = vmatmul.mubr.bf16.gmra.mxu0 %v2278
      %v3270 = vpop.f32.mrf.mxu0
      %v3271 = vadd.f32 %v765, %v3270
      %v3272 = vpop.f32.mrf.mxu0
      %v3273 = vpop.f32.mrf.mxu0
      %v3274 = vadd.f32 %v765, %v3273
      %v3275 = vpop.f32.mrf.mxu0
      %3276 = vmatprep.mubr.bf16.mxu0 0
      %3277 = vmatmul.mubr.bf16.gmra.mxu0 %v2281
      %v3278 = vpop.f32.mrf.mxu0
      %v3279 = vadd.f32 %v765, %v3278
      %v3280 = vpop.f32.mrf.mxu0
      %v3281 = vpop.f32.mrf.mxu0
      %v3282 = vadd.f32 %v765, %v3281
      %v3283 = vpop.f32.mrf.mxu0
      %3284 = vmatprep.mubr.bf16.mxu0 0
      %3285 = vmatmul.mubr.bf16.gmra.mxu0 %v2284
      %v3286 = vpop.f32.mrf.mxu0
      %v3287 = vadd.f32 %v765, %v3286
      %v3288 = vpop.f32.mrf.mxu0
      %v3289 = vpop.f32.mrf.mxu0
      %v3290 = vadd.f32 %v765, %v3289
      %v3291 = vpop.f32.mrf.mxu0
      %3292 = vmatprep.mubr.bf16.mxu0 0
      %3293 = vmatmul.mubr.bf16.gmra.mxu0 %v2287
      %v3294 = vpop.f32.mrf.mxu0
      %v3295 = vadd.f32 %v765, %v3294
      %v3296 = vpop.f32.mrf.mxu0
      %v3297 = vpop.f32.mrf.mxu0
      %v3298 = vadd.f32 %v765, %v3297
      %v3299 = vpop.f32.mrf.mxu0
      %3300 = vmatprep.mubr.bf16.mxu0 0
      %3301 = vmatmul.mubr.bf16.gmra.mxu0 %v2290
      %v3302 = vpop.f32.mrf.mxu0
      %v3303 = vadd.f32 %v765, %v3302
      %v3304 = vpop.f32.mrf.mxu0
      %v3305 = vpop.f32.mrf.mxu0
      %v3306 = vadd.f32 %v765, %v3305
      %v3307 = vpop.f32.mrf.mxu0
      %3308 = vmatprep.mubr.bf16.mxu0 0
      %3309 = vmatmul.mubr.bf16.gmra.mxu0 %v2293
      %v3310 = vpop.f32.mrf.mxu0
      %v3311 = vadd.f32 %v765, %v3310
      %v3312 = vpop.f32.mrf.mxu0
      %v3313 = vpop.f32.mrf.mxu0
      %v3314 = vadd.f32 %v765, %v3313
      %v3315 = vpop.f32.mrf.mxu0
      %3316 = vmatprep.mubr.bf16.mxu0 0
      %3317 = vmatmul.mubr.bf16.gmra.mxu0 %v2296
      %v3318 = vpop.f32.mrf.mxu0
      %v3319 = vadd.f32 %v765, %v3318
      %v3320 = vpop.f32.mrf.mxu0
      %v3321 = vpop.f32.mrf.mxu0
      %v3322 = vadd.f32 %v765, %v3321
      %v3323 = vpop.f32.mrf.mxu0
      %3324 = vmatprep.mubr.bf16.mxu0 0
      %3325 = vmatmul.mubr.bf16.gmra.mxu0 %v2299
      %v3326 = vpop.f32.mrf.mxu0
      %v3327 = vadd.f32 %v765, %v3326
      %v3328 = vpop.f32.mrf.mxu0
      %v3329 = vpop.f32.mrf.mxu0
      %v3330 = vadd.f32 %v765, %v3329
      %v3331 = vpop.f32.mrf.mxu0
      %3332 = vmatprep.mubr.bf16.mxu0 0
      %3333 = vmatmul.mubr.bf16.gmra.mxu0 %v2302
      %v3334 = vpop.f32.mrf.mxu0
      %v3335 = vadd.f32 %v765, %v3334
      %v3336 = vpop.f32.mrf.mxu0
      %v3337 = vpop.f32.mrf.mxu0
      %v3338 = vadd.f32 %v765, %v3337
      %v3339 = vpop.f32.mrf.mxu0
      %3340 = vmatprep.mubr.bf16.mxu0 0
      %3341 = vmatmul.mubr.bf16.gmra.mxu0 %v2305
      %v3342 = vpop.f32.mrf.mxu0
      %v3343 = vadd.f32 %v765, %v3342
      %v3344 = vpop.f32.mrf.mxu0
      %v3345 = vpop.f32.mrf.mxu0
      %v3346 = vadd.f32 %v765, %v3345
      %v3347 = vpop.f32.mrf.mxu0
      %3348 = vmatprep.mubr.bf16.mxu0 0
      %3349 = vmatmul.mubr.bf16.gmra.mxu0 %v2308
      %v3350 = vpop.f32.mrf.mxu0
      %v3351 = vadd.f32 %v765, %v3350
      %v3352 = vpop.f32.mrf.mxu0
      %v3353 = vpop.f32.mrf.mxu0
      %v3354 = vadd.f32 %v765, %v3353
      %v3355 = vpop.f32.mrf.mxu0
      %3356 = vmatprep.mubr.bf16.mxu0 0
      %3357 = vmatmul.mubr.bf16.gmra.mxu0 %v2311
      %v3358 = vpop.f32.mrf.mxu0
      %v3359 = vadd.f32 %v765, %v3358
      %v3360 = vpop.f32.mrf.mxu0
      %v3361 = vpop.f32.mrf.mxu0
      %v3362 = vadd.f32 %v765, %v3361
      %v3363 = vpop.f32.mrf.mxu0
      %3364 = vmatprep.mubr.bf16.mxu0 0
      %3365 = vmatmul.mubr.bf16.gmra.mxu0 %v2314
      %v3366 = vpop.f32.mrf.mxu0
      %v3367 = vadd.f32 %v765, %v3366
      %v3368 = vpop.f32.mrf.mxu0
      %v3369 = vpop.f32.mrf.mxu0
      %v3370 = vadd.f32 %v765, %v3369
      %v3371 = vpop.f32.mrf.mxu0
      %3372 = vmatprep.mubr.bf16.mxu0 0
      %3373 = vmatmul.mubr.bf16.gmra.mxu0 %v2317
      %v3374 = vpop.f32.mrf.mxu0
      %v3375 = vadd.f32 %v765, %v3374
      %v3376 = vpop.f32.mrf.mxu0
      %v3377 = vpop.f32.mrf.mxu0
      %v3378 = vadd.f32 %v765, %v3377
      %v3379 = vpop.f32.mrf.mxu0
      %3380 = vmatprep.mubr.bf16.mxu0 0
      %3381 = vmatmul.mubr.bf16.gmra.mxu0 %v2320
      %v3382 = vpop.f32.mrf.mxu0
      %v3383 = vadd.f32 %v765, %v3382
      %v3384 = vpop.f32.mrf.mxu0
      %v3385 = vpop.f32.mrf.mxu0
      %v3386 = vadd.f32 %v765, %v3385
      %v3387 = vpop.f32.mrf.mxu0
      %3388 = vmatprep.mubr.bf16.mxu0 0
      %3389 = vmatmul.mubr.bf16.gmra.mxu0 %v2323
      %v3390 = vpop.f32.mrf.mxu0
      %v3391 = vadd.f32 %v765, %v3390
      %v3392 = vpop.f32.mrf.mxu0
      %v3393 = vpop.f32.mrf.mxu0
      %v3394 = vadd.f32 %v765, %v3393
      %v3395 = vpop.f32.mrf.mxu0
      %3396 = vmatprep.mubr.bf16.mxu0 0
      %3397 = vmatmul.mubr.bf16.gmra.mxu0 %v2326
      %v3398 = vpop.f32.mrf.mxu0
      %v3399 = vadd.f32 %v765, %v3398
      %v3400 = vpop.f32.mrf.mxu0
      %v3401 = vpop.f32.mrf.mxu0
      %v3402 = vadd.f32 %v765, %v3401
      %v3403 = vpop.f32.mrf.mxu0
      %3404 = vmatprep.mubr.bf16.mxu0 0
      %3405 = vmatmul.mubr.bf16.gmra.mxu0 %v2329
      %v3406 = vpop.f32.mrf.mxu0
      %v3407 = vadd.f32 %v765, %v3406
      %v3408 = vpop.f32.mrf.mxu0
      %v3409 = vpop.f32.mrf.mxu0
      %v3410 = vadd.f32 %v765, %v3409
      %v3411 = vpop.f32.mrf.mxu0
      %3412 = vmatprep.mubr.bf16.mxu0 0
      %3413 = vmatmul.mubr.bf16.gmra.mxu0 %v2332
      %v3414 = vpop.f32.mrf.mxu0
      %v3415 = vadd.f32 %v765, %v3414
      %v3416 = vpop.f32.mrf.mxu0
      %v3417 = vpop.f32.mrf.mxu0
      %v3418 = vadd.f32 %v765, %v3417
      %v3419 = vpop.f32.mrf.mxu0
      %3420 = vmatprep.mubr.bf16.mxu0 0
      %3421 = vmatmul.mubr.bf16.gmra.mxu0 %v2335
      %v3422 = vpop.f32.mrf.mxu0
      %v3423 = vadd.f32 %v765, %v3422
      %v3424 = vpop.f32.mrf.mxu0
      %v3425 = vpop.f32.mrf.mxu0
      %v3426 = vadd.f32 %v765, %v3425
      %v3427 = vpop.f32.mrf.mxu0
      %3428 = vmatprep.mubr.bf16.mxu0 0
      %3429 = vmatmul.mubr.bf16.gmra.mxu0 %v2338
      %v3430 = vpop.f32.mrf.mxu0
      %v3431 = vadd.f32 %v765, %v3430
      %v3432 = vpop.f32.mrf.mxu0
      %v3433 = vpop.f32.mrf.mxu0
      %v3434 = vadd.f32 %v765, %v3433
      %v3435 = vpop.f32.mrf.mxu0
      %3436 = vmatprep.mubr.bf16.mxu0 0
      %3437 = vmatmul.mubr.bf16.gmra.mxu0 %v2341
      %v3438 = vpop.f32.mrf.mxu0
      %v3439 = vadd.f32 %v765, %v3438
      %v3440 = vpop.f32.mrf.mxu0
      %v3441 = vpop.f32.mrf.mxu0
      %v3442 = vadd.f32 %v765, %v3441
      %v3443 = vpop.f32.mrf.mxu0
      %3444 = vmatprep.mubr.bf16.mxu0 0
      %3445 = vmatmul.mubr.bf16.gmra.mxu0 %v2344
      %v3446 = vpop.f32.mrf.mxu0
      %v3447 = vadd.f32 %v765, %v3446
      %v3448 = vpop.f32.mrf.mxu0
      %v3449 = vpop.f32.mrf.mxu0
      %v3450 = vadd.f32 %v765, %v3449
      %v3451 = vpop.f32.mrf.mxu0
      %3452 = vmatprep.mubr.bf16.mxu0 0
      %3453 = vmatmul.mubr.bf16.gmra.mxu0 %v2347
      %v3454 = vpop.f32.mrf.mxu0
      %v3455 = vadd.f32 %v765, %v3454
      %v3456 = vpop.f32.mrf.mxu0
      %v3457 = vpop.f32.mrf.mxu0
      %v3458 = vadd.f32 %v765, %v3457
      %v3459 = vpop.f32.mrf.mxu0
      %3460 = vmatprep.mubr.bf16.mxu0 0
      %3461 = vmatmul.mubr.bf16.gmra.mxu0 %v2350
      %v3462 = vpop.f32.mrf.mxu0
      %v3463 = vadd.f32 %v765, %v3462
      %v3464 = vpop.f32.mrf.mxu0
      %v3465 = vpop.f32.mrf.mxu0
      %v3466 = vadd.f32 %v765, %v3465
      %v3467 = vpop.f32.mrf.mxu0
      %3468 = vmatprep.mubr.bf16.mxu0 0
      %3469 = vmatmul.mubr.bf16.gmra.mxu0 %v2353
      %v3470 = vpop.f32.mrf.mxu0
      %v3471 = vadd.f32 %v765, %v3470
      %v3472 = vpop.f32.mrf.mxu0
      %v3473 = vpop.f32.mrf.mxu0
      %v3474 = vadd.f32 %v765, %v3473
      %v3475 = vpop.f32.mrf.mxu0
      %3476 = vmatprep.mubr.bf16.mxu0 0
      %3477 = vmatmul.mubr.bf16.gmra.mxu0 %v2356
      %v3478 = vpop.f32.mrf.mxu0
      %v3479 = vadd.f32 %v765, %v3478
      %v3480 = vpop.f32.mrf.mxu0
      %v3481 = vpop.f32.mrf.mxu0
      %v3482 = vadd.f32 %v765, %v3481
      %v3483 = vpop.f32.mrf.mxu0
      %3484 = vmatprep.mubr.bf16.mxu0 0
      %3485 = vmatmul.mubr.bf16.gmra.mxu0 %v2359
      %v3486 = vpop.f32.mrf.mxu0
      %v3487 = vadd.f32 %v765, %v3486
      %v3488 = vpop.f32.mrf.mxu0
      %v3489 = vpop.f32.mrf.mxu0
      %v3490 = vadd.f32 %v765, %v3489
      %v3491 = vpop.f32.mrf.mxu0
      %3492 = vmatprep.mubr.bf16.mxu0 0
      %3493 = vmatmul.mubr.bf16.gmra.mxu0 %v2362
      %v3494 = vpop.f32.mrf.mxu0
      %v3495 = vadd.f32 %v765, %v3494
      %v3496 = vpop.f32.mrf.mxu0
      %v3497 = vpop.f32.mrf.mxu0
      %v3498 = vadd.f32 %v765, %v3497
      %v3499 = vpop.f32.mrf.mxu0
      %3500 = vmatprep.mubr.bf16.mxu0 0
      %3501 = vmatmul.mubr.bf16.gmra.mxu0 %v2365
      %v3502 = vpop.f32.mrf.mxu0
      %v3503 = vadd.f32 %v765, %v3502
      %v3504 = vpop.f32.mrf.mxu0
      %v3505 = vpop.f32.mrf.mxu0
      %v3506 = vadd.f32 %v765, %v3505
      %v3507 = vpop.f32.mrf.mxu0
      %3508 = vmatprep.mubr.bf16.mxu0 0
      %3509 = vmatmul.mubr.bf16.gmra.mxu0 %v2368
      %v3510 = vpop.f32.mrf.mxu0
      %v3511 = vadd.f32 %v765, %v3510
      %v3512 = vpop.f32.mrf.mxu0
      %v3513 = vpop.f32.mrf.mxu0
      %v3514 = vadd.f32 %v765, %v3513
      %v3515 = vpop.f32.mrf.mxu0
      %3516 = vmatprep.mubr.bf16.mxu0 0
      %3517 = vmatmul.mubr.bf16.gmra.mxu0 %v2371
      %v3518 = vpop.f32.mrf.mxu0
      %v3519 = vadd.f32 %v765, %v3518
      %v3520 = vpop.f32.mrf.mxu0
      %v3521 = vpop.f32.mrf.mxu0
      %v3522 = vadd.f32 %v765, %v3521
      %v3523 = vpop.f32.mrf.mxu0
      %3524 = vmatprep.mubr.bf16.mxu0 0
      %3525 = vmatmul.mubr.bf16.gmra.mxu0 %v2374
      %v3526 = vpop.f32.mrf.mxu0
      %v3527 = vadd.f32 %v765, %v3526
      %v3528 = vpop.f32.mrf.mxu0
      %v3529 = vpop.f32.mrf.mxu0
      %v3530 = vadd.f32 %v765, %v3529
      %v3531 = vpop.f32.mrf.mxu0
      %3532 = vmatprep.mubr.bf16.mxu0 0
      %3533 = vmatmul.mubr.bf16.gmra.mxu0 %v2377
      %v3534 = vpop.f32.mrf.mxu0
      %v3535 = vadd.f32 %v765, %v3534
      %v3536 = vpop.f32.mrf.mxu0
      %v3537 = vpop.f32.mrf.mxu0
      %v3538 = vadd.f32 %v765, %v3537
      %v3539 = vpop.f32.mrf.mxu0
      %3540 = vmatprep.mubr.bf16.mxu0 0
      %3541 = vmatmul.mubr.bf16.gmra.mxu0 %v2380
      %v3542 = vpop.f32.mrf.mxu0
      %v3543 = vadd.f32 %v765, %v3542
      %v3544 = vpop.f32.mrf.mxu0
      %v3545 = vpop.f32.mrf.mxu0
      %v3546 = vadd.f32 %v765, %v3545
      %v3547 = vpop.f32.mrf.mxu0
      %3548 = vmatprep.mubr.bf16.mxu0 0
      %3549 = vmatmul.mubr.bf16.gmra.mxu0 %v2383
      %v3550 = vpop.f32.mrf.mxu0
      %v3551 = vadd.f32 %v765, %v3550
      %v3552 = vpop.f32.mrf.mxu0
      %v3553 = vpop.f32.mrf.mxu0
      %v3554 = vadd.f32 %v765, %v3553
      %v3555 = vpop.f32.mrf.mxu0
      %3556 = vmatprep.mubr.bf16.mxu0 0
      %3557 = vmatmul.mubr.bf16.gmra.mxu0 %v2386
      %v3558 = vpop.f32.mrf.mxu0
      %v3559 = vadd.f32 %v765, %v3558
      %v3560 = vpop.f32.mrf.mxu0
      %v3561 = vpop.f32.mrf.mxu0
      %v3562 = vadd.f32 %v765, %v3561
      %v3563 = vpop.f32.mrf.mxu0
      %3564 = vmatprep.mubr.bf16.mxu0 0
      %3565 = vmatmul.mubr.bf16.gmra.mxu0 %v2389
      %v3566 = vpop.f32.mrf.mxu0
      %v3567 = vadd.f32 %v765, %v3566
      %v3568 = vpop.f32.mrf.mxu0
      %v3569 = vpop.f32.mrf.mxu0
      %v3570 = vadd.f32 %v765, %v3569
      %v3571 = vpop.f32.mrf.mxu0
      %3572 = vmatprep.mubr.bf16.mxu0 0
      %3573 = vmatmul.mubr.bf16.gmra.mxu0 %v2392
      %v3574 = vpop.f32.mrf.mxu0
      %v3575 = vadd.f32 %v765, %v3574
      %v3576 = vpop.f32.mrf.mxu0
      %v3577 = vpop.f32.mrf.mxu0
      %v3578 = vadd.f32 %v765, %v3577
      %v3579 = vpop.f32.mrf.mxu0
      %3580 = vmatprep.mubr.bf16.mxu0 0
      %3581 = vmatmul.mubr.bf16.gmra.mxu0 %v2395
      %v3582 = vpop.f32.mrf.mxu0
      %v3583 = vadd.f32 %v765, %v3582
      %v3584 = vpop.f32.mrf.mxu0
      %v3585 = vpop.f32.mrf.mxu0
      %v3586 = vadd.f32 %v765, %v3585
      %v3587 = vpop.f32.mrf.mxu0
      %3588 = vmatprep.mubr.bf16.mxu0 0
      %3589 = vmatmul.mubr.bf16.gmra.mxu0 %v2398
      %v3590 = vpop.f32.mrf.mxu0
      %v3591 = vadd.f32 %v765, %v3590
      %v3592 = vpop.f32.mrf.mxu0
      %v3593 = vpop.f32.mrf.mxu0
      %v3594 = vadd.f32 %v765, %v3593
      %v3595 = vpop.f32.mrf.mxu0
      %3596 = vmatprep.mubr.bf16.mxu0 0
      %3597 = vmatmul.mubr.bf16.gmra.mxu0 %v2401
      %v3598 = vpop.f32.mrf.mxu0
      %v3599 = vadd.f32 %v765, %v3598
      %v3600 = vpop.f32.mrf.mxu0
      %v3601 = vpop.f32.mrf.mxu0
      %v3602 = vadd.f32 %v765, %v3601
      %v3603 = vpop.f32.mrf.mxu0
      %3604 = vmatprep.mubr.bf16.mxu0 0
      %3605 = vmatmul.mubr.bf16.gmra.mxu0 %v2404
      %v3606 = vpop.f32.mrf.mxu0
      %v3607 = vadd.f32 %v765, %v3606
      %v3608 = vpop.f32.mrf.mxu0
      %v3609 = vpop.f32.mrf.mxu0
      %v3610 = vadd.f32 %v765, %v3609
      %v3611 = vpop.f32.mrf.mxu0
      %3612 = vmatprep.mubr.bf16.mxu0 0
      %3613 = vmatmul.mubr.bf16.gmra.mxu0 %v2407
      %v3614 = vpop.f32.mrf.mxu0
      %v3615 = vadd.f32 %v765, %v3614
      %v3616 = vpop.f32.mrf.mxu0
      %v3617 = vpop.f32.mrf.mxu0
      %v3618 = vadd.f32 %v765, %v3617
      %v3619 = vpop.f32.mrf.mxu0
      %3620 = vmatprep.mubr.bf16.mxu0 0
      %3621 = vmatmul.mubr.bf16.gmra.mxu0 %v2410
      %v3622 = vpop.f32.mrf.mxu0
      %v3623 = vadd.f32 %v765, %v3622
      %v3624 = vpop.f32.mrf.mxu0
      %v3625 = vpop.f32.mrf.mxu0
      %v3626 = vadd.f32 %v765, %v3625
      %v3627 = vpop.f32.mrf.mxu0
      %3628 = vmatprep.mubr.bf16.mxu0 0
      %3629 = vmatmul.mubr.bf16.gmra.mxu0 %v2413
      %v3630 = vpop.f32.mrf.mxu0
      %v3631 = vadd.f32 %v765, %v3630
      %v3632 = vpop.f32.mrf.mxu0
      %v3633 = vpop.f32.mrf.mxu0
      %v3634 = vadd.f32 %v765, %v3633
      %v3635 = vpop.f32.mrf.mxu0
      %3636 = vmatprep.mubr.bf16.mxu0 0
      %3637 = vmatmul.mubr.bf16.gmra.mxu0 %v2416
      %v3638 = vpop.f32.mrf.mxu0
      %v3639 = vadd.f32 %v765, %v3638
      %v3640 = vpop.f32.mrf.mxu0
      %v3641 = vpop.f32.mrf.mxu0
      %v3642 = vadd.f32 %v765, %v3641
      %v3643 = vpop.f32.mrf.mxu0
      %3644 = vmatprep.mubr.bf16.mxu0 0
      %3645 = vmatmul.mubr.bf16.gmra.mxu0 %v2419
      %v3646 = vpop.f32.mrf.mxu0
      %v3647 = vadd.f32 %v765, %v3646
      %v3648 = vpop.f32.mrf.mxu0
      %v3649 = vpop.f32.mrf.mxu0
      %v3650 = vadd.f32 %v765, %v3649
      %v3651 = vpop.f32.mrf.mxu0
      %3652 = vmatprep.mubr.bf16.mxu0 0
      %3653 = vmatmul.mubr.bf16.gmra.mxu0 %v2422
      %v3654 = vpop.f32.mrf.mxu0
      %v3655 = vadd.f32 %v765, %v3654
      %v3656 = vpop.f32.mrf.mxu0
      %v3657 = vpop.f32.mrf.mxu0
      %v3658 = vadd.f32 %v765, %v3657
      %v3659 = vpop.f32.mrf.mxu0
      %3660 = vmatprep.mubr.bf16.mxu0 0
      %3661 = vmatmul.mubr.bf16.gmra.mxu0 %v2425
      %v3662 = vpop.f32.mrf.mxu0
      %v3663 = vadd.f32 %v765, %v3662
      %v3664 = vpop.f32.mrf.mxu0
      %v3665 = vpop.f32.mrf.mxu0
      %v3666 = vadd.f32 %v765, %v3665
      %v3667 = vpop.f32.mrf.mxu0
      %3668 = vmatprep.mubr.bf16.mxu0 0
      %3669 = vmatmul.mubr.bf16.gmra.mxu0 %v2428
      %v3670 = vpop.f32.mrf.mxu0
      %v3671 = vadd.f32 %v765, %v3670
      %v3672 = vpop.f32.mrf.mxu0
      %v3673 = vpop.f32.mrf.mxu0
      %v3674 = vadd.f32 %v765, %v3673
      %v3675 = vpop.f32.mrf.mxu0
      %3676 = vmatprep.mubr.bf16.mxu0 0
      %3677 = vmatmul.mubr.bf16.gmra.mxu0 %v2431
      %v3678 = vpop.f32.mrf.mxu0
      %v3679 = vadd.f32 %v765, %v3678
      %v3680 = vpop.f32.mrf.mxu0
      %v3681 = vpop.f32.mrf.mxu0
      %v3682 = vadd.f32 %v765, %v3681
      %v3683 = vpop.f32.mrf.mxu0
      %3684 = vmatprep.mubr.bf16.mxu0 0
      %3685 = vmatmul.mubr.bf16.gmra.mxu0 %v2434
      %v3686 = vpop.f32.mrf.mxu0
      %v3687 = vadd.f32 %v765, %v3686
      %v3688 = vpop.f32.mrf.mxu0
      %v3689 = vpop.f32.mrf.mxu0
      %v3690 = vadd.f32 %v765, %v3689
      %v3691 = vpop.f32.mrf.mxu0
      %3692 = vmatprep.mubr.bf16.mxu0 0
      %3693 = vmatmul.mubr.bf16.gmra.mxu0 %v2437
      %v3694 = vpop.f32.mrf.mxu0
      %v3695 = vadd.f32 %v765, %v3694
      %v3696 = vpop.f32.mrf.mxu0
      %v3697 = vpop.f32.mrf.mxu0
      %v3698 = vadd.f32 %v765, %v3697
      %v3699 = vpop.f32.mrf.mxu0
      %3700 = vmatprep.mubr.bf16.mxu0 0
      %3701 = vmatmul.mubr.bf16.gmra.mxu0 %v2440
      %v3702 = vpop.f32.mrf.mxu0
      %v3703 = vadd.f32 %v765, %v3702
      %v3704 = vpop.f32.mrf.mxu0
      %v3705 = vpop.f32.mrf.mxu0
      %v3706 = vadd.f32 %v765, %v3705
      %v3707 = vpop.f32.mrf.mxu0
      %3708 = vmatprep.mubr.bf16.mxu0 0
      %3709 = vmatmul.mubr.bf16.gmra.mxu0 %v2443
      %v3710 = vpop.f32.mrf.mxu0
      %v3711 = vadd.f32 %v765, %v3710
      %v3712 = vpop.f32.mrf.mxu0
      %v3713 = vpop.f32.mrf.mxu0
      %v3714 = vadd.f32 %v765, %v3713
      %v3715 = vpop.f32.mrf.mxu0
      %3716 = vmatprep.mubr.bf16.mxu0 0
      %3717 = vmatmul.mubr.bf16.gmra.mxu0 %v2446
      %v3718 = vpop.f32.mrf.mxu0
      %v3719 = vadd.f32 %v765, %v3718
      %v3720 = vpop.f32.mrf.mxu0
      %v3721 = vpop.f32.mrf.mxu0
      %v3722 = vadd.f32 %v765, %v3721
      %v3723 = vpop.f32.mrf.mxu0
      %3724 = vmatprep.mubr.bf16.mxu0 0
      %3725 = vmatmul.mubr.bf16.gmra.mxu0 %v2449
      %v3726 = vpop.f32.mrf.mxu0
      %v3727 = vadd.f32 %v765, %v3726
      %v3728 = vpop.f32.mrf.mxu0
      %v3729 = vpop.f32.mrf.mxu0
      %v3730 = vadd.f32 %v765, %v3729
      %v3731 = vpop.f32.mrf.mxu0
      %3732 = vmatprep.mubr.bf16.mxu0 0
      %3733 = vmatmul.mubr.bf16.gmra.mxu0 %v2452
      %v3734 = vpop.f32.mrf.mxu0
      %v3735 = vadd.f32 %v765, %v3734
      %v3736 = vpop.f32.mrf.mxu0
      %v3737 = vpop.f32.mrf.mxu0
      %v3738 = vadd.f32 %v765, %v3737
      %v3739 = vpop.f32.mrf.mxu0
      %3740 = vmatprep.mubr.bf16.mxu0 0
      %3741 = vmatmul.mubr.bf16.gmra.mxu0 %v2455
      %v3742 = vpop.f32.mrf.mxu0
      %v3743 = vadd.f32 %v765, %v3742
      %v3744 = vpop.f32.mrf.mxu0
      %v3745 = vpop.f32.mrf.mxu0
      %v3746 = vadd.f32 %v765, %v3745
      %v3747 = vpop.f32.mrf.mxu0
      %3748 = vmatprep.mubr.bf16.mxu0 0
      %3749 = vmatmul.mubr.bf16.gmra.mxu0 %v2458
      %v3750 = vpop.f32.mrf.mxu0
      %v3751 = vadd.f32 %v765, %v3750
      %v3752 = vpop.f32.mrf.mxu0
      %v3753 = vpop.f32.mrf.mxu0
      %v3754 = vadd.f32 %v765, %v3753
      %v3755 = vpop.f32.mrf.mxu0
      %3756 = vmatprep.mubr.bf16.mxu0 0
      %3757 = vmatmul.mubr.bf16.gmra.mxu0 %v2461
      %v3758 = vpop.f32.mrf.mxu0
      %v3759 = vadd.f32 %v765, %v3758
      %v3760 = vpop.f32.mrf.mxu0
      %v3761 = vpop.f32.mrf.mxu0
      %v3762 = vadd.f32 %v765, %v3761
      %v3763 = vpop.f32.mrf.mxu0
      %3764 = vmatprep.mubr.bf16.mxu0 0
      %3765 = vmatmul.mubr.bf16.gmra.mxu0 %v2464
      %v3766 = vpop.f32.mrf.mxu0
      %v3767 = vadd.f32 %v765, %v3766
      %v3768 = vpop.f32.mrf.mxu0
      %v3769 = vpop.f32.mrf.mxu0
      %v3770 = vadd.f32 %v765, %v3769
      %v3771 = vpop.f32.mrf.mxu0
      %3772 = vmatprep.mubr.bf16.mxu0 0
      %3773 = vmatmul.mubr.bf16.gmra.mxu0 %v2467
      %v3774 = vpop.f32.mrf.mxu0
      %v3775 = vadd.f32 %v765, %v3774
      %v3776 = vpop.f32.mrf.mxu0
      %v3777 = vpop.f32.mrf.mxu0
      %v3778 = vadd.f32 %v765, %v3777
      %v3779 = vpop.f32.mrf.mxu0
      %3780 = vmatprep.mubr.bf16.mxu0 0
      %3781 = vmatmul.mubr.bf16.gmra.mxu0 %v2470
      %v3782 = vpop.f32.mrf.mxu0
      %v3783 = vadd.f32 %v765, %v3782
      %v3784 = vpop.f32.mrf.mxu0
      %v3785 = vpop.f32.mrf.mxu0
      %v3786 = vadd.f32 %v765, %v3785
      %v3787 = vpop.f32.mrf.mxu0
      %3788 = vmatprep.mubr.bf16.mxu0 0
      %3789 = vmatmul.mubr.bf16.gmra.mxu0 %v2473
      %v3790 = vpop.f32.mrf.mxu0
      %v3791 = vadd.f32 %v765, %v3790
      %v3792 = vpop.f32.mrf.mxu0
      %v3793 = vpop.f32.mrf.mxu0
      %v3794 = vadd.f32 %v765, %v3793
      %v3795 = vpop.f32.mrf.mxu0
      %3796 = vmatprep.mubr.bf16.mxu0 0
      %3797 = vmatmul.mubr.bf16.gmra.mxu0 %v2476
      %v3798 = vpop.f32.mrf.mxu0
      %v3799 = vadd.f32 %v765, %v3798
      %v3800 = vpop.f32.mrf.mxu0
      %v3801 = vpop.f32.mrf.mxu0
      %v3802 = vadd.f32 %v765, %v3801
      %v3803 = vpop.f32.mrf.mxu0
      %3804 = vmatprep.mubr.bf16.mxu0 0
      %3805 = vmatmul.mubr.bf16.gmra.mxu0 %v2479
      %v3806 = vpop.f32.mrf.mxu0
      %v3807 = vadd.f32 %v765, %v3806
      %v3808 = vpop.f32.mrf.mxu0
      %v3809 = vpop.f32.mrf.mxu0
      %v3810 = vadd.f32 %v765, %v3809
      %v3811 = vpop.f32.mrf.mxu0
      %3812 = vmatprep.mubr.bf16.mxu0 0
      %3813 = vmatmul.mubr.bf16.gmra.mxu0 %v2482
      %v3814 = vpop.f32.mrf.mxu0
      %v3815 = vadd.f32 %v765, %v3814
      %v3816 = vpop.f32.mrf.mxu0
      %v3817 = vpop.f32.mrf.mxu0
      %v3818 = vadd.f32 %v765, %v3817
      %v3819 = vpop.f32.mrf.mxu0
      %3820 = vmatprep.mubr.bf16.mxu0 0
      %3821 = vmatmul.mubr.bf16.gmra.mxu0 %v2485
      %v3822 = vpop.f32.mrf.mxu0
      %v3823 = vadd.f32 %v765, %v3822
      %v3824 = vpop.f32.mrf.mxu0
      %v3825 = vpop.f32.mrf.mxu0
      %v3826 = vadd.f32 %v765, %v3825
      %v3827 = vpop.f32.mrf.mxu0
      %3828 = vmatprep.mubr.bf16.mxu0 0
      %3829 = vmatmul.mubr.bf16.gmra.mxu0 %v2488
      %v3830 = vpop.f32.mrf.mxu0
      %v3831 = vadd.f32 %v765, %v3830
      %v3832 = vpop.f32.mrf.mxu0
      %v3833 = vpop.f32.mrf.mxu0
      %v3834 = vadd.f32 %v765, %v3833
      %v3835 = vpop.f32.mrf.mxu0
      %3836 = vmatprep.mubr.bf16.mxu0 0
      %3837 = vmatmul.mubr.bf16.gmra.mxu0 %v2491
      %v3838 = vpop.f32.mrf.mxu0
      %v3839 = vadd.f32 %v765, %v3838
      %v3840 = vpop.f32.mrf.mxu0
      %v3841 = vpop.f32.mrf.mxu0
      %v3842 = vadd.f32 %v765, %v3841
      %v3843 = vpop.f32.mrf.mxu0
      %3844 = vmatprep.mubr.bf16.mxu0 0
      %3845 = vmatmul.mubr.bf16.gmra.mxu0 %v2494
      %v3846 = vpop.f32.mrf.mxu0
      %v3847 = vadd.f32 %v765, %v3846
      %v3848 = vpop.f32.mrf.mxu0
      %v3849 = vpop.f32.mrf.mxu0
      %v3850 = vadd.f32 %v765, %v3849
      %v3851 = vpop.f32.mrf.mxu0
      %3852 = vmatprep.mubr.bf16.mxu0 0
      %3853 = vmatmul.mubr.bf16.gmra.mxu0 %v2497
      %v3854 = vpop.f32.mrf.mxu0
      %v3855 = vadd.f32 %v765, %v3854
      %v3856 = vpop.f32.mrf.mxu0
      %v3857 = vpop.f32.mrf.mxu0
      %v3858 = vadd.f32 %v765, %v3857
      %v3859 = vpop.f32.mrf.mxu0
      %3860 = vmatprep.mubr.bf16.mxu0 0
      %3861 = vmatmul.mubr.bf16.gmra.mxu0 %v2500
      %v3862 = vpop.f32.mrf.mxu0
      %v3863 = vadd.f32 %v765, %v3862
      %v3864 = vpop.f32.mrf.mxu0
      %v3865 = vpop.f32.mrf.mxu0
      %v3866 = vadd.f32 %v765, %v3865
      %v3867 = vpop.f32.mrf.mxu0
      %3868 = vmatprep.mubr.bf16.mxu0 0
      %3869 = vmatmul.mubr.bf16.gmra.mxu0 %v2503
      %v3870 = vpop.f32.mrf.mxu0
      %v3871 = vadd.f32 %v765, %v3870
      %v3872 = vpop.f32.mrf.mxu0
      %v3873 = vpop.f32.mrf.mxu0
      %v3874 = vadd.f32 %v765, %v3873
      %v3875 = vpop.f32.mrf.mxu0
      %3876 = vmatprep.mubr.bf16.mxu0 0
      %3877 = vmatmul.mubr.bf16.gmra.mxu0 %v2506
      %v3878 = vpop.f32.mrf.mxu0
      %v3879 = vadd.f32 %v765, %v3878
      %v3880 = vpop.f32.mrf.mxu0
      %v3881 = vpop.f32.mrf.mxu0
      %v3882 = vadd.f32 %v765, %v3881
      %v3883 = vpop.f32.mrf.mxu0
      %3884 = vmatprep.mubr.bf16.mxu0 0
      %3885 = vmatmul.mubr.bf16.gmra.mxu0 %v2509
      %v3886 = vpop.f32.mrf.mxu0
      %v3887 = vadd.f32 %v765, %v3886
      %v3888 = vpop.f32.mrf.mxu0
      %v3889 = vpop.f32.mrf.mxu0
      %v3890 = vadd.f32 %v765, %v3889
      %v3891 = vpop.f32.mrf.mxu0
      %3892 = vmatprep.mubr.bf16.mxu0 0
      %3893 = vmatmul.mubr.bf16.gmra.mxu0 %v2512
      %v3894 = vpop.f32.mrf.mxu0
      %v3895 = vadd.f32 %v765, %v3894
      %v3896 = vpop.f32.mrf.mxu0
      %v3897 = vpop.f32.mrf.mxu0
      %v3898 = vadd.f32 %v765, %v3897
      %v3899 = vpop.f32.mrf.mxu0
      %3900 = vmatprep.mubr.bf16.mxu0 0
      %3901 = vmatmul.mubr.bf16.gmra.mxu0 %v2515
      %v3902 = vpop.f32.mrf.mxu0
      %v3903 = vadd.f32 %v765, %v3902
      %v3904 = vpop.f32.mrf.mxu0
      %v3905 = vpop.f32.mrf.mxu0
      %v3906 = vadd.f32 %v765, %v3905
      %v3907 = vpop.f32.mrf.mxu0
      %3908 = vmatprep.mubr.bf16.mxu0 0
      %3909 = vmatmul.mubr.bf16.gmra.mxu0 %v2518
      %v3910 = vpop.f32.mrf.mxu0
      %v3911 = vadd.f32 %v765, %v3910
      %v3912 = vpop.f32.mrf.mxu0
      %v3913 = vpop.f32.mrf.mxu0
      %v3914 = vadd.f32 %v765, %v3913
      %v3915 = vpop.f32.mrf.mxu0
      %3916 = vmatprep.mubr.bf16.mxu0 0
      %3917 = vmatmul.mubr.bf16.gmra.mxu0 %v2521
      %v3918 = vpop.f32.mrf.mxu0
      %v3919 = vadd.f32 %v765, %v3918
      %v3920 = vpop.f32.mrf.mxu0
      %v3921 = vpop.f32.mrf.mxu0
      %v3922 = vadd.f32 %v765, %v3921
      %v3923 = vpop.f32.mrf.mxu0
      %3924 = vmatprep.mubr.bf16.mxu0 0
      %3925 = vmatmul.mubr.bf16.gmra.mxu0 %v2524
      %v3926 = vpop.f32.mrf.mxu0
      %v3927 = vadd.f32 %v765, %v3926
      %v3928 = vpop.f32.mrf.mxu0
      %v3929 = vpop.f32.mrf.mxu0
      %v3930 = vadd.f32 %v765, %v3929
      %v3931 = vpop.f32.mrf.mxu0
      %3932 = vmatprep.mubr.bf16.mxu0 0
      %3933 = vmatmul.mubr.bf16.gmra.mxu0 %v2527
      %v3934 = vpop.f32.mrf.mxu0
      %v3935 = vadd.f32 %v765, %v3934
      %v3936 = vpop.f32.mrf.mxu0
      %v3937 = vpop.f32.mrf.mxu0
      %v3938 = vadd.f32 %v765, %v3937
      %v3939 = vpop.f32.mrf.mxu0
      %3940 = vmatprep.mubr.bf16.mxu0 0
      %3941 = vmatmul.mubr.bf16.gmra.mxu0 %v2530
      %v3942 = vpop.f32.mrf.mxu0
      %v3943 = vadd.f32 %v765, %v3942
      %v3944 = vpop.f32.mrf.mxu0
      %v3945 = vpop.f32.mrf.mxu0
      %v3946 = vadd.f32 %v765, %v3945
      %v3947 = vpop.f32.mrf.mxu0
      %3948 = vmatprep.mubr.bf16.mxu0 0
      %3949 = vmatmul.mubr.bf16.gmra.mxu0 %v2533
      %v3950 = vpop.f32.mrf.mxu0
      %v3951 = vadd.f32 %v765, %v3950
      %v3952 = vpop.f32.mrf.mxu0
      %v3953 = vpop.f32.mrf.mxu0
      %v3954 = vadd.f32 %v765, %v3953
      %v3955 = vpop.f32.mrf.mxu0
      %3956 = vmatprep.mubr.bf16.mxu0 0
      %3957 = vmatmul.mubr.bf16.gmra.mxu0 %v2536
      %v3958 = vpop.f32.mrf.mxu0
      %v3959 = vadd.f32 %v765, %v3958
      %v3960 = vpop.f32.mrf.mxu0
      %v3961 = vpop.f32.mrf.mxu0
      %v3962 = vadd.f32 %v765, %v3961
      %v3963 = vpop.f32.mrf.mxu0
      %3964 = vmatprep.mubr.bf16.mxu0 0
      %3965 = vmatmul.mubr.bf16.gmra.mxu0 %v2539
      %v3966 = vpop.f32.mrf.mxu0
      %v3967 = vadd.f32 %v765, %v3966
      %v3968 = vpop.f32.mrf.mxu0
      %v3969 = vpop.f32.mrf.mxu0
      %v3970 = vadd.f32 %v765, %v3969
      %v3971 = vpop.f32.mrf.mxu0
      %3972 = vmatprep.mubr.bf16.mxu0 0
      %3973 = vmatmul.mubr.bf16.gmra.mxu0 %v2542
      %v3974 = vpop.f32.mrf.mxu0
      %v3975 = vadd.f32 %v765, %v3974
      %v3976 = vpop.f32.mrf.mxu0
      %v3977 = vpop.f32.mrf.mxu0
      %v3978 = vadd.f32 %v765, %v3977
      %v3979 = vpop.f32.mrf.mxu0
      %3980 = vmatprep.mubr.bf16.mxu0 0
      %3981 = vmatmul.mubr.bf16.gmra.mxu0 %v2545
      %v3982 = vpop.f32.mrf.mxu0
      %v3983 = vadd.f32 %v765, %v3982
      %v3984 = vpop.f32.mrf.mxu0
      %v3985 = vpop.f32.mrf.mxu0
      %v3986 = vadd.f32 %v765, %v3985
      %v3987 = vpop.f32.mrf.mxu0
      %3988 = vmatprep.mubr.bf16.mxu0 0
      %3989 = vmatmul.mubr.bf16.gmra.mxu0 %v2548
      %v3990 = vpop.f32.mrf.mxu0
      %v3991 = vadd.f32 %v765, %v3990
      %v3992 = vpop.f32.mrf.mxu0
      %v3993 = vpop.f32.mrf.mxu0
      %v3994 = vadd.f32 %v765, %v3993
      %v3995 = vpop.f32.mrf.mxu0
      %3996 = vmatprep.mubr.bf16.mxu0 0
      %3997 = vmatmul.mubr.bf16.gmra.mxu0 %v2551
      %v3998 = vpop.f32.mrf.mxu0
      %v3999 = vadd.f32 %v765, %v3998
      %v4000 = vpop.f32.mrf.mxu0
      %v4001 = vpop.f32.mrf.mxu0
      %v4002 = vadd.f32 %v765, %v4001
      %v4003 = vpop.f32.mrf.mxu0
      %4004 = vmatprep.mubr.bf16.mxu0 0
      %4005 = vmatmul.mubr.bf16.gmra.mxu0 %v2554
      %v4006 = vpop.f32.mrf.mxu0
      %v4007 = vadd.f32 %v765, %v4006
      %v4008 = vpop.f32.mrf.mxu0
      %v4009 = vpop.f32.mrf.mxu0
      %v4010 = vadd.f32 %v765, %v4009
      %v4011 = vpop.f32.mrf.mxu0
      %4012 = vmatprep.mubr.bf16.mxu0 0
      %4013 = vmatmul.mubr.bf16.gmra.mxu0 %v2557
      %v4014 = vpop.f32.mrf.mxu0
      %v4015 = vadd.f32 %v765, %v4014
      %v4016 = vpop.f32.mrf.mxu0
      %v4017 = vpop.f32.mrf.mxu0
      %v4018 = vadd.f32 %v765, %v4017
      %v4019 = vpop.f32.mrf.mxu0
      %4020 = vmatprep.mubr.bf16.mxu0 0
      %4021 = vmatmul.mubr.bf16.gmra.mxu0 %v2560
      %v4022 = vpop.f32.mrf.mxu0
      %v4023 = vadd.f32 %v765, %v4022
      %v4024 = vpop.f32.mrf.mxu0
      %v4025 = vpop.f32.mrf.mxu0
      %v4026 = vadd.f32 %v765, %v4025
      %v4027 = vpop.f32.mrf.mxu0
      %4028 = vmatprep.mubr.bf16.mxu0 0
      %4029 = vmatmul.mubr.bf16.gmra.mxu0 %v2563
      %v4030 = vpop.f32.mrf.mxu0
      %v4031 = vadd.f32 %v765, %v4030
      %v4032 = vpop.f32.mrf.mxu0
      %v4033 = vpop.f32.mrf.mxu0
      %v4034 = vadd.f32 %v765, %v4033
      %v4035 = vpop.f32.mrf.mxu0
      %4036 = vmatprep.mubr.bf16.mxu0 0
      %4037 = vmatmul.mubr.bf16.gmra.mxu0 %v2566
      %v4038 = vpop.f32.mrf.mxu0
      %v4039 = vadd.f32 %v765, %v4038
      %v4040 = vpop.f32.mrf.mxu0
      %v4041 = vpop.f32.mrf.mxu0
      %v4042 = vadd.f32 %v765, %v4041
      %v4043 = vpop.f32.mrf.mxu0
      %4044 = vmatprep.mubr.bf16.mxu0 0
      %4045 = vmatmul.mubr.bf16.gmra.mxu0 %v2569
      %v4046 = vpop.f32.mrf.mxu0
      %v4047 = vadd.f32 %v765, %v4046
      %v4048 = vpop.f32.mrf.mxu0
      %v4049 = vpop.f32.mrf.mxu0
      %v4050 = vadd.f32 %v765, %v4049
      %v4051 = vpop.f32.mrf.mxu0
      %4052 = vmatprep.mubr.bf16.mxu0 0
      %4053 = vmatmul.mubr.bf16.gmra.mxu0 %v2572
      %v4054 = vpop.f32.mrf.mxu0
      %v4055 = vadd.f32 %v765, %v4054
      %v4056 = vpop.f32.mrf.mxu0
      %v4057 = vpop.f32.mrf.mxu0
      %v4058 = vadd.f32 %v765, %v4057
      %v4059 = vpop.f32.mrf.mxu0
      %4060 = vmatprep.mubr.bf16.mxu0 0
      %4061 = vmatmul.mubr.bf16.gmra.mxu0 %v2575
      %v4062 = vpop.f32.mrf.mxu0
      %v4063 = vadd.f32 %v765, %v4062
      %v4064 = vpop.f32.mrf.mxu0
      %v4065 = vpop.f32.mrf.mxu0
      %v4066 = vadd.f32 %v765, %v4065
      %v4067 = vpop.f32.mrf.mxu0
      %4068 = vmatprep.mubr.bf16.mxu0 0
      %4069 = vmatmul.mubr.bf16.gmra.mxu0 %v2578
      %v4070 = vpop.f32.mrf.mxu0
      %v4071 = vadd.f32 %v765, %v4070
      %v4072 = vpop.f32.mrf.mxu0
      %v4073 = vpop.f32.mrf.mxu0
      %v4074 = vadd.f32 %v765, %v4073
      %v4075 = vpop.f32.mrf.mxu0
      %4076 = vmatprep.mubr.bf16.mxu0 0
      %4077 = vmatmul.mubr.bf16.gmra.mxu0 %v2581
      %v4078 = vpop.f32.mrf.mxu0
      %v4079 = vadd.f32 %v765, %v4078
      %v4080 = vpop.f32.mrf.mxu0
      %v4081 = vpop.f32.mrf.mxu0
      %v4082 = vadd.f32 %v765, %v4081
      %v4083 = vpop.f32.mrf.mxu0
      %4084 = vmatprep.mubr.bf16.mxu0 0
      %4085 = vmatmul.mubr.bf16.gmra.mxu0 %v2584
      %v4086 = vpop.f32.mrf.mxu0
      %v4087 = vadd.f32 %v765, %v4086
      %v4088 = vpop.f32.mrf.mxu0
      %v4089 = vpop.f32.mrf.mxu0
      %v4090 = vadd.f32 %v765, %v4089
      %v4091 = vpop.f32.mrf.mxu0
      %4092 = vmatprep.mubr.bf16.mxu0 0
      %4093 = vmatmul.mubr.bf16.gmra.mxu0 %v2587
      %v4094 = vpop.f32.mrf.mxu0
      %v4095 = vadd.f32 %v765, %v4094
      %v4096 = vpop.f32.mrf.mxu0
      %v4097 = vpop.f32.mrf.mxu0
      %v4098 = vadd.f32 %v765, %v4097
      %v4099 = vpop.f32.mrf.mxu0
      %4100 = vmatprep.mubr.bf16.mxu0 0
      %4101 = vmatmul.mubr.bf16.gmra.mxu0 %v2590
      %v4102 = vpop.f32.mrf.mxu0
      %v4103 = vadd.f32 %v765, %v4102
      %v4104 = vpop.f32.mrf.mxu0
      %v4105 = vpop.f32.mrf.mxu0
      %v4106 = vadd.f32 %v765, %v4105
      %v4107 = vpop.f32.mrf.mxu0
      %4108 = vmatprep.mubr.bf16.mxu0 0
      %4109 = vmatmul.mubr.bf16.gmra.mxu0 %v2593
      %v4110 = vpop.f32.mrf.mxu0
      %v4111 = vadd.f32 %v765, %v4110
      %v4112 = vpop.f32.mrf.mxu0
      %v4113 = vpop.f32.mrf.mxu0
      %v4114 = vadd.f32 %v765, %v4113
      %v4115 = vpop.f32.mrf.mxu0
      %4116 = vmatprep.mubr.bf16.mxu0 0
      %4117 = vmatmul.mubr.bf16.gmra.mxu0 %v2596
      %v4118 = vpop.f32.mrf.mxu0
      %v4119 = vadd.f32 %v765, %v4118
      %v4120 = vpop.f32.mrf.mxu0
      %v4121 = vpop.f32.mrf.mxu0
      %v4122 = vadd.f32 %v765, %v4121
      %v4123 = vpop.f32.mrf.mxu0
      %4124 = vmatprep.mubr.bf16.mxu0 0
      %4125 = vmatmul.mubr.bf16.gmra.mxu0 %v2599
      %v4126 = vpop.f32.mrf.mxu0
      %v4127 = vadd.f32 %v765, %v4126
      %v4128 = vpop.f32.mrf.mxu0
      %v4129 = vpop.f32.mrf.mxu0
      %v4130 = vadd.f32 %v765, %v4129
      %v4131 = vpop.f32.mrf.mxu0
      %4132 = vmatprep.mubr.bf16.mxu0 0
      %4133 = vmatmul.mubr.bf16.gmra.mxu0 %v2602
      %v4134 = vpop.f32.mrf.mxu0
      %v4135 = vadd.f32 %v765, %v4134
      %v4136 = vpop.f32.mrf.mxu0
      %v4137 = vpop.f32.mrf.mxu0
      %v4138 = vadd.f32 %v765, %v4137
      %v4139 = vpop.f32.mrf.mxu0
      %4140 = vmatprep.mubr.bf16.mxu0 0
      %4141 = vmatmul.mubr.bf16.gmra.mxu0 %v2605
      %v4142 = vpop.f32.mrf.mxu0
      %v4143 = vadd.f32 %v765, %v4142
      %v4144 = vpop.f32.mrf.mxu0
      %v4145 = vpop.f32.mrf.mxu0
      %v4146 = vadd.f32 %v765, %v4145
      %v4147 = vpop.f32.mrf.mxu0
      %4148 = vmatprep.mubr.bf16.mxu0 0
      %4149 = vmatmul.mubr.bf16.gmra.mxu0 %v2608
      %v4150 = vpop.f32.mrf.mxu0
      %v4151 = vadd.f32 %v765, %v4150
      %v4152 = vpop.f32.mrf.mxu0
      %v4153 = vpop.f32.mrf.mxu0
      %v4154 = vadd.f32 %v765, %v4153
      %v4155 = vpop.f32.mrf.mxu0
      %4156 = vmatprep.mubr.bf16.mxu0 0
      %4157 = vmatmul.mubr.bf16.gmra.mxu0 %v2611
      %v4158 = vpop.f32.mrf.mxu0
      %v4159 = vadd.f32 %v765, %v4158
      %v4160 = vpop.f32.mrf.mxu0
      %v4161 = vpop.f32.mrf.mxu0
      %v4162 = vadd.f32 %v765, %v4161
      %v4163 = vpop.f32.mrf.mxu0
      %4164 = vmatprep.mubr.bf16.mxu0 0
      %4165 = vmatmul.mubr.bf16.gmra.mxu0 %v2614
      %v4166 = vpop.f32.mrf.mxu0
      %v4167 = vadd.f32 %v765, %v4166
      %v4168 = vpop.f32.mrf.mxu0
      %v4169 = vpop.f32.mrf.mxu0
      %v4170 = vadd.f32 %v765, %v4169
      %v4171 = vpop.f32.mrf.mxu0
      %4172 = vmatprep.mubr.bf16.mxu0 0
      %4173 = vmatmul.mubr.bf16.gmra.mxu0 %v2617
      %v4174 = vpop.f32.mrf.mxu0
      %v4175 = vadd.f32 %v765, %v4174
      %v4176 = vpop.f32.mrf.mxu0
      %v4177 = vpop.f32.mrf.mxu0
      %v4178 = vadd.f32 %v765, %v4177
      %v4179 = vpop.f32.mrf.mxu0
      %4180 = vmatprep.mubr.bf16.mxu0 0
      %4181 = vmatmul.mubr.bf16.gmra.mxu0 %v2620
      %v4182 = vpop.f32.mrf.mxu0
      %v4183 = vadd.f32 %v765, %v4182
      %v4184 = vpop.f32.mrf.mxu0
      %v4185 = vpop.f32.mrf.mxu0
      %v4186 = vadd.f32 %v765, %v4185
      %v4187 = vpop.f32.mrf.mxu0
      %4188 = vmatprep.mubr.bf16.mxu0 0
      %4189 = vmatmul.mubr.bf16.gmra.mxu0 %v2623
      %v4190 = vpop.f32.mrf.mxu0
      %v4191 = vadd.f32 %v765, %v4190
      %v4192 = vpop.f32.mrf.mxu0
      %v4193 = vpop.f32.mrf.mxu0
      %v4194 = vadd.f32 %v765, %v4193
      %v4195 = vpop.f32.mrf.mxu0
      %4196 = vmatprep.mubr.bf16.mxu0 0
      %4197 = vmatmul.mubr.bf16.gmra.mxu0 %v2626
      %v4198 = vpop.f32.mrf.mxu0
      %v4199 = vadd.f32 %v765, %v4198
      %v4200 = vpop.f32.mrf.mxu0
      %v4201 = vpop.f32.mrf.mxu0
      %v4202 = vadd.f32 %v765, %v4201
      %v4203 = vpop.f32.mrf.mxu0
      %4204 = vmatprep.mubr.bf16.mxu0 0
      %4205 = vmatmul.mubr.bf16.gmra.mxu0 %v2629
      %v4206 = vpop.f32.mrf.mxu0
      %v4207 = vadd.f32 %v765, %v4206
      %v4208 = vpop.f32.mrf.mxu0
      %v4209 = vpop.f32.mrf.mxu0
      %v4210 = vadd.f32 %v765, %v4209
      %v4211 = vpop.f32.mrf.mxu0
      %4212 = vmatprep.mubr.bf16.mxu0 0
      %4213 = vmatmul.mubr.bf16.gmra.mxu0 %v2632
      %v4214 = vpop.f32.mrf.mxu0
      %v4215 = vadd.f32 %v765, %v4214
      %v4216 = vpop.f32.mrf.mxu0
      %v4217 = vpop.f32.mrf.mxu0
      %v4218 = vadd.f32 %v765, %v4217
      %v4219 = vpop.f32.mrf.mxu0
      %4220 = vmatprep.mubr.bf16.mxu0 0
      %4221 = vmatmul.mubr.bf16.gmra.mxu0 %v2635
      %v4222 = vpop.f32.mrf.mxu0
      %v4223 = vadd.f32 %v765, %v4222
      %v4224 = vpop.f32.mrf.mxu0
      %v4225 = vpop.f32.mrf.mxu0
      %v4226 = vadd.f32 %v765, %v4225
      %v4227 = vpop.f32.mrf.mxu0
      %4228 = vmatprep.mubr.bf16.mxu0 0
      %4229 = vmatmul.mubr.bf16.gmra.mxu0 %v2638
      %v4230 = vpop.f32.mrf.mxu0
      %v4231 = vadd.f32 %v765, %v4230
      %v4232 = vpop.f32.mrf.mxu0
      %v4233 = vpop.f32.mrf.mxu0
      %v4234 = vadd.f32 %v765, %v4233
      %v4235 = vpop.f32.mrf.mxu0
      %4236 = vmatprep.mubr.bf16.mxu0 0
      %4237 = vmatmul.mubr.bf16.gmra.mxu0 %v2641
      %v4238 = vpop.f32.mrf.mxu0
      %v4239 = vadd.f32 %v765, %v4238
      %v4240 = vpop.f32.mrf.mxu0
      %v4241 = vpop.f32.mrf.mxu0
      %v4242 = vadd.f32 %v765, %v4241
      %v4243 = vpop.f32.mrf.mxu0
      %4244 = vmatprep.mubr.bf16.mxu0 0
      %4245 = vmatmul.mubr.bf16.gmra.mxu0 %v2644
      %v4246 = vpop.f32.mrf.mxu0
      %v4247 = vadd.f32 %v765, %v4246
      %v4248 = vpop.f32.mrf.mxu0
      %v4249 = vpop.f32.mrf.mxu0
      %v4250 = vadd.f32 %v765, %v4249
      %v4251 = vpop.f32.mrf.mxu0
      %4252 = vmatprep.mubr.bf16.mxu0 0
      %4253 = vmatmul.mubr.bf16.gmra.mxu0 %v2647
      %v4254 = vpop.f32.mrf.mxu0
      %v4255 = vadd.f32 %v765, %v4254
      %v4256 = vpop.f32.mrf.mxu0
      %v4257 = vpop.f32.mrf.mxu0
      %v4258 = vadd.f32 %v765, %v4257
      %v4259 = vpop.f32.mrf.mxu0
      %4260 = vmatprep.mubr.bf16.mxu0 0
      %4261 = vmatmul.mubr.bf16.gmra.mxu0 %v2650
      %v4262 = vpop.f32.mrf.mxu0
      %v4263 = vadd.f32 %v765, %v4262
      %v4264 = vpop.f32.mrf.mxu0
      %v4265 = vpop.f32.mrf.mxu0
      %v4266 = vadd.f32 %v765, %v4265
      %v4267 = vpop.f32.mrf.mxu0
      %4268 = vmatprep.mubr.bf16.mxu0 0
      %4269 = vmatmul.mubr.bf16.gmra.mxu0 %v2653
      %v4270 = vpop.f32.mrf.mxu0
      %v4271 = vadd.f32 %v765, %v4270
      %v4272 = vpop.f32.mrf.mxu0
      %v4273 = vpop.f32.mrf.mxu0
      %v4274 = vadd.f32 %v765, %v4273
      %v4275 = vpop.f32.mrf.mxu0
      %4276 = vmatprep.mubr.bf16.mxu0 0
      %4277 = vmatmul.mubr.bf16.gmra.mxu0 %v2656
      %v4278 = vpop.f32.mrf.mxu0
      %v4279 = vadd.f32 %v765, %v4278
      %v4280 = vpop.f32.mrf.mxu0
      %v4281 = vpop.f32.mrf.mxu0
      %v4282 = vadd.f32 %v765, %v4281
      %v4283 = vpop.f32.mrf.mxu0
      %4284 = vmatprep.mubr.bf16.mxu0 0
      %4285 = vmatmul.mubr.bf16.gmra.mxu0 %v2659
      %v4286 = vpop.f32.mrf.mxu0
      %v4287 = vadd.f32 %v765, %v4286
      %v4288 = vpop.f32.mrf.mxu0
      %v4289 = vpop.f32.mrf.mxu0
      %v4290 = vadd.f32 %v765, %v4289
      %v4291 = vpop.f32.mrf.mxu0
      %4292 = vmatprep.mubr.bf16.mxu0 0
      %4293 = vmatmul.mubr.bf16.gmra.mxu0 %v2662
      %v4294 = vpop.f32.mrf.mxu0
      %v4295 = vadd.f32 %v765, %v4294
      %v4296 = vpop.f32.mrf.mxu0
      %v4297 = vpop.f32.mrf.mxu0
      %v4298 = vadd.f32 %v765, %v4297
      %v4299 = vpop.f32.mrf.mxu0
      %4300 = vmatprep.mubr.bf16.mxu0 0
      %4301 = vmatmul.mubr.bf16.gmra.mxu0 %v2665
      %v4302 = vpop.f32.mrf.mxu0
      %v4303 = vadd.f32 %v765, %v4302
      %v4304 = vpop.f32.mrf.mxu0
      %v4305 = vpop.f32.mrf.mxu0
      %v4306 = vadd.f32 %v765, %v4305
      %v4307 = vpop.f32.mrf.mxu0
      %4308 = vmatprep.mubr.bf16.mxu0 0
      %4309 = vmatmul.mubr.bf16.gmra.mxu0 %v2668
      %v4310 = vpop.f32.mrf.mxu0
      %v4311 = vadd.f32 %v765, %v4310
      %v4312 = vpop.f32.mrf.mxu0
      %v4313 = vpop.f32.mrf.mxu0
      %v4314 = vadd.f32 %v765, %v4313
      %v4315 = vpop.f32.mrf.mxu0
      %4316 = vmatprep.mubr.bf16.mxu0 0
      %4317 = vmatmul.mubr.bf16.gmra.mxu0 %v2671
      %v4318 = vpop.f32.mrf.mxu0
      %v4319 = vadd.f32 %v765, %v4318
      %v4320 = vpop.f32.mrf.mxu0
      %v4321 = vpop.f32.mrf.mxu0
      %v4322 = vadd.f32 %v765, %v4321
      %v4323 = vpop.f32.mrf.mxu0
      %4324 = vmatprep.mubr.bf16.mxu0 0
      %4325 = vmatmul.mubr.bf16.gmra.mxu0 %v2674
      %v4326 = vpop.f32.mrf.mxu0
      %v4327 = vadd.f32 %v765, %v4326
      %v4328 = vpop.f32.mrf.mxu0
      %v4329 = vpop.f32.mrf.mxu0
      %v4330 = vadd.f32 %v765, %v4329
      %v4331 = vpop.f32.mrf.mxu0
      %4332 = vmatprep.mubr.bf16.mxu0 0
      %4333 = vmatmul.mubr.bf16.gmra.mxu0 %v2677
      %v4334 = vpop.f32.mrf.mxu0
      %v4335 = vadd.f32 %v765, %v4334
      %v4336 = vpop.f32.mrf.mxu0
      %v4337 = vpop.f32.mrf.mxu0
      %v4338 = vadd.f32 %v765, %v4337
      %v4339 = vpop.f32.mrf.mxu0
      %4340 = vmatprep.mubr.bf16.mxu0 0
      %4341 = vmatmul.mubr.bf16.gmra.mxu0 %v2680
      %v4342 = vpop.f32.mrf.mxu0
      %v4343 = vadd.f32 %v765, %v4342
      %v4344 = vpop.f32.mrf.mxu0
      %v4345 = vpop.f32.mrf.mxu0
      %v4346 = vadd.f32 %v765, %v4345
      %v4347 = vpop.f32.mrf.mxu0
      %4348 = vmatprep.mubr.bf16.mxu0 0
      %4349 = vmatmul.mubr.bf16.gmra.mxu0 %v2683
      %v4350 = vpop.f32.mrf.mxu0
      %v4351 = vadd.f32 %v765, %v4350
      %v4352 = vpop.f32.mrf.mxu0
      %v4353 = vpop.f32.mrf.mxu0
      %v4354 = vadd.f32 %v765, %v4353
      %v4355 = vpop.f32.mrf.mxu0
      %4356 = vmatprep.mubr.bf16.mxu0 0
      %4357 = vmatmul.mubr.bf16.gmra.mxu0 %v2686
      %v4358 = vpop.f32.mrf.mxu0
      %v4359 = vadd.f32 %v765, %v4358
      %v4360 = vpop.f32.mrf.mxu0
      %v4361 = vpop.f32.mrf.mxu0
      %v4362 = vadd.f32 %v765, %v4361
      %v4363 = vpop.f32.mrf.mxu0
      %4364 = vmatprep.mubr.bf16.mxu0 0
      %4365 = vmatmul.mubr.bf16.gmra.mxu0 %v2689
      %v4366 = vpop.f32.mrf.mxu0
      %v4367 = vadd.f32 %v765, %v4366
      %v4368 = vpop.f32.mrf.mxu0
      %v4369 = vpop.f32.mrf.mxu0
      %v4370 = vadd.f32 %v765, %v4369
      %v4371 = vpop.f32.mrf.mxu0
      %4372 = vmatprep.mubr.bf16.mxu0 0
      %4373 = vmatmul.mubr.bf16.gmra.mxu0 %v2692
      %v4374 = vpop.f32.mrf.mxu0
      %v4375 = vadd.f32 %v765, %v4374
      %v4376 = vpop.f32.mrf.mxu0
      %v4377 = vpop.f32.mrf.mxu0
      %v4378 = vadd.f32 %v765, %v4377
      %v4379 = vpop.f32.mrf.mxu0
      %4380 = vmatprep.mubr.bf16.mxu0 0
      %4381 = vmatmul.mubr.bf16.gmra.mxu0 %v2695
      %v4382 = vpop.f32.mrf.mxu0
      %v4383 = vadd.f32 %v765, %v4382
      %v4384 = vpop.f32.mrf.mxu0
      %v4385 = vpop.f32.mrf.mxu0
      %v4386 = vadd.f32 %v765, %v4385
      %v4387 = vpop.f32.mrf.mxu0
      %4388 = vmatprep.mubr.bf16.mxu0 0
      %4389 = vmatmul.mubr.bf16.gmra.mxu0 %v2698
      %v4390 = vpop.f32.mrf.mxu0
      %v4391 = vadd.f32 %v765, %v4390
      %v4392 = vpop.f32.mrf.mxu0
      %v4393 = vpop.f32.mrf.mxu0
      %v4394 = vadd.f32 %v765, %v4393
      %v4395 = vpop.f32.mrf.mxu0
      %4396 = vmatprep.mubr.bf16.mxu0 0
      %4397 = vmatmul.mubr.bf16.gmra.mxu0 %v2701
      %v4398 = vpop.f32.mrf.mxu0
      %v4399 = vadd.f32 %v765, %v4398
      %v4400 = vpop.f32.mrf.mxu0
      %v4401 = vpop.f32.mrf.mxu0
      %v4402 = vadd.f32 %v765, %v4401
      %v4403 = vpop.f32.mrf.mxu0
      %4404 = vmatprep.mubr.bf16.mxu0 0
      %4405 = vmatmul.mubr.bf16.gmra.mxu0 %v2704
      %v4406 = vpop.f32.mrf.mxu0
      %v4407 = vadd.f32 %v765, %v4406
      %v4408 = vpop.f32.mrf.mxu0
      %v4409 = vpop.f32.mrf.mxu0
      %v4410 = vadd.f32 %v765, %v4409
      %v4411 = vpop.f32.mrf.mxu0
      %4412 = vmatprep.mubr.bf16.mxu0 0
      %4413 = vmatmul.mubr.bf16.gmra.mxu0 %v2707
      %v4414 = vpop.f32.mrf.mxu0
      %v4415 = vadd.f32 %v765, %v4414
      %v4416 = vpop.f32.mrf.mxu0
      %v4417 = vpop.f32.mrf.mxu0
      %v4418 = vadd.f32 %v765, %v4417
      %v4419 = vpop.f32.mrf.mxu0
      %4420 = vmatprep.mubr.bf16.mxu0 0
      %4421 = vmatmul.mubr.bf16.gmra.mxu0 %v2710
      %v4422 = vpop.f32.mrf.mxu0
      %v4423 = vadd.f32 %v765, %v4422
      %v4424 = vpop.f32.mrf.mxu0
      %v4425 = vpop.f32.mrf.mxu0
      %v4426 = vadd.f32 %v765, %v4425
      %v4427 = vpop.f32.mrf.mxu0
      %4428 = vmatprep.mubr.bf16.mxu0 0
      %4429 = vmatmul.mubr.bf16.gmra.mxu0 %v2713
      %v4430 = vpop.f32.mrf.mxu0
      %v4431 = vadd.f32 %v765, %v4430
      %v4432 = vpop.f32.mrf.mxu0
      %v4433 = vpop.f32.mrf.mxu0
      %v4434 = vadd.f32 %v765, %v4433
      %v4435 = vpop.f32.mrf.mxu0
      %4436 = vmatprep.mubr.bf16.mxu0 0
      %4437 = vmatmul.mubr.bf16.gmra.mxu0 %v2716
      %v4438 = vpop.f32.mrf.mxu0
      %v4439 = vadd.f32 %v765, %v4438
      %v4440 = vpop.f32.mrf.mxu0
      %v4441 = vpop.f32.mrf.mxu0
      %v4442 = vadd.f32 %v765, %v4441
      %v4443 = vpop.f32.mrf.mxu0
      %4444 = vmatprep.mubr.bf16.mxu0 0
      %4445 = vmatmul.mubr.bf16.gmra.mxu0 %v2719
      %v4446 = vpop.f32.mrf.mxu0
      %v4447 = vadd.f32 %v765, %v4446
      %v4448 = vpop.f32.mrf.mxu0
      %v4449 = vpop.f32.mrf.mxu0
      %v4450 = vadd.f32 %v765, %v4449
      %v4451 = vpop.f32.mrf.mxu0
      %4452 = vmatprep.mubr.bf16.mxu0 0
      %4453 = vmatmul.mubr.bf16.gmra.mxu0 %v2722
      %v4454 = vpop.f32.mrf.mxu0
      %v4455 = vadd.f32 %v765, %v4454
      %v4456 = vpop.f32.mrf.mxu0
      %v4457 = vpop.f32.mrf.mxu0
      %v4458 = vadd.f32 %v765, %v4457
      %v4459 = vpop.f32.mrf.mxu0
      %4460 = vmatprep.mubr.bf16.mxu0 0
      %4461 = vmatmul.mubr.bf16.gmra.mxu0 %v2725
      %v4462 = vpop.f32.mrf.mxu0
      %v4463 = vadd.f32 %v765, %v4462
      %v4464 = vpop.f32.mrf.mxu0
      %v4465 = vpop.f32.mrf.mxu0
      %v4466 = vadd.f32 %v765, %v4465
      %v4467 = vpop.f32.mrf.mxu0
      %4468 = vmatprep.mubr.bf16.mxu0 0
      %4469 = vmatmul.mubr.bf16.gmra.mxu0 %v2728
      %v4470 = vpop.f32.mrf.mxu0
      %v4471 = vadd.f32 %v765, %v4470
      %v4472 = vpop.f32.mrf.mxu0
      %v4473 = vpop.f32.mrf.mxu0
      %v4474 = vadd.f32 %v765, %v4473
      %v4475 = vpop.f32.mrf.mxu0
      %4476 = vmatprep.mubr.bf16.mxu0 0
      %4477 = vmatmul.mubr.bf16.gmra.mxu0 %v2731
      %v4478 = vpop.f32.mrf.mxu0
      %v4479 = vadd.f32 %v765, %v4478
      %v4480 = vpop.f32.mrf.mxu0
      %v4481 = vpop.f32.mrf.mxu0
      %v4482 = vadd.f32 %v765, %v4481
      %v4483 = vpop.f32.mrf.mxu0
      %4484 = vmatprep.mubr.bf16.mxu0 0
      %4485 = vmatmul.mubr.bf16.gmra.mxu0 %v2734
      %v4486 = vpop.f32.mrf.mxu0
      %v4487 = vadd.f32 %v765, %v4486
      %v4488 = vpop.f32.mrf.mxu0
      %v4489 = vpop.f32.mrf.mxu0
      %v4490 = vadd.f32 %v765, %v4489
      %v4491 = vpop.f32.mrf.mxu0
      %4492 = vmatprep.mubr.bf16.mxu0 0
      %4493 = vmatmul.mubr.bf16.gmra.mxu0 %v2737
      %v4494 = vpop.f32.mrf.mxu0
      %v4495 = vadd.f32 %v765, %v4494
      %v4496 = vpop.f32.mrf.mxu0
      %v4497 = vpop.f32.mrf.mxu0
      %v4498 = vadd.f32 %v765, %v4497
      %v4499 = vpop.f32.mrf.mxu0
      %4500 = vmatprep.mubr.bf16.mxu0 0
      %4501 = vmatmul.mubr.bf16.gmra.mxu0 %v2740
      %v4502 = vpop.f32.mrf.mxu0
      %v4503 = vadd.f32 %v765, %v4502
      %v4504 = vpop.f32.mrf.mxu0
      %v4505 = vpop.f32.mrf.mxu0
      %v4506 = vadd.f32 %v765, %v4505
      %v4507 = vpop.f32.mrf.mxu0
      %4508 = vmatprep.mubr.bf16.mxu0 0
      %4509 = vmatmul.mubr.bf16.gmra.mxu0 %v2743
      %v4510 = vpop.f32.mrf.mxu0
      %v4511 = vadd.f32 %v765, %v4510
      %v4512 = vpop.f32.mrf.mxu0
      %v4513 = vpop.f32.mrf.mxu0
      %v4514 = vadd.f32 %v765, %v4513
      %v4515 = vpop.f32.mrf.mxu0
      %4516 = vmatprep.mubr.bf16.mxu0 0
      %4517 = vmatmul.mubr.bf16.gmra.mxu0 %v2746
      %v4518 = vpop.f32.mrf.mxu0
      %v4519 = vadd.f32 %v765, %v4518
      %v4520 = vpop.f32.mrf.mxu0
      %v4521 = vpop.f32.mrf.mxu0
      %v4522 = vadd.f32 %v765, %v4521
      %v4523 = vpop.f32.mrf.mxu0
      %4524 = vmatprep.mubr.bf16.mxu0 0
      %4525 = vmatmul.mubr.bf16.gmra.mxu0 %v2749
      %v4526 = vpop.f32.mrf.mxu0
      %v4527 = vadd.f32 %v765, %v4526
      %v4528 = vpop.f32.mrf.mxu0
      %v4529 = vpop.f32.mrf.mxu0
      %v4530 = vadd.f32 %v765, %v4529
      %v4531 = vpop.f32.mrf.mxu0
      %4532 = vmatprep.mubr.bf16.mxu0 0
      %4533 = vmatmul.mubr.bf16.gmra.mxu0 %v2752
      %v4534 = vpop.f32.mrf.mxu0
      %v4535 = vadd.f32 %v765, %v4534
      %v4536 = vpop.f32.mrf.mxu0
      %v4537 = vpop.f32.mrf.mxu0
      %v4538 = vadd.f32 %v765, %v4537
      %v4539 = vpop.f32.mrf.mxu0
      %4540 = vmatprep.mubr.bf16.mxu0 0
      %4541 = vmatmul.mubr.bf16.gmra.mxu0 %v2755
      %v4542 = vpop.f32.mrf.mxu0
      %v4543 = vadd.f32 %v765, %v4542
      %v4544 = vpop.f32.mrf.mxu0
      %v4545 = vpop.f32.mrf.mxu0
      %v4546 = vadd.f32 %v765, %v4545
      %v4547 = vpop.f32.mrf.mxu0
      %4548 = vmatprep.mubr.bf16.mxu0 0
      %4549 = vmatmul.mubr.bf16.gmra.mxu0 %v2758
      %v4550 = vpop.f32.mrf.mxu0
      %v4551 = vadd.f32 %v765, %v4550
      %v4552 = vpop.f32.mrf.mxu0
      %v4553 = vpop.f32.mrf.mxu0
      %v4554 = vadd.f32 %v765, %v4553
      %v4555 = vpop.f32.mrf.mxu0
      %4556 = vmatprep.mubr.bf16.mxu0 0
      %4557 = vmatmul.mubr.bf16.gmra.mxu0 %v2761
      %v4558 = vpop.f32.mrf.mxu0
      %v4559 = vadd.f32 %v765, %v4558
      %v4560 = vpop.f32.mrf.mxu0
      %v4561 = vpop.f32.mrf.mxu0
      %v4562 = vadd.f32 %v765, %v4561
      %v4563 = vpop.f32.mrf.mxu0
      %4564 = vmatprep.mubr.bf16.mxu0 0
      %4565 = vmatmul.mubr.bf16.gmra.mxu0 %v2764
      %v4566 = vpop.f32.mrf.mxu0
      %v4567 = vadd.f32 %v765, %v4566
      %v4568 = vpop.f32.mrf.mxu0
      %v4569 = vpop.f32.mrf.mxu0
      %v4570 = vadd.f32 %v765, %v4569
      %v4571 = vpop.f32.mrf.mxu0
      %4572 = vmatprep.mubr.bf16.mxu0 0
      %4573 = vmatmul.mubr.bf16.gmra.mxu0 %v2767
      %v4574 = vpop.f32.mrf.mxu0
      %v4575 = vadd.f32 %v765, %v4574
      %v4576 = vpop.f32.mrf.mxu0
      %v4577 = vpop.f32.mrf.mxu0
      %v4578 = vadd.f32 %v765, %v4577
      %v4579 = vpop.f32.mrf.mxu0
      %4580 = vmatprep.mubr.bf16.mxu0 0
      %4581 = vmatmul.mubr.bf16.gmra.mxu0 %v2770
      %v4582 = vpop.f32.mrf.mxu0
      %v4583 = vadd.f32 %v765, %v4582
      %v4584 = vpop.f32.mrf.mxu0
      %v4585 = vpop.f32.mrf.mxu0
      %v4586 = vadd.f32 %v765, %v4585
      %v4587 = vpop.f32.mrf.mxu0
      %4588 = vmatprep.mubr.bf16.mxu0 0
      %4589 = vmatmul.mubr.bf16.gmra.mxu0 %v2773
      %v4590 = vpop.f32.mrf.mxu0
      %v4591 = vadd.f32 %v765, %v4590
      %v4592 = vpop.f32.mrf.mxu0
      %v4593 = vpop.f32.mrf.mxu0
      %v4594 = vadd.f32 %v765, %v4593
      %v4595 = vpop.f32.mrf.mxu0
      %4596 = vmatprep.mubr.bf16.mxu0 0
      %4597 = vmatmul.mubr.bf16.gmra.mxu0 %v2776
      %v4598 = vpop.f32.mrf.mxu0
      %v4599 = vadd.f32 %v765, %v4598
      %v4600 = vpop.f32.mrf.mxu0
      %v4601 = vpop.f32.mrf.mxu0
      %v4602 = vadd.f32 %v765, %v4601
      %v4603 = vpop.f32.mrf.mxu0
      %4604 = vmatprep.mubr.bf16.mxu0 0
      %4605 = vmatmul.mubr.bf16.gmra.mxu0 %v2779
      %v4606 = vpop.f32.mrf.mxu0
      %v4607 = vadd.f32 %v765, %v4606
      %v4608 = vpop.f32.mrf.mxu0
      %v4609 = vpop.f32.mrf.mxu0
      %v4610 = vadd.f32 %v765, %v4609
      %v4611 = vpop.f32.mrf.mxu0
      %4612 = vmatprep.mubr.bf16.mxu0 0
      %4613 = vmatmul.mubr.bf16.gmra.mxu0 %v2782
      %v4614 = vpop.f32.mrf.mxu0
      %v4615 = vadd.f32 %v765, %v4614
      %v4616 = vpop.f32.mrf.mxu0
      %v4617 = vpop.f32.mrf.mxu0
      %v4618 = vadd.f32 %v765, %v4617
      %v4619 = vpop.f32.mrf.mxu0
      %4620 = vmatprep.mubr.bf16.mxu0 0
      %4621 = vmatmul.mubr.bf16.gmra.mxu0 %v2785
      %v4622 = vpop.f32.mrf.mxu0
      %v4623 = vadd.f32 %v765, %v4622
      %v4624 = vpop.f32.mrf.mxu0
      %v4625 = vpop.f32.mrf.mxu0
      %v4626 = vadd.f32 %v765, %v4625
      %v4627 = vpop.f32.mrf.mxu0
      %4628 = vmatprep.mubr.bf16.mxu0 0
      %4629 = vmatmul.mubr.bf16.gmra.mxu0 %v2788
      %v4630 = vpop.f32.mrf.mxu0
      %v4631 = vadd.f32 %v765, %v4630
      %v4632 = vpop.f32.mrf.mxu0
      %v4633 = vpop.f32.mrf.mxu0
      %v4634 = vadd.f32 %v765, %v4633
      %v4635 = vpop.f32.mrf.mxu0
      %4636 = vmatprep.mubr.bf16.mxu0 0
      %4637 = vmatmul.mubr.bf16.gmra.mxu0 %v2791
      %v4638 = vpop.f32.mrf.mxu0
      %v4639 = vadd.f32 %v765, %v4638
      %v4640 = vpop.f32.mrf.mxu0
      %v4641 = vpop.f32.mrf.mxu0
      %v4642 = vadd.f32 %v765, %v4641
      %v4643 = vpop.f32.mrf.mxu0
      %4644 = vmatprep.mubr.bf16.mxu0 0
      %4645 = vmatmul.mubr.bf16.gmra.mxu0 %v2794
      %v4646 = vpop.f32.mrf.mxu0
      %v4647 = vadd.f32 %v765, %v4646
      %v4648 = vpop.f32.mrf.mxu0
      %v4649 = vpop.f32.mrf.mxu0
      %v4650 = vadd.f32 %v765, %v4649
      %v4651 = vpop.f32.mrf.mxu0
      %4652 = vmatprep.mubr.bf16.mxu0 0
      %4653 = vmatmul.mubr.bf16.gmra.mxu0 %v2797
      %v4654 = vpop.f32.mrf.mxu0
      %v4655 = vadd.f32 %v765, %v4654
      %v4656 = vpop.f32.mrf.mxu0
      %v4657 = vpop.f32.mrf.mxu0
      %v4658 = vadd.f32 %v765, %v4657
      %v4659 = vpop.f32.mrf.mxu0
      %4660 = vmatprep.mubr.bf16.mxu0 0
      %4661 = vmatmul.mubr.bf16.gmra.mxu0 %v2800
      %v4662 = vpop.f32.mrf.mxu0
      %v4663 = vadd.f32 %v765, %v4662
      %v4664 = vpop.f32.mrf.mxu0
      %v4665 = vpop.f32.mrf.mxu0
      %v4666 = vadd.f32 %v765, %v4665
      %v4667 = vpop.f32.mrf.mxu0
      %4668 = vmatprep.mubr.bf16.mxu0 0
      %4669 = vmatmul.mubr.bf16.gmra.mxu0 %v2803
      %v4670 = vpop.f32.mrf.mxu0
      %v4671 = vadd.f32 %v765, %v4670
      %v4672 = vpop.f32.mrf.mxu0
      %v4673 = vpop.f32.mrf.mxu0
      %v4674 = vadd.f32 %v765, %v4673
      %v4675 = vpop.f32.mrf.mxu0
      %4676 = vmatprep.mubr.bf16.mxu0 0
      %4677 = vmatmul.mubr.bf16.gmra.mxu0 %v2806
      %v4678 = vpop.f32.mrf.mxu0
      %v4679 = vadd.f32 %v765, %v4678
      %v4680 = vpop.f32.mrf.mxu0
      %v4681 = vpop.f32.mrf.mxu0
      %v4682 = vadd.f32 %v765, %v4681
      %v4683 = vpop.f32.mrf.mxu0
      %4684 = vmatprep.mubr.bf16.mxu0 0
      %4685 = vmatmul.mubr.bf16.gmra.mxu0 %v2809
      %v4686 = vpop.f32.mrf.mxu0
      %v4687 = vadd.f32 %v765, %v4686
      %v4688 = vpop.f32.mrf.mxu0
      %v4689 = vpop.f32.mrf.mxu0
      %v4690 = vadd.f32 %v765, %v4689
      %v4691 = vpop.f32.mrf.mxu0
      %4692 = vmatprep.mubr.bf16.mxu0 0
      %4693 = vmatmul.mubr.bf16.gmra.mxu0 %v2812
      %v4694 = vpop.f32.mrf.mxu0
      %v4695 = vadd.f32 %v765, %v4694
      %v4696 = vpop.f32.mrf.mxu0
      %v4697 = vpop.f32.mrf.mxu0
      %v4698 = vadd.f32 %v765, %v4697
      %v4699 = vpop.f32.mrf.mxu0
      %4700 = vmatprep.mubr.bf16.mxu0 0
      %4701 = vmatmul.mubr.bf16.gmra.mxu0 %v2815
      %v4702 = vpop.f32.mrf.mxu0
      %v4703 = vadd.f32 %v765, %v4702
      %v4704 = vpop.f32.mrf.mxu0
      %v4705 = vpop.f32.mrf.mxu0
      %v4706 = vadd.f32 %v765, %v4705
      %v4707 = vpop.f32.mrf.mxu0
      %4708 = vmatprep.mubr.bf16.mxu0 0
      %4709 = vmatmul.mubr.bf16.gmra.mxu0 %v2818
      %v4710 = vpop.f32.mrf.mxu0
      %v4711 = vadd.f32 %v765, %v4710
      %v4712 = vpop.f32.mrf.mxu0
      %v4713 = vpop.f32.mrf.mxu0
      %v4714 = vadd.f32 %v765, %v4713
      %v4715 = vpop.f32.mrf.mxu0
      %4716 = vmatprep.mubr.bf16.mxu0 0
      %4717 = vmatmul.mubr.bf16.gmra.mxu0 %v2821
      %v4718 = vpop.f32.mrf.mxu0
      %v4719 = vadd.f32 %v765, %v4718
      %v4720 = vpop.f32.mrf.mxu0
      %v4721 = vpop.f32.mrf.mxu0
      %v4722 = vadd.f32 %v765, %v4721
      %v4723 = vpop.f32.mrf.mxu0
      %4724 = vmatprep.mubr.bf16.mxu0 0
      %4725 = vmatmul.mubr.bf16.gmra.mxu0 %v2824
      %v4726 = vpop.f32.mrf.mxu0
      %v4727 = vadd.f32 %v765, %v4726
      %v4728 = vpop.f32.mrf.mxu0
      %v4729 = vpop.f32.mrf.mxu0
      %v4730 = vadd.f32 %v765, %v4729
      %v4731 = vpop.f32.mrf.mxu0
      %4732 = vmatprep.mubr.bf16.mxu0 0
      %4733 = vmatmul.mubr.bf16.gmra.mxu0 %v2827
      %v4734 = vpop.f32.mrf.mxu0
      %v4735 = vadd.f32 %v765, %v4734
      %v4736 = vpop.f32.mrf.mxu0
      %v4737 = vpop.f32.mrf.mxu0
      %v4738 = vadd.f32 %v765, %v4737
      %v4739 = vpop.f32.mrf.mxu0
      %4740 = vmatprep.mubr.bf16.mxu0 0
      %4741 = vmatmul.mubr.bf16.gmra.mxu0 %v2830
      %v4742 = vpop.f32.mrf.mxu0
      %v4743 = vadd.f32 %v765, %v4742
      %v4744 = vpop.f32.mrf.mxu0
      %v4745 = vpop.f32.mrf.mxu0
      %v4746 = vadd.f32 %v765, %v4745
      %v4747 = vpop.f32.mrf.mxu0
      %4748 = vmatprep.mubr.bf16.mxu0 0
      %4749 = vmatmul.mubr.bf16.gmra.mxu0 %v2833
      %v4750 = vpop.f32.mrf.mxu0
      %v4751 = vadd.f32 %v765, %v4750
      %v4752 = vpop.f32.mrf.mxu0
      %v4753 = vpop.f32.mrf.mxu0
      %v4754 = vadd.f32 %v765, %v4753
      %v4755 = vpop.f32.mrf.mxu0
      %4756 = vmatprep.mubr.bf16.mxu0 0
      %4757 = vmatmul.mubr.bf16.gmra.mxu0 %v2836
      %v4758 = vpop.f32.mrf.mxu0
      %v4759 = vadd.f32 %v765, %v4758
      %v4760 = vpop.f32.mrf.mxu0
      %v4761 = vpop.f32.mrf.mxu0
      %v4762 = vadd.f32 %v765, %v4761
      %v4763 = vpop.f32.mrf.mxu0
      %4764 = vmatprep.mubr.bf16.mxu0 0
      %4765 = vmatmul.mubr.bf16.gmra.mxu0 %v2839
      %v4766 = vpop.f32.mrf.mxu0
      %v4767 = vadd.f32 %v765, %v4766
      %v4768 = vpop.f32.mrf.mxu0
      %v4769 = vpop.f32.mrf.mxu0
      %v4770 = vadd.f32 %v765, %v4769
      %v4771 = vpop.f32.mrf.mxu0
      %4772 = vmatprep.mubr.bf16.mxu0 0
      %4773 = vmatmul.mubr.bf16.gmra.mxu0 %v2842
      %v4774 = vpop.f32.mrf.mxu0
      %v4775 = vadd.f32 %v765, %v4774
      %v4776 = vpop.f32.mrf.mxu0
      %v4777 = vpop.f32.mrf.mxu0
      %v4778 = vadd.f32 %v765, %v4777
      %v4779 = vpop.f32.mrf.mxu0
      %4780 = vmatprep.mubr.bf16.mxu0 0
      %4781 = vmatmul.mubr.bf16.gmra.mxu0 %v2845
      %v4782 = vpop.f32.mrf.mxu0
      %v4783 = vadd.f32 %v765, %v4782
      %v4784 = vpop.f32.mrf.mxu0
      %v4785 = vpop.f32.mrf.mxu0
      %v4786 = vadd.f32 %v765, %v4785
      %v4787 = vpop.f32.mrf.mxu0
      %4788 = vmatprep.mubr.bf16.mxu0 0
      %4789 = vmatmul.mubr.bf16.gmra.mxu0 %v2848
      %v4790 = vpop.f32.mrf.mxu0
      %v4791 = vadd.f32 %v765, %v4790
      %v4792 = vpop.f32.mrf.mxu0
      %v4793 = vpop.f32.mrf.mxu0
      %v4794 = vadd.f32 %v765, %v4793
      %v4795 = vpop.f32.mrf.mxu0
      %4796 = vmatprep.mubr.bf16.mxu0 0
      %4797 = vmatmul.mubr.bf16.gmra.mxu0 %v2851
      %v4798 = vpop.f32.mrf.mxu0
      %v4799 = vadd.f32 %v765, %v4798
      %v4800 = vpop.f32.mrf.mxu0
      %v4801 = vpop.f32.mrf.mxu0
      %v4802 = vadd.f32 %v765, %v4801
      %v4803 = vpop.f32.mrf.mxu0
      %4804 = vmatprep.mubr.bf16.mxu0 0
      %4805 = vmatmul.mubr.bf16.gmra.mxu0 %v2854
      %v4806 = vpop.f32.mrf.mxu0
      %v4807 = vadd.f32 %v765, %v4806
      %v4808 = vpop.f32.mrf.mxu0
      %v4809 = vpop.f32.mrf.mxu0
      %v4810 = vadd.f32 %v765, %v4809
      %v4811 = vpop.f32.mrf.mxu0
      %4812 = vmatprep.mubr.bf16.mxu0 0
      %4813 = vmatmul.mubr.bf16.gmra.mxu0 %v2857
      %v4814 = vpop.f32.mrf.mxu0
      %v4815 = vadd.f32 %v765, %v4814
      %v4816 = vpop.f32.mrf.mxu0
      %v4817 = vpop.f32.mrf.mxu0
      %v4818 = vadd.f32 %v765, %v4817
      %v4819 = vpop.f32.mrf.mxu0
      %4820 = vmatprep.mubr.bf16.mxu0 0
      %4821 = vmatmul.mubr.bf16.gmra.mxu0 %v2860
      %v4822 = vpop.f32.mrf.mxu0
      %v4823 = vadd.f32 %v765, %v4822
      %v4824 = vpop.f32.mrf.mxu0
      %v4825 = vpop.f32.mrf.mxu0
      %v4826 = vadd.f32 %v765, %v4825
      %v4827 = vpop.f32.mrf.mxu0
      %4828 = vmatprep.mubr.bf16.mxu0 0
      %4829 = vmatmul.mubr.bf16.gmra.mxu0 %v2863
      %v4830 = vpop.f32.mrf.mxu0
      %v4831 = vadd.f32 %v765, %v4830
      %v4832 = vpop.f32.mrf.mxu0
      %v4833 = vpop.f32.mrf.mxu0
      %v4834 = vadd.f32 %v765, %v4833
      %v4835 = vpop.f32.mrf.mxu0
      %4836 = vmatprep.mubr.bf16.mxu0 0
      %4837 = vmatmul.mubr.bf16.gmra.mxu0 %v2866
      %v4838 = vpop.f32.mrf.mxu0
      %v4839 = vadd.f32 %v765, %v4838
      %v4840 = vpop.f32.mrf.mxu0
      %v4841 = vpop.f32.mrf.mxu0
      %v4842 = vadd.f32 %v765, %v4841
      %v4843 = vpop.f32.mrf.mxu0
      %4844 = vmatprep.mubr.bf16.mxu0 0
      %4845 = vmatmul.mubr.bf16.gmra.mxu0 %v2869
      %v4846 = vpop.f32.mrf.mxu0
      %v4847 = vadd.f32 %v765, %v4846
      %v4848 = vpop.f32.mrf.mxu0
      %v4849 = vpop.f32.mrf.mxu0
      %v4850 = vadd.f32 %v765, %v4849
      %v4851 = vpop.f32.mrf.mxu0
      %4852 = vmatprep.mubr.bf16.mxu0 0
      %4853 = vmatmul.mubr.bf16.gmra.mxu0 %v2872
      %v4854 = vpop.f32.mrf.mxu0
      %v4855 = vadd.f32 %v765, %v4854
      %v4856 = vpop.f32.mrf.mxu0
      %v4857 = vpop.f32.mrf.mxu0
      %v4858 = vadd.f32 %v765, %v4857
      %v4859 = vpop.f32.mrf.mxu0
      %4860 = vmatprep.mubr.bf16.mxu0 0
      %4861 = vmatmul.mubr.bf16.gmra.mxu0 %v2875
      %v4862 = vpop.f32.mrf.mxu0
      %v4863 = vadd.f32 %v765, %v4862
      %v4864 = vpop.f32.mrf.mxu0
      %v4865 = vpop.f32.mrf.mxu0
      %v4866 = vadd.f32 %v765, %v4865
      %v4867 = vpop.f32.mrf.mxu0
      %4868 = vmatprep.mubr.bf16.mxu0 0
      %4869 = vmatmul.mubr.bf16.gmra.mxu0 %v2878
      %v4870 = vpop.f32.mrf.mxu0
      %v4871 = vadd.f32 %v765, %v4870
      %v4872 = vpop.f32.mrf.mxu0
      %v4873 = vpop.f32.mrf.mxu0
      %v4874 = vadd.f32 %v765, %v4873
      %v4875 = vpop.f32.mrf.mxu0
      %4876 = vmatprep.mubr.bf16.mxu0 0
      %4877 = vmatmul.mubr.bf16.gmra.mxu0 %v2881
      %v4878 = vpop.f32.mrf.mxu0
      %v4879 = vadd.f32 %v765, %v4878
      %v4880 = vpop.f32.mrf.mxu0
      %v4881 = vpop.f32.mrf.mxu0
      %v4882 = vadd.f32 %v765, %v4881
      %v4883 = vpop.f32.mrf.mxu0
      %4884 = vmatprep.mubr.bf16.mxu0 0
      %4885 = vmatmul.mubr.bf16.gmra.mxu0 %v2884
      %v4886 = vpop.f32.mrf.mxu0
      %v4887 = vadd.f32 %v765, %v4886
      %v4888 = vpop.f32.mrf.mxu0
      %v4889 = vpop.f32.mrf.mxu0
      %v4890 = vadd.f32 %v765, %v4889
      %v4891 = vpop.f32.mrf.mxu0
      %4892 = vmatprep.mubr.bf16.mxu0 0
      %4893 = vmatmul.mubr.bf16.gmra.mxu0 %v2887
      %v4894 = vpop.f32.mrf.mxu0
      %v4895 = vadd.f32 %v765, %v4894
      %v4896 = vpop.f32.mrf.mxu0
      %v4897 = vpop.f32.mrf.mxu0
      %v4898 = vadd.f32 %v765, %v4897
      %v4899 = vpop.f32.mrf.mxu0
      %4900 = vmatprep.mubr.bf16.mxu0 0
      %4901 = vmatmul.mubr.bf16.gmra.mxu0 %v2890
      %v4902 = vpop.f32.mrf.mxu0
      %v4903 = vadd.f32 %v765, %v4902
      %v4904 = vpop.f32.mrf.mxu0
      %v4905 = vpop.f32.mrf.mxu0
      %v4906 = vadd.f32 %v765, %v4905
      %v4907 = vpop.f32.mrf.mxu0
      %4908 = vmatprep.mubr.bf16.mxu0 0
      %4909 = vmatmul.mubr.bf16.gmra.mxu0 %v2893
      %v4910 = vpop.f32.mrf.mxu0
      %v4911 = vadd.f32 %v765, %v4910
      %v4912 = vpop.f32.mrf.mxu0
      %v4913 = vpop.f32.mrf.mxu0
      %v4914 = vadd.f32 %v765, %v4913
      %v4915 = vpop.f32.mrf.mxu0
      %4916 = vmatprep.mubr.bf16.mxu0 0
      %4917 = vmatmul.mubr.bf16.gmra.mxu0 %v2896
      %v4918 = vpop.f32.mrf.mxu0
      %v4919 = vadd.f32 %v765, %v4918
      %v4920 = vpop.f32.mrf.mxu0
      %v4921 = vpop.f32.mrf.mxu0
      %v4922 = vadd.f32 %v765, %v4921
      %v4923 = vpop.f32.mrf.mxu0
      %4924 = vmatprep.mubr.bf16.mxu0 0
      %4925 = vmatmul.mubr.bf16.gmra.mxu0 %v2899
      %v4926 = vpop.f32.mrf.mxu0
      %v4927 = vadd.f32 %v765, %v4926
      %v4928 = vpop.f32.mrf.mxu0
      %v4929 = vpop.f32.mrf.mxu0
      %v4930 = vadd.f32 %v765, %v4929
      %v4931 = vpop.f32.mrf.mxu0
      %4932 = vmatprep.mubr.bf16.mxu0 0
      %4933 = vmatmul.mubr.bf16.gmra.mxu0 %v2902
      %v4934 = vpop.f32.mrf.mxu0
      %v4935 = vadd.f32 %v765, %v4934
      %v4936 = vpop.f32.mrf.mxu0
      %v4937 = vpop.f32.mrf.mxu0
      %v4938 = vadd.f32 %v765, %v4937
      %v4939 = vpop.f32.mrf.mxu0
      %4940 = vmatprep.mubr.bf16.mxu0 0
      %4941 = vmatmul.mubr.bf16.gmra.mxu0 %v2905
      %v4942 = vpop.f32.mrf.mxu0
      %v4943 = vadd.f32 %v765, %v4942
      %v4944 = vpop.f32.mrf.mxu0
      %v4945 = vpop.f32.mrf.mxu0
      %v4946 = vadd.f32 %v765, %v4945
      %v4947 = vpop.f32.mrf.mxu0
      %4948 = vmatprep.mubr.bf16.mxu0 0
      %4949 = vmatmul.mubr.bf16.gmra.mxu0 %v2908
      %v4950 = vpop.f32.mrf.mxu0
      %v4951 = vadd.f32 %v765, %v4950
      %v4952 = vpop.f32.mrf.mxu0
      %v4953 = vpop.f32.mrf.mxu0
      %v4954 = vadd.f32 %v765, %v4953
      %v4955 = vpop.f32.mrf.mxu0
      %4956 = vmatprep.mubr.bf16.mxu0 0
      %4957 = vmatmul.mubr.bf16.gmra.mxu0 %v2911
      %v4958 = vpop.f32.mrf.mxu0
      %v4959 = vadd.f32 %v765, %v4958
      %v4960 = vpop.f32.mrf.mxu0
      %v4961 = vpop.f32.mrf.mxu0
      %v4962 = vadd.f32 %v765, %v4961
      %v4963 = vpop.f32.mrf.mxu0
      %4964 = vmatprep.mubr.bf16.mxu0 0
      %4965 = vmatmul.mubr.bf16.gmra.mxu0 %v2914
      %v4966 = vpop.f32.mrf.mxu0
      %v4967 = vadd.f32 %v765, %v4966
      %v4968 = vpop.f32.mrf.mxu0
      %v4969 = vpop.f32.mrf.mxu0
      %v4970 = vadd.f32 %v765, %v4969
      %v4971 = vpop.f32.mrf.mxu0
      %4972 = vmatprep.mubr.bf16.mxu0 0
      %4973 = vmatmul.mubr.bf16.gmra.mxu0 %v2917
      %v4974 = vpop.f32.mrf.mxu0
      %v4975 = vadd.f32 %v765, %v4974
      %v4976 = vpop.f32.mrf.mxu0
      %v4977 = vpop.f32.mrf.mxu0
      %v4978 = vadd.f32 %v765, %v4977
      %v4979 = vpop.f32.mrf.mxu0
      %4980 = vmatprep.mubr.bf16.mxu0 0
      %4981 = vmatmul.mubr.bf16.gmra.mxu0 %v2920
      %v4982 = vpop.f32.mrf.mxu0
      %v4983 = vadd.f32 %v765, %v4982
      %v4984 = vpop.f32.mrf.mxu0
      %v4985 = vpop.f32.mrf.mxu0
      %v4986 = vadd.f32 %v765, %v4985
      %v4987 = vpop.f32.mrf.mxu0
      %4988 = vmatprep.mubr.bf16.mxu0 0
      %4989 = vmatmul.mubr.bf16.gmra.mxu0 %v2923
      %v4990 = vpop.f32.mrf.mxu0
      %v4991 = vadd.f32 %v765, %v4990
      %v4992 = vpop.f32.mrf.mxu0
      %v4993 = vpop.f32.mrf.mxu0
      %v4994 = vadd.f32 %v765, %v4993
      %v4995 = vpop.f32.mrf.mxu0
      %4996 = vmatprep.mubr.bf16.mxu0 0
      %4997 = vmatmul.mubr.bf16.gmra.mxu0 %v2926
      %v4998 = vpop.f32.mrf.mxu0
      %v4999 = vadd.f32 %v765, %v4998
      %v5000 = vpop.f32.mrf.mxu0
      %v5001 = vpop.f32.mrf.mxu0
      %v5002 = vadd.f32 %v765, %v5001
      %v5003 = vpop.f32.mrf.mxu0
      %5004 = vmatprep.mubr.bf16.mxu0 0
      %5005 = vmatmul.mubr.bf16.gmra.mxu0 %v2929
      %v5006 = vpop.f32.mrf.mxu0
      %v5007 = vadd.f32 %v765, %v5006
      %v5008 = vpop.f32.mrf.mxu0
      %v5009 = vpop.f32.mrf.mxu0
      %v5010 = vadd.f32 %v765, %v5009
      %v5011 = vpop.f32.mrf.mxu0
      %5012 = vmatprep.mubr.bf16.mxu0 0
      %5013 = vmatmul.mubr.bf16.gmra.mxu0 %v2932
      %v5014 = vpop.f32.mrf.mxu0
      %v5015 = vadd.f32 %v765, %v5014
      %v5016 = vpop.f32.mrf.mxu0
      %v5017 = vpop.f32.mrf.mxu0
      %v5018 = vadd.f32 %v765, %v5017
      %v5019 = vpop.f32.mrf.mxu0
      %5020 = vmatprep.mubr.bf16.mxu0 0
      %5021 = vmatmul.mubr.bf16.gmra.mxu0 %v2935
      %v5022 = vpop.f32.mrf.mxu0
      %v5023 = vadd.f32 %v765, %v5022
      %v5024 = vpop.f32.mrf.mxu0
      %v5025 = vpop.f32.mrf.mxu0
      %v5026 = vadd.f32 %v765, %v5025
      %v5027 = vpop.f32.mrf.mxu0
      %5028 = vmatprep.mubr.bf16.mxu0 0
      %5029 = vmatmul.mubr.bf16.gmra.mxu0 %v2938
      %v5030 = vpop.f32.mrf.mxu0
      %v5031 = vadd.f32 %v765, %v5030
      %v5032 = vpop.f32.mrf.mxu0
      %v5033 = vpop.f32.mrf.mxu0
      %v5034 = vadd.f32 %v765, %v5033
      %v5035 = vpop.f32.mrf.mxu0
      %5036 = vmatprep.mubr.bf16.mxu0 0
      %5037 = vmatmul.mubr.bf16.gmra.mxu0 %v2941
      %v5038 = vpop.f32.mrf.mxu0
      %v5039 = vadd.f32 %v765, %v5038
      %v5040 = vpop.f32.mrf.mxu0
      %v5041 = vpop.f32.mrf.mxu0
      %v5042 = vadd.f32 %v765, %v5041
      %v5043 = vpop.f32.mrf.mxu0
      %5044 = vmatprep.mubr.bf16.mxu0 0
      %5045 = vmatmul.mubr.bf16.gmra.mxu0 %v2944
      %v5046 = vpop.f32.mrf.mxu0
      %v5047 = vadd.f32 %v765, %v5046
      %v5048 = vpop.f32.mrf.mxu0
      %v5049 = vpop.f32.mrf.mxu0
      %v5050 = vadd.f32 %v765, %v5049
      %v5051 = vpop.f32.mrf.mxu0
      %5052 = vmatprep.mubr.bf16.mxu0 0
      %5053 = vmatmul.mubr.bf16.gmra.mxu0 %v2947
      %v5054 = vpop.f32.mrf.mxu0
      %v5055 = vadd.f32 %v765, %v5054
      %v5056 = vpop.f32.mrf.mxu0
      %v5057 = vpop.f32.mrf.mxu0
      %v5058 = vadd.f32 %v765, %v5057
      %v5059 = vpop.f32.mrf.mxu0
      %5060 = vmatprep.mubr.bf16.mxu0 0
      %5061 = vmatmul.mubr.bf16.gmra.mxu0 %v2950
      %v5062 = vpop.f32.mrf.mxu0
      %v5063 = vadd.f32 %v765, %v5062
      %v5064 = vpop.f32.mrf.mxu0
      %v5065 = vpop.f32.mrf.mxu0
      %v5066 = vadd.f32 %v765, %v5065
      %v5067 = vpop.f32.mrf.mxu0
      %5068 = vmatprep.mubr.bf16.mxu0 0
      %5069 = vmatmul.mubr.bf16.gmra.mxu0 %v2953
      %v5070 = vpop.f32.mrf.mxu0
      %v5071 = vadd.f32 %v765, %v5070
      %v5072 = vpop.f32.mrf.mxu0
      %v5073 = vpop.f32.mrf.mxu0
      %v5074 = vadd.f32 %v765, %v5073
      %v5075 = vpop.f32.mrf.mxu0
      %5076 = vmatprep.mubr.bf16.mxu0 0
      %5077 = vmatmul.mubr.bf16.gmra.mxu0 %v2956
      %v5078 = vpop.f32.mrf.mxu0
      %v5079 = vadd.f32 %v765, %v5078
      %v5080 = vpop.f32.mrf.mxu0
      %v5081 = vpop.f32.mrf.mxu0
      %v5082 = vadd.f32 %v765, %v5081
      %v5083 = vpop.f32.mrf.mxu0
      %5084 = vmatprep.mubr.bf16.mxu0 0
      %5085 = vmatmul.mubr.bf16.gmra.mxu0 %v2959
      %v5086 = vpop.f32.mrf.mxu0
      %v5087 = vadd.f32 %v765, %v5086
      %v5088 = vpop.f32.mrf.mxu0
      %v5089 = vpop.f32.mrf.mxu0
      %v5090 = vadd.f32 %v765, %v5089
      %v5091 = vpop.f32.mrf.mxu0
      %5092 = vmatprep.mubr.bf16.mxu0 0
      %5093 = vmatmul.mubr.bf16.gmra.mxu0 %v2962
      %v5094 = vpop.f32.mrf.mxu0
      %v5095 = vadd.f32 %v765, %v5094
      %v5096 = vpop.f32.mrf.mxu0
      %v5097 = vpop.f32.mrf.mxu0
      %v5098 = vadd.f32 %v765, %v5097
      %v5099 = vpop.f32.mrf.mxu0
      %5100 = vmatprep.mubr.bf16.mxu0 0
      %5101 = vmatmul.mubr.bf16.gmra.mxu0 %v2965
      %v5102 = vpop.f32.mrf.mxu0
      %v5103 = vadd.f32 %v765, %v5102
      %v5104 = vpop.f32.mrf.mxu0
      %v5105 = vpop.f32.mrf.mxu0
      %v5106 = vadd.f32 %v765, %v5105
      %v5107 = vpop.f32.mrf.mxu0
      %5108 = vmatprep.mubr.bf16.mxu0 0
      %5109 = vmatmul.mubr.bf16.gmra.mxu0 %v2968
      %v5110 = vpop.f32.mrf.mxu0
      %v5111 = vadd.f32 %v765, %v5110
      %v5112 = vpop.f32.mrf.mxu0
      %v5113 = vpop.f32.mrf.mxu0
      %v5114 = vadd.f32 %v765, %v5113
      %v5115 = vpop.f32.mrf.mxu0
      %5116 = vmatprep.mubr.bf16.mxu0 0
      %5117 = vmatmul.mubr.bf16.gmra.mxu0 %v2971
      %v5118 = vpop.f32.mrf.mxu0
      %v5119 = vadd.f32 %v765, %v5118
      %v5120 = vpop.f32.mrf.mxu0
      %v5121 = vpop.f32.mrf.mxu0
      %v5122 = vadd.f32 %v765, %v5121
      %v5123 = vpop.f32.mrf.mxu0
      %5124 = vmatprep.mubr.bf16.mxu0 0
      %5125 = vmatmul.mubr.bf16.gmra.mxu0 %v2974
      %v5126 = vpop.f32.mrf.mxu0
      %v5127 = vadd.f32 %v765, %v5126
      %v5128 = vpop.f32.mrf.mxu0
      %v5129 = vpop.f32.mrf.mxu0
      %v5130 = vadd.f32 %v765, %v5129
      %v5131 = vpop.f32.mrf.mxu0
      %5132 = vmatprep.mubr.bf16.mxu0 0
      %5133 = vmatmul.mubr.bf16.gmra.mxu0 %v2977
      %v5134 = vpop.f32.mrf.mxu0
      %v5135 = vadd.f32 %v765, %v5134
      %v5136 = vpop.f32.mrf.mxu0
      %v5137 = vpop.f32.mrf.mxu0
      %v5138 = vadd.f32 %v765, %v5137
      %v5139 = vpop.f32.mrf.mxu0
      %5140 = vmatprep.mubr.bf16.mxu0 0
      %5141 = vmatmul.mubr.bf16.gmra.mxu0 %v2980
      %v5142 = vpop.f32.mrf.mxu0
      %v5143 = vadd.f32 %v765, %v5142
      %v5144 = vpop.f32.mrf.mxu0
      %v5145 = vpop.f32.mrf.mxu0
      %v5146 = vadd.f32 %v765, %v5145
      %v5147 = vpop.f32.mrf.mxu0
      %5148 = vmatprep.mubr.bf16.mxu0 0
      %5149 = vmatmul.mubr.bf16.gmra.mxu0 %v2983
      %v5150 = vpop.f32.mrf.mxu0
      %v5151 = vadd.f32 %v765, %v5150
      %v5152 = vpop.f32.mrf.mxu0
      %v5153 = vpop.f32.mrf.mxu0
      %v5154 = vadd.f32 %v765, %v5153
      %v5155 = vpop.f32.mrf.mxu0
      %5156 = vmatprep.mubr.bf16.mxu0 0
      %5157 = vmatmul.mubr.bf16.gmra.mxu0 %v2986
      %v5158 = vpop.f32.mrf.mxu0
      %v5159 = vadd.f32 %v765, %v5158
      %v5160 = vpop.f32.mrf.mxu0
      %v5161 = vpop.f32.mrf.mxu0
      %v5162 = vadd.f32 %v765, %v5161
      %v5163 = vpop.f32.mrf.mxu0
      %5164 = vmatprep.mubr.bf16.mxu0 0
      %5165 = vmatmul.mubr.bf16.gmra.mxu0 %v2989
      %v5166 = vpop.f32.mrf.mxu0
      %v5167 = vadd.f32 %v765, %v5166
      %v5168 = vpop.f32.mrf.mxu0
      %v5169 = vpop.f32.mrf.mxu0
      %v5170 = vadd.f32 %v765, %v5169
      %v5171 = vpop.f32.mrf.mxu0
      %5172 = vmatprep.mubr.bf16.mxu0 0
      %5173 = vmatmul.mubr.bf16.gmra.mxu0 %v2992
      %v5174 = vpop.f32.mrf.mxu0
      %v5175 = vadd.f32 %v765, %v5174
      %v5176 = vpop.f32.mrf.mxu0
      %v5177 = vpop.f32.mrf.mxu0
      %v5178 = vadd.f32 %v765, %v5177
      %v5179 = vpop.f32.mrf.mxu0
      %5180 = vmatprep.mubr.bf16.mxu0 0
      %5181 = vmatmul.mubr.bf16.gmra.mxu0 %v2995
      %v5182 = vpop.f32.mrf.mxu0
      %v5183 = vadd.f32 %v765, %v5182
      %v5184 = vpop.f32.mrf.mxu0
      %v5185 = vpop.f32.mrf.mxu0
      %v5186 = vadd.f32 %v765, %v5185
      %v5187 = vpop.f32.mrf.mxu0
      %5188 = vmatprep.mubr.bf16.mxu0 0
      %5189 = vmatmul.mubr.bf16.gmra.mxu0 %v2998
      %v5190 = vpop.f32.mrf.mxu0
      %v5191 = vadd.f32 %v765, %v5190
      %v5192 = vpop.f32.mrf.mxu0
      %v5193 = vpop.f32.mrf.mxu0
      %v5194 = vadd.f32 %v765, %v5193
      %v5195 = vpop.f32.mrf.mxu0
      %5196 = vmatprep.mubr.bf16.mxu0 0
      %5197 = vmatmul.mubr.bf16.gmra.mxu0 %v3001
      %v5198 = vpop.f32.mrf.mxu0
      %v5199 = vadd.f32 %v765, %v5198
      %v5200 = vpop.f32.mrf.mxu0
      %v5201 = vpop.f32.mrf.mxu0
      %v5202 = vadd.f32 %v765, %v5201
      %v5203 = vpop.f32.mrf.mxu0
      %5204 = vmatprep.mubr.bf16.mxu0 0
      %5205 = vmatmul.mubr.bf16.gmra.mxu0 %v3004
      %v5206 = vpop.f32.mrf.mxu0
      %v5207 = vadd.f32 %v765, %v5206
      %v5208 = vpop.f32.mrf.mxu0
      %v5209 = vpop.f32.mrf.mxu0
      %v5210 = vadd.f32 %v765, %v5209
      %v5211 = vpop.f32.mrf.mxu0
      %5212 = vmatprep.mubr.bf16.mxu0 0
      %5213 = vmatmul.mubr.bf16.gmra.mxu0 %v3007
      %v5214 = vpop.f32.mrf.mxu0
      %v5215 = vadd.f32 %v765, %v5214
      %v5216 = vpop.f32.mrf.mxu0
      %v5217 = vpop.f32.mrf.mxu0
      %v5218 = vadd.f32 %v765, %v5217
      %v5219 = vpop.f32.mrf.mxu0
      %5220 = vmatprep.mubr.bf16.mxu0 0
      %5221 = vmatmul.mubr.bf16.gmra.mxu0 %v3010
      %v5222 = vpop.f32.mrf.mxu0
      %v5223 = vadd.f32 %v765, %v5222
      %v5224 = vpop.f32.mrf.mxu0
      %v5225 = vpop.f32.mrf.mxu0
      %v5226 = vadd.f32 %v765, %v5225
      %v5227 = vpop.f32.mrf.mxu0
      %5228 = vmatprep.mubr.bf16.mxu0 0
      %5229 = vmatmul.mubr.bf16.gmra.mxu0 %v3013
      %v5230 = vpop.f32.mrf.mxu0
      %v5231 = vadd.f32 %v765, %v5230
      %v5232 = vpop.f32.mrf.mxu0
      %v5233 = vpop.f32.mrf.mxu0
      %v5234 = vadd.f32 %v765, %v5233
      %v5235 = vpop.f32.mrf.mxu0
      %5236 = vmatprep.mubr.bf16.mxu0 0
      %5237 = vmatmul.mubr.bf16.gmra.mxu0 %v3016
      %v5238 = vpop.f32.mrf.mxu0
      %v5239 = vadd.f32 %v765, %v5238
      %v5240 = vpop.f32.mrf.mxu0
      %v5241 = vpop.f32.mrf.mxu0
      %v5242 = vadd.f32 %v765, %v5241
      %v5243 = vpop.f32.mrf.mxu0
      %5244 = vmatprep.mubr.bf16.mxu0 0
      %5245 = vmatmul.mubr.bf16.gmra.mxu0 %v3019
      %v5246 = vpop.f32.mrf.mxu0
      %v5247 = vadd.f32 %v765, %v5246
      %v5248 = vpop.f32.mrf.mxu0
      %v5249 = vpop.f32.mrf.mxu0
      %v5250 = vadd.f32 %v765, %v5249
      %v5251 = vpop.f32.mrf.mxu0
      %5252 = vmatprep.mubr.bf16.mxu0 0
      %5253 = vmatmul.mubr.bf16.gmra.mxu0 %v3022
      %v5254 = vpop.f32.mrf.mxu0
      %v5255 = vadd.f32 %v765, %v5254
      %v5256 = vpop.f32.mrf.mxu0
      %v5257 = vpop.f32.mrf.mxu0
      %v5258 = vadd.f32 %v765, %v5257
      %v5259 = vpop.f32.mrf.mxu0
      %5260 = vmatprep.mubr.bf16.mxu0 0
      %5261 = vmatmul.mubr.bf16.gmra.mxu0 %v3025
      %v5262 = vpop.f32.mrf.mxu0
      %v5263 = vadd.f32 %v765, %v5262
      %v5264 = vpop.f32.mrf.mxu0
      %v5265 = vpop.f32.mrf.mxu0
      %v5266 = vadd.f32 %v765, %v5265
      %v5267 = vpop.f32.mrf.mxu0
      %5268 = vmatprep.mubr.bf16.mxu0 0
      %5269 = vmatmul.mubr.bf16.gmra.mxu0 %v3028
      %v5270 = vpop.f32.mrf.mxu0
      %v5271 = vadd.f32 %v765, %v5270
      %v5272 = vpop.f32.mrf.mxu0
      %v5273 = vpop.f32.mrf.mxu0
      %v5274 = vadd.f32 %v765, %v5273
      %v5275 = vpop.f32.mrf.mxu0
      %5276 = vmatprep.mubr.bf16.mxu0 0
      %5277 = vmatmul.mubr.bf16.gmra.mxu0 %v3031
      %v5278 = vpop.f32.mrf.mxu0
      %v5279 = vadd.f32 %v765, %v5278
      %v5280 = vpop.f32.mrf.mxu0
      %v5281 = vpop.f32.mrf.mxu0
      %v5282 = vadd.f32 %v765, %v5281
      %v5283 = vpop.f32.mrf.mxu0
      %5284 = vmatprep.mubr.bf16.mxu0 0
      %5285 = vmatmul.mubr.bf16.gmra.mxu0 %v3034
      %v5286 = vpop.f32.mrf.mxu0
      %v5287 = vadd.f32 %v765, %v5286
      %v5288 = vpop.f32.mrf.mxu0
      %v5289 = vpop.f32.mrf.mxu0
      %v5290 = vadd.f32 %v765, %v5289
      %v5291 = vpop.f32.mrf.mxu0
      %5292 = vmatprep.mubr.bf16.mxu0 0
      %5293 = vmatmul.mubr.bf16.gmra.mxu0 %v3037
      %v5294 = vpop.f32.mrf.mxu0
      %v5295 = vadd.f32 %v765, %v5294
      %v5296 = vpop.f32.mrf.mxu0
      %v5297 = vpop.f32.mrf.mxu0
      %v5298 = vadd.f32 %v765, %v5297
      %v5299 = vpop.f32.mrf.mxu0
      %5300 = vmatprep.mubr.bf16.mxu0 0
      %5301 = vmatmul.mubr.bf16.gmra.mxu0 %v3040
      %v5302 = vpop.f32.mrf.mxu0
      %v5303 = vadd.f32 %v765, %v5302
      %v5304 = vpop.f32.mrf.mxu0
      %v5305 = vpop.f32.mrf.mxu0
      %v5306 = vadd.f32 %v765, %v5305
      %v5307 = vpop.f32.mrf.mxu0
      %5308 = vmatprep.mubr.bf16.mxu0 0
      %5309 = vmatmul.mubr.bf16.gmra.mxu0 %v3043
      %v5310 = vpop.f32.mrf.mxu0
      %v5311 = vadd.f32 %v765, %v5310
      %v5312 = vpop.f32.mrf.mxu0
      %v5313 = vpop.f32.mrf.mxu0
      %v5314 = vadd.f32 %v765, %v5313
      %v5315 = vpop.f32.mrf.mxu0
      %5316 = vmatprep.mubr.bf16.mxu0 0
      %5317 = vmatmul.mubr.bf16.gmra.mxu0 %v3046
      %v5318 = vpop.f32.mrf.mxu0
      %v5319 = vadd.f32 %v765, %v5318
      %v5320 = vpop.f32.mrf.mxu0
      %v5321 = vpop.f32.mrf.mxu0
      %v5322 = vadd.f32 %v765, %v5321
      %v5323 = vpop.f32.mrf.mxu0
      %5324 = vmatprep.mubr.bf16.mxu0 0
      %5325 = vmatmul.mubr.bf16.gmra.mxu0 %v3049
      %v5326 = vpop.f32.mrf.mxu0
      %v5327 = vadd.f32 %v765, %v5326
      %v5328 = vpop.f32.mrf.mxu0
      %v5329 = vpop.f32.mrf.mxu0
      %v5330 = vadd.f32 %v765, %v5329
      %v5331 = vpop.f32.mrf.mxu0
      %5332 = vmatprep.mubr.bf16.mxu0 0
      %5333 = vmatmul.mubr.bf16.gmra.mxu0 %v3052
      %v5334 = vpop.f32.mrf.mxu0
      %v5335 = vadd.f32 %v765, %v5334
      %v5336 = vpop.f32.mrf.mxu0
      %v5337 = vpop.f32.mrf.mxu0
      %v5338 = vadd.f32 %v765, %v5337
      %v5339 = vpop.f32.mrf.mxu0
      %5340 = vmatprep.mubr.bf16.mxu0 0
      %5341 = vmatmul.mubr.bf16.gmra.mxu0 %v3055
      %v5342 = vpop.f32.mrf.mxu0
      %v5343 = vadd.f32 %v765, %v5342
      %v5344 = vpop.f32.mrf.mxu0
      %v5345 = vpop.f32.mrf.mxu0
      %v5346 = vadd.f32 %v765, %v5345
      %v5347 = vpop.f32.mrf.mxu0
      %5348 = vmatprep.mubr.bf16.mxu0 0
      %5349 = vmatmul.mubr.bf16.gmra.mxu0 %v3058
      %v5350 = vpop.f32.mrf.mxu0
      %v5351 = vadd.f32 %v765, %v5350
      %v5352 = vpop.f32.mrf.mxu0
      %v5353 = vpop.f32.mrf.mxu0
      %v5354 = vadd.f32 %v765, %v5353
      %v5355 = vpop.f32.mrf.mxu0
      %5356 = vmatprep.mubr.bf16.mxu0 0
      %5357 = vmatmul.mubr.bf16.gmra.mxu0 %v3061
      %v5358 = vpop.f32.mrf.mxu0
      %v5359 = vadd.f32 %v765, %v5358
      %v5360 = vpop.f32.mrf.mxu0
      %v5361 = vpop.f32.mrf.mxu0
      %v5362 = vadd.f32 %v765, %v5361
      %v5363 = vpop.f32.mrf.mxu0
      %5364 = vmatprep.mubr.bf16.mxu0 0
      %5365 = vmatmul.mubr.bf16.gmra.mxu0 %v3064
      %v5366 = vpop.f32.mrf.mxu0
      %v5367 = vadd.f32 %v765, %v5366
      %v5368 = vpop.f32.mrf.mxu0
      %v5369 = vpop.f32.mrf.mxu0
      %v5370 = vadd.f32 %v765, %v5369
      %v5371 = vpop.f32.mrf.mxu0
      %5372 = vmatprep.mubr.bf16.mxu0 0
      %5373 = vmatmul.mubr.bf16.gmra.mxu0 %v3067
      %v5374 = vpop.f32.mrf.mxu0
      %v5375 = vadd.f32 %v765, %v5374
      %v5376 = vpop.f32.mrf.mxu0
      %v5377 = vpop.f32.mrf.mxu0
      %v5378 = vadd.f32 %v765, %v5377
      %v5379 = vpop.f32.mrf.mxu0
      %5380 = vmatprep.mubr.bf16.mxu0 0
      %5381 = vmatmul.mubr.bf16.gmra.mxu0 %v3070
      %v5382 = vpop.f32.mrf.mxu0
      %v5383 = vadd.f32 %v765, %v5382
      %v5384 = vpop.f32.mrf.mxu0
      %v5385 = vpop.f32.mrf.mxu0
      %v5386 = vadd.f32 %v765, %v5385
      %v5387 = vpop.f32.mrf.mxu0
      %5388 = vmatprep.mubr.bf16.mxu0 0
      %5389 = vmatmul.mubr.bf16.gmra.mxu0 %v3073
      %v5390 = vpop.f32.mrf.mxu0
      %v5391 = vadd.f32 %v765, %v5390
      %v5392 = vpop.f32.mrf.mxu0
      %v5393 = vpop.f32.mrf.mxu0
      %v5394 = vadd.f32 %v765, %v5393
      %v5395 = vpop.f32.mrf.mxu0
      %5396 = vmatprep.mubr.bf16.mxu0 0
      %5397 = vmatmul.mubr.bf16.gmra.mxu0 %v3076
      %v5398 = vpop.f32.mrf.mxu0
      %v5399 = vadd.f32 %v765, %v5398
      %v5400 = vpop.f32.mrf.mxu0
      %v5401 = vpop.f32.mrf.mxu0
      %v5402 = vadd.f32 %v765, %v5401
      %v5403 = vpop.f32.mrf.mxu0
      %5404 = vmatprep.mubr.bf16.mxu0 0
      %5405 = vmatmul.mubr.bf16.gmra.mxu0 %v3079
      %v5406 = vpop.f32.mrf.mxu0
      %v5407 = vadd.f32 %v765, %v5406
      %v5408 = vpop.f32.mrf.mxu0
      %v5409 = vpop.f32.mrf.mxu0
      %v5410 = vadd.f32 %v765, %v5409
      %v5411 = vpop.f32.mrf.mxu0
      %5412 = vmatprep.mubr.bf16.mxu0 0
      %5413 = vmatmul.mubr.bf16.gmra.mxu0 %v3082
      %v5414 = vpop.f32.mrf.mxu0
      %v5415 = vadd.f32 %v765, %v5414
      %v5416 = vpop.f32.mrf.mxu0
      %v5417 = vpop.f32.mrf.mxu0
      %v5418 = vadd.f32 %v765, %v5417
      %v5419 = vpop.f32.mrf.mxu0
      %5420 = vdwg.mxu0
      %v5421 = vmul.f32 %v3119, 0.5
      %v5422 = vmul.f32 %v3122, 0.5
      %v5423 = vmul.f32 %v3127, 0.5
      %v5424 = vmul.f32 %v3130, 0.5
      %v5425 = vmul.f32 %v3135, 0.5
      %v5426 = vmul.f32 %v3138, 0.5
      %v5427 = vmul.f32 %v3143, 0.5
      %v5428 = vmul.f32 %v3146, 0.5
      %v5429 = vmul.f32 %v3151, 0.5
      %v5430 = vmul.f32 %v3154, 0.5
      %v5431 = vmul.f32 %v3159, 0.5
      %v5432 = vmul.f32 %v3162, 0.5
      %v5433 = vmul.f32 %v3167, 0.5
      %v5434 = vmul.f32 %v3170, 0.5
      %v5435 = vmul.f32 %v3175, 0.5
      %v5436 = vmul.f32 %v3178, 0.5
      %v5437 = vmul.f32 %v3183, 0.5
      %v5438 = vmul.f32 %v3186, 0.5
      %v5439 = vmul.f32 %v3191, 0.5
      %v5440 = vmul.f32 %v3194, 0.5
      %v5441 = vmul.f32 %v3199, 0.5
      %v5442 = vmul.f32 %v3202, 0.5
      %v5443 = vmul.f32 %v3207, 0.5
      %v5444 = vmul.f32 %v3210, 0.5
      %v5445 = vmul.f32 %v3215, 0.5
      %v5446 = vmul.f32 %v3218, 0.5
      %v5447 = vmul.f32 %v3223, 0.5
      %v5448 = vmul.f32 %v3226, 0.5
      %v5449 = vmul.f32 %v3231, 0.5
      %v5450 = vmul.f32 %v3234, 0.5
      %v5451 = vmul.f32 %v3239, 0.5
      %v5452 = vmul.f32 %v3242, 0.5
      %v5453 = vmul.f32 %v3247, 0.5
      %v5454 = vmul.f32 %v3250, 0.5
      %v5455 = vmul.f32 %v3255, 0.5
      %v5456 = vmul.f32 %v3258, 0.5
      %v5457 = vmul.f32 %v3263, 0.5
      %v5458 = vmul.f32 %v3266, 0.5
      %v5459 = vmul.f32 %v3271, 0.5
      %v5460 = vmul.f32 %v3274, 0.5
      %v5461 = vmul.f32 %v3279, 0.5
      %v5462 = vmul.f32 %v3282, 0.5
      %v5463 = vmul.f32 %v3287, 0.5
      %v5464 = vmul.f32 %v3290, 0.5
      %v5465 = vmul.f32 %v3295, 0.5
      %v5466 = vmul.f32 %v3298, 0.5
      %v5467 = vmul.f32 %v3303, 0.5
      %v5468 = vmul.f32 %v3306, 0.5
      %v5469 = vmul.f32 %v3311, 0.5
      %v5470 = vmul.f32 %v3314, 0.5
      %v5471 = vmul.f32 %v3319, 0.5
      %v5472 = vmul.f32 %v3322, 0.5
      %v5473 = vmul.f32 %v3327, 0.5
      %v5474 = vmul.f32 %v3330, 0.5
      %v5475 = vmul.f32 %v3335, 0.5
      %v5476 = vmul.f32 %v3338, 0.5
      %v5477 = vmul.f32 %v3343, 0.5
      %v5478 = vmul.f32 %v3346, 0.5
      %v5479 = vmul.f32 %v3351, 0.5
      %v5480 = vmul.f32 %v3354, 0.5
      %v5481 = vmul.f32 %v3359, 0.5
      %v5482 = vmul.f32 %v3362, 0.5
      %v5483 = vmul.f32 %v3367, 0.5
      %v5484 = vmul.f32 %v3370, 0.5
      %v5485 = vmul.f32 %v3375, 0.5
      %v5486 = vmul.f32 %v3378, 0.5
      %v5487 = vmul.f32 %v3383, 0.5
      %v5488 = vmul.f32 %v3386, 0.5
      %v5489 = vmul.f32 %v3391, 0.5
      %v5490 = vmul.f32 %v3394, 0.5
      %v5491 = vmul.f32 %v3399, 0.5
      %v5492 = vmul.f32 %v3402, 0.5
      %v5493 = vmul.f32 %v3407, 0.5
      %v5494 = vmul.f32 %v3410, 0.5
      %v5495 = vmul.f32 %v3415, 0.5
      %v5496 = vmul.f32 %v3418, 0.5
      %v5497 = vmul.f32 %v3423, 0.5
      %v5498 = vmul.f32 %v3426, 0.5
      %v5499 = vmul.f32 %v3431, 0.5
      %v5500 = vmul.f32 %v3434, 0.5
      %v5501 = vmul.f32 %v3439, 0.5
      %v5502 = vmul.f32 %v3442, 0.5
      %v5503 = vmul.f32 %v3447, 0.5
      %v5504 = vmul.f32 %v3450, 0.5
      %v5505 = vmul.f32 %v3455, 0.5
      %v5506 = vmul.f32 %v3458, 0.5
      %v5507 = vmul.f32 %v3463, 0.5
      %v5508 = vmul.f32 %v3466, 0.5
      %v5509 = vmul.f32 %v3471, 0.5
      %v5510 = vmul.f32 %v3474, 0.5
      %v5511 = vmul.f32 %v3479, 0.5
      %v5512 = vmul.f32 %v3482, 0.5
      %v5513 = vmul.f32 %v3487, 0.5
      %v5514 = vmul.f32 %v3490, 0.5
      %v5515 = vmul.f32 %v3495, 0.5
      %v5516 = vmul.f32 %v3498, 0.5
      %v5517 = vmul.f32 %v3503, 0.5
      %v5518 = vmul.f32 %v3506, 0.5
      %v5519 = vmul.f32 %v3511, 0.5
      %v5520 = vmul.f32 %v3514, 0.5
      %v5521 = vmul.f32 %v3519, 0.5
      %v5522 = vmul.f32 %v3522, 0.5
      %v5523 = vmul.f32 %v3527, 0.5
      %v5524 = vmul.f32 %v3530, 0.5
      %v5525 = vmul.f32 %v3535, 0.5
      %v5526 = vmul.f32 %v3538, 0.5
      %v5527 = vmul.f32 %v3543, 0.5
      %v5528 = vmul.f32 %v3546, 0.5
      %v5529 = vmul.f32 %v3551, 0.5
      %v5530 = vmul.f32 %v3554, 0.5
      %v5531 = vmul.f32 %v3559, 0.5
      %v5532 = vmul.f32 %v3562, 0.5
      %v5533 = vmul.f32 %v3567, 0.5
      %v5534 = vmul.f32 %v3570, 0.5
      %v5535 = vmul.f32 %v3575, 0.5
      %v5536 = vmul.f32 %v3578, 0.5
      %v5537 = vmul.f32 %v3583, 0.5
      %v5538 = vmul.f32 %v3586, 0.5
      %v5539 = vmul.f32 %v3591, 0.5
      %v5540 = vmul.f32 %v3594, 0.5
      %v5541 = vmul.f32 %v3599, 0.5
      %v5542 = vmul.f32 %v3602, 0.5
      %v5543 = vmul.f32 %v3607, 0.5
      %v5544 = vmul.f32 %v3610, 0.5
      %v5545 = vmul.f32 %v3615, 0.5
      %v5546 = vmul.f32 %v3618, 0.5
      %v5547 = vmul.f32 %v3623, 0.5
      %v5548 = vmul.f32 %v3626, 0.5
      %v5549 = vmul.f32 %v3631, 0.5
      %v5550 = vmul.f32 %v3634, 0.5
      %v5551 = vmul.f32 %v3639, 0.5
      %v5552 = vmul.f32 %v3642, 0.5
      %v5553 = vmul.f32 %v3647, 0.5
      %v5554 = vmul.f32 %v3650, 0.5
      %v5555 = vmul.f32 %v3655, 0.5
      %v5556 = vmul.f32 %v3658, 0.5
      %v5557 = vmul.f32 %v3663, 0.5
      %v5558 = vmul.f32 %v3666, 0.5
      %v5559 = vmul.f32 %v3671, 0.5
      %v5560 = vmul.f32 %v3674, 0.5
      %v5561 = vmul.f32 %v3679, 0.5
      %v5562 = vmul.f32 %v3682, 0.5
      %v5563 = vmul.f32 %v3687, 0.5
      %v5564 = vmul.f32 %v3690, 0.5
      %v5565 = vmul.f32 %v3695, 0.5
      %v5566 = vmul.f32 %v3698, 0.5
      %v5567 = vmul.f32 %v3703, 0.5
      %v5568 = vmul.f32 %v3706, 0.5
      %v5569 = vmul.f32 %v3711, 0.5
      %v5570 = vmul.f32 %v3714, 0.5
      %v5571 = vmul.f32 %v3719, 0.5
      %v5572 = vmul.f32 %v3722, 0.5
      %v5573 = vmul.f32 %v3727, 0.5
      %v5574 = vmul.f32 %v3730, 0.5
      %v5575 = vmul.f32 %v3735, 0.5
      %v5576 = vmul.f32 %v3738, 0.5
      %v5577 = vmul.f32 %v3743, 0.5
      %v5578 = vmul.f32 %v3746, 0.5
      %v5579 = vmul.f32 %v3751, 0.5
      %v5580 = vmul.f32 %v3754, 0.5
      %v5581 = vmul.f32 %v3759, 0.5
      %v5582 = vmul.f32 %v3762, 0.5
      %v5583 = vmul.f32 %v3767, 0.5
      %v5584 = vmul.f32 %v3770, 0.5
      %v5585 = vmul.f32 %v3775, 0.5
      %v5586 = vmul.f32 %v3778, 0.5
      %v5587 = vmul.f32 %v3783, 0.5
      %v5588 = vmul.f32 %v3786, 0.5
      %v5589 = vmul.f32 %v3791, 0.5
      %v5590 = vmul.f32 %v3794, 0.5
      %v5591 = vmul.f32 %v3799, 0.5
      %v5592 = vmul.f32 %v3802, 0.5
      %v5593 = vmul.f32 %v3807, 0.5
      %v5594 = vmul.f32 %v3810, 0.5
      %v5595 = vmul.f32 %v3815, 0.5
      %v5596 = vmul.f32 %v3818, 0.5
      %v5597 = vmul.f32 %v3823, 0.5
      %v5598 = vmul.f32 %v3826, 0.5
      %v5599 = vmul.f32 %v3831, 0.5
      %v5600 = vmul.f32 %v3834, 0.5
      %v5601 = vmul.f32 %v3839, 0.5
      %v5602 = vmul.f32 %v3842, 0.5
      %v5603 = vmul.f32 %v3847, 0.5
      %v5604 = vmul.f32 %v3850, 0.5
      %v5605 = vmul.f32 %v3855, 0.5
      %v5606 = vmul.f32 %v3858, 0.5
      %v5607 = vmul.f32 %v3863, 0.5
      %v5608 = vmul.f32 %v3866, 0.5
      %v5609 = vmul.f32 %v3871, 0.5
      %v5610 = vmul.f32 %v3874, 0.5
      %v5611 = vmul.f32 %v3879, 0.5
      %v5612 = vmul.f32 %v3882, 0.5
      %v5613 = vmul.f32 %v3887, 0.5
      %v5614 = vmul.f32 %v3890, 0.5
      %v5615 = vmul.f32 %v3895, 0.5
      %v5616 = vmul.f32 %v3898, 0.5
      %v5617 = vmul.f32 %v3903, 0.5
      %v5618 = vmul.f32 %v3906, 0.5
      %v5619 = vmul.f32 %v3911, 0.5
      %v5620 = vmul.f32 %v3914, 0.5
      %v5621 = vmul.f32 %v3919, 0.5
      %v5622 = vmul.f32 %v3922, 0.5
      %v5623 = vmul.f32 %v3927, 0.5
      %v5624 = vmul.f32 %v3930, 0.5
      %v5625 = vmul.f32 %v3935, 0.5
      %v5626 = vmul.f32 %v3938, 0.5
      %v5627 = vmul.f32 %v3943, 0.5
      %v5628 = vmul.f32 %v3946, 0.5
      %v5629 = vmul.f32 %v3951, 0.5
      %v5630 = vmul.f32 %v3954, 0.5
      %v5631 = vmul.f32 %v3959, 0.5
      %v5632 = vmul.f32 %v3962, 0.5
      %v5633 = vmul.f32 %v3967, 0.5
      %v5634 = vmul.f32 %v3970, 0.5
      %v5635 = vmul.f32 %v3975, 0.5
      %v5636 = vmul.f32 %v3978, 0.5
      %v5637 = vmul.f32 %v3983, 0.5
      %v5638 = vmul.f32 %v3986, 0.5
      %v5639 = vmul.f32 %v3991, 0.5
      %v5640 = vmul.f32 %v3994, 0.5
      %v5641 = vmul.f32 %v3999, 0.5
      %v5642 = vmul.f32 %v4002, 0.5
      %v5643 = vmul.f32 %v4007, 0.5
      %v5644 = vmul.f32 %v4010, 0.5
      %v5645 = vmul.f32 %v4015, 0.5
      %v5646 = vmul.f32 %v4018, 0.5
      %v5647 = vmul.f32 %v4023, 0.5
      %v5648 = vmul.f32 %v4026, 0.5
      %v5649 = vmul.f32 %v4031, 0.5
      %v5650 = vmul.f32 %v4034, 0.5
      %v5651 = vmul.f32 %v4039, 0.5
      %v5652 = vmul.f32 %v4042, 0.5
      %v5653 = vmul.f32 %v4047, 0.5
      %v5654 = vmul.f32 %v4050, 0.5
      %v5655 = vmul.f32 %v4055, 0.5
      %v5656 = vmul.f32 %v4058, 0.5
      %v5657 = vmul.f32 %v4063, 0.5
      %v5658 = vmul.f32 %v4066, 0.5
      %v5659 = vmul.f32 %v4071, 0.5
      %v5660 = vmul.f32 %v4074, 0.5
      %v5661 = vmul.f32 %v4079, 0.5
      %v5662 = vmul.f32 %v4082, 0.5
      %v5663 = vmul.f32 %v4087, 0.5
      %v5664 = vmul.f32 %v4090, 0.5
      %v5665 = vmul.f32 %v4095, 0.5
      %v5666 = vmul.f32 %v4098, 0.5
      %v5667 = vmul.f32 %v4103, 0.5
      %v5668 = vmul.f32 %v4106, 0.5
      %v5669 = vmul.f32 %v4111, 0.5
      %v5670 = vmul.f32 %v4114, 0.5
      %v5671 = vmul.f32 %v4119, 0.5
      %v5672 = vmul.f32 %v4122, 0.5
      %v5673 = vmul.f32 %v4127, 0.5
      %v5674 = vmul.f32 %v4130, 0.5
      %v5675 = vmul.f32 %v4135, 0.5
      %v5676 = vmul.f32 %v4138, 0.5
      %v5677 = vmul.f32 %v4143, 0.5
      %v5678 = vmul.f32 %v4146, 0.5
      %v5679 = vmul.f32 %v4151, 0.5
      %v5680 = vmul.f32 %v4154, 0.5
      %v5681 = vmul.f32 %v4159, 0.5
      %v5682 = vmul.f32 %v4162, 0.5
      %v5683 = vmul.f32 %v4167, 0.5
      %v5684 = vmul.f32 %v4170, 0.5
      %v5685 = vmul.f32 %v4175, 0.5
      %v5686 = vmul.f32 %v4178, 0.5
      %v5687 = vmul.f32 %v4183, 0.5
      %v5688 = vmul.f32 %v4186, 0.5
      %v5689 = vmul.f32 %v4191, 0.5
      %v5690 = vmul.f32 %v4194, 0.5
      %v5691 = vmul.f32 %v4199, 0.5
      %v5692 = vmul.f32 %v4202, 0.5
      %v5693 = vmul.f32 %v4207, 0.5
      %v5694 = vmul.f32 %v4210, 0.5
      %v5695 = vmul.f32 %v4215, 0.5
      %v5696 = vmul.f32 %v4218, 0.5
      %v5697 = vmul.f32 %v4223, 0.5
      %v5698 = vmul.f32 %v4226, 0.5
      %v5699 = vmul.f32 %v4231, 0.5
      %v5700 = vmul.f32 %v4234, 0.5
      %v5701 = vmul.f32 %v4239, 0.5
      %v5702 = vmul.f32 %v4242, 0.5
      %v5703 = vmul.f32 %v4247, 0.5
      %v5704 = vmul.f32 %v4250, 0.5
      %v5705 = vmul.f32 %v4255, 0.5
      %v5706 = vmul.f32 %v4258, 0.5
      %v5707 = vmul.f32 %v4263, 0.5
      %v5708 = vmul.f32 %v4266, 0.5
      %v5709 = vmul.f32 %v4271, 0.5
      %v5710 = vmul.f32 %v4274, 0.5
      %v5711 = vmul.f32 %v4279, 0.5
      %v5712 = vmul.f32 %v4282, 0.5
      %v5713 = vmul.f32 %v4287, 0.5
      %v5714 = vmul.f32 %v4290, 0.5
      %v5715 = vmul.f32 %v4295, 0.5
      %v5716 = vmul.f32 %v4298, 0.5
      %v5717 = vmul.f32 %v4303, 0.5
      %v5718 = vmul.f32 %v4306, 0.5
      %v5719 = vmul.f32 %v4311, 0.5
      %v5720 = vmul.f32 %v4314, 0.5
      %v5721 = vmul.f32 %v4319, 0.5
      %v5722 = vmul.f32 %v4322, 0.5
      %v5723 = vmul.f32 %v4327, 0.5
      %v5724 = vmul.f32 %v4330, 0.5
      %v5725 = vmul.f32 %v4335, 0.5
      %v5726 = vmul.f32 %v4338, 0.5
      %v5727 = vmul.f32 %v4343, 0.5
      %v5728 = vmul.f32 %v4346, 0.5
      %v5729 = vmul.f32 %v4351, 0.5
      %v5730 = vmul.f32 %v4354, 0.5
      %v5731 = vmul.f32 %v4359, 0.5
      %v5732 = vmul.f32 %v4362, 0.5
      %v5733 = vmul.f32 %v4367, 0.5
      %v5734 = vmul.f32 %v4370, 0.5
      %v5735 = vmul.f32 %v4375, 0.5
      %v5736 = vmul.f32 %v4378, 0.5
      %v5737 = vmul.f32 %v4383, 0.5
      %v5738 = vmul.f32 %v4386, 0.5
      %v5739 = vmul.f32 %v4391, 0.5
      %v5740 = vmul.f32 %v4394, 0.5
      %v5741 = vmul.f32 %v4399, 0.5
      %v5742 = vmul.f32 %v4402, 0.5
      %v5743 = vmul.f32 %v4407, 0.5
      %v5744 = vmul.f32 %v4410, 0.5
      %v5745 = vmul.f32 %v4415, 0.5
      %v5746 = vmul.f32 %v4418, 0.5
      %v5747 = vmul.f32 %v4423, 0.5
      %v5748 = vmul.f32 %v4426, 0.5
      %v5749 = vmul.f32 %v4431, 0.5
      %v5750 = vmul.f32 %v4434, 0.5
      %v5751 = vmul.f32 %v4439, 0.5
      %v5752 = vmul.f32 %v4442, 0.5
      %v5753 = vmul.f32 %v4447, 0.5
      %v5754 = vmul.f32 %v4450, 0.5
      %v5755 = vmul.f32 %v4455, 0.5
      %v5756 = vmul.f32 %v4458, 0.5
      %v5757 = vmul.f32 %v4463, 0.5
      %v5758 = vmul.f32 %v4466, 0.5
      %v5759 = vmul.f32 %v4471, 0.5
      %v5760 = vmul.f32 %v4474, 0.5
      %v5761 = vmul.f32 %v4479, 0.5
      %v5762 = vmul.f32 %v4482, 0.5
      %v5763 = vmul.f32 %v4487, 0.5
      %v5764 = vmul.f32 %v4490, 0.5
      %v5765 = vmul.f32 %v4495, 0.5
      %v5766 = vmul.f32 %v4498, 0.5
      %v5767 = vmul.f32 %v4503, 0.5
      %v5768 = vmul.f32 %v4506, 0.5
      %v5769 = vmul.f32 %v4511, 0.5
      %v5770 = vmul.f32 %v4514, 0.5
      %v5771 = vmul.f32 %v4519, 0.5
      %v5772 = vmul.f32 %v4522, 0.5
      %v5773 = vmul.f32 %v4527, 0.5
      %v5774 = vmul.f32 %v4530, 0.5
      %v5775 = vmul.f32 %v4535, 0.5
      %v5776 = vmul.f32 %v4538, 0.5
      %v5777 = vmul.f32 %v4543, 0.5
      %v5778 = vmul.f32 %v4546, 0.5
      %v5779 = vmul.f32 %v4551, 0.5
      %v5780 = vmul.f32 %v4554, 0.5
      %v5781 = vmul.f32 %v4559, 0.5
      %v5782 = vmul.f32 %v4562, 0.5
      %v5783 = vmul.f32 %v4567, 0.5
      %v5784 = vmul.f32 %v4570, 0.5
      %v5785 = vmul.f32 %v4575, 0.5
      %v5786 = vmul.f32 %v4578, 0.5
      %v5787 = vmul.f32 %v4583, 0.5
      %v5788 = vmul.f32 %v4586, 0.5
      %v5789 = vmul.f32 %v4591, 0.5
      %v5790 = vmul.f32 %v4594, 0.5
      %v5791 = vmul.f32 %v4599, 0.5
      %v5792 = vmul.f32 %v4602, 0.5
      %v5793 = vmul.f32 %v4607, 0.5
      %v5794 = vmul.f32 %v4610, 0.5
      %v5795 = vmul.f32 %v4615, 0.5
      %v5796 = vmul.f32 %v4618, 0.5
      %v5797 = vmul.f32 %v4623, 0.5
      %v5798 = vmul.f32 %v4626, 0.5
      %v5799 = vmul.f32 %v4631, 0.5
      %v5800 = vmul.f32 %v4634, 0.5
      %v5801 = vmul.f32 %v4639, 0.5
      %v5802 = vmul.f32 %v4642, 0.5
      %v5803 = vmul.f32 %v4647, 0.5
      %v5804 = vmul.f32 %v4650, 0.5
      %v5805 = vmul.f32 %v4655, 0.5
      %v5806 = vmul.f32 %v4658, 0.5
      %v5807 = vmul.f32 %v4663, 0.5
      %v5808 = vmul.f32 %v4666, 0.5
      %v5809 = vmul.f32 %v4671, 0.5
      %v5810 = vmul.f32 %v4674, 0.5
      %v5811 = vmul.f32 %v4679, 0.5
      %v5812 = vmul.f32 %v4682, 0.5
      %v5813 = vmul.f32 %v4687, 0.5
      %v5814 = vmul.f32 %v4690, 0.5
      %v5815 = vmul.f32 %v4695, 0.5
      %v5816 = vmul.f32 %v4698, 0.5
      %v5817 = vmul.f32 %v4703, 0.5
      %v5818 = vmul.f32 %v4706, 0.5
      %v5819 = vmul.f32 %v4711, 0.5
      %v5820 = vmul.f32 %v4714, 0.5
      %v5821 = vmul.f32 %v4719, 0.5
      %v5822 = vmul.f32 %v4722, 0.5
      %v5823 = vmul.f32 %v4727, 0.5
      %v5824 = vmul.f32 %v4730, 0.5
      %v5825 = vmul.f32 %v4735, 0.5
      %v5826 = vmul.f32 %v4738, 0.5
      %v5827 = vmul.f32 %v4743, 0.5
      %v5828 = vmul.f32 %v4746, 0.5
      %v5829 = vmul.f32 %v4751, 0.5
      %v5830 = vmul.f32 %v4754, 0.5
      %v5831 = vmul.f32 %v4759, 0.5
      %v5832 = vmul.f32 %v4762, 0.5
      %v5833 = vmul.f32 %v4767, 0.5
      %v5834 = vmul.f32 %v4770, 0.5
      %v5835 = vmul.f32 %v4775, 0.5
      %v5836 = vmul.f32 %v4778, 0.5
      %v5837 = vmul.f32 %v4783, 0.5
      %v5838 = vmul.f32 %v4786, 0.5
      %v5839 = vmul.f32 %v4791, 0.5
      %v5840 = vmul.f32 %v4794, 0.5
      %v5841 = vmul.f32 %v4799, 0.5
      %v5842 = vmul.f32 %v4802, 0.5
      %v5843 = vmul.f32 %v4807, 0.5
      %v5844 = vmul.f32 %v4810, 0.5
      %v5845 = vmul.f32 %v4815, 0.5
      %v5846 = vmul.f32 %v4818, 0.5
      %v5847 = vmul.f32 %v4823, 0.5
      %v5848 = vmul.f32 %v4826, 0.5
      %v5849 = vmul.f32 %v4831, 0.5
      %v5850 = vmul.f32 %v4834, 0.5
      %v5851 = vmul.f32 %v4839, 0.5
      %v5852 = vmul.f32 %v4842, 0.5
      %v5853 = vmul.f32 %v4847, 0.5
      %v5854 = vmul.f32 %v4850, 0.5
      %v5855 = vmul.f32 %v4855, 0.5
      %v5856 = vmul.f32 %v4858, 0.5
      %v5857 = vmul.f32 %v4863, 0.5
      %v5858 = vmul.f32 %v4866, 0.5
      %v5859 = vmul.f32 %v4871, 0.5
      %v5860 = vmul.f32 %v4874, 0.5
      %v5861 = vmul.f32 %v4879, 0.5
      %v5862 = vmul.f32 %v4882, 0.5
      %v5863 = vmul.f32 %v4887, 0.5
      %v5864 = vmul.f32 %v4890, 0.5
      %v5865 = vmul.f32 %v4895, 0.5
      %v5866 = vmul.f32 %v4898, 0.5
      %v5867 = vmul.f32 %v4903, 0.5
      %v5868 = vmul.f32 %v4906, 0.5
      %v5869 = vmul.f32 %v4911, 0.5
      %v5870 = vmul.f32 %v4914, 0.5
      %v5871 = vmul.f32 %v4919, 0.5
      %v5872 = vmul.f32 %v4922, 0.5
      %v5873 = vmul.f32 %v4927, 0.5
      %v5874 = vmul.f32 %v4930, 0.5
      %v5875 = vmul.f32 %v4935, 0.5
      %v5876 = vmul.f32 %v4938, 0.5
      %v5877 = vmul.f32 %v4943, 0.5
      %v5878 = vmul.f32 %v4946, 0.5
      %v5879 = vmul.f32 %v4951, 0.5
      %v5880 = vmul.f32 %v4954, 0.5
      %v5881 = vmul.f32 %v4959, 0.5
      %v5882 = vmul.f32 %v4962, 0.5
      %v5883 = vmul.f32 %v4967, 0.5
      %v5884 = vmul.f32 %v4970, 0.5
      %v5885 = vmul.f32 %v4975, 0.5
      %v5886 = vmul.f32 %v4978, 0.5
      %v5887 = vmul.f32 %v4983, 0.5
      %v5888 = vmul.f32 %v4986, 0.5
      %v5889 = vmul.f32 %v4991, 0.5
      %v5890 = vmul.f32 %v4994, 0.5
      %v5891 = vmul.f32 %v4999, 0.5
      %v5892 = vmul.f32 %v5002, 0.5
      %v5893 = vmul.f32 %v5007, 0.5
      %v5894 = vmul.f32 %v5010, 0.5
      %v5895 = vmul.f32 %v5015, 0.5
      %v5896 = vmul.f32 %v5018, 0.5
      %v5897 = vmul.f32 %v5023, 0.5
      %v5898 = vmul.f32 %v5026, 0.5
      %v5899 = vmul.f32 %v5031, 0.5
      %v5900 = vmul.f32 %v5034, 0.5
      %v5901 = vmul.f32 %v5039, 0.5
      %v5902 = vmul.f32 %v5042, 0.5
      %v5903 = vmul.f32 %v5047, 0.5
      %v5904 = vmul.f32 %v5050, 0.5
      %v5905 = vmul.f32 %v5055, 0.5
      %v5906 = vmul.f32 %v5058, 0.5
      %v5907 = vmul.f32 %v5063, 0.5
      %v5908 = vmul.f32 %v5066, 0.5
      %v5909 = vmul.f32 %v5071, 0.5
      %v5910 = vmul.f32 %v5074, 0.5
      %v5911 = vmul.f32 %v5079, 0.5
      %v5912 = vmul.f32 %v5082, 0.5
      %v5913 = vmul.f32 %v5087, 0.5
      %v5914 = vmul.f32 %v5090, 0.5
      %v5915 = vmul.f32 %v5095, 0.5
      %v5916 = vmul.f32 %v5098, 0.5
      %v5917 = vmul.f32 %v5103, 0.5
      %v5918 = vmul.f32 %v5106, 0.5
      %v5919 = vmul.f32 %v5111, 0.5
      %v5920 = vmul.f32 %v5114, 0.5
      %v5921 = vmul.f32 %v5119, 0.5
      %v5922 = vmul.f32 %v5122, 0.5
      %v5923 = vmul.f32 %v5127, 0.5
      %v5924 = vmul.f32 %v5130, 0.5
      %v5925 = vmul.f32 %v5135, 0.5
      %v5926 = vmul.f32 %v5138, 0.5
      %v5927 = vmul.f32 %v5143, 0.5
      %v5928 = vmul.f32 %v5146, 0.5
      %v5929 = vmul.f32 %v5151, 0.5
      %v5930 = vmul.f32 %v5154, 0.5
      %v5931 = vmul.f32 %v5159, 0.5
      %v5932 = vmul.f32 %v5162, 0.5
      %v5933 = vmul.f32 %v5167, 0.5
      %v5934 = vmul.f32 %v5170, 0.5
      %v5935 = vmul.f32 %v5175, 0.5
      %v5936 = vmul.f32 %v5178, 0.5
      %v5937 = vmul.f32 %v5183, 0.5
      %v5938 = vmul.f32 %v5186, 0.5
      %v5939 = vmul.f32 %v5191, 0.5
      %v5940 = vmul.f32 %v5194, 0.5
      %v5941 = vmul.f32 %v5199, 0.5
      %v5942 = vmul.f32 %v5202, 0.5
      %v5943 = vmul.f32 %v5207, 0.5
      %v5944 = vmul.f32 %v5210, 0.5
      %v5945 = vmul.f32 %v5215, 0.5
      %v5946 = vmul.f32 %v5218, 0.5
      %v5947 = vmul.f32 %v5223, 0.5
      %v5948 = vmul.f32 %v5226, 0.5
      %v5949 = vmul.f32 %v5231, 0.5
      %v5950 = vmul.f32 %v5234, 0.5
      %v5951 = vmul.f32 %v5239, 0.5
      %v5952 = vmul.f32 %v5242, 0.5
      %v5953 = vmul.f32 %v5247, 0.5
      %v5954 = vmul.f32 %v5250, 0.5
      %v5955 = vmul.f32 %v5255, 0.5
      %v5956 = vmul.f32 %v5258, 0.5
      %v5957 = vmul.f32 %v5263, 0.5
      %v5958 = vmul.f32 %v5266, 0.5
      %v5959 = vmul.f32 %v5271, 0.5
      %v5960 = vmul.f32 %v5274, 0.5
      %v5961 = vmul.f32 %v5279, 0.5
      %v5962 = vmul.f32 %v5282, 0.5
      %v5963 = vmul.f32 %v5287, 0.5
      %v5964 = vmul.f32 %v5290, 0.5
      %v5965 = vmul.f32 %v5295, 0.5
      %v5966 = vmul.f32 %v5298, 0.5
      %v5967 = vmul.f32 %v5303, 0.5
      %v5968 = vmul.f32 %v5306, 0.5
      %v5969 = vmul.f32 %v5311, 0.5
      %v5970 = vmul.f32 %v5314, 0.5
      %v5971 = vmul.f32 %v5319, 0.5
      %v5972 = vmul.f32 %v5322, 0.5
      %v5973 = vmul.f32 %v5327, 0.5
      %v5974 = vmul.f32 %v5330, 0.5
      %v5975 = vmul.f32 %v5335, 0.5
      %v5976 = vmul.f32 %v5338, 0.5
      %v5977 = vmul.f32 %v5343, 0.5
      %v5978 = vmul.f32 %v5346, 0.5
      %v5979 = vmul.f32 %v5351, 0.5
      %v5980 = vmul.f32 %v5354, 0.5
      %v5981 = vmul.f32 %v5359, 0.5
      %v5982 = vmul.f32 %v5362, 0.5
      %v5983 = vmul.f32 %v5367, 0.5
      %v5984 = vmul.f32 %v5370, 0.5
      %v5985 = vmul.f32 %v5375, 0.5
      %v5986 = vmul.f32 %v5378, 0.5
      %v5987 = vmul.f32 %v5383, 0.5
      %v5988 = vmul.f32 %v5386, 0.5
      %v5989 = vmul.f32 %v5391, 0.5
      %v5990 = vmul.f32 %v5394, 0.5
      %v5991 = vmul.f32 %v5399, 0.5
      %v5992 = vmul.f32 %v5402, 0.5
      %v5993 = vmul.f32 %v5407, 0.5
      %v5994 = vmul.f32 %v5410, 0.5
      %v5995 = vmul.f32 %v5415, 0.5
      %v5996 = vmul.f32 %v5418, 0.5
      %v5997 = vtanh.pop %v5421
      %v5998 = vtanh.pop %v5422
      %v5999 = vtanh.pop %v5423
      %v6000 = vtanh.pop %v5424
      %v6001 = vtanh.pop %v5425
      %v6002 = vtanh.pop %v5426
      %v6003 = vtanh.pop %v5427
      %v6004 = vtanh.pop %v5428
      %v6005 = vtanh.pop %v5429
      %v6006 = vtanh.pop %v5430
      %v6007 = vtanh.pop %v5431
      %v6008 = vtanh.pop %v5432
      %v6009 = vtanh.pop %v5433
      %v6010 = vtanh.pop %v5434
      %v6011 = vtanh.pop %v5435
      %v6012 = vtanh.pop %v5436
      %v6013 = vtanh.pop %v5437
      %v6014 = vtanh.pop %v5438
      %v6015 = vtanh.pop %v5439
      %v6016 = vtanh.pop %v5440
      %v6017 = vtanh.pop %v5441
      %v6018 = vtanh.pop %v5442
      %v6019 = vtanh.pop %v5443
      %v6020 = vtanh.pop %v5444
      %v6021 = vtanh.pop %v5445
      %v6022 = vtanh.pop %v5446
      %v6023 = vtanh.pop %v5447
      %v6024 = vtanh.pop %v5448
      %v6025 = vtanh.pop %v5449
      %v6026 = vtanh.pop %v5450
      %v6027 = vtanh.pop %v5451
      %v6028 = vtanh.pop %v5452
      %v6029 = vtanh.pop %v5453
      %v6030 = vtanh.pop %v5454
      %v6031 = vtanh.pop %v5455
      %v6032 = vtanh.pop %v5456
      %v6033 = vtanh.pop %v5457
      %v6034 = vtanh.pop %v5458
      %v6035 = vtanh.pop %v5459
      %v6036 = vtanh.pop %v5460
      %v6037 = vtanh.pop %v5461
      %v6038 = vtanh.pop %v5462
      %v6039 = vtanh.pop %v5463
      %v6040 = vtanh.pop %v5464
      %v6041 = vtanh.pop %v5465
      %v6042 = vtanh.pop %v5466
      %v6043 = vtanh.pop %v5467
      %v6044 = vtanh.pop %v5468
      %v6045 = vtanh.pop %v5469
      %v6046 = vtanh.pop %v5470
      %v6047 = vtanh.pop %v5471
      %v6048 = vtanh.pop %v5472
      %v6049 = vtanh.pop %v5473
      %v6050 = vtanh.pop %v5474
      %v6051 = vtanh.pop %v5475
      %v6052 = vtanh.pop %v5476
      %v6053 = vtanh.pop %v5477
      %v6054 = vtanh.pop %v5478
      %v6055 = vtanh.pop %v5479
      %v6056 = vtanh.pop %v5480
      %v6057 = vtanh.pop %v5481
      %v6058 = vtanh.pop %v5482
      %v6059 = vtanh.pop %v5483
      %v6060 = vtanh.pop %v5484
      %v6061 = vtanh.pop %v5485
      %v6062 = vtanh.pop %v5486
      %v6063 = vtanh.pop %v5487
      %v6064 = vtanh.pop %v5488
      %v6065 = vtanh.pop %v5489
      %v6066 = vtanh.pop %v5490
      %v6067 = vtanh.pop %v5491
      %v6068 = vtanh.pop %v5492
      %v6069 = vtanh.pop %v5493
      %v6070 = vtanh.pop %v5494
      %v6071 = vtanh.pop %v5495
      %v6072 = vtanh.pop %v5496
      %v6073 = vtanh.pop %v5497
      %v6074 = vtanh.pop %v5498
      %v6075 = vtanh.pop %v5499
      %v6076 = vtanh.pop %v5500
      %v6077 = vtanh.pop %v5501
      %v6078 = vtanh.pop %v5502
      %v6079 = vtanh.pop %v5503
      %v6080 = vtanh.pop %v5504
      %v6081 = vtanh.pop %v5505
      %v6082 = vtanh.pop %v5506
      %v6083 = vtanh.pop %v5507
      %v6084 = vtanh.pop %v5508
      %v6085 = vtanh.pop %v5509
      %v6086 = vtanh.pop %v5510
      %v6087 = vtanh.pop %v5511
      %v6088 = vtanh.pop %v5512
      %v6089 = vtanh.pop %v5513
      %v6090 = vtanh.pop %v5514
      %v6091 = vtanh.pop %v5515
      %v6092 = vtanh.pop %v5516
      %v6093 = vtanh.pop %v5517
      %v6094 = vtanh.pop %v5518
      %v6095 = vtanh.pop %v5519
      %v6096 = vtanh.pop %v5520
      %v6097 = vtanh.pop %v5521
      %v6098 = vtanh.pop %v5522
      %v6099 = vtanh.pop %v5523
      %v6100 = vtanh.pop %v5524
      %v6101 = vtanh.pop %v5525
      %v6102 = vtanh.pop %v5526
      %v6103 = vtanh.pop %v5527
      %v6104 = vtanh.pop %v5528
      %v6105 = vtanh.pop %v5529
      %v6106 = vtanh.pop %v5530
      %v6107 = vtanh.pop %v5531
      %v6108 = vtanh.pop %v5532
      %v6109 = vtanh.pop %v5533
      %v6110 = vtanh.pop %v5534
      %v6111 = vtanh.pop %v5535
      %v6112 = vtanh.pop %v5536
      %v6113 = vtanh.pop %v5537
      %v6114 = vtanh.pop %v5538
      %v6115 = vtanh.pop %v5539
      %v6116 = vtanh.pop %v5540
      %v6117 = vtanh.pop %v5541
      %v6118 = vtanh.pop %v5542
      %v6119 = vtanh.pop %v5543
      %v6120 = vtanh.pop %v5544
      %v6121 = vtanh.pop %v5545
      %v6122 = vtanh.pop %v5546
      %v6123 = vtanh.pop %v5547
      %v6124 = vtanh.pop %v5548
      %v6125 = vtanh.pop %v5549
      %v6126 = vtanh.pop %v5550
      %v6127 = vtanh.pop %v5551
      %v6128 = vtanh.pop %v5552
      %v6129 = vtanh.pop %v5553
      %v6130 = vtanh.pop %v5554
      %v6131 = vtanh.pop %v5555
      %v6132 = vtanh.pop %v5556
      %v6133 = vtanh.pop %v5557
      %v6134 = vtanh.pop %v5558
      %v6135 = vtanh.pop %v5559
      %v6136 = vtanh.pop %v5560
      %v6137 = vtanh.pop %v5561
      %v6138 = vtanh.pop %v5562
      %v6139 = vtanh.pop %v5563
      %v6140 = vtanh.pop %v5564
      %v6141 = vtanh.pop %v5565
      %v6142 = vtanh.pop %v5566
      %v6143 = vtanh.pop %v5567
      %v6144 = vtanh.pop %v5568
      %v6145 = vtanh.pop %v5569
      %v6146 = vtanh.pop %v5570
      %v6147 = vtanh.pop %v5571
      %v6148 = vtanh.pop %v5572
      %v6149 = vtanh.pop %v5573
      %v6150 = vtanh.pop %v5574
      %v6151 = vtanh.pop %v5575
      %v6152 = vtanh.pop %v5576
      %v6153 = vtanh.pop %v5577
      %v6154 = vtanh.pop %v5578
      %v6155 = vtanh.pop %v5579
      %v6156 = vtanh.pop %v5580
      %v6157 = vtanh.pop %v5581
      %v6158 = vtanh.pop %v5582
      %v6159 = vtanh.pop %v5583
      %v6160 = vtanh.pop %v5584
      %v6161 = vtanh.pop %v5585
      %v6162 = vtanh.pop %v5586
      %v6163 = vtanh.pop %v5587
      %v6164 = vtanh.pop %v5588
      %v6165 = vtanh.pop %v5589
      %v6166 = vtanh.pop %v5590
      %v6167 = vtanh.pop %v5591
      %v6168 = vtanh.pop %v5592
      %v6169 = vtanh.pop %v5593
      %v6170 = vtanh.pop %v5594
      %v6171 = vtanh.pop %v5595
      %v6172 = vtanh.pop %v5596
      %v6173 = vtanh.pop %v5597
      %v6174 = vtanh.pop %v5598
      %v6175 = vtanh.pop %v5599
      %v6176 = vtanh.pop %v5600
      %v6177 = vtanh.pop %v5601
      %v6178 = vtanh.pop %v5602
      %v6179 = vtanh.pop %v5603
      %v6180 = vtanh.pop %v5604
      %v6181 = vtanh.pop %v5605
      %v6182 = vtanh.pop %v5606
      %v6183 = vtanh.pop %v5607
      %v6184 = vtanh.pop %v5608
      %v6185 = vtanh.pop %v5609
      %v6186 = vtanh.pop %v5610
      %v6187 = vtanh.pop %v5611
      %v6188 = vtanh.pop %v5612
      %v6189 = vtanh.pop %v5613
      %v6190 = vtanh.pop %v5614
      %v6191 = vtanh.pop %v5615
      %v6192 = vtanh.pop %v5616
      %v6193 = vtanh.pop %v5617
      %v6194 = vtanh.pop %v5618
      %v6195 = vtanh.pop %v5619
      %v6196 = vtanh.pop %v5620
      %v6197 = vtanh.pop %v5621
      %v6198 = vtanh.pop %v5622
      %v6199 = vtanh.pop %v5623
      %v6200 = vtanh.pop %v5624
      %v6201 = vtanh.pop %v5625
      %v6202 = vtanh.pop %v5626
      %v6203 = vtanh.pop %v5627
      %v6204 = vtanh.pop %v5628
      %v6205 = vtanh.pop %v5629
      %v6206 = vtanh.pop %v5630
      %v6207 = vtanh.pop %v5631
      %v6208 = vtanh.pop %v5632
      %v6209 = vtanh.pop %v5633
      %v6210 = vtanh.pop %v5634
      %v6211 = vtanh.pop %v5635
      %v6212 = vtanh.pop %v5636
      %v6213 = vtanh.pop %v5637
      %v6214 = vtanh.pop %v5638
      %v6215 = vtanh.pop %v5639
      %v6216 = vtanh.pop %v5640
      %v6217 = vtanh.pop %v5641
      %v6218 = vtanh.pop %v5642
      %v6219 = vtanh.pop %v5643
      %v6220 = vtanh.pop %v5644
      %v6221 = vtanh.pop %v5645
      %v6222 = vtanh.pop %v5646
      %v6223 = vtanh.pop %v5647
      %v6224 = vtanh.pop %v5648
      %v6225 = vtanh.pop %v5649
      %v6226 = vtanh.pop %v5650
      %v6227 = vtanh.pop %v5651
      %v6228 = vtanh.pop %v5652
      %v6229 = vtanh.pop %v5653
      %v6230 = vtanh.pop %v5654
      %v6231 = vtanh.pop %v5655
      %v6232 = vtanh.pop %v5656
      %v6233 = vtanh.pop %v5657
      %v6234 = vtanh.pop %v5658
      %v6235 = vtanh.pop %v5659
      %v6236 = vtanh.pop %v5660
      %v6237 = vtanh.pop %v5661
      %v6238 = vtanh.pop %v5662
      %v6239 = vtanh.pop %v5663
      %v6240 = vtanh.pop %v5664
      %v6241 = vtanh.pop %v5665
      %v6242 = vtanh.pop %v5666
      %v6243 = vtanh.pop %v5667
      %v6244 = vtanh.pop %v5668
      %v6245 = vtanh.pop %v5669
      %v6246 = vtanh.pop %v5670
      %v6247 = vtanh.pop %v5671
      %v6248 = vtanh.pop %v5672
      %v6249 = vtanh.pop %v5673
      %v6250 = vtanh.pop %v5674
      %v6251 = vtanh.pop %v5675
      %v6252 = vtanh.pop %v5676
      %v6253 = vtanh.pop %v5677
      %v6254 = vtanh.pop %v5678
      %v6255 = vtanh.pop %v5679
      %v6256 = vtanh.pop %v5680
      %v6257 = vtanh.pop %v5681
      %v6258 = vtanh.pop %v5682
      %v6259 = vtanh.pop %v5683
      %v6260 = vtanh.pop %v5684
      %v6261 = vtanh.pop %v5685
      %v6262 = vtanh.pop %v5686
      %v6263 = vtanh.pop %v5687
      %v6264 = vtanh.pop %v5688
      %v6265 = vtanh.pop %v5689
      %v6266 = vtanh.pop %v5690
      %v6267 = vtanh.pop %v5691
      %v6268 = vtanh.pop %v5692
      %v6269 = vtanh.pop %v5693
      %v6270 = vtanh.pop %v5694
      %v6271 = vtanh.pop %v5695
      %v6272 = vtanh.pop %v5696
      %v6273 = vtanh.pop %v5697
      %v6274 = vtanh.pop %v5698
      %v6275 = vtanh.pop %v5699
      %v6276 = vtanh.pop %v5700
      %v6277 = vtanh.pop %v5701
      %v6278 = vtanh.pop %v5702
      %v6279 = vtanh.pop %v5703
      %v6280 = vtanh.pop %v5704
      %v6281 = vtanh.pop %v5705
      %v6282 = vtanh.pop %v5706
      %v6283 = vtanh.pop %v5707
      %v6284 = vtanh.pop %v5708
      %v6285 = vtanh.pop %v5709
      %v6286 = vtanh.pop %v5710
      %v6287 = vtanh.pop %v5711
      %v6288 = vtanh.pop %v5712
      %v6289 = vtanh.pop %v5713
      %v6290 = vtanh.pop %v5714
      %v6291 = vtanh.pop %v5715
      %v6292 = vtanh.pop %v5716
      %v6293 = vtanh.pop %v5717
      %v6294 = vtanh.pop %v5718
      %v6295 = vtanh.pop %v5719
      %v6296 = vtanh.pop %v5720
      %v6297 = vtanh.pop %v5721
      %v6298 = vtanh.pop %v5722
      %v6299 = vtanh.pop %v5723
      %v6300 = vtanh.pop %v5724
      %v6301 = vtanh.pop %v5725
      %v6302 = vtanh.pop %v5726
      %v6303 = vtanh.pop %v5727
      %v6304 = vtanh.pop %v5728
      %v6305 = vtanh.pop %v5729
      %v6306 = vtanh.pop %v5730
      %v6307 = vtanh.pop %v5731
      %v6308 = vtanh.pop %v5732
      %v6309 = vtanh.pop %v5733
      %v6310 = vtanh.pop %v5734
      %v6311 = vtanh.pop %v5735
      %v6312 = vtanh.pop %v5736
      %v6313 = vtanh.pop %v5737
      %v6314 = vtanh.pop %v5738
      %v6315 = vtanh.pop %v5739
      %v6316 = vtanh.pop %v5740
      %v6317 = vtanh.pop %v5741
      %v6318 = vtanh.pop %v5742
      %v6319 = vtanh.pop %v5743
      %v6320 = vtanh.pop %v5744
      %v6321 = vtanh.pop %v5745
      %v6322 = vtanh.pop %v5746
      %v6323 = vtanh.pop %v5747
      %v6324 = vtanh.pop %v5748
      %v6325 = vtanh.pop %v5749
      %v6326 = vtanh.pop %v5750
      %v6327 = vtanh.pop %v5751
      %v6328 = vtanh.pop %v5752
      %v6329 = vtanh.pop %v5753
      %v6330 = vtanh.pop %v5754
      %v6331 = vtanh.pop %v5755
      %v6332 = vtanh.pop %v5756
      %v6333 = vtanh.pop %v5757
      %v6334 = vtanh.pop %v5758
      %v6335 = vtanh.pop %v5759
      %v6336 = vtanh.pop %v5760
      %v6337 = vtanh.pop %v5761
      %v6338 = vtanh.pop %v5762
      %v6339 = vtanh.pop %v5763
      %v6340 = vtanh.pop %v5764
      %v6341 = vtanh.pop %v5765
      %v6342 = vtanh.pop %v5766
      %v6343 = vtanh.pop %v5767
      %v6344 = vtanh.pop %v5768
      %v6345 = vtanh.pop %v5769
      %v6346 = vtanh.pop %v5770
      %v6347 = vtanh.pop %v5771
      %v6348 = vtanh.pop %v5772
      %v6349 = vtanh.pop %v5773
      %v6350 = vtanh.pop %v5774
      %v6351 = vtanh.pop %v5775
      %v6352 = vtanh.pop %v5776
      %v6353 = vtanh.pop %v5777
      %v6354 = vtanh.pop %v5778
      %v6355 = vtanh.pop %v5779
      %v6356 = vtanh.pop %v5780
      %v6357 = vtanh.pop %v5781
      %v6358 = vtanh.pop %v5782
      %v6359 = vtanh.pop %v5783
      %v6360 = vtanh.pop %v5784
      %v6361 = vtanh.pop %v5785
      %v6362 = vtanh.pop %v5786
      %v6363 = vtanh.pop %v5787
      %v6364 = vtanh.pop %v5788
      %v6365 = vtanh.pop %v5789
      %v6366 = vtanh.pop %v5790
      %v6367 = vtanh.pop %v5791
      %v6368 = vtanh.pop %v5792
      %v6369 = vtanh.pop %v5793
      %v6370 = vtanh.pop %v5794
      %v6371 = vtanh.pop %v5795
      %v6372 = vtanh.pop %v5796
      %v6373 = vtanh.pop %v5797
      %v6374 = vtanh.pop %v5798
      %v6375 = vtanh.pop %v5799
      %v6376 = vtanh.pop %v5800
      %v6377 = vtanh.pop %v5801
      %v6378 = vtanh.pop %v5802
      %v6379 = vtanh.pop %v5803
      %v6380 = vtanh.pop %v5804
      %v6381 = vtanh.pop %v5805
      %v6382 = vtanh.pop %v5806
      %v6383 = vtanh.pop %v5807
      %v6384 = vtanh.pop %v5808
      %v6385 = vtanh.pop %v5809
      %v6386 = vtanh.pop %v5810
      %v6387 = vtanh.pop %v5811
      %v6388 = vtanh.pop %v5812
      %v6389 = vtanh.pop %v5813
      %v6390 = vtanh.pop %v5814
      %v6391 = vtanh.pop %v5815
      %v6392 = vtanh.pop %v5816
      %v6393 = vtanh.pop %v5817
      %v6394 = vtanh.pop %v5818
      %v6395 = vtanh.pop %v5819
      %v6396 = vtanh.pop %v5820
      %v6397 = vtanh.pop %v5821
      %v6398 = vtanh.pop %v5822
      %v6399 = vtanh.pop %v5823
      %v6400 = vtanh.pop %v5824
      %v6401 = vtanh.pop %v5825
      %v6402 = vtanh.pop %v5826
      %v6403 = vtanh.pop %v5827
      %v6404 = vtanh.pop %v5828
      %v6405 = vtanh.pop %v5829
      %v6406 = vtanh.pop %v5830
      %v6407 = vtanh.pop %v5831
      %v6408 = vtanh.pop %v5832
      %v6409 = vtanh.pop %v5833
      %v6410 = vtanh.pop %v5834
      %v6411 = vtanh.pop %v5835
      %v6412 = vtanh.pop %v5836
      %v6413 = vtanh.pop %v5837
      %v6414 = vtanh.pop %v5838
      %v6415 = vtanh.pop %v5839
      %v6416 = vtanh.pop %v5840
      %v6417 = vtanh.pop %v5841
      %v6418 = vtanh.pop %v5842
      %v6419 = vtanh.pop %v5843
      %v6420 = vtanh.pop %v5844
      %v6421 = vtanh.pop %v5845
      %v6422 = vtanh.pop %v5846
      %v6423 = vtanh.pop %v5847
      %v6424 = vtanh.pop %v5848
      %v6425 = vtanh.pop %v5849
      %v6426 = vtanh.pop %v5850
      %v6427 = vtanh.pop %v5851
      %v6428 = vtanh.pop %v5852
      %v6429 = vtanh.pop %v5853
      %v6430 = vtanh.pop %v5854
      %v6431 = vtanh.pop %v5855
      %v6432 = vtanh.pop %v5856
      %v6433 = vtanh.pop %v5857
      %v6434 = vtanh.pop %v5858
      %v6435 = vtanh.pop %v5859
      %v6436 = vtanh.pop %v5860
      %v6437 = vtanh.pop %v5861
      %v6438 = vtanh.pop %v5862
      %v6439 = vtanh.pop %v5863
      %v6440 = vtanh.pop %v5864
      %v6441 = vtanh.pop %v5865
      %v6442 = vtanh.pop %v5866
      %v6443 = vtanh.pop %v5867
      %v6444 = vtanh.pop %v5868
      %v6445 = vtanh.pop %v5869
      %v6446 = vtanh.pop %v5870
      %v6447 = vtanh.pop %v5871
      %v6448 = vtanh.pop %v5872
      %v6449 = vtanh.pop %v5873
      %v6450 = vtanh.pop %v5874
      %v6451 = vtanh.pop %v5875
      %v6452 = vtanh.pop %v5876
      %v6453 = vtanh.pop %v5877
      %v6454 = vtanh.pop %v5878
      %v6455 = vtanh.pop %v5879
      %v6456 = vtanh.pop %v5880
      %v6457 = vtanh.pop %v5881
      %v6458 = vtanh.pop %v5882
      %v6459 = vtanh.pop %v5883
      %v6460 = vtanh.pop %v5884
      %v6461 = vtanh.pop %v5885
      %v6462 = vtanh.pop %v5886
      %v6463 = vtanh.pop %v5887
      %v6464 = vtanh.pop %v5888
      %v6465 = vtanh.pop %v5889
      %v6466 = vtanh.pop %v5890
      %v6467 = vtanh.pop %v5891
      %v6468 = vtanh.pop %v5892
      %v6469 = vtanh.pop %v5893
      %v6470 = vtanh.pop %v5894
      %v6471 = vtanh.pop %v5895
      %v6472 = vtanh.pop %v5896
      %v6473 = vtanh.pop %v5897
      %v6474 = vtanh.pop %v5898
      %v6475 = vtanh.pop %v5899
      %v6476 = vtanh.pop %v5900
      %v6477 = vtanh.pop %v5901
      %v6478 = vtanh.pop %v5902
      %v6479 = vtanh.pop %v5903
      %v6480 = vtanh.pop %v5904
      %v6481 = vtanh.pop %v5905
      %v6482 = vtanh.pop %v5906
      %v6483 = vtanh.pop %v5907
      %v6484 = vtanh.pop %v5908
      %v6485 = vtanh.pop %v5909
      %v6486 = vtanh.pop %v5910
      %v6487 = vtanh.pop %v5911
      %v6488 = vtanh.pop %v5912
      %v6489 = vtanh.pop %v5913
      %v6490 = vtanh.pop %v5914
      %v6491 = vtanh.pop %v5915
      %v6492 = vtanh.pop %v5916
      %v6493 = vtanh.pop %v5917
      %v6494 = vtanh.pop %v5918
      %v6495 = vtanh.pop %v5919
      %v6496 = vtanh.pop %v5920
      %v6497 = vtanh.pop %v5921
      %v6498 = vtanh.pop %v5922
      %v6499 = vtanh.pop %v5923
      %v6500 = vtanh.pop %v5924
      %v6501 = vtanh.pop %v5925
      %v6502 = vtanh.pop %v5926
      %v6503 = vtanh.pop %v5927
      %v6504 = vtanh.pop %v5928
      %v6505 = vtanh.pop %v5929
      %v6506 = vtanh.pop %v5930
      %v6507 = vtanh.pop %v5931
      %v6508 = vtanh.pop %v5932
      %v6509 = vtanh.pop %v5933
      %v6510 = vtanh.pop %v5934
      %v6511 = vtanh.pop %v5935
      %v6512 = vtanh.pop %v5936
      %v6513 = vtanh.pop %v5937
      %v6514 = vtanh.pop %v5938
      %v6515 = vtanh.pop %v5939
      %v6516 = vtanh.pop %v5940
      %v6517 = vtanh.pop %v5941
      %v6518 = vtanh.pop %v5942
      %v6519 = vtanh.pop %v5943
      %v6520 = vtanh.pop %v5944
      %v6521 = vtanh.pop %v5945
      %v6522 = vtanh.pop %v5946
      %v6523 = vtanh.pop %v5947
      %v6524 = vtanh.pop %v5948
      %v6525 = vtanh.pop %v5949
      %v6526 = vtanh.pop %v5950
      %v6527 = vtanh.pop %v5951
      %v6528 = vtanh.pop %v5952
      %v6529 = vtanh.pop %v5953
      %v6530 = vtanh.pop %v5954
      %v6531 = vtanh.pop %v5955
      %v6532 = vtanh.pop %v5956
      %v6533 = vtanh.pop %v5957
      %v6534 = vtanh.pop %v5958
      %v6535 = vtanh.pop %v5959
      %v6536 = vtanh.pop %v5960
      %v6537 = vtanh.pop %v5961
      %v6538 = vtanh.pop %v5962
      %v6539 = vtanh.pop %v5963
      %v6540 = vtanh.pop %v5964
      %v6541 = vtanh.pop %v5965
      %v6542 = vtanh.pop %v5966
      %v6543 = vtanh.pop %v5967
      %v6544 = vtanh.pop %v5968
      %v6545 = vtanh.pop %v5969
      %v6546 = vtanh.pop %v5970
      %v6547 = vtanh.pop %v5971
      %v6548 = vtanh.pop %v5972
      %v6549 = vtanh.pop %v5973
      %v6550 = vtanh.pop %v5974
      %v6551 = vtanh.pop %v5975
      %v6552 = vtanh.pop %v5976
      %v6553 = vtanh.pop %v5977
      %v6554 = vtanh.pop %v5978
      %v6555 = vtanh.pop %v5979
      %v6556 = vtanh.pop %v5980
      %v6557 = vtanh.pop %v5981
      %v6558 = vtanh.pop %v5982
      %v6559 = vtanh.pop %v5983
      %v6560 = vtanh.pop %v5984
      %v6561 = vtanh.pop %v5985
      %v6562 = vtanh.pop %v5986
      %v6563 = vtanh.pop %v5987
      %v6564 = vtanh.pop %v5988
      %v6565 = vtanh.pop %v5989
      %v6566 = vtanh.pop %v5990
      %v6567 = vtanh.pop %v5991
      %v6568 = vtanh.pop %v5992
      %v6569 = vtanh.pop %v5993
      %v6570 = vtanh.pop %v5994
      %v6571 = vtanh.pop %v5995
      %v6572 = vtanh.pop %v5996
      %v6573 = vmul.f32 %v5997, 0.5
      %v6574 = vmul.f32 %v5998, 0.5
      %v6575 = vmul.f32 %v5999, 0.5
      %v6576 = vmul.f32 %v6000, 0.5
      %v6577 = vmul.f32 %v6001, 0.5
      %v6578 = vmul.f32 %v6002, 0.5
      %v6579 = vmul.f32 %v6003, 0.5
      %v6580 = vmul.f32 %v6004, 0.5
      %v6581 = vmul.f32 %v6005, 0.5
      %v6582 = vmul.f32 %v6006, 0.5
      %v6583 = vmul.f32 %v6007, 0.5
      %v6584 = vmul.f32 %v6008, 0.5
      %v6585 = vmul.f32 %v6009, 0.5
      %v6586 = vmul.f32 %v6010, 0.5
      %v6587 = vmul.f32 %v6011, 0.5
      %v6588 = vmul.f32 %v6012, 0.5
      %v6589 = vmul.f32 %v6013, 0.5
      %v6590 = vmul.f32 %v6014, 0.5
      %v6591 = vmul.f32 %v6015, 0.5
      %v6592 = vmul.f32 %v6016, 0.5
      %v6593 = vmul.f32 %v6017, 0.5
      %v6594 = vmul.f32 %v6018, 0.5
      %v6595 = vmul.f32 %v6019, 0.5
      %v6596 = vmul.f32 %v6020, 0.5
      %v6597 = vmul.f32 %v6021, 0.5
      %v6598 = vmul.f32 %v6022, 0.5
      %v6599 = vmul.f32 %v6023, 0.5
      %v6600 = vmul.f32 %v6024, 0.5
      %v6601 = vmul.f32 %v6025, 0.5
      %v6602 = vmul.f32 %v6026, 0.5
      %v6603 = vmul.f32 %v6027, 0.5
      %v6604 = vmul.f32 %v6028, 0.5
      %v6605 = vmul.f32 %v6029, 0.5
      %v6606 = vmul.f32 %v6030, 0.5
      %v6607 = vmul.f32 %v6031, 0.5
      %v6608 = vmul.f32 %v6032, 0.5
      %v6609 = vmul.f32 %v6033, 0.5
      %v6610 = vmul.f32 %v6034, 0.5
      %v6611 = vmul.f32 %v6035, 0.5
      %v6612 = vmul.f32 %v6036, 0.5
      %v6613 = vmul.f32 %v6037, 0.5
      %v6614 = vmul.f32 %v6038, 0.5
      %v6615 = vmul.f32 %v6039, 0.5
      %v6616 = vmul.f32 %v6040, 0.5
      %v6617 = vmul.f32 %v6041, 0.5
      %v6618 = vmul.f32 %v6042, 0.5
      %v6619 = vmul.f32 %v6043, 0.5
      %v6620 = vmul.f32 %v6044, 0.5
      %v6621 = vmul.f32 %v6045, 0.5
      %v6622 = vmul.f32 %v6046, 0.5
      %v6623 = vmul.f32 %v6047, 0.5
      %v6624 = vmul.f32 %v6048, 0.5
      %v6625 = vmul.f32 %v6049, 0.5
      %v6626 = vmul.f32 %v6050, 0.5
      %v6627 = vmul.f32 %v6051, 0.5
      %v6628 = vmul.f32 %v6052, 0.5
      %v6629 = vmul.f32 %v6053, 0.5
      %v6630 = vmul.f32 %v6054, 0.5
      %v6631 = vmul.f32 %v6055, 0.5
      %v6632 = vmul.f32 %v6056, 0.5
      %v6633 = vmul.f32 %v6057, 0.5
      %v6634 = vmul.f32 %v6058, 0.5
      %v6635 = vmul.f32 %v6059, 0.5
      %v6636 = vmul.f32 %v6060, 0.5
      %v6637 = vmul.f32 %v6061, 0.5
      %v6638 = vmul.f32 %v6062, 0.5
      %v6639 = vmul.f32 %v6063, 0.5
      %v6640 = vmul.f32 %v6064, 0.5
      %v6641 = vmul.f32 %v6065, 0.5
      %v6642 = vmul.f32 %v6066, 0.5
      %v6643 = vmul.f32 %v6067, 0.5
      %v6644 = vmul.f32 %v6068, 0.5
      %v6645 = vmul.f32 %v6069, 0.5
      %v6646 = vmul.f32 %v6070, 0.5
      %v6647 = vmul.f32 %v6071, 0.5
      %v6648 = vmul.f32 %v6072, 0.5
      %v6649 = vmul.f32 %v6073, 0.5
      %v6650 = vmul.f32 %v6074, 0.5
      %v6651 = vmul.f32 %v6075, 0.5
      %v6652 = vmul.f32 %v6076, 0.5
      %v6653 = vmul.f32 %v6077, 0.5
      %v6654 = vmul.f32 %v6078, 0.5
      %v6655 = vmul.f32 %v6079, 0.5
      %v6656 = vmul.f32 %v6080, 0.5
      %v6657 = vmul.f32 %v6081, 0.5
      %v6658 = vmul.f32 %v6082, 0.5
      %v6659 = vmul.f32 %v6083, 0.5
      %v6660 = vmul.f32 %v6084, 0.5
      %v6661 = vmul.f32 %v6085, 0.5
      %v6662 = vmul.f32 %v6086, 0.5
      %v6663 = vmul.f32 %v6087, 0.5
      %v6664 = vmul.f32 %v6088, 0.5
      %v6665 = vmul.f32 %v6089, 0.5
      %v6666 = vmul.f32 %v6090, 0.5
      %v6667 = vmul.f32 %v6091, 0.5
      %v6668 = vmul.f32 %v6092, 0.5
      %v6669 = vmul.f32 %v6093, 0.5
      %v6670 = vmul.f32 %v6094, 0.5
      %v6671 = vmul.f32 %v6095, 0.5
      %v6672 = vmul.f32 %v6096, 0.5
      %v6673 = vmul.f32 %v6097, 0.5
      %v6674 = vmul.f32 %v6098, 0.5
      %v6675 = vmul.f32 %v6099, 0.5
      %v6676 = vmul.f32 %v6100, 0.5
      %v6677 = vmul.f32 %v6101, 0.5
      %v6678 = vmul.f32 %v6102, 0.5
      %v6679 = vmul.f32 %v6103, 0.5
      %v6680 = vmul.f32 %v6104, 0.5
      %v6681 = vmul.f32 %v6105, 0.5
      %v6682 = vmul.f32 %v6106, 0.5
      %v6683 = vmul.f32 %v6107, 0.5
      %v6684 = vmul.f32 %v6108, 0.5
      %v6685 = vmul.f32 %v6109, 0.5
      %v6686 = vmul.f32 %v6110, 0.5
      %v6687 = vmul.f32 %v6111, 0.5
      %v6688 = vmul.f32 %v6112, 0.5
      %v6689 = vmul.f32 %v6113, 0.5
      %v6690 = vmul.f32 %v6114, 0.5
      %v6691 = vmul.f32 %v6115, 0.5
      %v6692 = vmul.f32 %v6116, 0.5
      %v6693 = vmul.f32 %v6117, 0.5
      %v6694 = vmul.f32 %v6118, 0.5
      %v6695 = vmul.f32 %v6119, 0.5
      %v6696 = vmul.f32 %v6120, 0.5
      %v6697 = vmul.f32 %v6121, 0.5
      %v6698 = vmul.f32 %v6122, 0.5
      %v6699 = vmul.f32 %v6123, 0.5
      %v6700 = vmul.f32 %v6124, 0.5
      %v6701 = vmul.f32 %v6125, 0.5
      %v6702 = vmul.f32 %v6126, 0.5
      %v6703 = vmul.f32 %v6127, 0.5
      %v6704 = vmul.f32 %v6128, 0.5
      %v6705 = vmul.f32 %v6129, 0.5
      %v6706 = vmul.f32 %v6130, 0.5
      %v6707 = vmul.f32 %v6131, 0.5
      %v6708 = vmul.f32 %v6132, 0.5
      %v6709 = vmul.f32 %v6133, 0.5
      %v6710 = vmul.f32 %v6134, 0.5
      %v6711 = vmul.f32 %v6135, 0.5
      %v6712 = vmul.f32 %v6136, 0.5
      %v6713 = vmul.f32 %v6137, 0.5
      %v6714 = vmul.f32 %v6138, 0.5
      %v6715 = vmul.f32 %v6139, 0.5
      %v6716 = vmul.f32 %v6140, 0.5
      %v6717 = vmul.f32 %v6141, 0.5
      %v6718 = vmul.f32 %v6142, 0.5
      %v6719 = vmul.f32 %v6143, 0.5
      %v6720 = vmul.f32 %v6144, 0.5
      %v6721 = vmul.f32 %v6145, 0.5
      %v6722 = vmul.f32 %v6146, 0.5
      %v6723 = vmul.f32 %v6147, 0.5
      %v6724 = vmul.f32 %v6148, 0.5
      %v6725 = vmul.f32 %v6149, 0.5
      %v6726 = vmul.f32 %v6150, 0.5
      %v6727 = vmul.f32 %v6151, 0.5
      %v6728 = vmul.f32 %v6152, 0.5
      %v6729 = vmul.f32 %v6153, 0.5
      %v6730 = vmul.f32 %v6154, 0.5
      %v6731 = vmul.f32 %v6155, 0.5
      %v6732 = vmul.f32 %v6156, 0.5
      %v6733 = vmul.f32 %v6157, 0.5
      %v6734 = vmul.f32 %v6158, 0.5
      %v6735 = vmul.f32 %v6159, 0.5
      %v6736 = vmul.f32 %v6160, 0.5
      %v6737 = vmul.f32 %v6161, 0.5
      %v6738 = vmul.f32 %v6162, 0.5
      %v6739 = vmul.f32 %v6163, 0.5
      %v6740 = vmul.f32 %v6164, 0.5
      %v6741 = vmul.f32 %v6165, 0.5
      %v6742 = vmul.f32 %v6166, 0.5
      %v6743 = vmul.f32 %v6167, 0.5
      %v6744 = vmul.f32 %v6168, 0.5
      %v6745 = vmul.f32 %v6169, 0.5
      %v6746 = vmul.f32 %v6170, 0.5
      %v6747 = vmul.f32 %v6171, 0.5
      %v6748 = vmul.f32 %v6172, 0.5
      %v6749 = vmul.f32 %v6173, 0.5
      %v6750 = vmul.f32 %v6174, 0.5
      %v6751 = vmul.f32 %v6175, 0.5
      %v6752 = vmul.f32 %v6176, 0.5
      %v6753 = vmul.f32 %v6177, 0.5
      %v6754 = vmul.f32 %v6178, 0.5
      %v6755 = vmul.f32 %v6179, 0.5
      %v6756 = vmul.f32 %v6180, 0.5
      %v6757 = vmul.f32 %v6181, 0.5
      %v6758 = vmul.f32 %v6182, 0.5
      %v6759 = vmul.f32 %v6183, 0.5
      %v6760 = vmul.f32 %v6184, 0.5
      %v6761 = vmul.f32 %v6185, 0.5
      %v6762 = vmul.f32 %v6186, 0.5
      %v6763 = vmul.f32 %v6187, 0.5
      %v6764 = vmul.f32 %v6188, 0.5
      %v6765 = vmul.f32 %v6189, 0.5
      %v6766 = vmul.f32 %v6190, 0.5
      %v6767 = vmul.f32 %v6191, 0.5
      %v6768 = vmul.f32 %v6192, 0.5
      %v6769 = vmul.f32 %v6193, 0.5
      %v6770 = vmul.f32 %v6194, 0.5
      %v6771 = vmul.f32 %v6195, 0.5
      %v6772 = vmul.f32 %v6196, 0.5
      %v6773 = vmul.f32 %v6197, 0.5
      %v6774 = vmul.f32 %v6198, 0.5
      %v6775 = vmul.f32 %v6199, 0.5
      %v6776 = vmul.f32 %v6200, 0.5
      %v6777 = vmul.f32 %v6201, 0.5
      %v6778 = vmul.f32 %v6202, 0.5
      %v6779 = vmul.f32 %v6203, 0.5
      %v6780 = vmul.f32 %v6204, 0.5
      %v6781 = vmul.f32 %v6205, 0.5
      %v6782 = vmul.f32 %v6206, 0.5
      %v6783 = vmul.f32 %v6207, 0.5
      %v6784 = vmul.f32 %v6208, 0.5
      %v6785 = vmul.f32 %v6209, 0.5
      %v6786 = vmul.f32 %v6210, 0.5
      %v6787 = vmul.f32 %v6211, 0.5
      %v6788 = vmul.f32 %v6212, 0.5
      %v6789 = vmul.f32 %v6213, 0.5
      %v6790 = vmul.f32 %v6214, 0.5
      %v6791 = vmul.f32 %v6215, 0.5
      %v6792 = vmul.f32 %v6216, 0.5
      %v6793 = vmul.f32 %v6217, 0.5
      %v6794 = vmul.f32 %v6218, 0.5
      %v6795 = vmul.f32 %v6219, 0.5
      %v6796 = vmul.f32 %v6220, 0.5
      %v6797 = vmul.f32 %v6221, 0.5
      %v6798 = vmul.f32 %v6222, 0.5
      %v6799 = vmul.f32 %v6223, 0.5
      %v6800 = vmul.f32 %v6224, 0.5
      %v6801 = vmul.f32 %v6225, 0.5
      %v6802 = vmul.f32 %v6226, 0.5
      %v6803 = vmul.f32 %v6227, 0.5
      %v6804 = vmul.f32 %v6228, 0.5
      %v6805 = vmul.f32 %v6229, 0.5
      %v6806 = vmul.f32 %v6230, 0.5
      %v6807 = vmul.f32 %v6231, 0.5
      %v6808 = vmul.f32 %v6232, 0.5
      %v6809 = vmul.f32 %v6233, 0.5
      %v6810 = vmul.f32 %v6234, 0.5
      %v6811 = vmul.f32 %v6235, 0.5
      %v6812 = vmul.f32 %v6236, 0.5
      %v6813 = vmul.f32 %v6237, 0.5
      %v6814 = vmul.f32 %v6238, 0.5
      %v6815 = vmul.f32 %v6239, 0.5
      %v6816 = vmul.f32 %v6240, 0.5
      %v6817 = vmul.f32 %v6241, 0.5
      %v6818 = vmul.f32 %v6242, 0.5
      %v6819 = vmul.f32 %v6243, 0.5
      %v6820 = vmul.f32 %v6244, 0.5
      %v6821 = vmul.f32 %v6245, 0.5
      %v6822 = vmul.f32 %v6246, 0.5
      %v6823 = vmul.f32 %v6247, 0.5
      %v6824 = vmul.f32 %v6248, 0.5
      %v6825 = vmul.f32 %v6249, 0.5
      %v6826 = vmul.f32 %v6250, 0.5
      %v6827 = vmul.f32 %v6251, 0.5
      %v6828 = vmul.f32 %v6252, 0.5
      %v6829 = vmul.f32 %v6253, 0.5
      %v6830 = vmul.f32 %v6254, 0.5
      %v6831 = vmul.f32 %v6255, 0.5
      %v6832 = vmul.f32 %v6256, 0.5
      %v6833 = vmul.f32 %v6257, 0.5
      %v6834 = vmul.f32 %v6258, 0.5
      %v6835 = vmul.f32 %v6259, 0.5
      %v6836 = vmul.f32 %v6260, 0.5
      %v6837 = vmul.f32 %v6261, 0.5
      %v6838 = vmul.f32 %v6262, 0.5
      %v6839 = vmul.f32 %v6263, 0.5
      %v6840 = vmul.f32 %v6264, 0.5
      %v6841 = vmul.f32 %v6265, 0.5
      %v6842 = vmul.f32 %v6266, 0.5
      %v6843 = vmul.f32 %v6267, 0.5
      %v6844 = vmul.f32 %v6268, 0.5
      %v6845 = vmul.f32 %v6269, 0.5
      %v6846 = vmul.f32 %v6270, 0.5
      %v6847 = vmul.f32 %v6271, 0.5
      %v6848 = vmul.f32 %v6272, 0.5
      %v6849 = vmul.f32 %v6273, 0.5
      %v6850 = vmul.f32 %v6274, 0.5
      %v6851 = vmul.f32 %v6275, 0.5
      %v6852 = vmul.f32 %v6276, 0.5
      %v6853 = vmul.f32 %v6277, 0.5
      %v6854 = vmul.f32 %v6278, 0.5
      %v6855 = vmul.f32 %v6279, 0.5
      %v6856 = vmul.f32 %v6280, 0.5
      %v6857 = vmul.f32 %v6281, 0.5
      %v6858 = vmul.f32 %v6282, 0.5
      %v6859 = vmul.f32 %v6283, 0.5
      %v6860 = vmul.f32 %v6284, 0.5
      %v6861 = vmul.f32 %v6285, 0.5
      %v6862 = vmul.f32 %v6286, 0.5
      %v6863 = vmul.f32 %v6287, 0.5
      %v6864 = vmul.f32 %v6288, 0.5
      %v6865 = vmul.f32 %v6289, 0.5
      %v6866 = vmul.f32 %v6290, 0.5
      %v6867 = vmul.f32 %v6291, 0.5
      %v6868 = vmul.f32 %v6292, 0.5
      %v6869 = vmul.f32 %v6293, 0.5
      %v6870 = vmul.f32 %v6294, 0.5
      %v6871 = vmul.f32 %v6295, 0.5
      %v6872 = vmul.f32 %v6296, 0.5
      %v6873 = vmul.f32 %v6297, 0.5
      %v6874 = vmul.f32 %v6298, 0.5
      %v6875 = vmul.f32 %v6299, 0.5
      %v6876 = vmul.f32 %v6300, 0.5
      %v6877 = vmul.f32 %v6301, 0.5
      %v6878 = vmul.f32 %v6302, 0.5
      %v6879 = vmul.f32 %v6303, 0.5
      %v6880 = vmul.f32 %v6304, 0.5
      %v6881 = vmul.f32 %v6305, 0.5
      %v6882 = vmul.f32 %v6306, 0.5
      %v6883 = vmul.f32 %v6307, 0.5
      %v6884 = vmul.f32 %v6308, 0.5
      %v6885 = vmul.f32 %v6309, 0.5
      %v6886 = vmul.f32 %v6310, 0.5
      %v6887 = vmul.f32 %v6311, 0.5
      %v6888 = vmul.f32 %v6312, 0.5
      %v6889 = vmul.f32 %v6313, 0.5
      %v6890 = vmul.f32 %v6314, 0.5
      %v6891 = vmul.f32 %v6315, 0.5
      %v6892 = vmul.f32 %v6316, 0.5
      %v6893 = vmul.f32 %v6317, 0.5
      %v6894 = vmul.f32 %v6318, 0.5
      %v6895 = vmul.f32 %v6319, 0.5
      %v6896 = vmul.f32 %v6320, 0.5
      %v6897 = vmul.f32 %v6321, 0.5
      %v6898 = vmul.f32 %v6322, 0.5
      %v6899 = vmul.f32 %v6323, 0.5
      %v6900 = vmul.f32 %v6324, 0.5
      %v6901 = vmul.f32 %v6325, 0.5
      %v6902 = vmul.f32 %v6326, 0.5
      %v6903 = vmul.f32 %v6327, 0.5
      %v6904 = vmul.f32 %v6328, 0.5
      %v6905 = vmul.f32 %v6329, 0.5
      %v6906 = vmul.f32 %v6330, 0.5
      %v6907 = vmul.f32 %v6331, 0.5
      %v6908 = vmul.f32 %v6332, 0.5
      %v6909 = vmul.f32 %v6333, 0.5
      %v6910 = vmul.f32 %v6334, 0.5
      %v6911 = vmul.f32 %v6335, 0.5
      %v6912 = vmul.f32 %v6336, 0.5
      %v6913 = vmul.f32 %v6337, 0.5
      %v6914 = vmul.f32 %v6338, 0.5
      %v6915 = vmul.f32 %v6339, 0.5
      %v6916 = vmul.f32 %v6340, 0.5
      %v6917 = vmul.f32 %v6341, 0.5
      %v6918 = vmul.f32 %v6342, 0.5
      %v6919 = vmul.f32 %v6343, 0.5
      %v6920 = vmul.f32 %v6344, 0.5
      %v6921 = vmul.f32 %v6345, 0.5
      %v6922 = vmul.f32 %v6346, 0.5
      %v6923 = vmul.f32 %v6347, 0.5
      %v6924 = vmul.f32 %v6348, 0.5
      %v6925 = vmul.f32 %v6349, 0.5
      %v6926 = vmul.f32 %v6350, 0.5
      %v6927 = vmul.f32 %v6351, 0.5
      %v6928 = vmul.f32 %v6352, 0.5
      %v6929 = vmul.f32 %v6353, 0.5
      %v6930 = vmul.f32 %v6354, 0.5
      %v6931 = vmul.f32 %v6355, 0.5
      %v6932 = vmul.f32 %v6356, 0.5
      %v6933 = vmul.f32 %v6357, 0.5
      %v6934 = vmul.f32 %v6358, 0.5
      %v6935 = vmul.f32 %v6359, 0.5
      %v6936 = vmul.f32 %v6360, 0.5
      %v6937 = vmul.f32 %v6361, 0.5
      %v6938 = vmul.f32 %v6362, 0.5
      %v6939 = vmul.f32 %v6363, 0.5
      %v6940 = vmul.f32 %v6364, 0.5
      %v6941 = vmul.f32 %v6365, 0.5
      %v6942 = vmul.f32 %v6366, 0.5
      %v6943 = vmul.f32 %v6367, 0.5
      %v6944 = vmul.f32 %v6368, 0.5
      %v6945 = vmul.f32 %v6369, 0.5
      %v6946 = vmul.f32 %v6370, 0.5
      %v6947 = vmul.f32 %v6371, 0.5
      %v6948 = vmul.f32 %v6372, 0.5
      %v6949 = vmul.f32 %v6373, 0.5
      %v6950 = vmul.f32 %v6374, 0.5
      %v6951 = vmul.f32 %v6375, 0.5
      %v6952 = vmul.f32 %v6376, 0.5
      %v6953 = vmul.f32 %v6377, 0.5
      %v6954 = vmul.f32 %v6378, 0.5
      %v6955 = vmul.f32 %v6379, 0.5
      %v6956 = vmul.f32 %v6380, 0.5
      %v6957 = vmul.f32 %v6381, 0.5
      %v6958 = vmul.f32 %v6382, 0.5
      %v6959 = vmul.f32 %v6383, 0.5
      %v6960 = vmul.f32 %v6384, 0.5
      %v6961 = vmul.f32 %v6385, 0.5
      %v6962 = vmul.f32 %v6386, 0.5
      %v6963 = vmul.f32 %v6387, 0.5
      %v6964 = vmul.f32 %v6388, 0.5
      %v6965 = vmul.f32 %v6389, 0.5
      %v6966 = vmul.f32 %v6390, 0.5
      %v6967 = vmul.f32 %v6391, 0.5
      %v6968 = vmul.f32 %v6392, 0.5
      %v6969 = vmul.f32 %v6393, 0.5
      %v6970 = vmul.f32 %v6394, 0.5
      %v6971 = vmul.f32 %v6395, 0.5
      %v6972 = vmul.f32 %v6396, 0.5
      %v6973 = vmul.f32 %v6397, 0.5
      %v6974 = vmul.f32 %v6398, 0.5
      %v6975 = vmul.f32 %v6399, 0.5
      %v6976 = vmul.f32 %v6400, 0.5
      %v6977 = vmul.f32 %v6401, 0.5
      %v6978 = vmul.f32 %v6402, 0.5
      %v6979 = vmul.f32 %v6403, 0.5
      %v6980 = vmul.f32 %v6404, 0.5
      %v6981 = vmul.f32 %v6405, 0.5
      %v6982 = vmul.f32 %v6406, 0.5
      %v6983 = vmul.f32 %v6407, 0.5
      %v6984 = vmul.f32 %v6408, 0.5
      %v6985 = vmul.f32 %v6409, 0.5
      %v6986 = vmul.f32 %v6410, 0.5
      %v6987 = vmul.f32 %v6411, 0.5
      %v6988 = vmul.f32 %v6412, 0.5
      %v6989 = vmul.f32 %v6413, 0.5
      %v6990 = vmul.f32 %v6414, 0.5
      %v6991 = vmul.f32 %v6415, 0.5
      %v6992 = vmul.f32 %v6416, 0.5
      %v6993 = vmul.f32 %v6417, 0.5
      %v6994 = vmul.f32 %v6418, 0.5
      %v6995 = vmul.f32 %v6419, 0.5
      %v6996 = vmul.f32 %v6420, 0.5
      %v6997 = vmul.f32 %v6421, 0.5
      %v6998 = vmul.f32 %v6422, 0.5
      %v6999 = vmul.f32 %v6423, 0.5
      %v7000 = vmul.f32 %v6424, 0.5
      %v7001 = vmul.f32 %v6425, 0.5
      %v7002 = vmul.f32 %v6426, 0.5
      %v7003 = vmul.f32 %v6427, 0.5
      %v7004 = vmul.f32 %v6428, 0.5
      %v7005 = vmul.f32 %v6429, 0.5
      %v7006 = vmul.f32 %v6430, 0.5
      %v7007 = vmul.f32 %v6431, 0.5
      %v7008 = vmul.f32 %v6432, 0.5
      %v7009 = vmul.f32 %v6433, 0.5
      %v7010 = vmul.f32 %v6434, 0.5
      %v7011 = vmul.f32 %v6435, 0.5
      %v7012 = vmul.f32 %v6436, 0.5
      %v7013 = vmul.f32 %v6437, 0.5
      %v7014 = vmul.f32 %v6438, 0.5
      %v7015 = vmul.f32 %v6439, 0.5
      %v7016 = vmul.f32 %v6440, 0.5
      %v7017 = vmul.f32 %v6441, 0.5
      %v7018 = vmul.f32 %v6442, 0.5
      %v7019 = vmul.f32 %v6443, 0.5
      %v7020 = vmul.f32 %v6444, 0.5
      %v7021 = vmul.f32 %v6445, 0.5
      %v7022 = vmul.f32 %v6446, 0.5
      %v7023 = vmul.f32 %v6447, 0.5
      %v7024 = vmul.f32 %v6448, 0.5
      %v7025 = vmul.f32 %v6449, 0.5
      %v7026 = vmul.f32 %v6450, 0.5
      %v7027 = vmul.f32 %v6451, 0.5
      %v7028 = vmul.f32 %v6452, 0.5
      %v7029 = vmul.f32 %v6453, 0.5
      %v7030 = vmul.f32 %v6454, 0.5
      %v7031 = vmul.f32 %v6455, 0.5
      %v7032 = vmul.f32 %v6456, 0.5
      %v7033 = vmul.f32 %v6457, 0.5
      %v7034 = vmul.f32 %v6458, 0.5
      %v7035 = vmul.f32 %v6459, 0.5
      %v7036 = vmul.f32 %v6460, 0.5
      %v7037 = vmul.f32 %v6461, 0.5
      %v7038 = vmul.f32 %v6462, 0.5
      %v7039 = vmul.f32 %v6463, 0.5
      %v7040 = vmul.f32 %v6464, 0.5
      %v7041 = vmul.f32 %v6465, 0.5
      %v7042 = vmul.f32 %v6466, 0.5
      %v7043 = vmul.f32 %v6467, 0.5
      %v7044 = vmul.f32 %v6468, 0.5
      %v7045 = vmul.f32 %v6469, 0.5
      %v7046 = vmul.f32 %v6470, 0.5
      %v7047 = vmul.f32 %v6471, 0.5
      %v7048 = vmul.f32 %v6472, 0.5
      %v7049 = vmul.f32 %v6473, 0.5
      %v7050 = vmul.f32 %v6474, 0.5
      %v7051 = vmul.f32 %v6475, 0.5
      %v7052 = vmul.f32 %v6476, 0.5
      %v7053 = vmul.f32 %v6477, 0.5
      %v7054 = vmul.f32 %v6478, 0.5
      %v7055 = vmul.f32 %v6479, 0.5
      %v7056 = vmul.f32 %v6480, 0.5
      %v7057 = vmul.f32 %v6481, 0.5
      %v7058 = vmul.f32 %v6482, 0.5
      %v7059 = vmul.f32 %v6483, 0.5
      %v7060 = vmul.f32 %v6484, 0.5
      %v7061 = vmul.f32 %v6485, 0.5
      %v7062 = vmul.f32 %v6486, 0.5
      %v7063 = vmul.f32 %v6487, 0.5
      %v7064 = vmul.f32 %v6488, 0.5
      %v7065 = vmul.f32 %v6489, 0.5
      %v7066 = vmul.f32 %v6490, 0.5
      %v7067 = vmul.f32 %v6491, 0.5
      %v7068 = vmul.f32 %v6492, 0.5
      %v7069 = vmul.f32 %v6493, 0.5
      %v7070 = vmul.f32 %v6494, 0.5
      %v7071 = vmul.f32 %v6495, 0.5
      %v7072 = vmul.f32 %v6496, 0.5
      %v7073 = vmul.f32 %v6497, 0.5
      %v7074 = vmul.f32 %v6498, 0.5
      %v7075 = vmul.f32 %v6499, 0.5
      %v7076 = vmul.f32 %v6500, 0.5
      %v7077 = vmul.f32 %v6501, 0.5
      %v7078 = vmul.f32 %v6502, 0.5
      %v7079 = vmul.f32 %v6503, 0.5
      %v7080 = vmul.f32 %v6504, 0.5
      %v7081 = vmul.f32 %v6505, 0.5
      %v7082 = vmul.f32 %v6506, 0.5
      %v7083 = vmul.f32 %v6507, 0.5
      %v7084 = vmul.f32 %v6508, 0.5
      %v7085 = vmul.f32 %v6509, 0.5
      %v7086 = vmul.f32 %v6510, 0.5
      %v7087 = vmul.f32 %v6511, 0.5
      %v7088 = vmul.f32 %v6512, 0.5
      %v7089 = vmul.f32 %v6513, 0.5
      %v7090 = vmul.f32 %v6514, 0.5
      %v7091 = vmul.f32 %v6515, 0.5
      %v7092 = vmul.f32 %v6516, 0.5
      %v7093 = vmul.f32 %v6517, 0.5
      %v7094 = vmul.f32 %v6518, 0.5
      %v7095 = vmul.f32 %v6519, 0.5
      %v7096 = vmul.f32 %v6520, 0.5
      %v7097 = vmul.f32 %v6521, 0.5
      %v7098 = vmul.f32 %v6522, 0.5
      %v7099 = vmul.f32 %v6523, 0.5
      %v7100 = vmul.f32 %v6524, 0.5
      %v7101 = vmul.f32 %v6525, 0.5
      %v7102 = vmul.f32 %v6526, 0.5
      %v7103 = vmul.f32 %v6527, 0.5
      %v7104 = vmul.f32 %v6528, 0.5
      %v7105 = vmul.f32 %v6529, 0.5
      %v7106 = vmul.f32 %v6530, 0.5
      %v7107 = vmul.f32 %v6531, 0.5
      %v7108 = vmul.f32 %v6532, 0.5
      %v7109 = vmul.f32 %v6533, 0.5
      %v7110 = vmul.f32 %v6534, 0.5
      %v7111 = vmul.f32 %v6535, 0.5
      %v7112 = vmul.f32 %v6536, 0.5
      %v7113 = vmul.f32 %v6537, 0.5
      %v7114 = vmul.f32 %v6538, 0.5
      %v7115 = vmul.f32 %v6539, 0.5
      %v7116 = vmul.f32 %v6540, 0.5
      %v7117 = vmul.f32 %v6541, 0.5
      %v7118 = vmul.f32 %v6542, 0.5
      %v7119 = vmul.f32 %v6543, 0.5
      %v7120 = vmul.f32 %v6544, 0.5
      %v7121 = vmul.f32 %v6545, 0.5
      %v7122 = vmul.f32 %v6546, 0.5
      %v7123 = vmul.f32 %v6547, 0.5
      %v7124 = vmul.f32 %v6548, 0.5
      %v7125 = vmul.f32 %v6549, 0.5
      %v7126 = vmul.f32 %v6550, 0.5
      %v7127 = vmul.f32 %v6551, 0.5
      %v7128 = vmul.f32 %v6552, 0.5
      %v7129 = vmul.f32 %v6553, 0.5
      %v7130 = vmul.f32 %v6554, 0.5
      %v7131 = vmul.f32 %v6555, 0.5
      %v7132 = vmul.f32 %v6556, 0.5
      %v7133 = vmul.f32 %v6557, 0.5
      %v7134 = vmul.f32 %v6558, 0.5
      %v7135 = vmul.f32 %v6559, 0.5
      %v7136 = vmul.f32 %v6560, 0.5
      %v7137 = vmul.f32 %v6561, 0.5
      %v7138 = vmul.f32 %v6562, 0.5
      %v7139 = vmul.f32 %v6563, 0.5
      %v7140 = vmul.f32 %v6564, 0.5
      %v7141 = vmul.f32 %v6565, 0.5
      %v7142 = vmul.f32 %v6566, 0.5
      %v7143 = vmul.f32 %v6567, 0.5
      %v7144 = vmul.f32 %v6568, 0.5
      %v7145 = vmul.f32 %v6569, 0.5
      %v7146 = vmul.f32 %v6570, 0.5
      %v7147 = vmul.f32 %v6571, 0.5
      %v7148 = vmul.f32 %v6572, 0.5
      %v7149 = vadd.f32 %v6573, 0.5
      %v7150 = vadd.f32 %v6574, 0.5
      %v7151 = vadd.f32 %v6575, 0.5
      %v7152 = vadd.f32 %v6576, 0.5
      %v7153 = vadd.f32 %v6577, 0.5
      %v7154 = vadd.f32 %v6578, 0.5
      %v7155 = vadd.f32 %v6579, 0.5
      %v7156 = vadd.f32 %v6580, 0.5
      %v7157 = vadd.f32 %v6581, 0.5
      %v7158 = vadd.f32 %v6582, 0.5
      %v7159 = vadd.f32 %v6583, 0.5
      %v7160 = vadd.f32 %v6584, 0.5
      %v7161 = vadd.f32 %v6585, 0.5
      %v7162 = vadd.f32 %v6586, 0.5
      %v7163 = vadd.f32 %v6587, 0.5
      %v7164 = vadd.f32 %v6588, 0.5
      %v7165 = vadd.f32 %v6589, 0.5
      %v7166 = vadd.f32 %v6590, 0.5
      %v7167 = vadd.f32 %v6591, 0.5
      %v7168 = vadd.f32 %v6592, 0.5
      %v7169 = vadd.f32 %v6593, 0.5
      %v7170 = vadd.f32 %v6594, 0.5
      %v7171 = vadd.f32 %v6595, 0.5
      %v7172 = vadd.f32 %v6596, 0.5
      %v7173 = vadd.f32 %v6597, 0.5
      %v7174 = vadd.f32 %v6598, 0.5
      %v7175 = vadd.f32 %v6599, 0.5
      %v7176 = vadd.f32 %v6600, 0.5
      %v7177 = vadd.f32 %v6601, 0.5
      %v7178 = vadd.f32 %v6602, 0.5
      %v7179 = vadd.f32 %v6603, 0.5
      %v7180 = vadd.f32 %v6604, 0.5
      %v7181 = vadd.f32 %v6605, 0.5
      %v7182 = vadd.f32 %v6606, 0.5
      %v7183 = vadd.f32 %v6607, 0.5
      %v7184 = vadd.f32 %v6608, 0.5
      %v7185 = vadd.f32 %v6609, 0.5
      %v7186 = vadd.f32 %v6610, 0.5
      %v7187 = vadd.f32 %v6611, 0.5
      %v7188 = vadd.f32 %v6612, 0.5
      %v7189 = vadd.f32 %v6613, 0.5
      %v7190 = vadd.f32 %v6614, 0.5
      %v7191 = vadd.f32 %v6615, 0.5
      %v7192 = vadd.f32 %v6616, 0.5
      %v7193 = vadd.f32 %v6617, 0.5
      %v7194 = vadd.f32 %v6618, 0.5
      %v7195 = vadd.f32 %v6619, 0.5
      %v7196 = vadd.f32 %v6620, 0.5
      %v7197 = vadd.f32 %v6621, 0.5
      %v7198 = vadd.f32 %v6622, 0.5
      %v7199 = vadd.f32 %v6623, 0.5
      %v7200 = vadd.f32 %v6624, 0.5
      %v7201 = vadd.f32 %v6625, 0.5
      %v7202 = vadd.f32 %v6626, 0.5
      %v7203 = vadd.f32 %v6627, 0.5
      %v7204 = vadd.f32 %v6628, 0.5
      %v7205 = vadd.f32 %v6629, 0.5
      %v7206 = vadd.f32 %v6630, 0.5
      %v7207 = vadd.f32 %v6631, 0.5
      %v7208 = vadd.f32 %v6632, 0.5
      %v7209 = vadd.f32 %v6633, 0.5
      %v7210 = vadd.f32 %v6634, 0.5
      %v7211 = vadd.f32 %v6635, 0.5
      %v7212 = vadd.f32 %v6636, 0.5
      %v7213 = vadd.f32 %v6637, 0.5
      %v7214 = vadd.f32 %v6638, 0.5
      %v7215 = vadd.f32 %v6639, 0.5
      %v7216 = vadd.f32 %v6640, 0.5
      %v7217 = vadd.f32 %v6641, 0.5
      %v7218 = vadd.f32 %v6642, 0.5
      %v7219 = vadd.f32 %v6643, 0.5
      %v7220 = vadd.f32 %v6644, 0.5
      %v7221 = vadd.f32 %v6645, 0.5
      %v7222 = vadd.f32 %v6646, 0.5
      %v7223 = vadd.f32 %v6647, 0.5
      %v7224 = vadd.f32 %v6648, 0.5
      %v7225 = vadd.f32 %v6649, 0.5
      %v7226 = vadd.f32 %v6650, 0.5
      %v7227 = vadd.f32 %v6651, 0.5
      %v7228 = vadd.f32 %v6652, 0.5
      %v7229 = vadd.f32 %v6653, 0.5
      %v7230 = vadd.f32 %v6654, 0.5
      %v7231 = vadd.f32 %v6655, 0.5
      %v7232 = vadd.f32 %v6656, 0.5
      %v7233 = vadd.f32 %v6657, 0.5
      %v7234 = vadd.f32 %v6658, 0.5
      %v7235 = vadd.f32 %v6659, 0.5
      %v7236 = vadd.f32 %v6660, 0.5
      %v7237 = vadd.f32 %v6661, 0.5
      %v7238 = vadd.f32 %v6662, 0.5
      %v7239 = vadd.f32 %v6663, 0.5
      %v7240 = vadd.f32 %v6664, 0.5
      %v7241 = vadd.f32 %v6665, 0.5
      %v7242 = vadd.f32 %v6666, 0.5
      %v7243 = vadd.f32 %v6667, 0.5
      %v7244 = vadd.f32 %v6668, 0.5
      %v7245 = vadd.f32 %v6669, 0.5
      %v7246 = vadd.f32 %v6670, 0.5
      %v7247 = vadd.f32 %v6671, 0.5
      %v7248 = vadd.f32 %v6672, 0.5
      %v7249 = vadd.f32 %v6673, 0.5
      %v7250 = vadd.f32 %v6674, 0.5
      %v7251 = vadd.f32 %v6675, 0.5
      %v7252 = vadd.f32 %v6676, 0.5
      %v7253 = vadd.f32 %v6677, 0.5
      %v7254 = vadd.f32 %v6678, 0.5
      %v7255 = vadd.f32 %v6679, 0.5
      %v7256 = vadd.f32 %v6680, 0.5
      %v7257 = vadd.f32 %v6681, 0.5
      %v7258 = vadd.f32 %v6682, 0.5
      %v7259 = vadd.f32 %v6683, 0.5
      %v7260 = vadd.f32 %v6684, 0.5
      %v7261 = vadd.f32 %v6685, 0.5
      %v7262 = vadd.f32 %v6686, 0.5
      %v7263 = vadd.f32 %v6687, 0.5
      %v7264 = vadd.f32 %v6688, 0.5
      %v7265 = vadd.f32 %v6689, 0.5
      %v7266 = vadd.f32 %v6690, 0.5
      %v7267 = vadd.f32 %v6691, 0.5
      %v7268 = vadd.f32 %v6692, 0.5
      %v7269 = vadd.f32 %v6693, 0.5
      %v7270 = vadd.f32 %v6694, 0.5
      %v7271 = vadd.f32 %v6695, 0.5
      %v7272 = vadd.f32 %v6696, 0.5
      %v7273 = vadd.f32 %v6697, 0.5
      %v7274 = vadd.f32 %v6698, 0.5
      %v7275 = vadd.f32 %v6699, 0.5
      %v7276 = vadd.f32 %v6700, 0.5
      %v7277 = vadd.f32 %v6701, 0.5
      %v7278 = vadd.f32 %v6702, 0.5
      %v7279 = vadd.f32 %v6703, 0.5
      %v7280 = vadd.f32 %v6704, 0.5
      %v7281 = vadd.f32 %v6705, 0.5
      %v7282 = vadd.f32 %v6706, 0.5
      %v7283 = vadd.f32 %v6707, 0.5
      %v7284 = vadd.f32 %v6708, 0.5
      %v7285 = vadd.f32 %v6709, 0.5
      %v7286 = vadd.f32 %v6710, 0.5
      %v7287 = vadd.f32 %v6711, 0.5
      %v7288 = vadd.f32 %v6712, 0.5
      %v7289 = vadd.f32 %v6713, 0.5
      %v7290 = vadd.f32 %v6714, 0.5
      %v7291 = vadd.f32 %v6715, 0.5
      %v7292 = vadd.f32 %v6716, 0.5
      %v7293 = vadd.f32 %v6717, 0.5
      %v7294 = vadd.f32 %v6718, 0.5
      %v7295 = vadd.f32 %v6719, 0.5
      %v7296 = vadd.f32 %v6720, 0.5
      %v7297 = vadd.f32 %v6721, 0.5
      %v7298 = vadd.f32 %v6722, 0.5
      %v7299 = vadd.f32 %v6723, 0.5
      %v7300 = vadd.f32 %v6724, 0.5
      %v7301 = vadd.f32 %v6725, 0.5
      %v7302 = vadd.f32 %v6726, 0.5
      %v7303 = vadd.f32 %v6727, 0.5
      %v7304 = vadd.f32 %v6728, 0.5
      %v7305 = vadd.f32 %v6729, 0.5
      %v7306 = vadd.f32 %v6730, 0.5
      %v7307 = vadd.f32 %v6731, 0.5
      %v7308 = vadd.f32 %v6732, 0.5
      %v7309 = vadd.f32 %v6733, 0.5
      %v7310 = vadd.f32 %v6734, 0.5
      %v7311 = vadd.f32 %v6735, 0.5
      %v7312 = vadd.f32 %v6736, 0.5
      %v7313 = vadd.f32 %v6737, 0.5
      %v7314 = vadd.f32 %v6738, 0.5
      %v7315 = vadd.f32 %v6739, 0.5
      %v7316 = vadd.f32 %v6740, 0.5
      %v7317 = vadd.f32 %v6741, 0.5
      %v7318 = vadd.f32 %v6742, 0.5
      %v7319 = vadd.f32 %v6743, 0.5
      %v7320 = vadd.f32 %v6744, 0.5
      %v7321 = vadd.f32 %v6745, 0.5
      %v7322 = vadd.f32 %v6746, 0.5
      %v7323 = vadd.f32 %v6747, 0.5
      %v7324 = vadd.f32 %v6748, 0.5
      %v7325 = vadd.f32 %v6749, 0.5
      %v7326 = vadd.f32 %v6750, 0.5
      %v7327 = vadd.f32 %v6751, 0.5
      %v7328 = vadd.f32 %v6752, 0.5
      %v7329 = vadd.f32 %v6753, 0.5
      %v7330 = vadd.f32 %v6754, 0.5
      %v7331 = vadd.f32 %v6755, 0.5
      %v7332 = vadd.f32 %v6756, 0.5
      %v7333 = vadd.f32 %v6757, 0.5
      %v7334 = vadd.f32 %v6758, 0.5
      %v7335 = vadd.f32 %v6759, 0.5
      %v7336 = vadd.f32 %v6760, 0.5
      %v7337 = vadd.f32 %v6761, 0.5
      %v7338 = vadd.f32 %v6762, 0.5
      %v7339 = vadd.f32 %v6763, 0.5
      %v7340 = vadd.f32 %v6764, 0.5
      %v7341 = vadd.f32 %v6765, 0.5
      %v7342 = vadd.f32 %v6766, 0.5
      %v7343 = vadd.f32 %v6767, 0.5
      %v7344 = vadd.f32 %v6768, 0.5
      %v7345 = vadd.f32 %v6769, 0.5
      %v7346 = vadd.f32 %v6770, 0.5
      %v7347 = vadd.f32 %v6771, 0.5
      %v7348 = vadd.f32 %v6772, 0.5
      %v7349 = vadd.f32 %v6773, 0.5
      %v7350 = vadd.f32 %v6774, 0.5
      %v7351 = vadd.f32 %v6775, 0.5
      %v7352 = vadd.f32 %v6776, 0.5
      %v7353 = vadd.f32 %v6777, 0.5
      %v7354 = vadd.f32 %v6778, 0.5
      %v7355 = vadd.f32 %v6779, 0.5
      %v7356 = vadd.f32 %v6780, 0.5
      %v7357 = vadd.f32 %v6781, 0.5
      %v7358 = vadd.f32 %v6782, 0.5
      %v7359 = vadd.f32 %v6783, 0.5
      %v7360 = vadd.f32 %v6784, 0.5
      %v7361 = vadd.f32 %v6785, 0.5
      %v7362 = vadd.f32 %v6786, 0.5
      %v7363 = vadd.f32 %v6787, 0.5
      %v7364 = vadd.f32 %v6788, 0.5
      %v7365 = vadd.f32 %v6789, 0.5
      %v7366 = vadd.f32 %v6790, 0.5
      %v7367 = vadd.f32 %v6791, 0.5
      %v7368 = vadd.f32 %v6792, 0.5
      %v7369 = vadd.f32 %v6793, 0.5
      %v7370 = vadd.f32 %v6794, 0.5
      %v7371 = vadd.f32 %v6795, 0.5
      %v7372 = vadd.f32 %v6796, 0.5
      %v7373 = vadd.f32 %v6797, 0.5
      %v7374 = vadd.f32 %v6798, 0.5
      %v7375 = vadd.f32 %v6799, 0.5
      %v7376 = vadd.f32 %v6800, 0.5
      %v7377 = vadd.f32 %v6801, 0.5
      %v7378 = vadd.f32 %v6802, 0.5
      %v7379 = vadd.f32 %v6803, 0.5
      %v7380 = vadd.f32 %v6804, 0.5
      %v7381 = vadd.f32 %v6805, 0.5
      %v7382 = vadd.f32 %v6806, 0.5
      %v7383 = vadd.f32 %v6807, 0.5
      %v7384 = vadd.f32 %v6808, 0.5
      %v7385 = vadd.f32 %v6809, 0.5
      %v7386 = vadd.f32 %v6810, 0.5
      %v7387 = vadd.f32 %v6811, 0.5
      %v7388 = vadd.f32 %v6812, 0.5
      %v7389 = vadd.f32 %v6813, 0.5
      %v7390 = vadd.f32 %v6814, 0.5
      %v7391 = vadd.f32 %v6815, 0.5
      %v7392 = vadd.f32 %v6816, 0.5
      %v7393 = vadd.f32 %v6817, 0.5
      %v7394 = vadd.f32 %v6818, 0.5
      %v7395 = vadd.f32 %v6819, 0.5
      %v7396 = vadd.f32 %v6820, 0.5
      %v7397 = vadd.f32 %v6821, 0.5
      %v7398 = vadd.f32 %v6822, 0.5
      %v7399 = vadd.f32 %v6823, 0.5
      %v7400 = vadd.f32 %v6824, 0.5
      %v7401 = vadd.f32 %v6825, 0.5
      %v7402 = vadd.f32 %v6826, 0.5
      %v7403 = vadd.f32 %v6827, 0.5
      %v7404 = vadd.f32 %v6828, 0.5
      %v7405 = vadd.f32 %v6829, 0.5
      %v7406 = vadd.f32 %v6830, 0.5
      %v7407 = vadd.f32 %v6831, 0.5
      %v7408 = vadd.f32 %v6832, 0.5
      %v7409 = vadd.f32 %v6833, 0.5
      %v7410 = vadd.f32 %v6834, 0.5
      %v7411 = vadd.f32 %v6835, 0.5
      %v7412 = vadd.f32 %v6836, 0.5
      %v7413 = vadd.f32 %v6837, 0.5
      %v7414 = vadd.f32 %v6838, 0.5
      %v7415 = vadd.f32 %v6839, 0.5
      %v7416 = vadd.f32 %v6840, 0.5
      %v7417 = vadd.f32 %v6841, 0.5
      %v7418 = vadd.f32 %v6842, 0.5
      %v7419 = vadd.f32 %v6843, 0.5
      %v7420 = vadd.f32 %v6844, 0.5
      %v7421 = vadd.f32 %v6845, 0.5
      %v7422 = vadd.f32 %v6846, 0.5
      %v7423 = vadd.f32 %v6847, 0.5
      %v7424 = vadd.f32 %v6848, 0.5
      %v7425 = vadd.f32 %v6849, 0.5
      %v7426 = vadd.f32 %v6850, 0.5
      %v7427 = vadd.f32 %v6851, 0.5
      %v7428 = vadd.f32 %v6852, 0.5
      %v7429 = vadd.f32 %v6853, 0.5
      %v7430 = vadd.f32 %v6854, 0.5
      %v7431 = vadd.f32 %v6855, 0.5
      %v7432 = vadd.f32 %v6856, 0.5
      %v7433 = vadd.f32 %v6857, 0.5
      %v7434 = vadd.f32 %v6858, 0.5
      %v7435 = vadd.f32 %v6859, 0.5
      %v7436 = vadd.f32 %v6860, 0.5
      %v7437 = vadd.f32 %v6861, 0.5
      %v7438 = vadd.f32 %v6862, 0.5
      %v7439 = vadd.f32 %v6863, 0.5
      %v7440 = vadd.f32 %v6864, 0.5
      %v7441 = vadd.f32 %v6865, 0.5
      %v7442 = vadd.f32 %v6866, 0.5
      %v7443 = vadd.f32 %v6867, 0.5
      %v7444 = vadd.f32 %v6868, 0.5
      %v7445 = vadd.f32 %v6869, 0.5
      %v7446 = vadd.f32 %v6870, 0.5
      %v7447 = vadd.f32 %v6871, 0.5
      %v7448 = vadd.f32 %v6872, 0.5
      %v7449 = vadd.f32 %v6873, 0.5
      %v7450 = vadd.f32 %v6874, 0.5
      %v7451 = vadd.f32 %v6875, 0.5
      %v7452 = vadd.f32 %v6876, 0.5
      %v7453 = vadd.f32 %v6877, 0.5
      %v7454 = vadd.f32 %v6878, 0.5
      %v7455 = vadd.f32 %v6879, 0.5
      %v7456 = vadd.f32 %v6880, 0.5
      %v7457 = vadd.f32 %v6881, 0.5
      %v7458 = vadd.f32 %v6882, 0.5
      %v7459 = vadd.f32 %v6883, 0.5
      %v7460 = vadd.f32 %v6884, 0.5
      %v7461 = vadd.f32 %v6885, 0.5
      %v7462 = vadd.f32 %v6886, 0.5
      %v7463 = vadd.f32 %v6887, 0.5
      %v7464 = vadd.f32 %v6888, 0.5
      %v7465 = vadd.f32 %v6889, 0.5
      %v7466 = vadd.f32 %v6890, 0.5
      %v7467 = vadd.f32 %v6891, 0.5
      %v7468 = vadd.f32 %v6892, 0.5
      %v7469 = vadd.f32 %v6893, 0.5
      %v7470 = vadd.f32 %v6894, 0.5
      %v7471 = vadd.f32 %v6895, 0.5
      %v7472 = vadd.f32 %v6896, 0.5
      %v7473 = vadd.f32 %v6897, 0.5
      %v7474 = vadd.f32 %v6898, 0.5
      %v7475 = vadd.f32 %v6899, 0.5
      %v7476 = vadd.f32 %v6900, 0.5
      %v7477 = vadd.f32 %v6901, 0.5
      %v7478 = vadd.f32 %v6902, 0.5
      %v7479 = vadd.f32 %v6903, 0.5
      %v7480 = vadd.f32 %v6904, 0.5
      %v7481 = vadd.f32 %v6905, 0.5
      %v7482 = vadd.f32 %v6906, 0.5
      %v7483 = vadd.f32 %v6907, 0.5
      %v7484 = vadd.f32 %v6908, 0.5
      %v7485 = vadd.f32 %v6909, 0.5
      %v7486 = vadd.f32 %v6910, 0.5
      %v7487 = vadd.f32 %v6911, 0.5
      %v7488 = vadd.f32 %v6912, 0.5
      %v7489 = vadd.f32 %v6913, 0.5
      %v7490 = vadd.f32 %v6914, 0.5
      %v7491 = vadd.f32 %v6915, 0.5
      %v7492 = vadd.f32 %v6916, 0.5
      %v7493 = vadd.f32 %v6917, 0.5
      %v7494 = vadd.f32 %v6918, 0.5
      %v7495 = vadd.f32 %v6919, 0.5
      %v7496 = vadd.f32 %v6920, 0.5
      %v7497 = vadd.f32 %v6921, 0.5
      %v7498 = vadd.f32 %v6922, 0.5
      %v7499 = vadd.f32 %v6923, 0.5
      %v7500 = vadd.f32 %v6924, 0.5
      %v7501 = vadd.f32 %v6925, 0.5
      %v7502 = vadd.f32 %v6926, 0.5
      %v7503 = vadd.f32 %v6927, 0.5
      %v7504 = vadd.f32 %v6928, 0.5
      %v7505 = vadd.f32 %v6929, 0.5
      %v7506 = vadd.f32 %v6930, 0.5
      %v7507 = vadd.f32 %v6931, 0.5
      %v7508 = vadd.f32 %v6932, 0.5
      %v7509 = vadd.f32 %v6933, 0.5
      %v7510 = vadd.f32 %v6934, 0.5
      %v7511 = vadd.f32 %v6935, 0.5
      %v7512 = vadd.f32 %v6936, 0.5
      %v7513 = vadd.f32 %v6937, 0.5
      %v7514 = vadd.f32 %v6938, 0.5
      %v7515 = vadd.f32 %v6939, 0.5
      %v7516 = vadd.f32 %v6940, 0.5
      %v7517 = vadd.f32 %v6941, 0.5
      %v7518 = vadd.f32 %v6942, 0.5
      %v7519 = vadd.f32 %v6943, 0.5
      %v7520 = vadd.f32 %v6944, 0.5
      %v7521 = vadd.f32 %v6945, 0.5
      %v7522 = vadd.f32 %v6946, 0.5
      %v7523 = vadd.f32 %v6947, 0.5
      %v7524 = vadd.f32 %v6948, 0.5
      %v7525 = vadd.f32 %v6949, 0.5
      %v7526 = vadd.f32 %v6950, 0.5
      %v7527 = vadd.f32 %v6951, 0.5
      %v7528 = vadd.f32 %v6952, 0.5
      %v7529 = vadd.f32 %v6953, 0.5
      %v7530 = vadd.f32 %v6954, 0.5
      %v7531 = vadd.f32 %v6955, 0.5
      %v7532 = vadd.f32 %v6956, 0.5
      %v7533 = vadd.f32 %v6957, 0.5
      %v7534 = vadd.f32 %v6958, 0.5
      %v7535 = vadd.f32 %v6959, 0.5
      %v7536 = vadd.f32 %v6960, 0.5
      %v7537 = vadd.f32 %v6961, 0.5
      %v7538 = vadd.f32 %v6962, 0.5
      %v7539 = vadd.f32 %v6963, 0.5
      %v7540 = vadd.f32 %v6964, 0.5
      %v7541 = vadd.f32 %v6965, 0.5
      %v7542 = vadd.f32 %v6966, 0.5
      %v7543 = vadd.f32 %v6967, 0.5
      %v7544 = vadd.f32 %v6968, 0.5
      %v7545 = vadd.f32 %v6969, 0.5
      %v7546 = vadd.f32 %v6970, 0.5
      %v7547 = vadd.f32 %v6971, 0.5
      %v7548 = vadd.f32 %v6972, 0.5
      %v7549 = vadd.f32 %v6973, 0.5
      %v7550 = vadd.f32 %v6974, 0.5
      %v7551 = vadd.f32 %v6975, 0.5
      %v7552 = vadd.f32 %v6976, 0.5
      %v7553 = vadd.f32 %v6977, 0.5
      %v7554 = vadd.f32 %v6978, 0.5
      %v7555 = vadd.f32 %v6979, 0.5
      %v7556 = vadd.f32 %v6980, 0.5
      %v7557 = vadd.f32 %v6981, 0.5
      %v7558 = vadd.f32 %v6982, 0.5
      %v7559 = vadd.f32 %v6983, 0.5
      %v7560 = vadd.f32 %v6984, 0.5
      %v7561 = vadd.f32 %v6985, 0.5
      %v7562 = vadd.f32 %v6986, 0.5
      %v7563 = vadd.f32 %v6987, 0.5
      %v7564 = vadd.f32 %v6988, 0.5
      %v7565 = vadd.f32 %v6989, 0.5
      %v7566 = vadd.f32 %v6990, 0.5
      %v7567 = vadd.f32 %v6991, 0.5
      %v7568 = vadd.f32 %v6992, 0.5
      %v7569 = vadd.f32 %v6993, 0.5
      %v7570 = vadd.f32 %v6994, 0.5
      %v7571 = vadd.f32 %v6995, 0.5
      %v7572 = vadd.f32 %v6996, 0.5
      %v7573 = vadd.f32 %v6997, 0.5
      %v7574 = vadd.f32 %v6998, 0.5
      %v7575 = vadd.f32 %v6999, 0.5
      %v7576 = vadd.f32 %v7000, 0.5
      %v7577 = vadd.f32 %v7001, 0.5
      %v7578 = vadd.f32 %v7002, 0.5
      %v7579 = vadd.f32 %v7003, 0.5
      %v7580 = vadd.f32 %v7004, 0.5
      %v7581 = vadd.f32 %v7005, 0.5
      %v7582 = vadd.f32 %v7006, 0.5
      %v7583 = vadd.f32 %v7007, 0.5
      %v7584 = vadd.f32 %v7008, 0.5
      %v7585 = vadd.f32 %v7009, 0.5
      %v7586 = vadd.f32 %v7010, 0.5
      %v7587 = vadd.f32 %v7011, 0.5
      %v7588 = vadd.f32 %v7012, 0.5
      %v7589 = vadd.f32 %v7013, 0.5
      %v7590 = vadd.f32 %v7014, 0.5
      %v7591 = vadd.f32 %v7015, 0.5
      %v7592 = vadd.f32 %v7016, 0.5
      %v7593 = vadd.f32 %v7017, 0.5
      %v7594 = vadd.f32 %v7018, 0.5
      %v7595 = vadd.f32 %v7019, 0.5
      %v7596 = vadd.f32 %v7020, 0.5
      %v7597 = vadd.f32 %v7021, 0.5
      %v7598 = vadd.f32 %v7022, 0.5
      %v7599 = vadd.f32 %v7023, 0.5
      %v7600 = vadd.f32 %v7024, 0.5
      %v7601 = vadd.f32 %v7025, 0.5
      %v7602 = vadd.f32 %v7026, 0.5
      %v7603 = vadd.f32 %v7027, 0.5
      %v7604 = vadd.f32 %v7028, 0.5
      %v7605 = vadd.f32 %v7029, 0.5
      %v7606 = vadd.f32 %v7030, 0.5
      %v7607 = vadd.f32 %v7031, 0.5
      %v7608 = vadd.f32 %v7032, 0.5
      %v7609 = vadd.f32 %v7033, 0.5
      %v7610 = vadd.f32 %v7034, 0.5
      %v7611 = vadd.f32 %v7035, 0.5
      %v7612 = vadd.f32 %v7036, 0.5
      %v7613 = vadd.f32 %v7037, 0.5
      %v7614 = vadd.f32 %v7038, 0.5
      %v7615 = vadd.f32 %v7039, 0.5
      %v7616 = vadd.f32 %v7040, 0.5
      %v7617 = vadd.f32 %v7041, 0.5
      %v7618 = vadd.f32 %v7042, 0.5
      %v7619 = vadd.f32 %v7043, 0.5
      %v7620 = vadd.f32 %v7044, 0.5
      %v7621 = vadd.f32 %v7045, 0.5
      %v7622 = vadd.f32 %v7046, 0.5
      %v7623 = vadd.f32 %v7047, 0.5
      %v7624 = vadd.f32 %v7048, 0.5
      %v7625 = vadd.f32 %v7049, 0.5
      %v7626 = vadd.f32 %v7050, 0.5
      %v7627 = vadd.f32 %v7051, 0.5
      %v7628 = vadd.f32 %v7052, 0.5
      %v7629 = vadd.f32 %v7053, 0.5
      %v7630 = vadd.f32 %v7054, 0.5
      %v7631 = vadd.f32 %v7055, 0.5
      %v7632 = vadd.f32 %v7056, 0.5
      %v7633 = vadd.f32 %v7057, 0.5
      %v7634 = vadd.f32 %v7058, 0.5
      %v7635 = vadd.f32 %v7059, 0.5
      %v7636 = vadd.f32 %v7060, 0.5
      %v7637 = vadd.f32 %v7061, 0.5
      %v7638 = vadd.f32 %v7062, 0.5
      %v7639 = vadd.f32 %v7063, 0.5
      %v7640 = vadd.f32 %v7064, 0.5
      %v7641 = vadd.f32 %v7065, 0.5
      %v7642 = vadd.f32 %v7066, 0.5
      %v7643 = vadd.f32 %v7067, 0.5
      %v7644 = vadd.f32 %v7068, 0.5
      %v7645 = vadd.f32 %v7069, 0.5
      %v7646 = vadd.f32 %v7070, 0.5
      %v7647 = vadd.f32 %v7071, 0.5
      %v7648 = vadd.f32 %v7072, 0.5
      %v7649 = vadd.f32 %v7073, 0.5
      %v7650 = vadd.f32 %v7074, 0.5
      %v7651 = vadd.f32 %v7075, 0.5
      %v7652 = vadd.f32 %v7076, 0.5
      %v7653 = vadd.f32 %v7077, 0.5
      %v7654 = vadd.f32 %v7078, 0.5
      %v7655 = vadd.f32 %v7079, 0.5
      %v7656 = vadd.f32 %v7080, 0.5
      %v7657 = vadd.f32 %v7081, 0.5
      %v7658 = vadd.f32 %v7082, 0.5
      %v7659 = vadd.f32 %v7083, 0.5
      %v7660 = vadd.f32 %v7084, 0.5
      %v7661 = vadd.f32 %v7085, 0.5
      %v7662 = vadd.f32 %v7086, 0.5
      %v7663 = vadd.f32 %v7087, 0.5
      %v7664 = vadd.f32 %v7088, 0.5
      %v7665 = vadd.f32 %v7089, 0.5
      %v7666 = vadd.f32 %v7090, 0.5
      %v7667 = vadd.f32 %v7091, 0.5
      %v7668 = vadd.f32 %v7092, 0.5
      %v7669 = vadd.f32 %v7093, 0.5
      %v7670 = vadd.f32 %v7094, 0.5
      %v7671 = vadd.f32 %v7095, 0.5
      %v7672 = vadd.f32 %v7096, 0.5
      %v7673 = vadd.f32 %v7097, 0.5
      %v7674 = vadd.f32 %v7098, 0.5
      %v7675 = vadd.f32 %v7099, 0.5
      %v7676 = vadd.f32 %v7100, 0.5
      %v7677 = vadd.f32 %v7101, 0.5
      %v7678 = vadd.f32 %v7102, 0.5
      %v7679 = vadd.f32 %v7103, 0.5
      %v7680 = vadd.f32 %v7104, 0.5
      %v7681 = vadd.f32 %v7105, 0.5
      %v7682 = vadd.f32 %v7106, 0.5
      %v7683 = vadd.f32 %v7107, 0.5
      %v7684 = vadd.f32 %v7108, 0.5
      %v7685 = vadd.f32 %v7109, 0.5
      %v7686 = vadd.f32 %v7110, 0.5
      %v7687 = vadd.f32 %v7111, 0.5
      %v7688 = vadd.f32 %v7112, 0.5
      %v7689 = vadd.f32 %v7113, 0.5
      %v7690 = vadd.f32 %v7114, 0.5
      %v7691 = vadd.f32 %v7115, 0.5
      %v7692 = vadd.f32 %v7116, 0.5
      %v7693 = vadd.f32 %v7117, 0.5
      %v7694 = vadd.f32 %v7118, 0.5
      %v7695 = vadd.f32 %v7119, 0.5
      %v7696 = vadd.f32 %v7120, 0.5
      %v7697 = vadd.f32 %v7121, 0.5
      %v7698 = vadd.f32 %v7122, 0.5
      %v7699 = vadd.f32 %v7123, 0.5
      %v7700 = vadd.f32 %v7124, 0.5
      %v7701 = vadd.f32 %v7125, 0.5
      %v7702 = vadd.f32 %v7126, 0.5
      %v7703 = vadd.f32 %v7127, 0.5
      %v7704 = vadd.f32 %v7128, 0.5
      %v7705 = vadd.f32 %v7129, 0.5
      %v7706 = vadd.f32 %v7130, 0.5
      %v7707 = vadd.f32 %v7131, 0.5
      %v7708 = vadd.f32 %v7132, 0.5
      %v7709 = vadd.f32 %v7133, 0.5
      %v7710 = vadd.f32 %v7134, 0.5
      %v7711 = vadd.f32 %v7135, 0.5
      %v7712 = vadd.f32 %v7136, 0.5
      %v7713 = vadd.f32 %v7137, 0.5
      %v7714 = vadd.f32 %v7138, 0.5
      %v7715 = vadd.f32 %v7139, 0.5
      %v7716 = vadd.f32 %v7140, 0.5
      %v7717 = vadd.f32 %v7141, 0.5
      %v7718 = vadd.f32 %v7142, 0.5
      %v7719 = vadd.f32 %v7143, 0.5
      %v7720 = vadd.f32 %v7144, 0.5
      %v7721 = vadd.f32 %v7145, 0.5
      %v7722 = vadd.f32 %v7146, 0.5
      %v7723 = vadd.f32 %v7147, 0.5
      %v7724 = vadd.f32 %v7148, 0.5
      %v7725 = vadd.f32 %v7149, %v7167
      %v7726 = vadd.f32 %v7150, %v7168
      %v7727 = vadd.f32 %v7151, %v7169
      %v7728 = vadd.f32 %v7152, %v7170
      %v7729 = vadd.f32 %v7153, %v7171
      %v7730 = vadd.f32 %v7154, %v7172
      %v7731 = vadd.f32 %v7155, %v7173
      %v7732 = vadd.f32 %v7156, %v7174
      %v7733 = vadd.f32 %v7157, %v7175
      %v7734 = vadd.f32 %v7158, %v7176
      %v7735 = vadd.f32 %v7159, %v7177
      %v7736 = vadd.f32 %v7160, %v7178
      %v7737 = vadd.f32 %v7161, %v7179
      %v7738 = vadd.f32 %v7162, %v7180
      %v7739 = vadd.f32 %v7163, %v7181
      %v7740 = vadd.f32 %v7164, %v7182
      %v7741 = vadd.f32 %v7165, %v7183
      %v7742 = vadd.f32 %v7166, %v7184
      %v7743 = vadd.f32 %v7221, %v7239
      %v7744 = vadd.f32 %v7222, %v7240
      %v7745 = vadd.f32 %v7223, %v7241
      %v7746 = vadd.f32 %v7224, %v7242
      %v7747 = vadd.f32 %v7225, %v7243
      %v7748 = vadd.f32 %v7226, %v7244
      %v7749 = vadd.f32 %v7227, %v7245
      %v7750 = vadd.f32 %v7228, %v7246
      %v7751 = vadd.f32 %v7229, %v7247
      %v7752 = vadd.f32 %v7230, %v7248
      %v7753 = vadd.f32 %v7231, %v7249
      %v7754 = vadd.f32 %v7232, %v7250
      %v7755 = vadd.f32 %v7233, %v7251
      %v7756 = vadd.f32 %v7234, %v7252
      %v7757 = vadd.f32 %v7235, %v7253
      %v7758 = vadd.f32 %v7236, %v7254
      %v7759 = vadd.f32 %v7237, %v7255
      %v7760 = vadd.f32 %v7238, %v7256
      %v7761 = vadd.f32 %v7293, %v7311
      %v7762 = vadd.f32 %v7294, %v7312
      %v7763 = vadd.f32 %v7295, %v7313
      %v7764 = vadd.f32 %v7296, %v7314
      %v7765 = vadd.f32 %v7297, %v7315
      %v7766 = vadd.f32 %v7298, %v7316
      %v7767 = vadd.f32 %v7299, %v7317
      %v7768 = vadd.f32 %v7300, %v7318
      %v7769 = vadd.f32 %v7301, %v7319
      %v7770 = vadd.f32 %v7302, %v7320
      %v7771 = vadd.f32 %v7303, %v7321
      %v7772 = vadd.f32 %v7304, %v7322
      %v7773 = vadd.f32 %v7305, %v7323
      %v7774 = vadd.f32 %v7306, %v7324
      %v7775 = vadd.f32 %v7307, %v7325
      %v7776 = vadd.f32 %v7308, %v7326
      %v7777 = vadd.f32 %v7309, %v7327
      %v7778 = vadd.f32 %v7310, %v7328
      %v7779 = vadd.f32 %v7365, %v7383
      %v7780 = vadd.f32 %v7366, %v7384
      %v7781 = vadd.f32 %v7367, %v7385
      %v7782 = vadd.f32 %v7368, %v7386
      %v7783 = vadd.f32 %v7369, %v7387
      %v7784 = vadd.f32 %v7370, %v7388
      %v7785 = vadd.f32 %v7371, %v7389
      %v7786 = vadd.f32 %v7372, %v7390
      %v7787 = vadd.f32 %v7373, %v7391
      %v7788 = vadd.f32 %v7374, %v7392
      %v7789 = vadd.f32 %v7375, %v7393
      %v7790 = vadd.f32 %v7376, %v7394
      %v7791 = vadd.f32 %v7377, %v7395
      %v7792 = vadd.f32 %v7378, %v7396
      %v7793 = vadd.f32 %v7379, %v7397
      %v7794 = vadd.f32 %v7380, %v7398
      %v7795 = vadd.f32 %v7381, %v7399
      %v7796 = vadd.f32 %v7382, %v7400
      %v7797 = vadd.f32 %v7437, %v7455
      %v7798 = vadd.f32 %v7438, %v7456
      %v7799 = vadd.f32 %v7439, %v7457
      %v7800 = vadd.f32 %v7440, %v7458
      %v7801 = vadd.f32 %v7441, %v7459
      %v7802 = vadd.f32 %v7442, %v7460
      %v7803 = vadd.f32 %v7443, %v7461
      %v7804 = vadd.f32 %v7444, %v7462
      %v7805 = vadd.f32 %v7445, %v7463
      %v7806 = vadd.f32 %v7446, %v7464
      %v7807 = vadd.f32 %v7447, %v7465
      %v7808 = vadd.f32 %v7448, %v7466
      %v7809 = vadd.f32 %v7449, %v7467
      %v7810 = vadd.f32 %v7450, %v7468
      %v7811 = vadd.f32 %v7451, %v7469
      %v7812 = vadd.f32 %v7452, %v7470
      %v7813 = vadd.f32 %v7453, %v7471
      %v7814 = vadd.f32 %v7454, %v7472
      %v7815 = vadd.f32 %v7509, %v7527
      %v7816 = vadd.f32 %v7510, %v7528
      %v7817 = vadd.f32 %v7511, %v7529
      %v7818 = vadd.f32 %v7512, %v7530
      %v7819 = vadd.f32 %v7513, %v7531
      %v7820 = vadd.f32 %v7514, %v7532
      %v7821 = vadd.f32 %v7515, %v7533
      %v7822 = vadd.f32 %v7516, %v7534
      %v7823 = vadd.f32 %v7517, %v7535
      %v7824 = vadd.f32 %v7518, %v7536
      %v7825 = vadd.f32 %v7519, %v7537
      %v7826 = vadd.f32 %v7520, %v7538
      %v7827 = vadd.f32 %v7521, %v7539
      %v7828 = vadd.f32 %v7522, %v7540
      %v7829 = vadd.f32 %v7523, %v7541
      %v7830 = vadd.f32 %v7524, %v7542
      %v7831 = vadd.f32 %v7525, %v7543
      %v7832 = vadd.f32 %v7526, %v7544
      %v7833 = vadd.f32 %v7581, %v7599
      %v7834 = vadd.f32 %v7582, %v7600
      %v7835 = vadd.f32 %v7583, %v7601
      %v7836 = vadd.f32 %v7584, %v7602
      %v7837 = vadd.f32 %v7585, %v7603
      %v7838 = vadd.f32 %v7586, %v7604
      %v7839 = vadd.f32 %v7587, %v7605
      %v7840 = vadd.f32 %v7588, %v7606
      %v7841 = vadd.f32 %v7589, %v7607
      %v7842 = vadd.f32 %v7590, %v7608
      %v7843 = vadd.f32 %v7591, %v7609
      %v7844 = vadd.f32 %v7592, %v7610
      %v7845 = vadd.f32 %v7593, %v7611
      %v7846 = vadd.f32 %v7594, %v7612
      %v7847 = vadd.f32 %v7595, %v7613
      %v7848 = vadd.f32 %v7596, %v7614
      %v7849 = vadd.f32 %v7597, %v7615
      %v7850 = vadd.f32 %v7598, %v7616
      %v7851 = vadd.f32 %v7653, %v7671
      %v7852 = vadd.f32 %v7654, %v7672
      %v7853 = vadd.f32 %v7655, %v7673
      %v7854 = vadd.f32 %v7656, %v7674
      %v7855 = vadd.f32 %v7657, %v7675
      %v7856 = vadd.f32 %v7658, %v7676
      %v7857 = vadd.f32 %v7659, %v7677
      %v7858 = vadd.f32 %v7660, %v7678
      %v7859 = vadd.f32 %v7661, %v7679
      %v7860 = vadd.f32 %v7662, %v7680
      %v7861 = vadd.f32 %v7663, %v7681
      %v7862 = vadd.f32 %v7664, %v7682
      %v7863 = vadd.f32 %v7665, %v7683
      %v7864 = vadd.f32 %v7666, %v7684
      %v7865 = vadd.f32 %v7667, %v7685
      %v7866 = vadd.f32 %v7668, %v7686
      %v7867 = vadd.f32 %v7669, %v7687
      %v7868 = vadd.f32 %v7670, %v7688
      %v7869 = vadd.f32 %v7725, %v7185
      %v7870 = vadd.f32 %v7726, %v7186
      %v7871 = vadd.f32 %v7727, %v7187
      %v7872 = vadd.f32 %v7728, %v7188
      %v7873 = vadd.f32 %v7729, %v7189
      %v7874 = vadd.f32 %v7730, %v7190
      %v7875 = vadd.f32 %v7731, %v7191
      %v7876 = vadd.f32 %v7732, %v7192
      %v7877 = vadd.f32 %v7733, %v7193
      %v7878 = vadd.f32 %v7734, %v7194
      %v7879 = vadd.f32 %v7735, %v7195
      %v7880 = vadd.f32 %v7736, %v7196
      %v7881 = vadd.f32 %v7737, %v7197
      %v7882 = vadd.f32 %v7738, %v7198
      %v7883 = vadd.f32 %v7739, %v7199
      %v7884 = vadd.f32 %v7740, %v7200
      %v7885 = vadd.f32 %v7741, %v7201
      %v7886 = vadd.f32 %v7742, %v7202
      %v7887 = vadd.f32 %v7743, %v7257
      %v7888 = vadd.f32 %v7744, %v7258
      %v7889 = vadd.f32 %v7745, %v7259
      %v7890 = vadd.f32 %v7746, %v7260
      %v7891 = vadd.f32 %v7747, %v7261
      %v7892 = vadd.f32 %v7748, %v7262
      %v7893 = vadd.f32 %v7749, %v7263
      %v7894 = vadd.f32 %v7750, %v7264
      %v7895 = vadd.f32 %v7751, %v7265
      %v7896 = vadd.f32 %v7752, %v7266
      %v7897 = vadd.f32 %v7753, %v7267
      %v7898 = vadd.f32 %v7754, %v7268
      %v7899 = vadd.f32 %v7755, %v7269
      %v7900 = vadd.f32 %v7756, %v7270
      %v7901 = vadd.f32 %v7757, %v7271
      %v7902 = vadd.f32 %v7758, %v7272
      %v7903 = vadd.f32 %v7759, %v7273
      %v7904 = vadd.f32 %v7760, %v7274
      %v7905 = vadd.f32 %v7761, %v7329
      %v7906 = vadd.f32 %v7762, %v7330
      %v7907 = vadd.f32 %v7763, %v7331
      %v7908 = vadd.f32 %v7764, %v7332
      %v7909 = vadd.f32 %v7765, %v7333
      %v7910 = vadd.f32 %v7766, %v7334
      %v7911 = vadd.f32 %v7767, %v7335
      %v7912 = vadd.f32 %v7768, %v7336
      %v7913 = vadd.f32 %v7769, %v7337
      %v7914 = vadd.f32 %v7770, %v7338
      %v7915 = vadd.f32 %v7771, %v7339
      %v7916 = vadd.f32 %v7772, %v7340
      %v7917 = vadd.f32 %v7773, %v7341
      %v7918 = vadd.f32 %v7774, %v7342
      %v7919 = vadd.f32 %v7775, %v7343
      %v7920 = vadd.f32 %v7776, %v7344
      %v7921 = vadd.f32 %v7777, %v7345
      %v7922 = vadd.f32 %v7778, %v7346
      %v7923 = vadd.f32 %v7779, %v7401
      %v7924 = vadd.f32 %v7780, %v7402
      %v7925 = vadd.f32 %v7781, %v7403
      %v7926 = vadd.f32 %v7782, %v7404
      %v7927 = vadd.f32 %v7783, %v7405
      %v7928 = vadd.f32 %v7784, %v7406
      %v7929 = vadd.f32 %v7785, %v7407
      %v7930 = vadd.f32 %v7786, %v7408
      %v7931 = vadd.f32 %v7787, %v7409
      %v7932 = vadd.f32 %v7788, %v7410
      %v7933 = vadd.f32 %v7789, %v7411
      %v7934 = vadd.f32 %v7790, %v7412
      %v7935 = vadd.f32 %v7791, %v7413
      %v7936 = vadd.f32 %v7792, %v7414
      %v7937 = vadd.f32 %v7793, %v7415
      %v7938 = vadd.f32 %v7794, %v7416
      %v7939 = vadd.f32 %v7795, %v7417
      %v7940 = vadd.f32 %v7796, %v7418
      %v7941 = vadd.f32 %v7797, %v7473
      %v7942 = vadd.f32 %v7798, %v7474
      %v7943 = vadd.f32 %v7799, %v7475
      %v7944 = vadd.f32 %v7800, %v7476
      %v7945 = vadd.f32 %v7801, %v7477
      %v7946 = vadd.f32 %v7802, %v7478
      %v7947 = vadd.f32 %v7803, %v7479
      %v7948 = vadd.f32 %v7804, %v7480
      %v7949 = vadd.f32 %v7805, %v7481
      %v7950 = vadd.f32 %v7806, %v7482
      %v7951 = vadd.f32 %v7807, %v7483
      %v7952 = vadd.f32 %v7808, %v7484
      %v7953 = vadd.f32 %v7809, %v7485
      %v7954 = vadd.f32 %v7810, %v7486
      %v7955 = vadd.f32 %v7811, %v7487
      %v7956 = vadd.f32 %v7812, %v7488
      %v7957 = vadd.f32 %v7813, %v7489
      %v7958 = vadd.f32 %v7814, %v7490
      %v7959 = vadd.f32 %v7815, %v7545
      %v7960 = vadd.f32 %v7816, %v7546
      %v7961 = vadd.f32 %v7817, %v7547
      %v7962 = vadd.f32 %v7818, %v7548
      %v7963 = vadd.f32 %v7819, %v7549
      %v7964 = vadd.f32 %v7820, %v7550
      %v7965 = vadd.f32 %v7821, %v7551
      %v7966 = vadd.f32 %v7822, %v7552
      %v7967 = vadd.f32 %v7823, %v7553
      %v7968 = vadd.f32 %v7824, %v7554
      %v7969 = vadd.f32 %v7825, %v7555
      %v7970 = vadd.f32 %v7826, %v7556
      %v7971 = vadd.f32 %v7827, %v7557
      %v7972 = vadd.f32 %v7828, %v7558
      %v7973 = vadd.f32 %v7829, %v7559
      %v7974 = vadd.f32 %v7830, %v7560
      %v7975 = vadd.f32 %v7831, %v7561
      %v7976 = vadd.f32 %v7832, %v7562
      %v7977 = vadd.f32 %v7833, %v7617
      %v7978 = vadd.f32 %v7834, %v7618
      %v7979 = vadd.f32 %v7835, %v7619
      %v7980 = vadd.f32 %v7836, %v7620
      %v7981 = vadd.f32 %v7837, %v7621
      %v7982 = vadd.f32 %v7838, %v7622
      %v7983 = vadd.f32 %v7839, %v7623
      %v7984 = vadd.f32 %v7840, %v7624
      %v7985 = vadd.f32 %v7841, %v7625
      %v7986 = vadd.f32 %v7842, %v7626
      %v7987 = vadd.f32 %v7843, %v7627
      %v7988 = vadd.f32 %v7844, %v7628
      %v7989 = vadd.f32 %v7845, %v7629
      %v7990 = vadd.f32 %v7846, %v7630
      %v7991 = vadd.f32 %v7847, %v7631
      %v7992 = vadd.f32 %v7848, %v7632
      %v7993 = vadd.f32 %v7849, %v7633
      %v7994 = vadd.f32 %v7850, %v7634
      %v7995 = vadd.f32 %v7851, %v7689
      %v7996 = vadd.f32 %v7852, %v7690
      %v7997 = vadd.f32 %v7853, %v7691
      %v7998 = vadd.f32 %v7854, %v7692
      %v7999 = vadd.f32 %v7855, %v7693
      %v8000 = vadd.f32 %v7856, %v7694
      %v8001 = vadd.f32 %v7857, %v7695
      %v8002 = vadd.f32 %v7858, %v7696
      %v8003 = vadd.f32 %v7859, %v7697
      %v8004 = vadd.f32 %v7860, %v7698
      %v8005 = vadd.f32 %v7861, %v7699
      %v8006 = vadd.f32 %v7862, %v7700
      %v8007 = vadd.f32 %v7863, %v7701
      %v8008 = vadd.f32 %v7864, %v7702
      %v8009 = vadd.f32 %v7865, %v7703
      %v8010 = vadd.f32 %v7866, %v7704
      %v8011 = vadd.f32 %v7867, %v7705
      %v8012 = vadd.f32 %v7868, %v7706
      %v8013 = vadd.f32 %v7869, %v7203
      %v8014 = vadd.f32 %v7870, %v7204
      %v8015 = vadd.f32 %v7871, %v7205
      %v8016 = vadd.f32 %v7872, %v7206
      %v8017 = vadd.f32 %v7873, %v7207
      %v8018 = vadd.f32 %v7874, %v7208
      %v8019 = vadd.f32 %v7875, %v7209
      %v8020 = vadd.f32 %v7876, %v7210
      %v8021 = vadd.f32 %v7877, %v7211
      %v8022 = vadd.f32 %v7878, %v7212
      %v8023 = vadd.f32 %v7879, %v7213
      %v8024 = vadd.f32 %v7880, %v7214
      %v8025 = vadd.f32 %v7881, %v7215
      %v8026 = vadd.f32 %v7882, %v7216
      %v8027 = vadd.f32 %v7883, %v7217
      %v8028 = vadd.f32 %v7884, %v7218
      %v8029 = vadd.f32 %v7885, %v7219
      %v8030 = vadd.f32 %v7886, %v7220
      %v8031 = vadd.f32 %v7887, %v7275
      %v8032 = vadd.f32 %v7888, %v7276
      %v8033 = vadd.f32 %v7889, %v7277
      %v8034 = vadd.f32 %v7890, %v7278
      %v8035 = vadd.f32 %v7891, %v7279
      %v8036 = vadd.f32 %v7892, %v7280
      %v8037 = vadd.f32 %v7893, %v7281
      %v8038 = vadd.f32 %v7894, %v7282
      %v8039 = vadd.f32 %v7895, %v7283
      %v8040 = vadd.f32 %v7896, %v7284
      %v8041 = vadd.f32 %v7897, %v7285
      %v8042 = vadd.f32 %v7898, %v7286
      %v8043 = vadd.f32 %v7899, %v7287
      %v8044 = vadd.f32 %v7900, %v7288
      %v8045 = vadd.f32 %v7901, %v7289
      %v8046 = vadd.f32 %v7902, %v7290
      %v8047 = vadd.f32 %v7903, %v7291
      %v8048 = vadd.f32 %v7904, %v7292
      %v8049 = vadd.f32 %v7905, %v7347
      %v8050 = vadd.f32 %v7906, %v7348
      %v8051 = vadd.f32 %v7907, %v7349
      %v8052 = vadd.f32 %v7908, %v7350
      %v8053 = vadd.f32 %v7909, %v7351
      %v8054 = vadd.f32 %v7910, %v7352
      %v8055 = vadd.f32 %v7911, %v7353
      %v8056 = vadd.f32 %v7912, %v7354
      %v8057 = vadd.f32 %v7913, %v7355
      %v8058 = vadd.f32 %v7914, %v7356
      %v8059 = vadd.f32 %v7915, %v7357
      %v8060 = vadd.f32 %v7916, %v7358
      %v8061 = vadd.f32 %v7917, %v7359
      %v8062 = vadd.f32 %v7918, %v7360
      %v8063 = vadd.f32 %v7919, %v7361
      %v8064 = vadd.f32 %v7920, %v7362
      %v8065 = vadd.f32 %v7921, %v7363
      %v8066 = vadd.f32 %v7922, %v7364
      %v8067 = vadd.f32 %v7923, %v7419
      %v8068 = vadd.f32 %v7924, %v7420
      %v8069 = vadd.f32 %v7925, %v7421
      %v8070 = vadd.f32 %v7926, %v7422
      %v8071 = vadd.f32 %v7927, %v7423
      %v8072 = vadd.f32 %v7928, %v7424
      %v8073 = vadd.f32 %v7929, %v7425
      %v8074 = vadd.f32 %v7930, %v7426
      %v8075 = vadd.f32 %v7931, %v7427
      %v8076 = vadd.f32 %v7932, %v7428
      %v8077 = vadd.f32 %v7933, %v7429
      %v8078 = vadd.f32 %v7934, %v7430
      %v8079 = vadd.f32 %v7935, %v7431
      %v8080 = vadd.f32 %v7936, %v7432
      %v8081 = vadd.f32 %v7937, %v7433
      %v8082 = vadd.f32 %v7938, %v7434
      %v8083 = vadd.f32 %v7939, %v7435
      %v8084 = vadd.f32 %v7940, %v7436
      %v8085 = vadd.f32 %v7941, %v7491
      %v8086 = vadd.f32 %v7942, %v7492
      %v8087 = vadd.f32 %v7943, %v7493
      %v8088 = vadd.f32 %v7944, %v7494
      %v8089 = vadd.f32 %v7945, %v7495
      %v8090 = vadd.f32 %v7946, %v7496
      %v8091 = vadd.f32 %v7947, %v7497
      %v8092 = vadd.f32 %v7948, %v7498
      %v8093 = vadd.f32 %v7949, %v7499
      %v8094 = vadd.f32 %v7950, %v7500
      %v8095 = vadd.f32 %v7951, %v7501
      %v8096 = vadd.f32 %v7952, %v7502
      %v8097 = vadd.f32 %v7953, %v7503
      %v8098 = vadd.f32 %v7954, %v7504
      %v8099 = vadd.f32 %v7955, %v7505
      %v8100 = vadd.f32 %v7956, %v7506
      %v8101 = vadd.f32 %v7957, %v7507
      %v8102 = vadd.f32 %v7958, %v7508
      %v8103 = vadd.f32 %v7959, %v7563
      %v8104 = vadd.f32 %v7960, %v7564
      %v8105 = vadd.f32 %v7961, %v7565
      %v8106 = vadd.f32 %v7962, %v7566
      %v8107 = vadd.f32 %v7963, %v7567
      %v8108 = vadd.f32 %v7964, %v7568
      %v8109 = vadd.f32 %v7965, %v7569
      %v8110 = vadd.f32 %v7966, %v7570
      %v8111 = vadd.f32 %v7967, %v7571
      %v8112 = vadd.f32 %v7968, %v7572
      %v8113 = vadd.f32 %v7969, %v7573
      %v8114 = vadd.f32 %v7970, %v7574
      %v8115 = vadd.f32 %v7971, %v7575
      %v8116 = vadd.f32 %v7972, %v7576
      %v8117 = vadd.f32 %v7973, %v7577
      %v8118 = vadd.f32 %v7974, %v7578
      %v8119 = vadd.f32 %v7975, %v7579
      %v8120 = vadd.f32 %v7976, %v7580
      %v8121 = vadd.f32 %v7977, %v7635
      %v8122 = vadd.f32 %v7978, %v7636
      %v8123 = vadd.f32 %v7979, %v7637
      %v8124 = vadd.f32 %v7980, %v7638
      %v8125 = vadd.f32 %v7981, %v7639
      %v8126 = vadd.f32 %v7982, %v7640
      %v8127 = vadd.f32 %v7983, %v7641
      %v8128 = vadd.f32 %v7984, %v7642
      %v8129 = vadd.f32 %v7985, %v7643
      %v8130 = vadd.f32 %v7986, %v7644
      %v8131 = vadd.f32 %v7987, %v7645
      %v8132 = vadd.f32 %v7988, %v7646
      %v8133 = vadd.f32 %v7989, %v7647
      %v8134 = vadd.f32 %v7990, %v7648
      %v8135 = vadd.f32 %v7991, %v7649
      %v8136 = vadd.f32 %v7992, %v7650
      %v8137 = vadd.f32 %v7993, %v7651
      %v8138 = vadd.f32 %v7994, %v7652
      %v8139 = vadd.f32 %v7995, %v7707
      %v8140 = vadd.f32 %v7996, %v7708
      %v8141 = vadd.f32 %v7997, %v7709
      %v8142 = vadd.f32 %v7998, %v7710
      %v8143 = vadd.f32 %v7999, %v7711
      %v8144 = vadd.f32 %v8000, %v7712
      %v8145 = vadd.f32 %v8001, %v7713
      %v8146 = vadd.f32 %v8002, %v7714
      %v8147 = vadd.f32 %v8003, %v7715
      %v8148 = vadd.f32 %v8004, %v7716
      %v8149 = vadd.f32 %v8005, %v7717
      %v8150 = vadd.f32 %v8006, %v7718
      %v8151 = vadd.f32 %v8007, %v7719
      %v8152 = vadd.f32 %v8008, %v7720
      %v8153 = vadd.f32 %v8009, %v7721
      %v8154 = vadd.f32 %v8010, %v7722
      %v8155 = vadd.f32 %v8011, %v7723
      %v8156 = vadd.f32 %v8012, %v7724
      %v8157 = vmul.f32 %v8013, 0.25
      %v8158 = vmul.f32 %v8014, 0.25
      %v8159 = vmul.f32 %v8015, 0.25
      %v8160 = vmul.f32 %v8016, 0.25
      %v8161 = vmul.f32 %v8017, 0.25
      %v8162 = vmul.f32 %v8018, 0.25
      %v8163 = vmul.f32 %v8019, 0.25
      %v8164 = vmul.f32 %v8020, 0.25
      %v8165 = vmul.f32 %v8021, 0.25
      %v8166 = vmul.f32 %v8022, 0.25
      %v8167 = vmul.f32 %v8023, 0.25
      %v8168 = vmul.f32 %v8024, 0.25
      %v8169 = vmul.f32 %v8025, 0.25
      %v8170 = vmul.f32 %v8026, 0.25
      %v8171 = vmul.f32 %v8027, 0.25
      %v8172 = vmul.f32 %v8028, 0.25
      %v8173 = vmul.f32 %v8029, 0.25
      %v8174 = vmul.f32 %v8030, 0.25
      %v8175 = vmul.f32 %v8031, 0.25
      %v8176 = vmul.f32 %v8032, 0.25
      %v8177 = vmul.f32 %v8033, 0.25
      %v8178 = vmul.f32 %v8034, 0.25
      %v8179 = vmul.f32 %v8035, 0.25
      %v8180 = vmul.f32 %v8036, 0.25
      %v8181 = vmul.f32 %v8037, 0.25
      %v8182 = vmul.f32 %v8038, 0.25
      %v8183 = vmul.f32 %v8039, 0.25
      %v8184 = vmul.f32 %v8040, 0.25
      %v8185 = vmul.f32 %v8041, 0.25
      %v8186 = vmul.f32 %v8042, 0.25
      %v8187 = vmul.f32 %v8043, 0.25
      %v8188 = vmul.f32 %v8044, 0.25
      %v8189 = vmul.f32 %v8045, 0.25
      %v8190 = vmul.f32 %v8046, 0.25
      %v8191 = vmul.f32 %v8047, 0.25
      %v8192 = vmul.f32 %v8048, 0.25
      %v8193 = vmul.f32 %v8049, 0.25
      %v8194 = vmul.f32 %v8050, 0.25
      %v8195 = vmul.f32 %v8051, 0.25
      %v8196 = vmul.f32 %v8052, 0.25
      %v8197 = vmul.f32 %v8053, 0.25
      %v8198 = vmul.f32 %v8054, 0.25
      %v8199 = vmul.f32 %v8055, 0.25
      %v8200 = vmul.f32 %v8056, 0.25
      %v8201 = vmul.f32 %v8057, 0.25
      %v8202 = vmul.f32 %v8058, 0.25
      %v8203 = vmul.f32 %v8059, 0.25
      %v8204 = vmul.f32 %v8060, 0.25
      %v8205 = vmul.f32 %v8061, 0.25
      %v8206 = vmul.f32 %v8062, 0.25
      %v8207 = vmul.f32 %v8063, 0.25
      %v8208 = vmul.f32 %v8064, 0.25
      %v8209 = vmul.f32 %v8065, 0.25
      %v8210 = vmul.f32 %v8066, 0.25
      %v8211 = vmul.f32 %v8067, 0.25
      %v8212 = vmul.f32 %v8068, 0.25
      %v8213 = vmul.f32 %v8069, 0.25
      %v8214 = vmul.f32 %v8070, 0.25
      %v8215 = vmul.f32 %v8071, 0.25
      %v8216 = vmul.f32 %v8072, 0.25
      %v8217 = vmul.f32 %v8073, 0.25
      %v8218 = vmul.f32 %v8074, 0.25
      %v8219 = vmul.f32 %v8075, 0.25
      %v8220 = vmul.f32 %v8076, 0.25
      %v8221 = vmul.f32 %v8077, 0.25
      %v8222 = vmul.f32 %v8078, 0.25
      %v8223 = vmul.f32 %v8079, 0.25
      %v8224 = vmul.f32 %v8080, 0.25
      %v8225 = vmul.f32 %v8081, 0.25
      %v8226 = vmul.f32 %v8082, 0.25
      %v8227 = vmul.f32 %v8083, 0.25
      %v8228 = vmul.f32 %v8084, 0.25
      %v8229 = vmul.f32 %v8085, 0.25
      %v8230 = vmul.f32 %v8086, 0.25
      %v8231 = vmul.f32 %v8087, 0.25
      %v8232 = vmul.f32 %v8088, 0.25
      %v8233 = vmul.f32 %v8089, 0.25
      %v8234 = vmul.f32 %v8090, 0.25
      %v8235 = vmul.f32 %v8091, 0.25
      %v8236 = vmul.f32 %v8092, 0.25
      %v8237 = vmul.f32 %v8093, 0.25
      %v8238 = vmul.f32 %v8094, 0.25
      %v8239 = vmul.f32 %v8095, 0.25
      %v8240 = vmul.f32 %v8096, 0.25
      %v8241 = vmul.f32 %v8097, 0.25
      %v8242 = vmul.f32 %v8098, 0.25
      %v8243 = vmul.f32 %v8099, 0.25
      %v8244 = vmul.f32 %v8100, 0.25
      %v8245 = vmul.f32 %v8101, 0.25
      %v8246 = vmul.f32 %v8102, 0.25
      %v8247 = vmul.f32 %v8103, 0.25
      %v8248 = vmul.f32 %v8104, 0.25
      %v8249 = vmul.f32 %v8105, 0.25
      %v8250 = vmul.f32 %v8106, 0.25
      %v8251 = vmul.f32 %v8107, 0.25
      %v8252 = vmul.f32 %v8108, 0.25
      %v8253 = vmul.f32 %v8109, 0.25
      %v8254 = vmul.f32 %v8110, 0.25
      %v8255 = vmul.f32 %v8111, 0.25
      %v8256 = vmul.f32 %v8112, 0.25
      %v8257 = vmul.f32 %v8113, 0.25
      %v8258 = vmul.f32 %v8114, 0.25
      %v8259 = vmul.f32 %v8115, 0.25
      %v8260 = vmul.f32 %v8116, 0.25
      %v8261 = vmul.f32 %v8117, 0.25
      %v8262 = vmul.f32 %v8118, 0.25
      %v8263 = vmul.f32 %v8119, 0.25
      %v8264 = vmul.f32 %v8120, 0.25
      %v8265 = vmul.f32 %v8121, 0.25
      %v8266 = vmul.f32 %v8122, 0.25
      %v8267 = vmul.f32 %v8123, 0.25
      %v8268 = vmul.f32 %v8124, 0.25
      %v8269 = vmul.f32 %v8125, 0.25
      %v8270 = vmul.f32 %v8126, 0.25
      %v8271 = vmul.f32 %v8127, 0.25
      %v8272 = vmul.f32 %v8128, 0.25
      %v8273 = vmul.f32 %v8129, 0.25
      %v8274 = vmul.f32 %v8130, 0.25
      %v8275 = vmul.f32 %v8131, 0.25
      %v8276 = vmul.f32 %v8132, 0.25
      %v8277 = vmul.f32 %v8133, 0.25
      %v8278 = vmul.f32 %v8134, 0.25
      %v8279 = vmul.f32 %v8135, 0.25
      %v8280 = vmul.f32 %v8136, 0.25
      %v8281 = vmul.f32 %v8137, 0.25
      %v8282 = vmul.f32 %v8138, 0.25
      %v8283 = vmul.f32 %v8139, 0.25
      %v8284 = vmul.f32 %v8140, 0.25
      %v8285 = vmul.f32 %v8141, 0.25
      %v8286 = vmul.f32 %v8142, 0.25
      %v8287 = vmul.f32 %v8143, 0.25
      %v8288 = vmul.f32 %v8144, 0.25
      %v8289 = vmul.f32 %v8145, 0.25
      %v8290 = vmul.f32 %v8146, 0.25
      %v8291 = vmul.f32 %v8147, 0.25
      %v8292 = vmul.f32 %v8148, 0.25
      %v8293 = vmul.f32 %v8149, 0.25
      %v8294 = vmul.f32 %v8150, 0.25
      %v8295 = vmul.f32 %v8151, 0.25
      %v8296 = vmul.f32 %v8152, 0.25
      %v8297 = vmul.f32 %v8153, 0.25
      %v8298 = vmul.f32 %v8154, 0.25
      %v8299 = vmul.f32 %v8155, 0.25
      %v8300 = vmul.f32 %v8156, 0.25
      %v8301 = vpack.c.bf16 %v8158, %v8157
      %v8302 = vpack.c.bf16 %v8160, %v8159
      %v8303 = vpack.c.bf16 %v8162, %v8161
      %v8304 = vpack.c.bf16 %v8164, %v8163
      %v8305 = vpack.c.bf16 %v8166, %v8165
      %v8306 = vpack.c.bf16 %v8168, %v8167
      %v8307 = vpack.c.bf16 %v8170, %v8169
      %v8308 = vpack.c.bf16 %v8172, %v8171
      %v8309 = vpack.c.bf16 %v8174, %v8173
      %v8310 = vpack.c.bf16 %v8176, %v8175
      %v8311 = vpack.c.bf16 %v8178, %v8177
      %v8312 = vpack.c.bf16 %v8180, %v8179
      %v8313 = vpack.c.bf16 %v8182, %v8181
      %v8314 = vpack.c.bf16 %v8184, %v8183
      %v8315 = vpack.c.bf16 %v8186, %v8185
      %v8316 = vpack.c.bf16 %v8188, %v8187
      %v8317 = vpack.c.bf16 %v8190, %v8189
      %v8318 = vpack.c.bf16 %v8192, %v8191
      %v8319 = vpack.c.bf16 %v8194, %v8193
      %v8320 = vpack.c.bf16 %v8196, %v8195
      %v8321 = vpack.c.bf16 %v8198, %v8197
      %v8322 = vpack.c.bf16 %v8200, %v8199
      %v8323 = vpack.c.bf16 %v8202, %v8201
      %v8324 = vpack.c.bf16 %v8204, %v8203
      %v8325 = vpack.c.bf16 %v8206, %v8205
      %v8326 = vpack.c.bf16 %v8208, %v8207
      %v8327 = vpack.c.bf16 %v8210, %v8209
      %v8328 = vpack.c.bf16 %v8212, %v8211
      %v8329 = vpack.c.bf16 %v8214, %v8213
      %v8330 = vpack.c.bf16 %v8216, %v8215
      %v8331 = vpack.c.bf16 %v8218, %v8217
      %v8332 = vpack.c.bf16 %v8220, %v8219
      %v8333 = vpack.c.bf16 %v8222, %v8221
      %v8334 = vpack.c.bf16 %v8224, %v8223
      %v8335 = vpack.c.bf16 %v8226, %v8225
      %v8336 = vpack.c.bf16 %v8228, %v8227
      %v8337 = vpack.c.bf16 %v8230, %v8229
      %v8338 = vpack.c.bf16 %v8232, %v8231
      %v8339 = vpack.c.bf16 %v8234, %v8233
      %v8340 = vpack.c.bf16 %v8236, %v8235
      %v8341 = vpack.c.bf16 %v8238, %v8237
      %v8342 = vpack.c.bf16 %v8240, %v8239
      %v8343 = vpack.c.bf16 %v8242, %v8241
      %v8344 = vpack.c.bf16 %v8244, %v8243
      %v8345 = vpack.c.bf16 %v8246, %v8245
      %v8346 = vpack.c.bf16 %v8248, %v8247
      %v8347 = vpack.c.bf16 %v8250, %v8249
      %v8348 = vpack.c.bf16 %v8252, %v8251
      %v8349 = vpack.c.bf16 %v8254, %v8253
      %v8350 = vpack.c.bf16 %v8256, %v8255
      %v8351 = vpack.c.bf16 %v8258, %v8257
      %v8352 = vpack.c.bf16 %v8260, %v8259
      %v8353 = vpack.c.bf16 %v8262, %v8261
      %v8354 = vpack.c.bf16 %v8264, %v8263
      %v8355 = vpack.c.bf16 %v8266, %v8265
      %v8356 = vpack.c.bf16 %v8268, %v8267
      %v8357 = vpack.c.bf16 %v8270, %v8269
      %v8358 = vpack.c.bf16 %v8272, %v8271
      %v8359 = vpack.c.bf16 %v8274, %v8273
      %v8360 = vpack.c.bf16 %v8276, %v8275
      %v8361 = vpack.c.bf16 %v8278, %v8277
      %v8362 = vpack.c.bf16 %v8280, %v8279
      %v8363 = vpack.c.bf16 %v8282, %v8281
      %v8364 = vpack.c.bf16 %v8284, %v8283
      %v8365 = vpack.c.bf16 %v8286, %v8285
      %v8366 = vpack.c.bf16 %v8288, %v8287
      %v8367 = vpack.c.bf16 %v8290, %v8289
      %v8368 = vpack.c.bf16 %v8292, %v8291
      %v8369 = vpack.c.bf16 %v8294, %v8293
      %v8370 = vpack.c.bf16 %v8296, %v8295
      %v8371 = vpack.c.bf16 %v8298, %v8297
      %v8372 = vpack.c.bf16 %v8300, %v8299
      %v8445 = vunpack.c.l.b16 %v8301
      %v8446 = vunpack.c.h.b16 %v8301
      %v8447 = vunpack.c.l.b16 %v8302
      %v8448 = vunpack.c.h.b16 %v8302
      %v8449 = vunpack.c.l.b16 %v8303
      %v8450 = vunpack.c.h.b16 %v8303
      %v8451 = vunpack.c.l.b16 %v8304
      %v8452 = vunpack.c.h.b16 %v8304
      %v8453 = vunpack.c.l.b16 %v8305
      %v8454 = vunpack.c.h.b16 %v8305
      %v8455 = vunpack.c.l.b16 %v8306
      %v8456 = vunpack.c.h.b16 %v8306
      %v8457 = vunpack.c.l.b16 %v8307
      %v8458 = vunpack.c.h.b16 %v8307
      %v8459 = vunpack.c.l.b16 %v8308
      %v8460 = vunpack.c.h.b16 %v8308
      %v8461 = vunpack.c.l.b16 %v8309
      %v8462 = vunpack.c.h.b16 %v8309
      %v8463 = vunpack.c.l.b16 %v8310
      %v8464 = vunpack.c.h.b16 %v8310
      %v8465 = vunpack.c.l.b16 %v8311
      %v8466 = vunpack.c.h.b16 %v8311
      %v8467 = vunpack.c.l.b16 %v8312
      %v8468 = vunpack.c.h.b16 %v8312
      %v8469 = vunpack.c.l.b16 %v8313
      %v8470 = vunpack.c.h.b16 %v8313
      %v8471 = vunpack.c.l.b16 %v8314
      %v8472 = vunpack.c.h.b16 %v8314
      %v8473 = vunpack.c.l.b16 %v8315
      %v8474 = vunpack.c.h.b16 %v8315
      %v8475 = vunpack.c.l.b16 %v8316
      %v8476 = vunpack.c.h.b16 %v8316
      %v8477 = vunpack.c.l.b16 %v8317
      %v8478 = vunpack.c.h.b16 %v8317
      %v8479 = vunpack.c.l.b16 %v8318
      %v8480 = vunpack.c.h.b16 %v8318
      %v8481 = vunpack.c.l.b16 %v8319
      %v8482 = vunpack.c.h.b16 %v8319
      %v8483 = vunpack.c.l.b16 %v8320
      %v8484 = vunpack.c.h.b16 %v8320
      %v8485 = vunpack.c.l.b16 %v8321
      %v8486 = vunpack.c.h.b16 %v8321
      %v8487 = vunpack.c.l.b16 %v8322
      %v8488 = vunpack.c.h.b16 %v8322
      %v8489 = vunpack.c.l.b16 %v8323
      %v8490 = vunpack.c.h.b16 %v8323
      %v8491 = vunpack.c.l.b16 %v8324
      %v8492 = vunpack.c.h.b16 %v8324
      %v8493 = vunpack.c.l.b16 %v8325
      %v8494 = vunpack.c.h.b16 %v8325
      %v8495 = vunpack.c.l.b16 %v8326
      %v8496 = vunpack.c.h.b16 %v8326
      %v8497 = vunpack.c.l.b16 %v8327
      %v8498 = vunpack.c.h.b16 %v8327
      %v8499 = vunpack.c.l.b16 %v8328
      %v8500 = vunpack.c.h.b16 %v8328
      %v8501 = vunpack.c.l.b16 %v8329
      %v8502 = vunpack.c.h.b16 %v8329
      %v8503 = vunpack.c.l.b16 %v8330
      %v8504 = vunpack.c.h.b16 %v8330
      %v8505 = vunpack.c.l.b16 %v8331
      %v8506 = vunpack.c.h.b16 %v8331
      %v8507 = vunpack.c.l.b16 %v8332
      %v8508 = vunpack.c.h.b16 %v8332
      %v8509 = vunpack.c.l.b16 %v8333
      %v8510 = vunpack.c.h.b16 %v8333
      %v8511 = vunpack.c.l.b16 %v8334
      %v8512 = vunpack.c.h.b16 %v8334
      %v8513 = vunpack.c.l.b16 %v8335
      %v8514 = vunpack.c.h.b16 %v8335
      %v8515 = vunpack.c.l.b16 %v8336
      %v8516 = vunpack.c.h.b16 %v8336
      %v8517 = vunpack.c.l.b16 %v8337
      %v8518 = vunpack.c.h.b16 %v8337
      %v8519 = vunpack.c.l.b16 %v8338
      %v8520 = vunpack.c.h.b16 %v8338
      %v8521 = vunpack.c.l.b16 %v8339
      %v8522 = vunpack.c.h.b16 %v8339
      %v8523 = vunpack.c.l.b16 %v8340
      %v8524 = vunpack.c.h.b16 %v8340
      %v8525 = vunpack.c.l.b16 %v8341
      %v8526 = vunpack.c.h.b16 %v8341
      %v8527 = vunpack.c.l.b16 %v8342
      %v8528 = vunpack.c.h.b16 %v8342
      %v8529 = vunpack.c.l.b16 %v8343
      %v8530 = vunpack.c.h.b16 %v8343
      %v8531 = vunpack.c.l.b16 %v8344
      %v8532 = vunpack.c.h.b16 %v8344
      %v8533 = vunpack.c.l.b16 %v8345
      %v8534 = vunpack.c.h.b16 %v8345
      %v8535 = vunpack.c.l.b16 %v8346
      %v8536 = vunpack.c.h.b16 %v8346
      %v8537 = vunpack.c.l.b16 %v8347
      %v8538 = vunpack.c.h.b16 %v8347
      %v8539 = vunpack.c.l.b16 %v8348
      %v8540 = vunpack.c.h.b16 %v8348
      %v8541 = vunpack.c.l.b16 %v8349
      %v8542 = vunpack.c.h.b16 %v8349
      %v8543 = vunpack.c.l.b16 %v8350
      %v8544 = vunpack.c.h.b16 %v8350
      %v8545 = vunpack.c.l.b16 %v8351
      %v8546 = vunpack.c.h.b16 %v8351
      %v8547 = vunpack.c.l.b16 %v8352
      %v8548 = vunpack.c.h.b16 %v8352
      %v8549 = vunpack.c.l.b16 %v8353
      %v8550 = vunpack.c.h.b16 %v8353
      %v8551 = vunpack.c.l.b16 %v8354
      %v8552 = vunpack.c.h.b16 %v8354
      %v8553 = vunpack.c.l.b16 %v8355
      %v8554 = vunpack.c.h.b16 %v8355
      %v8555 = vunpack.c.l.b16 %v8356
      %v8556 = vunpack.c.h.b16 %v8356
      %v8557 = vunpack.c.l.b16 %v8357
      %v8558 = vunpack.c.h.b16 %v8357
      %v8559 = vunpack.c.l.b16 %v8358
      %v8560 = vunpack.c.h.b16 %v8358
      %v8561 = vunpack.c.l.b16 %v8359
      %v8562 = vunpack.c.h.b16 %v8359
      %v8563 = vunpack.c.l.b16 %v8360
      %v8564 = vunpack.c.h.b16 %v8360
      %v8565 = vunpack.c.l.b16 %v8361
      %v8566 = vunpack.c.h.b16 %v8361
      %v8567 = vunpack.c.l.b16 %v8362
      %v8568 = vunpack.c.h.b16 %v8362
      %v8569 = vunpack.c.l.b16 %v8363
      %v8570 = vunpack.c.h.b16 %v8363
      %v8571 = vunpack.c.l.b16 %v8364
      %v8572 = vunpack.c.h.b16 %v8364
      %v8573 = vunpack.c.l.b16 %v8365
      %v8574 = vunpack.c.h.b16 %v8365
      %v8575 = vunpack.c.l.b16 %v8366
      %v8576 = vunpack.c.h.b16 %v8366
      %v8577 = vunpack.c.l.b16 %v8367
      %v8578 = vunpack.c.h.b16 %v8367
      %v8579 = vunpack.c.l.b16 %v8368
      %v8580 = vunpack.c.h.b16 %v8368
      %v8581 = vunpack.c.l.b16 %v8369
      %v8582 = vunpack.c.h.b16 %v8369
      %v8583 = vunpack.c.l.b16 %v8370
      %v8584 = vunpack.c.h.b16 %v8370
      %v8585 = vunpack.c.l.b16 %v8371
      %v8586 = vunpack.c.h.b16 %v8371
      %v8587 = vunpack.c.l.b16 %v8372
      %v8588 = vunpack.c.h.b16 %v8372
      %v8589 = vpack.c.b16 %v8445, %v8445
      %v8590 = vpack.c.b16 %v8446, %v8446
      %v8591 = vpack.c.b16 %v8447, %v8447
      %v8592 = vpack.c.b16 %v8448, %v8448
      %v8593 = vpack.c.b16 %v8449, %v8449
      %v8594 = vpack.c.b16 %v8450, %v8450
      %v8595 = vpack.c.b16 %v8451, %v8451
      %v8596 = vpack.c.b16 %v8452, %v8452
      %v8597 = vpack.c.b16 %v8453, %v8453
      %v8598 = vpack.c.b16 %v8454, %v8454
      %v8599 = vpack.c.b16 %v8455, %v8455
      %v8600 = vpack.c.b16 %v8456, %v8456
      %v8601 = vpack.c.b16 %v8457, %v8457
      %v8602 = vpack.c.b16 %v8458, %v8458
      %v8603 = vpack.c.b16 %v8459, %v8459
      %v8604 = vpack.c.b16 %v8460, %v8460
      %v8605 = vpack.c.b16 %v8461, %v8461
      %v8606 = vpack.c.b16 %v8462, %v8462
      %v8607 = vpack.c.b16 %v8463, %v8463
      %v8608 = vpack.c.b16 %v8464, %v8464
      %v8609 = vpack.c.b16 %v8465, %v8465
      %v8610 = vpack.c.b16 %v8466, %v8466
      %v8611 = vpack.c.b16 %v8467, %v8467
      %v8612 = vpack.c.b16 %v8468, %v8468
      %v8613 = vpack.c.b16 %v8469, %v8469
      %v8614 = vpack.c.b16 %v8470, %v8470
      %v8615 = vpack.c.b16 %v8471, %v8471
      %v8616 = vpack.c.b16 %v8472, %v8472
      %v8617 = vpack.c.b16 %v8473, %v8473
      %v8618 = vpack.c.b16 %v8474, %v8474
      %v8619 = vpack.c.b16 %v8475, %v8475
      %v8620 = vpack.c.b16 %v8476, %v8476
      %v8621 = vpack.c.b16 %v8477, %v8477
      %v8622 = vpack.c.b16 %v8478, %v8478
      %v8623 = vpack.c.b16 %v8479, %v8479
      %v8624 = vpack.c.b16 %v8480, %v8480
      %v8625 = vpack.c.b16 %v8481, %v8481
      %v8626 = vpack.c.b16 %v8482, %v8482
      %v8627 = vpack.c.b16 %v8483, %v8483
      %v8628 = vpack.c.b16 %v8484, %v8484
      %v8629 = vpack.c.b16 %v8485, %v8485
      %v8630 = vpack.c.b16 %v8486, %v8486
      %v8631 = vpack.c.b16 %v8487, %v8487
      %v8632 = vpack.c.b16 %v8488, %v8488
      %v8633 = vpack.c.b16 %v8489, %v8489
      %v8634 = vpack.c.b16 %v8490, %v8490
      %v8635 = vpack.c.b16 %v8491, %v8491
      %v8636 = vpack.c.b16 %v8492, %v8492
      %v8637 = vpack.c.b16 %v8493, %v8493
      %v8638 = vpack.c.b16 %v8494, %v8494
      %v8639 = vpack.c.b16 %v8495, %v8495
      %v8640 = vpack.c.b16 %v8496, %v8496
      %v8641 = vpack.c.b16 %v8497, %v8497
      %v8642 = vpack.c.b16 %v8498, %v8498
      %v8643 = vpack.c.b16 %v8499, %v8499
      %v8644 = vpack.c.b16 %v8500, %v8500
      %v8645 = vpack.c.b16 %v8501, %v8501
      %v8646 = vpack.c.b16 %v8502, %v8502
      %v8647 = vpack.c.b16 %v8503, %v8503
      %v8648 = vpack.c.b16 %v8504, %v8504
      %v8649 = vpack.c.b16 %v8505, %v8505
      %v8650 = vpack.c.b16 %v8506, %v8506
      %v8651 = vpack.c.b16 %v8507, %v8507
      %v8652 = vpack.c.b16 %v8508, %v8508
      %v8653 = vpack.c.b16 %v8509, %v8509
      %v8654 = vpack.c.b16 %v8510, %v8510
      %v8655 = vpack.c.b16 %v8511, %v8511
      %v8656 = vpack.c.b16 %v8512, %v8512
      %v8657 = vpack.c.b16 %v8513, %v8513
      %v8658 = vpack.c.b16 %v8514, %v8514
      %v8659 = vpack.c.b16 %v8515, %v8515
      %v8660 = vpack.c.b16 %v8516, %v8516
      %v8661 = vpack.c.b16 %v8517, %v8517
      %v8662 = vpack.c.b16 %v8518, %v8518
      %v8663 = vpack.c.b16 %v8519, %v8519
      %v8664 = vpack.c.b16 %v8520, %v8520
      %v8665 = vpack.c.b16 %v8521, %v8521
      %v8666 = vpack.c.b16 %v8522, %v8522
      %v8667 = vpack.c.b16 %v8523, %v8523
      %v8668 = vpack.c.b16 %v8524, %v8524
      %v8669 = vpack.c.b16 %v8525, %v8525
      %v8670 = vpack.c.b16 %v8526, %v8526
      %v8671 = vpack.c.b16 %v8527, %v8527
      %v8672 = vpack.c.b16 %v8528, %v8528
      %v8673 = vpack.c.b16 %v8529, %v8529
      %v8674 = vpack.c.b16 %v8530, %v8530
      %v8675 = vpack.c.b16 %v8531, %v8531
      %v8676 = vpack.c.b16 %v8532, %v8532
      %v8677 = vpack.c.b16 %v8533, %v8533
      %v8678 = vpack.c.b16 %v8534, %v8534
      %v8679 = vpack.c.b16 %v8535, %v8535
      %v8680 = vpack.c.b16 %v8536, %v8536
      %v8681 = vpack.c.b16 %v8537, %v8537
      %v8682 = vpack.c.b16 %v8538, %v8538
      %v8683 = vpack.c.b16 %v8539, %v8539
      %v8684 = vpack.c.b16 %v8540, %v8540
      %v8685 = vpack.c.b16 %v8541, %v8541
      %v8686 = vpack.c.b16 %v8542, %v8542
      %v8687 = vpack.c.b16 %v8543, %v8543
      %v8688 = vpack.c.b16 %v8544, %v8544
      %v8689 = vpack.c.b16 %v8545, %v8545
      %v8690 = vpack.c.b16 %v8546, %v8546
      %v8691 = vpack.c.b16 %v8547, %v8547
      %v8692 = vpack.c.b16 %v8548, %v8548
      %v8693 = vpack.c.b16 %v8549, %v8549
      %v8694 = vpack.c.b16 %v8550, %v8550
      %v8695 = vpack.c.b16 %v8551, %v8551
      %v8696 = vpack.c.b16 %v8552, %v8552
      %v8697 = vpack.c.b16 %v8553, %v8553
      %v8698 = vpack.c.b16 %v8554, %v8554
      %v8699 = vpack.c.b16 %v8555, %v8555
      %v8700 = vpack.c.b16 %v8556, %v8556
      %v8701 = vpack.c.b16 %v8557, %v8557
      %v8702 = vpack.c.b16 %v8558, %v8558
      %v8703 = vpack.c.b16 %v8559, %v8559
      %v8704 = vpack.c.b16 %v8560, %v8560
      %v8705 = vpack.c.b16 %v8561, %v8561
      %v8706 = vpack.c.b16 %v8562, %v8562
      %v8707 = vpack.c.b16 %v8563, %v8563
      %v8708 = vpack.c.b16 %v8564, %v8564
      %v8709 = vpack.c.b16 %v8565, %v8565
      %v8710 = vpack.c.b16 %v8566, %v8566
      %v8711 = vpack.c.b16 %v8567, %v8567
      %v8712 = vpack.c.b16 %v8568, %v8568
      %v8713 = vpack.c.b16 %v8569, %v8569
      %v8714 = vpack.c.b16 %v8570, %v8570
      %v8715 = vpack.c.b16 %v8571, %v8571
      %v8716 = vpack.c.b16 %v8572, %v8572
      %v8717 = vpack.c.b16 %v8573, %v8573
      %v8718 = vpack.c.b16 %v8574, %v8574
      %v8719 = vpack.c.b16 %v8575, %v8575
      %v8720 = vpack.c.b16 %v8576, %v8576
      %v8721 = vpack.c.b16 %v8577, %v8577
      %v8722 = vpack.c.b16 %v8578, %v8578
      %v8723 = vpack.c.b16 %v8579, %v8579
      %v8724 = vpack.c.b16 %v8580, %v8580
      %v8725 = vpack.c.b16 %v8581, %v8581
      %v8726 = vpack.c.b16 %v8582, %v8582
      %v8727 = vpack.c.b16 %v8583, %v8583
      %v8728 = vpack.c.b16 %v8584, %v8584
      %v8729 = vpack.c.b16 %v8585, %v8585
      %v8730 = vpack.c.b16 %v8586, %v8586
      %v8731 = vpack.c.b16 %v8587, %v8587
      %v8732 = vpack.c.b16 %v8588, %v8588
      %8877 = vst [vmem:[%s177] sm:$0xf] %v8589
      %8878 = vst [vmem:[%s177 + $0x4] sm:$0xf] %v8590
      %8879 = vst [vmem:[%s177 + $0x8] sm:$0xf] %v8591
      %8880 = vst [vmem:[%s177 + $0xc] sm:$0xf] %v8592
      %8881 = vst [vmem:[%s177 + $0x10] sm:$0xf] %v8593
      %8882 = vst [vmem:[%s177 + $0x14] sm:$0xf] %v8594
      %8883 = vst [vmem:[%s177 + $0x18] sm:$0xf] %v8595
      %8884 = vst [vmem:[%s177 + $0x1c] sm:$0xf] %v8596
      %8885 = vst [vmem:[%s177 + $0x20] sm:$0xf] %v8597
      %8886 = vst [vmem:[%s177 + $0x24] sm:$0xf] %v8598
      %8887 = vst [vmem:[%s177 + $0x28] sm:$0xf] %v8599
      %8888 = vst [vmem:[%s177 + $0x2c] sm:$0xf] %v8600
      %8889 = vst [vmem:[%s177 + $0x30] sm:$0xf] %v8601
      %8890 = vst [vmem:[%s177 + $0x34] sm:$0xf] %v8602
      %8891 = vst [vmem:[%s177 + $0x38] sm:$0xf] %v8603
      %8892 = vst [vmem:[%s177 + $0x3c] sm:$0xf] %v8604
      %8893 = vst [vmem:[%s177 + $0x40] sm:$0xf] %v8605
      %8894 = vst [vmem:[%s177 + $0x44] sm:$0xf] %v8606
      %8895 = vst [vmem:[%s177 + $0x48] sm:$0xf] %v8607
      %8896 = vst [vmem:[%s177 + $0x4c] sm:$0xf] %v8608
      %8897 = vst [vmem:[%s177 + $0x50] sm:$0xf] %v8609
      %8898 = vst [vmem:[%s177 + $0x54] sm:$0xf] %v8610
      %8899 = vst [vmem:[%s177 + $0x58] sm:$0xf] %v8611
      %8900 = vst [vmem:[%s177 + $0x5c] sm:$0xf] %v8612
      %8901 = vst [vmem:[%s177 + $0x60] sm:$0xf] %v8613
      %8902 = vst [vmem:[%s177 + $0x64] sm:$0xf] %v8614
      %8903 = vst [vmem:[%s177 + $0x68] sm:$0xf] %v8615
      %8904 = vst [vmem:[%s177 + $0x6c] sm:$0xf] %v8616
      %8905 = vst [vmem:[%s177 + $0x70] sm:$0xf] %v8617
      %8906 = vst [vmem:[%s177 + $0x74] sm:$0xf] %v8618
      %8907 = vst [vmem:[%s177 + $0x78] sm:$0xf] %v8619
      %8908 = vst [vmem:[%s177 + $0x7c] sm:$0xf] %v8620
      %8909 = vst [vmem:[%s177 + $0x80] sm:$0xf] %v8621
      %8910 = vst [vmem:[%s177 + $0x84] sm:$0xf] %v8622
      %8911 = vst [vmem:[%s177 + $0x88] sm:$0xf] %v8623
      %8912 = vst [vmem:[%s177 + $0x8c] sm:$0xf] %v8624
      %8913 = vst [vmem:[%s177 + $0x90] sm:$0xf] %v8625
      %8914 = vst [vmem:[%s177 + $0x94] sm:$0xf] %v8626
      %8915 = vst [vmem:[%s177 + $0x98] sm:$0xf] %v8627
      %8916 = vst [vmem:[%s177 + $0x9c] sm:$0xf] %v8628
      %8917 = vst [vmem:[%s177 + $0xa0] sm:$0xf] %v8629
      %8918 = vst [vmem:[%s177 + $0xa4] sm:$0xf] %v8630
      %8919 = vst [vmem:[%s177 + $0xa8] sm:$0xf] %v8631
      %8920 = vst [vmem:[%s177 + $0xac] sm:$0xf] %v8632
      %8921 = vst [vmem:[%s177 + $0xb0] sm:$0xf] %v8633
      %8922 = vst [vmem:[%s177 + $0xb4] sm:$0xf] %v8634
      %8923 = vst [vmem:[%s177 + $0xb8] sm:$0xf] %v8635
      %8924 = vst [vmem:[%s177 + $0xbc] sm:$0xf] %v8636
      %8925 = vst [vmem:[%s177 + $0xc0] sm:$0xf] %v8637
      %8926 = vst [vmem:[%s177 + $0xc4] sm:$0xf] %v8638
      %8927 = vst [vmem:[%s177 + $0xc8] sm:$0xf] %v8639
      %8928 = vst [vmem:[%s177 + $0xcc] sm:$0xf] %v8640
      %8929 = vst [vmem:[%s177 + $0xd0] sm:$0xf] %v8641
      %8930 = vst [vmem:[%s177 + $0xd4] sm:$0xf] %v8642
      %8931 = vst [vmem:[%s177 + $0xd8] sm:$0xf] %v8643
      %8932 = vst [vmem:[%s177 + $0xdc] sm:$0xf] %v8644
      %8933 = vst [vmem:[%s177 + $0xe0] sm:$0xf] %v8645
      %8934 = vst [vmem:[%s177 + $0xe4] sm:$0xf] %v8646
      %8935 = vst [vmem:[%s177 + $0xe8] sm:$0xf] %v8647
      %8936 = vst [vmem:[%s177 + $0xec] sm:$0xf] %v8648
      %8937 = vst [vmem:[%s177 + $0xf0] sm:$0xf] %v8649
      %8938 = vst [vmem:[%s177 + $0xf4] sm:$0xf] %v8650
      %8939 = vst [vmem:[%s177 + $0xf8] sm:$0xf] %v8651
      %8940 = vst [vmem:[%s177 + $0xfc] sm:$0xf] %v8652
      %8941 = vst [vmem:[%s177 + $0x100] sm:$0xf] %v8653
      %8942 = vst [vmem:[%s177 + $0x104] sm:$0xf] %v8654
      %8943 = vst [vmem:[%s177 + $0x108] sm:$0xf] %v8655
      %8944 = vst [vmem:[%s177 + $0x10c] sm:$0xf] %v8656
      %8945 = vst [vmem:[%s177 + $0x110] sm:$0xf] %v8657
      %8946 = vst [vmem:[%s177 + $0x114] sm:$0xf] %v8658
      %8947 = vst [vmem:[%s177 + $0x118] sm:$0xf] %v8659
      %8948 = vst [vmem:[%s177 + $0x11c] sm:$0xf] %v8660
      %8949 = vst [vmem:[%s177 + $0x120] sm:$0xf] %v8661
      %8950 = vst [vmem:[%s177 + $0x124] sm:$0xf] %v8662
      %8951 = vst [vmem:[%s177 + $0x128] sm:$0xf] %v8663
      %8952 = vst [vmem:[%s177 + $0x12c] sm:$0xf] %v8664
      %8953 = vst [vmem:[%s177 + $0x130] sm:$0xf] %v8665
      %8954 = vst [vmem:[%s177 + $0x134] sm:$0xf] %v8666
      %8955 = vst [vmem:[%s177 + $0x138] sm:$0xf] %v8667
      %8956 = vst [vmem:[%s177 + $0x13c] sm:$0xf] %v8668
      %8957 = vst [vmem:[%s177 + $0x140] sm:$0xf] %v8669
      %8958 = vst [vmem:[%s177 + $0x144] sm:$0xf] %v8670
      %8959 = vst [vmem:[%s177 + $0x148] sm:$0xf] %v8671
      %8960 = vst [vmem:[%s177 + $0x14c] sm:$0xf] %v8672
      %8961 = vst [vmem:[%s177 + $0x150] sm:$0xf] %v8673
      %8962 = vst [vmem:[%s177 + $0x154] sm:$0xf] %v8674
      %8963 = vst [vmem:[%s177 + $0x158] sm:$0xf] %v8675
      %8964 = vst [vmem:[%s177 + $0x15c] sm:$0xf] %v8676
      %8965 = vst [vmem:[%s177 + $0x160] sm:$0xf] %v8677
      %8966 = vst [vmem:[%s177 + $0x164] sm:$0xf] %v8678
      %8967 = vst [vmem:[%s177 + $0x168] sm:$0xf] %v8679
      %8968 = vst [vmem:[%s177 + $0x16c] sm:$0xf] %v8680
      %8969 = vst [vmem:[%s177 + $0x170] sm:$0xf] %v8681
      %8970 = vst [vmem:[%s177 + $0x174] sm:$0xf] %v8682
      %8971 = vst [vmem:[%s177 + $0x178] sm:$0xf] %v8683
      %8972 = vst [vmem:[%s177 + $0x17c] sm:$0xf] %v8684
      %8973 = vst [vmem:[%s177 + $0x180] sm:$0xf] %v8685
      %8974 = vst [vmem:[%s177 + $0x184] sm:$0xf] %v8686
      %8975 = vst [vmem:[%s177 + $0x188] sm:$0xf] %v8687
      %8976 = vst [vmem:[%s177 + $0x18c] sm:$0xf] %v8688
      %8977 = vst [vmem:[%s177 + $0x190] sm:$0xf] %v8689
      %8978 = vst [vmem:[%s177 + $0x194] sm:$0xf] %v8690
      %8979 = vst [vmem:[%s177 + $0x198] sm:$0xf] %v8691
      %8980 = vst [vmem:[%s177 + $0x19c] sm:$0xf] %v8692
      %8981 = vst [vmem:[%s177 + $0x1a0] sm:$0xf] %v8693
      %8982 = vst [vmem:[%s177 + $0x1a4] sm:$0xf] %v8694
      %8983 = vst [vmem:[%s177 + $0x1a8] sm:$0xf] %v8695
      %8984 = vst [vmem:[%s177 + $0x1ac] sm:$0xf] %v8696
      %8985 = vst [vmem:[%s177 + $0x1b0] sm:$0xf] %v8697
      %8986 = vst [vmem:[%s177 + $0x1b4] sm:$0xf] %v8698
      %8987 = vst [vmem:[%s177 + $0x1b8] sm:$0xf] %v8699
      %8988 = vst [vmem:[%s177 + $0x1bc] sm:$0xf] %v8700
      %8989 = vst [vmem:[%s177 + $0x1c0] sm:$0xf] %v8701
      %8990 = vst [vmem:[%s177 + $0x1c4] sm:$0xf] %v8702
      %8991 = vst [vmem:[%s177 + $0x1c8] sm:$0xf] %v8703
      %8992 = vst [vmem:[%s177 + $0x1cc] sm:$0xf] %v8704
      %8993 = vst [vmem:[%s177 + $0x1d0] sm:$0xf] %v8705
      %8994 = vst [vmem:[%s177 + $0x1d4] sm:$0xf] %v8706
      %8995 = vst [vmem:[%s177 + $0x1d8] sm:$0xf] %v8707
      %8996 = vst [vmem:[%s177 + $0x1dc] sm:$0xf] %v8708
      %8997 = vst [vmem:[%s177 + $0x1e0] sm:$0xf] %v8709
      %8998 = vst [vmem:[%s177 + $0x1e4] sm:$0xf] %v8710
      %8999 = vst [vmem:[%s177 + $0x1e8] sm:$0xf] %v8711
      %9000 = vst [vmem:[%s177 + $0x1ec] sm:$0xf] %v8712
      %9001 = vst [vmem:[%s177 + $0x1f0] sm:$0xf] %v8713
      %9002 = vst [vmem:[%s177 + $0x1f4] sm:$0xf] %v8714
      %9003 = vst [vmem:[%s177 + $0x1f8] sm:$0xf] %v8715
      %9004 = vst [vmem:[%s177 + $0x1fc] sm:$0xf] %v8716
      %9005 = vst [vmem:[%s177 + $0x200] sm:$0xf] %v8717
      %9006 = vst [vmem:[%s177 + $0x204] sm:$0xf] %v8718
      %9007 = vst [vmem:[%s177 + $0x208] sm:$0xf] %v8719
      %9008 = vst [vmem:[%s177 + $0x20c] sm:$0xf] %v8720
      %9009 = vst [vmem:[%s177 + $0x210] sm:$0xf] %v8721
      %9010 = vst [vmem:[%s177 + $0x214] sm:$0xf] %v8722
      %9011 = vst [vmem:[%s177 + $0x218] sm:$0xf] %v8723
      %9012 = vst [vmem:[%s177 + $0x21c] sm:$0xf] %v8724
      %9013 = vst [vmem:[%s177 + $0x220] sm:$0xf] %v8725
      %9014 = vst [vmem:[%s177 + $0x224] sm:$0xf] %v8726
      %9015 = vst [vmem:[%s177 + $0x228] sm:$0xf] %v8727
      %9016 = vst [vmem:[%s177 + $0x22c] sm:$0xf] %v8728
      %9017 = vst [vmem:[%s177 + $0x230] sm:$0xf] %v8729
      %9018 = vst [vmem:[%s177 + $0x234] sm:$0xf] %v8730
      %9019 = vst [vmem:[%s177 + $0x238] sm:$0xf] %v8731
      %9020 = vst [vmem:[%s177 + $0x23c] sm:$0xf] %v8732
      %s9021 = smul.u32 8, %s14
      %p9022 = scmp.lt.s32.totalorder %s9021, 15
      %s9023 = scalar_select %p9022, %s9021, 15
      %s9024 = smul.addr %s9023, 18
      %s9025 = smul.addr %s9024, 4
      %s9026 = scalar_lea.vmem %s3, %s9025
      // Predicated region
      $region33: #{lenet_forward.2} parent=31 // pred_check
        %p9027 = pneg %p100
      $region34: #{lenet_forward.2} parent=31 // pred_check_branch
        %9029 = sbr.rel (%p9027) target = $region36
      $region35: #{lenet_forward.2} parent=31 // pred_region
        %s9030 = smul.u32 8, %s14
      $region36: #{lenet_forward.2} parent=31 // pred_fallthru
        _
    $region32: #{lenet_forward.2} parent=5 // pred_fallthru
      _
    %p9031 = scmp.le.s32.totalorder 2, %s9
    // Predicated region
    $region37: #{lenet_forward.2} parent=5 // pred_check
      %p9032 = pneg %p9031
    $region38: #{lenet_forward.2} parent=5 // pred_check_branch
      %9034 = sbr.rel (%p9032) target = $region40
    $region39: #{lenet_forward.2} parent=5 // pred_region
      %s9035 = ssub.s32 %s9, 2
      // Predicated region
      $region41: #{lenet_forward.2} parent=39 // pred_check
        %p9036 = pneg %p106
      $region42: #{lenet_forward.2} parent=39 // pred_check_branch
        %9038 = sbr.rel (%p9036) target = $region44
      $region43: #{lenet_forward.2} parent=39 // pred_region
        %s9039 = smul.u32 8, %s15
        %p9040 = scmp.lt.s32.totalorder %s9039, 15
        %s9041 = scalar_select %p9040, %s9039, 15
        %s9042 = smul.addr %s9041, 18
        %s9043 = smul.addr %s9042, 4
        %s9044 = scalar_lea.vmem %s3, %s9043
      $region44: #{lenet_forward.2} parent=39 // pred_fallthru
        _
    $region40: #{lenet_forward.2} parent=5 // pred_fallthru
      _
  $region6: #{lenet_forward.2} parent=0 // loop_footer
    %s13 = sadd.s32 1, %s9
  $region7: #{lenet_forward.2} parent=0 // loop_footer_branch
    %8 = sbr.rel target = $region3
  $region8: #{lenet_forward.2} parent=0 // loop_exit
    _

// kernel: lenet_forward.3
$region0: #{lenet_forward.3}
  #allocation0 [shape = 'u32[]', space=smem, size = 0x4, offset = 0x4, fixed_abs, tag = 'smem constant byte address 0x4 - core index']
  #allocation1 [shape = 'u32[144,128]{1,0:T(1,128)}', space=vmem, size = 0x12000, scoped, tag = 'internal scratch']
  %s0 = inlined_call_operand.vmem [shape: bf16[64,16,160], index: 0, kind: input, shape index: {}]
  %s1 = inlined_call_operand.vmem [shape: bf16[160,128], index: 1, kind: input, shape index: {}]
  %s2 = inlined_call_operand.vmem [shape: f32[1,128], index: 2, kind: input, shape index: {}]
  %s3 = inlined_call_operand.vmem [shape: bf16[16,128,128], index: 3, kind: input, shape index: {}]
  %s4 = inlined_call_operand.vmem [shape: f32[1,128], index: 4, kind: input, shape index: {}]
  %s5 = inlined_call_operand.vmem [shape: bf16[128,128], index: 5, kind: input, shape index: {}]
  %s6 = inlined_call_operand.vmem [shape: f32[1,128], index: 6, kind: input, shape index: {}]
  %s7 = inlined_call_operand.vmem [shape: bf16[128,128], index: 7, kind: input, shape index: {}]
  %s8 = inlined_call_operand.vmem [shape: f32[1,128], index: 8, kind: input, shape index: {}]
  %s9 = inlined_call_operand.vmem [shape: f32[16,128], index: 9, kind: output, shape index: {}]
  %s10 = sld [smem:[#allocation0]]
  $region46: #{lenet_forward.3} parent=0
    _
  %s12 = ssub.s32 1, %s10
  %s13 = scalar_select 0, %s12, %s10
  // Predicated region
  $region2: #{lenet_forward.3} parent=0 // pred_check
    _
  $region3: #{lenet_forward.3} parent=0 // pred_check_branch
    %15 = sbr.rel (0) target = $region5
  $region4: #{lenet_forward.3} parent=0 // pred_region
    _
  $region5: #{lenet_forward.3} parent=0 // pred_fallthru
    _
  // Predicated region
  $region6: #{lenet_forward.3} parent=0 // pred_check
    _
  $region7: #{lenet_forward.3} parent=0 // pred_check_branch
    %17 = sbr.rel (0) target = $region9
  $region8: #{lenet_forward.3} parent=0 // pred_region
    _
  $region9: #{lenet_forward.3} parent=0 // pred_fallthru
    _
  // Predicated region
  $region10: #{lenet_forward.3} parent=0 // pred_check
    _
  $region11: #{lenet_forward.3} parent=0 // pred_check_branch
    %19 = sbr.rel (0) target = $region13
  $region12: #{lenet_forward.3} parent=0 // pred_region
    _
  $region13: #{lenet_forward.3} parent=0 // pred_fallthru
    _
  // Predicated region
  $region14: #{lenet_forward.3} parent=0 // pred_check
    _
  $region15: #{lenet_forward.3} parent=0 // pred_check_branch
    %21 = sbr.rel (0) target = $region17
  $region16: #{lenet_forward.3} parent=0 // pred_region
    _
  $region17: #{lenet_forward.3} parent=0 // pred_fallthru
    _
  // Predicated region
  $region18: #{lenet_forward.3} parent=0 // pred_check
    _
  $region19: #{lenet_forward.3} parent=0 // pred_check_branch
    %23 = sbr.rel (0) target = $region21
  $region20: #{lenet_forward.3} parent=0 // pred_region
    _
  $region21: #{lenet_forward.3} parent=0 // pred_fallthru
    _
  // Predicated region
  $region22: #{lenet_forward.3} parent=0 // pred_check
    _
  $region23: #{lenet_forward.3} parent=0 // pred_check_branch
    %25 = sbr.rel (0) target = $region25
  $region24: #{lenet_forward.3} parent=0 // pred_region
    _
  $region25: #{lenet_forward.3} parent=0 // pred_fallthru
    _
  // Predicated region
  $region26: #{lenet_forward.3} parent=0 // pred_check
    _
  $region27: #{lenet_forward.3} parent=0 // pred_check_branch
    %27 = sbr.rel (0) target = $region29
  $region28: #{lenet_forward.3} parent=0 // pred_region
    _
  $region29: #{lenet_forward.3} parent=0 // pred_fallthru
    _
  // Predicated region
  $region30: #{lenet_forward.3} parent=0 // pred_check
    _
  $region31: #{lenet_forward.3} parent=0 // pred_check_branch
    %29 = sbr.rel (0) target = $region33
  $region32: #{lenet_forward.3} parent=0 // pred_region
    _
  $region33: #{lenet_forward.3} parent=0 // pred_fallthru
    _
  // Predicated region
  $region34: #{lenet_forward.3} parent=0 // pred_check
    _
  $region35: #{lenet_forward.3} parent=0 // pred_check_branch
    %31 = sbr.rel (0) target = $region37
  $region36: #{lenet_forward.3} parent=0 // pred_region
    _
  $region37: #{lenet_forward.3} parent=0 // pred_fallthru
    _
  %v33 = vld [vmem:[%s0] sm:$0xff]
  %v34 = vld [vmem:[%s0 + $0x8] sm:$0xff]
  %v35 = vld [vmem:[%s0 + $0x10] sm:$0xff]
  %v36 = vld [vmem:[%s0 + $0x18] sm:$0xff]
  %v37 = vld [vmem:[%s0 + $0x20] sm:$0xff]
  %v38 = vld [vmem:[%s0 + $0x28] sm:$0xff]
  %v39 = vld [vmem:[%s0 + $0x30] sm:$0xff]
  %v40 = vld [vmem:[%s0 + $0x38] sm:$0xff]
  %v41 = vld [vmem:[%s0 + $0x40] sm:$0xff]
  %v42 = vld [vmem:[%s0 + $0x48] sm:$0xff]
  %v43 = vld [vmem:[%s0 + $0x50] sm:$0xff]
  %v44 = vld [vmem:[%s0 + $0x58] sm:$0xff]
  %v45 = vld [vmem:[%s0 + $0x60] sm:$0xff]
  %v46 = vld [vmem:[%s0 + $0x68] sm:$0xff]
  %v47 = vld [vmem:[%s0 + $0x70] sm:$0xff]
  %v48 = vld [vmem:[%s0 + $0x78] sm:$0xff]
  %v49 = vld [vmem:[%s0 + $0x80] sm:$0xff]
  %v50 = vld [vmem:[%s0 + $0x88] sm:$0xff]
  %v51 = vld [vmem:[%s0 + $0x90] sm:$0xff]
  %v52 = vld [vmem:[%s0 + $0x98] sm:$0xff]
  %v53 = vld [vmem:[%s0 + $0xa0] sm:$0xff]
  %v54 = vld [vmem:[%s0 + $0xa8] sm:$0xff]
  %v55 = vld [vmem:[%s0 + $0xb0] sm:$0xff]
  %v56 = vld [vmem:[%s0 + $0xb8] sm:$0xff]
  %v57 = vld [vmem:[%s0 + $0xc0] sm:$0xff]
  %v58 = vld [vmem:[%s0 + $0xc8] sm:$0xff]
  %v59 = vld [vmem:[%s0 + $0xd0] sm:$0xff]
  %v60 = vld [vmem:[%s0 + $0xd8] sm:$0xff]
  %v61 = vld [vmem:[%s0 + $0xe0] sm:$0xff]
  %v62 = vld [vmem:[%s0 + $0xe8] sm:$0xff]
  %v63 = vld [vmem:[%s0 + $0xf0] sm:$0xff]
  %v64 = vld [vmem:[%s0 + $0xf8] sm:$0xff]
  %v65 = vld [vmem:[%s0 + $0x100] sm:$0xff]
  %v66 = vld [vmem:[%s0 + $0x108] sm:$0xff]
  %v67 = vld [vmem:[%s0 + $0x110] sm:$0xff]
  %v68 = vld [vmem:[%s0 + $0x118] sm:$0xff]
  %v69 = vld [vmem:[%s0 + $0x120] sm:$0xff]
  %v70 = vld [vmem:[%s0 + $0x128] sm:$0xff]
  %v71 = vld [vmem:[%s0 + $0x130] sm:$0xff]
  %v72 = vld [vmem:[%s0 + $0x138] sm:$0xff]
  %v73 = vld [vmem:[%s0 + $0x140] sm:$0xff]
  %v74 = vld [vmem:[%s0 + $0x148] sm:$0xff]
  %v75 = vld [vmem:[%s0 + $0x150] sm:$0xff]
  %v76 = vld [vmem:[%s0 + $0x158] sm:$0xff]
  %v77 = vld [vmem:[%s0 + $0x160] sm:$0xff]
  %v78 = vld [vmem:[%s0 + $0x168] sm:$0xff]
  %v79 = vld [vmem:[%s0 + $0x170] sm:$0xff]
  %v80 = vld [vmem:[%s0 + $0x178] sm:$0xff]
  %v81 = vld [vmem:[%s0 + $0x180] sm:$0xff]
  %v82 = vld [vmem:[%s0 + $0x188] sm:$0xff]
  %v83 = vld [vmem:[%s0 + $0x190] sm:$0xff]
  %v84 = vld [vmem:[%s0 + $0x198] sm:$0xff]
  %v85 = vld [vmem:[%s0 + $0x1a0] sm:$0xff]
  %v86 = vld [vmem:[%s0 + $0x1a8] sm:$0xff]
  %v87 = vld [vmem:[%s0 + $0x1b0] sm:$0xff]
  %v88 = vld [vmem:[%s0 + $0x1b8] sm:$0xff]
  %v89 = vld [vmem:[%s0 + $0x1c0] sm:$0xff]
  %v90 = vld [vmem:[%s0 + $0x1c8] sm:$0xff]
  %v91 = vld [vmem:[%s0 + $0x1d0] sm:$0xff]
  %v92 = vld [vmem:[%s0 + $0x1d8] sm:$0xff]
  %v93 = vld [vmem:[%s0 + $0x1e0] sm:$0xff]
  %v94 = vld [vmem:[%s0 + $0x1e8] sm:$0xff]
  %v95 = vld [vmem:[%s0 + $0x1f0] sm:$0xff]
  %v96 = vld [vmem:[%s0 + $0x1f8] sm:$0xff]
  %v97 = vld [vmem:[%s0 + $0x200] sm:$0xff]
  %v98 = vld [vmem:[%s0 + $0x208] sm:$0xff]
  %v99 = vld [vmem:[%s0 + $0x210] sm:$0xff]
  %v100 = vld [vmem:[%s0 + $0x218] sm:$0xff]
  %v101 = vld [vmem:[%s0 + $0x220] sm:$0xff]
  %v102 = vld [vmem:[%s0 + $0x228] sm:$0xff]
  %v103 = vld [vmem:[%s0 + $0x230] sm:$0xff]
  %v104 = vld [vmem:[%s0 + $0x238] sm:$0xff]
  %v105 = vld [vmem:[%s0 + $0x240] sm:$0xff]
  %v106 = vld [vmem:[%s0 + $0x248] sm:$0xff]
  %v107 = vld [vmem:[%s0 + $0x250] sm:$0xff]
  %v108 = vld [vmem:[%s0 + $0x258] sm:$0xff]
  %v109 = vld [vmem:[%s0 + $0x260] sm:$0xff]
  %v110 = vld [vmem:[%s0 + $0x268] sm:$0xff]
  %v111 = vld [vmem:[%s0 + $0x270] sm:$0xff]
  %v112 = vld [vmem:[%s0 + $0x278] sm:$0xff]
  %v113 = vld [vmem:[%s0 + $0x280] sm:$0xff]
  %v114 = vld [vmem:[%s0 + $0x288] sm:$0xff]
  %v115 = vld [vmem:[%s0 + $0x290] sm:$0xff]
  %v116 = vld [vmem:[%s0 + $0x298] sm:$0xff]
  %v117 = vld [vmem:[%s0 + $0x2a0] sm:$0xff]
  %v118 = vld [vmem:[%s0 + $0x2a8] sm:$0xff]
  %v119 = vld [vmem:[%s0 + $0x2b0] sm:$0xff]
  %v120 = vld [vmem:[%s0 + $0x2b8] sm:$0xff]
  %v121 = vld [vmem:[%s0 + $0x2c0] sm:$0xff]
  %v122 = vld [vmem:[%s0 + $0x2c8] sm:$0xff]
  %v123 = vld [vmem:[%s0 + $0x2d0] sm:$0xff]
  %v124 = vld [vmem:[%s0 + $0x2d8] sm:$0xff]
  %v125 = vld [vmem:[%s0 + $0x2e0] sm:$0xff]
  %v126 = vld [vmem:[%s0 + $0x2e8] sm:$0xff]
  %v127 = vld [vmem:[%s0 + $0x2f0] sm:$0xff]
  %v128 = vld [vmem:[%s0 + $0x2f8] sm:$0xff]
  %v129 = vld [vmem:[%s0 + $0x300] sm:$0xff]
  %v130 = vld [vmem:[%s0 + $0x308] sm:$0xff]
  %v131 = vld [vmem:[%s0 + $0x310] sm:$0xff]
  %v132 = vld [vmem:[%s0 + $0x318] sm:$0xff]
  %v133 = vld [vmem:[%s0 + $0x320] sm:$0xff]
  %v134 = vld [vmem:[%s0 + $0x328] sm:$0xff]
  %v135 = vld [vmem:[%s0 + $0x330] sm:$0xff]
  %v136 = vld [vmem:[%s0 + $0x338] sm:$0xff]
  %v137 = vld [vmem:[%s0 + $0x340] sm:$0xff]
  %v138 = vld [vmem:[%s0 + $0x348] sm:$0xff]
  %v139 = vld [vmem:[%s0 + $0x350] sm:$0xff]
  %v140 = vld [vmem:[%s0 + $0x358] sm:$0xff]
  %v141 = vld [vmem:[%s0 + $0x360] sm:$0xff]
  %v142 = vld [vmem:[%s0 + $0x368] sm:$0xff]
  %v143 = vld [vmem:[%s0 + $0x370] sm:$0xff]
  %v144 = vld [vmem:[%s0 + $0x378] sm:$0xff]
  %v145 = vld [vmem:[%s0 + $0x380] sm:$0xff]
  %v146 = vld [vmem:[%s0 + $0x388] sm:$0xff]
  %v147 = vld [vmem:[%s0 + $0x390] sm:$0xff]
  %v148 = vld [vmem:[%s0 + $0x398] sm:$0xff]
  %v149 = vld [vmem:[%s0 + $0x3a0] sm:$0xff]
  %v150 = vld [vmem:[%s0 + $0x3a8] sm:$0xff]
  %v151 = vld [vmem:[%s0 + $0x3b0] sm:$0xff]
  %v152 = vld [vmem:[%s0 + $0x3b8] sm:$0xff]
  %v153 = vld [vmem:[%s0 + $0x3c0] sm:$0xff]
  %v154 = vld [vmem:[%s0 + $0x3c8] sm:$0xff]
  %v155 = vld [vmem:[%s0 + $0x3d0] sm:$0xff]
  %v156 = vld [vmem:[%s0 + $0x3d8] sm:$0xff]
  %v157 = vld [vmem:[%s0 + $0x3e0] sm:$0xff]
  %v158 = vld [vmem:[%s0 + $0x3e8] sm:$0xff]
  %v159 = vld [vmem:[%s0 + $0x3f0] sm:$0xff]
  %v160 = vld [vmem:[%s0 + $0x3f8] sm:$0xff]
  %v161 = vld [vmem:[%s1] sm:$0xf]
  %v162 = vld [vmem:[%s1 + $0x4] sm:$0xf]
  %v163 = vld [vmem:[%s1 + $0x8] sm:$0xf]
  %v164 = vld [vmem:[%s1 + $0xc] sm:$0xf]
  %v165 = vld [vmem:[%s1 + $0x10] sm:$0xf]
  %v166 = vld [vmem:[%s1 + $0x14] sm:$0xf]
  %v167 = vld [vmem:[%s1 + $0x18] sm:$0xf]
  %v168 = vld [vmem:[%s1 + $0x1c] sm:$0xf]
  %v169 = vld [vmem:[%s1 + $0x20] sm:$0xf]
  %v170 = vld [vmem:[%s1 + $0x24] sm:$0xf]
  %v171 = vld [vmem:[%s1 + $0x28] sm:$0xf]
  %v172 = vld [vmem:[%s1 + $0x2c] sm:$0xf]
  %v173 = vld [vmem:[%s1 + $0x30] sm:$0xf]
  %v174 = vld [vmem:[%s1 + $0x34] sm:$0xf]
  %v175 = vld [vmem:[%s1 + $0x38] sm:$0xf]
  %v176 = vld [vmem:[%s1 + $0x3c] sm:$0xf]
  %v177 = vld [vmem:[%s1 + $0x40] sm:$0xf]
  %v178 = vld [vmem:[%s1 + $0x44] sm:$0xf]
  %v179 = vld [vmem:[%s1 + $0x48] sm:$0xf]
  %v180 = vld [vmem:[%s1 + $0x4c] sm:$0xf]
  %v181 = vld [vmem:[%s2] sm:$0x1]
  %v183 = vlaneseq
  %v184 = vshrl.u32 %v183, 7
  %v185 = vsub.s32 0, %v184
  %v186 = vrot.slane %v181, %v185
  %v316 = vunpack.c.l.b16 %v33
  %v317 = vunpack.c.h.b16 %v33
  %v318 = vunpack.c.l.b16 %v34
  %v319 = vunpack.c.h.b16 %v34
  %v320 = vunpack.c.l.b16 %v35
  %v321 = vunpack.c.h.b16 %v35
  %v322 = vunpack.c.l.b16 %v36
  %v323 = vunpack.c.h.b16 %v36
  %v324 = vunpack.c.l.b16 %v37
  %v325 = vunpack.c.h.b16 %v37
  %v326 = vunpack.c.l.b16 %v38
  %v327 = vunpack.c.h.b16 %v38
  %v328 = vunpack.c.l.b16 %v39
  %v329 = vunpack.c.h.b16 %v39
  %v330 = vunpack.c.l.b16 %v40
  %v331 = vunpack.c.h.b16 %v40
  %v332 = vunpack.c.l.b16 %v41
  %v333 = vunpack.c.h.b16 %v41
  %v334 = vunpack.c.l.b16 %v42
  %v335 = vunpack.c.h.b16 %v42
  %v336 = vunpack.c.l.b16 %v43
  %v337 = vunpack.c.h.b16 %v43
  %v338 = vunpack.c.l.b16 %v44
  %v339 = vunpack.c.h.b16 %v44
  %v340 = vunpack.c.l.b16 %v45
  %v341 = vunpack.c.h.b16 %v45
  %v342 = vunpack.c.l.b16 %v46
  %v343 = vunpack.c.h.b16 %v46
  %v344 = vunpack.c.l.b16 %v47
  %v345 = vunpack.c.h.b16 %v47
  %v346 = vunpack.c.l.b16 %v48
  %v347 = vunpack.c.h.b16 %v48
  %v348 = vunpack.c.l.b16 %v49
  %v349 = vunpack.c.h.b16 %v49
  %v350 = vunpack.c.l.b16 %v50
  %v351 = vunpack.c.h.b16 %v50
  %v352 = vunpack.c.l.b16 %v51
  %v353 = vunpack.c.h.b16 %v51
  %v354 = vunpack.c.l.b16 %v52
  %v355 = vunpack.c.h.b16 %v52
  %v356 = vunpack.c.l.b16 %v53
  %v357 = vunpack.c.h.b16 %v53
  %v358 = vunpack.c.l.b16 %v54
  %v359 = vunpack.c.h.b16 %v54
  %v360 = vunpack.c.l.b16 %v55
  %v361 = vunpack.c.h.b16 %v55
  %v362 = vunpack.c.l.b16 %v56
  %v363 = vunpack.c.h.b16 %v56
  %v364 = vunpack.c.l.b16 %v57
  %v365 = vunpack.c.h.b16 %v57
  %v366 = vunpack.c.l.b16 %v58
  %v367 = vunpack.c.h.b16 %v58
  %v368 = vunpack.c.l.b16 %v59
  %v369 = vunpack.c.h.b16 %v59
  %v370 = vunpack.c.l.b16 %v60
  %v371 = vunpack.c.h.b16 %v60
  %v372 = vunpack.c.l.b16 %v61
  %v373 = vunpack.c.h.b16 %v61
  %v374 = vunpack.c.l.b16 %v62
  %v375 = vunpack.c.h.b16 %v62
  %v376 = vunpack.c.l.b16 %v63
  %v377 = vunpack.c.h.b16 %v63
  %v378 = vunpack.c.l.b16 %v64
  %v379 = vunpack.c.h.b16 %v64
  %v380 = vunpack.c.l.b16 %v65
  %v381 = vunpack.c.h.b16 %v65
  %v382 = vunpack.c.l.b16 %v66
  %v383 = vunpack.c.h.b16 %v66
  %v384 = vunpack.c.l.b16 %v67
  %v385 = vunpack.c.h.b16 %v67
  %v386 = vunpack.c.l.b16 %v68
  %v387 = vunpack.c.h.b16 %v68
  %v388 = vunpack.c.l.b16 %v69
  %v389 = vunpack.c.h.b16 %v69
  %v390 = vunpack.c.l.b16 %v70
  %v391 = vunpack.c.h.b16 %v70
  %v392 = vunpack.c.l.b16 %v71
  %v393 = vunpack.c.h.b16 %v71
  %v394 = vunpack.c.l.b16 %v72
  %v395 = vunpack.c.h.b16 %v72
  %v396 = vunpack.c.l.b16 %v73
  %v397 = vunpack.c.h.b16 %v73
  %v398 = vunpack.c.l.b16 %v74
  %v399 = vunpack.c.h.b16 %v74
  %v400 = vunpack.c.l.b16 %v75
  %v401 = vunpack.c.h.b16 %v75
  %v402 = vunpack.c.l.b16 %v76
  %v403 = vunpack.c.h.b16 %v76
  %v404 = vunpack.c.l.b16 %v77
  %v405 = vunpack.c.h.b16 %v77
  %v406 = vunpack.c.l.b16 %v78
  %v407 = vunpack.c.h.b16 %v78
  %v408 = vunpack.c.l.b16 %v79
  %v409 = vunpack.c.h.b16 %v79
  %v410 = vunpack.c.l.b16 %v80
  %v411 = vunpack.c.h.b16 %v80
  %v412 = vunpack.c.l.b16 %v81
  %v413 = vunpack.c.h.b16 %v81
  %v414 = vunpack.c.l.b16 %v82
  %v415 = vunpack.c.h.b16 %v82
  %v416 = vunpack.c.l.b16 %v83
  %v417 = vunpack.c.h.b16 %v83
  %v418 = vunpack.c.l.b16 %v84
  %v419 = vunpack.c.h.b16 %v84
  %v420 = vunpack.c.l.b16 %v85
  %v421 = vunpack.c.h.b16 %v85
  %v422 = vunpack.c.l.b16 %v86
  %v423 = vunpack.c.h.b16 %v86
  %v424 = vunpack.c.l.b16 %v87
  %v425 = vunpack.c.h.b16 %v87
  %v426 = vunpack.c.l.b16 %v88
  %v427 = vunpack.c.h.b16 %v88
  %v428 = vunpack.c.l.b16 %v89
  %v429 = vunpack.c.h.b16 %v89
  %v430 = vunpack.c.l.b16 %v90
  %v431 = vunpack.c.h.b16 %v90
  %v432 = vunpack.c.l.b16 %v91
  %v433 = vunpack.c.h.b16 %v91
  %v434 = vunpack.c.l.b16 %v92
  %v435 = vunpack.c.h.b16 %v92
  %v436 = vunpack.c.l.b16 %v93
  %v437 = vunpack.c.h.b16 %v93
  %v438 = vunpack.c.l.b16 %v94
  %v439 = vunpack.c.h.b16 %v94
  %v440 = vunpack.c.l.b16 %v95
  %v441 = vunpack.c.h.b16 %v95
  %v442 = vunpack.c.l.b16 %v96
  %v443 = vunpack.c.h.b16 %v96
  %v444 = vunpack.c.l.b16 %v97
  %v445 = vunpack.c.h.b16 %v97
  %v446 = vunpack.c.l.b16 %v98
  %v447 = vunpack.c.h.b16 %v98
  %v448 = vunpack.c.l.b16 %v99
  %v449 = vunpack.c.h.b16 %v99
  %v450 = vunpack.c.l.b16 %v100
  %v451 = vunpack.c.h.b16 %v100
  %v452 = vunpack.c.l.b16 %v101
  %v453 = vunpack.c.h.b16 %v101
  %v454 = vunpack.c.l.b16 %v102
  %v455 = vunpack.c.h.b16 %v102
  %v456 = vunpack.c.l.b16 %v103
  %v457 = vunpack.c.h.b16 %v103
  %v458 = vunpack.c.l.b16 %v104
  %v459 = vunpack.c.h.b16 %v104
  %v460 = vunpack.c.l.b16 %v105
  %v461 = vunpack.c.h.b16 %v105
  %v462 = vunpack.c.l.b16 %v106
  %v463 = vunpack.c.h.b16 %v106
  %v464 = vunpack.c.l.b16 %v107
  %v465 = vunpack.c.h.b16 %v107
  %v466 = vunpack.c.l.b16 %v108
  %v467 = vunpack.c.h.b16 %v108
  %v468 = vunpack.c.l.b16 %v109
  %v469 = vunpack.c.h.b16 %v109
  %v470 = vunpack.c.l.b16 %v110
  %v471 = vunpack.c.h.b16 %v110
  %v472 = vunpack.c.l.b16 %v111
  %v473 = vunpack.c.h.b16 %v111
  %v474 = vunpack.c.l.b16 %v112
  %v475 = vunpack.c.h.b16 %v112
  %v476 = vunpack.c.l.b16 %v113
  %v477 = vunpack.c.h.b16 %v113
  %v478 = vunpack.c.l.b16 %v114
  %v479 = vunpack.c.h.b16 %v114
  %v480 = vunpack.c.l.b16 %v115
  %v481 = vunpack.c.h.b16 %v115
  %v482 = vunpack.c.l.b16 %v116
  %v483 = vunpack.c.h.b16 %v116
  %v484 = vunpack.c.l.b16 %v117
  %v485 = vunpack.c.h.b16 %v117
  %v486 = vunpack.c.l.b16 %v118
  %v487 = vunpack.c.h.b16 %v118
  %v488 = vunpack.c.l.b16 %v119
  %v489 = vunpack.c.h.b16 %v119
  %v490 = vunpack.c.l.b16 %v120
  %v491 = vunpack.c.h.b16 %v120
  %v492 = vunpack.c.l.b16 %v121
  %v493 = vunpack.c.h.b16 %v121
  %v494 = vunpack.c.l.b16 %v122
  %v495 = vunpack.c.h.b16 %v122
  %v496 = vunpack.c.l.b16 %v123
  %v497 = vunpack.c.h.b16 %v123
  %v498 = vunpack.c.l.b16 %v124
  %v499 = vunpack.c.h.b16 %v124
  %v500 = vunpack.c.l.b16 %v125
  %v501 = vunpack.c.h.b16 %v125
  %v502 = vunpack.c.l.b16 %v126
  %v503 = vunpack.c.h.b16 %v126
  %v504 = vunpack.c.l.b16 %v127
  %v505 = vunpack.c.h.b16 %v127
  %v506 = vunpack.c.l.b16 %v128
  %v507 = vunpack.c.h.b16 %v128
  %v508 = vunpack.c.l.b16 %v129
  %v509 = vunpack.c.h.b16 %v129
  %v510 = vunpack.c.l.b16 %v130
  %v511 = vunpack.c.h.b16 %v130
  %v512 = vunpack.c.l.b16 %v131
  %v513 = vunpack.c.h.b16 %v131
  %v514 = vunpack.c.l.b16 %v132
  %v515 = vunpack.c.h.b16 %v132
  %v516 = vunpack.c.l.b16 %v133
  %v517 = vunpack.c.h.b16 %v133
  %v518 = vunpack.c.l.b16 %v134
  %v519 = vunpack.c.h.b16 %v134
  %v520 = vunpack.c.l.b16 %v135
  %v521 = vunpack.c.h.b16 %v135
  %v522 = vunpack.c.l.b16 %v136
  %v523 = vunpack.c.h.b16 %v136
  %v524 = vunpack.c.l.b16 %v137
  %v525 = vunpack.c.h.b16 %v137
  %v526 = vunpack.c.l.b16 %v138
  %v527 = vunpack.c.h.b16 %v138
  %v528 = vunpack.c.l.b16 %v139
  %v529 = vunpack.c.h.b16 %v139
  %v530 = vunpack.c.l.b16 %v140
  %v531 = vunpack.c.h.b16 %v140
  %v532 = vunpack.c.l.b16 %v141
  %v533 = vunpack.c.h.b16 %v141
  %v534 = vunpack.c.l.b16 %v142
  %v535 = vunpack.c.h.b16 %v142
  %v536 = vunpack.c.l.b16 %v143
  %v537 = vunpack.c.h.b16 %v143
  %v538 = vunpack.c.l.b16 %v144
  %v539 = vunpack.c.h.b16 %v144
  %v540 = vunpack.c.l.b16 %v145
  %v541 = vunpack.c.h.b16 %v145
  %v542 = vunpack.c.l.b16 %v146
  %v543 = vunpack.c.h.b16 %v146
  %v544 = vunpack.c.l.b16 %v147
  %v545 = vunpack.c.h.b16 %v147
  %v546 = vunpack.c.l.b16 %v148
  %v547 = vunpack.c.h.b16 %v148
  %v548 = vunpack.c.l.b16 %v149
  %v549 = vunpack.c.h.b16 %v149
  %v550 = vunpack.c.l.b16 %v150
  %v551 = vunpack.c.h.b16 %v150
  %v552 = vunpack.c.l.b16 %v151
  %v553 = vunpack.c.h.b16 %v151
  %v554 = vunpack.c.l.b16 %v152
  %v555 = vunpack.c.h.b16 %v152
  %v556 = vunpack.c.l.b16 %v153
  %v557 = vunpack.c.h.b16 %v153
  %v558 = vunpack.c.l.b16 %v154
  %v559 = vunpack.c.h.b16 %v154
  %v560 = vunpack.c.l.b16 %v155
  %v561 = vunpack.c.h.b16 %v155
  %v562 = vunpack.c.l.b16 %v156
  %v563 = vunpack.c.h.b16 %v156
  %v564 = vunpack.c.l.b16 %v157
  %v565 = vunpack.c.h.b16 %v157
  %v566 = vunpack.c.l.b16 %v158
  %v567 = vunpack.c.h.b16 %v158
  %v568 = vunpack.c.l.b16 %v159
  %v569 = vunpack.c.h.b16 %v159
  %v570 = vunpack.c.l.b16 %v160
  %v571 = vunpack.c.h.b16 %v160
  %v572 = vpack.c.b16 %v318, %v316
  %v573 = vpack.c.b16 %v319, %v317
  %v574 = vpack.c.b16 %v322, %v320
  %v575 = vpack.c.b16 %v323, %v321
  %v576 = vpack.c.b16 %v326, %v324
  %v577 = vpack.c.b16 %v327, %v325
  %v578 = vpack.c.b16 %v330, %v328
  %v579 = vpack.c.b16 %v331, %v329
  %v580 = vpack.c.b16 %v334, %v332
  %v581 = vpack.c.b16 %v335, %v333
  %v582 = vpack.c.b16 %v338, %v336
  %v583 = vpack.c.b16 %v339, %v337
  %v584 = vpack.c.b16 %v342, %v340
  %v585 = vpack.c.b16 %v343, %v341
  %v586 = vpack.c.b16 %v346, %v344
  %v587 = vpack.c.b16 %v347, %v345
  %v588 = vpack.c.b16 %v350, %v348
  %v589 = vpack.c.b16 %v351, %v349
  %v590 = vpack.c.b16 %v354, %v352
  %v591 = vpack.c.b16 %v355, %v353
  %v592 = vpack.c.b16 %v358, %v356
  %v593 = vpack.c.b16 %v359, %v357
  %v594 = vpack.c.b16 %v362, %v360
  %v595 = vpack.c.b16 %v363, %v361
  %v596 = vpack.c.b16 %v366, %v364
  %v597 = vpack.c.b16 %v367, %v365
  %v598 = vpack.c.b16 %v370, %v368
  %v599 = vpack.c.b16 %v371, %v369
  %v600 = vpack.c.b16 %v374, %v372
  %v601 = vpack.c.b16 %v375, %v373
  %v602 = vpack.c.b16 %v378, %v376
  %v603 = vpack.c.b16 %v379, %v377
  %v604 = vpack.c.b16 %v382, %v380
  %v605 = vpack.c.b16 %v383, %v381
  %v606 = vpack.c.b16 %v386, %v384
  %v607 = vpack.c.b16 %v387, %v385
  %v608 = vpack.c.b16 %v390, %v388
  %v609 = vpack.c.b16 %v391, %v389
  %v610 = vpack.c.b16 %v394, %v392
  %v611 = vpack.c.b16 %v395, %v393
  %v612 = vpack.c.b16 %v398, %v396
  %v613 = vpack.c.b16 %v399, %v397
  %v614 = vpack.c.b16 %v402, %v400
  %v615 = vpack.c.b16 %v403, %v401
  %v616 = vpack.c.b16 %v406, %v404
  %v617 = vpack.c.b16 %v407, %v405
  %v618 = vpack.c.b16 %v410, %v408
  %v619 = vpack.c.b16 %v411, %v409
  %v620 = vpack.c.b16 %v414, %v412
  %v621 = vpack.c.b16 %v415, %v413
  %v622 = vpack.c.b16 %v418, %v416
  %v623 = vpack.c.b16 %v419, %v417
  %v624 = vpack.c.b16 %v422, %v420
  %v625 = vpack.c.b16 %v423, %v421
  %v626 = vpack.c.b16 %v426, %v424
  %v627 = vpack.c.b16 %v427, %v425
  %v628 = vpack.c.b16 %v430, %v428
  %v629 = vpack.c.b16 %v431, %v429
  %v630 = vpack.c.b16 %v434, %v432
  %v631 = vpack.c.b16 %v435, %v433
  %v632 = vpack.c.b16 %v438, %v436
  %v633 = vpack.c.b16 %v439, %v437
  %v634 = vpack.c.b16 %v442, %v440
  %v635 = vpack.c.b16 %v443, %v441
  %v636 = vpack.c.b16 %v446, %v444
  %v637 = vpack.c.b16 %v447, %v445
  %v638 = vpack.c.b16 %v450, %v448
  %v639 = vpack.c.b16 %v451, %v449
  %v640 = vpack.c.b16 %v454, %v452
  %v641 = vpack.c.b16 %v455, %v453
  %v642 = vpack.c.b16 %v458, %v456
  %v643 = vpack.c.b16 %v459, %v457
  %v644 = vpack.c.b16 %v462, %v460
  %v645 = vpack.c.b16 %v463, %v461
  %v646 = vpack.c.b16 %v466, %v464
  %v647 = vpack.c.b16 %v467, %v465
  %v648 = vpack.c.b16 %v470, %v468
  %v649 = vpack.c.b16 %v471, %v469
  %v650 = vpack.c.b16 %v474, %v472
  %v651 = vpack.c.b16 %v475, %v473
  %v652 = vpack.c.b16 %v478, %v476
  %v653 = vpack.c.b16 %v479, %v477
  %v654 = vpack.c.b16 %v482, %v480
  %v655 = vpack.c.b16 %v483, %v481
  %v656 = vpack.c.b16 %v486, %v484
  %v657 = vpack.c.b16 %v487, %v485
  %v658 = vpack.c.b16 %v490, %v488
  %v659 = vpack.c.b16 %v491, %v489
  %v660 = vpack.c.b16 %v494, %v492
  %v661 = vpack.c.b16 %v495, %v493
  %v662 = vpack.c.b16 %v498, %v496
  %v663 = vpack.c.b16 %v499, %v497
  %v664 = vpack.c.b16 %v502, %v500
  %v665 = vpack.c.b16 %v503, %v501
  %v666 = vpack.c.b16 %v506, %v504
  %v667 = vpack.c.b16 %v507, %v505
  %v668 = vpack.c.b16 %v510, %v508
  %v669 = vpack.c.b16 %v511, %v509
  %v670 = vpack.c.b16 %v514, %v512
  %v671 = vpack.c.b16 %v515, %v513
  %v672 = vpack.c.b16 %v518, %v516
  %v673 = vpack.c.b16 %v519, %v517
  %v674 = vpack.c.b16 %v522, %v520
  %v675 = vpack.c.b16 %v523, %v521
  %v676 = vpack.c.b16 %v526, %v524
  %v677 = vpack.c.b16 %v527, %v525
  %v678 = vpack.c.b16 %v530, %v528
  %v679 = vpack.c.b16 %v531, %v529
  %v680 = vpack.c.b16 %v534, %v532
  %v681 = vpack.c.b16 %v535, %v533
  %v682 = vpack.c.b16 %v538, %v536
  %v683 = vpack.c.b16 %v539, %v537
  %v684 = vpack.c.b16 %v542, %v540
  %v685 = vpack.c.b16 %v543, %v541
  %v686 = vpack.c.b16 %v546, %v544
  %v687 = vpack.c.b16 %v547, %v545
  %v688 = vpack.c.b16 %v550, %v548
  %v689 = vpack.c.b16 %v551, %v549
  %v690 = vpack.c.b16 %v554, %v552
  %v691 = vpack.c.b16 %v555, %v553
  %v692 = vpack.c.b16 %v558, %v556
  %v693 = vpack.c.b16 %v559, %v557
  %v694 = vpack.c.b16 %v562, %v560
  %v695 = vpack.c.b16 %v563, %v561
  %v696 = vpack.c.b16 %v566, %v564
  %v697 = vpack.c.b16 %v567, %v565
  %v698 = vpack.c.b16 %v570, %v568
  %v699 = vpack.c.b16 %v571, %v569
  %v784 = vunpack.c.l.b16 %v161
  %v785 = vunpack.c.l.b16 %v162
  %v786 = vunpack.c.l.b16 %v163
  %v787 = vunpack.c.l.b16 %v164
  %v788 = vunpack.c.l.b16 %v165
  %v789 = vunpack.c.l.b16 %v166
  %v790 = vunpack.c.l.b16 %v167
  %v791 = vunpack.c.l.b16 %v168
  %v792 = vunpack.c.l.b16 %v169
  %v793 = vunpack.c.l.b16 %v170
  %v794 = vunpack.c.l.b16 %v171
  %v795 = vunpack.c.l.b16 %v172
  %v796 = vunpack.c.l.b16 %v173
  %v797 = vunpack.c.l.b16 %v174
  %v798 = vunpack.c.l.b16 %v175
  %v799 = vunpack.c.l.b16 %v176
  %v800 = vunpack.c.l.b16 %v177
  %v801 = vunpack.c.l.b16 %v178
  %v802 = vunpack.c.l.b16 %v179
  %v803 = vunpack.c.l.b16 %v180
  %v804 = vpack.c.b16 %v785, %v784
  %v805 = vpack.c.b16 %v787, %v786
  %v806 = vpack.c.b16 %v789, %v788
  %v807 = vpack.c.b16 %v791, %v790
  %v808 = vpack.c.b16 %v793, %v792
  %v809 = vpack.c.b16 %v795, %v794
  %v810 = vpack.c.b16 %v797, %v796
  %v811 = vpack.c.b16 %v799, %v798
  %v812 = vpack.c.b16 %v801, %v800
  %v813 = vpack.c.b16 %v803, %v802
  %vm824 = vcmask 261120
  %v826 = vsel %vm824, %v573, 0
  %v829 = vsel %vm824, %v575, 0
  %v832 = vsel %vm824, %v577, 0
  %v835 = vsel %vm824, %v579, 0
  %v838 = vsel %vm824, %v581, 0
  %v841 = vsel %vm824, %v583, 0
  %v844 = vsel %vm824, %v585, 0
  %v847 = vsel %vm824, %v587, 0
  %v850 = vsel %vm824, %v589, 0
  %v853 = vsel %vm824, %v591, 0
  %v856 = vsel %vm824, %v593, 0
  %v859 = vsel %vm824, %v595, 0
  %v862 = vsel %vm824, %v597, 0
  %v865 = vsel %vm824, %v599, 0
  %v868 = vsel %vm824, %v601, 0
  %v871 = vsel %vm824, %v603, 0
  %v874 = vsel %vm824, %v605, 0
  %v877 = vsel %vm824, %v607, 0
  %v880 = vsel %vm824, %v609, 0
  %v883 = vsel %vm824, %v611, 0
  %v886 = vsel %vm824, %v613, 0
  %v889 = vsel %vm824, %v615, 0
  %v892 = vsel %vm824, %v617, 0
  %v895 = vsel %vm824, %v619, 0
  %v898 = vsel %vm824, %v621, 0
  %v901 = vsel %vm824, %v623, 0
  %v904 = vsel %vm824, %v625, 0
  %v907 = vsel %vm824, %v627, 0
  %v910 = vsel %vm824, %v629, 0
  %v913 = vsel %vm824, %v631, 0
  %v916 = vsel %vm824, %v633, 0
  %v919 = vsel %vm824, %v635, 0
  %v922 = vsel %vm824, %v637, 0
  %v925 = vsel %vm824, %v639, 0
  %v928 = vsel %vm824, %v641, 0
  %v931 = vsel %vm824, %v643, 0
  %v934 = vsel %vm824, %v645, 0
  %v937 = vsel %vm824, %v647, 0
  %v940 = vsel %vm824, %v649, 0
  %v943 = vsel %vm824, %v651, 0
  %v946 = vsel %vm824, %v653, 0
  %v949 = vsel %vm824, %v655, 0
  %v952 = vsel %vm824, %v657, 0
  %v955 = vsel %vm824, %v659, 0
  %v958 = vsel %vm824, %v661, 0
  %v961 = vsel %vm824, %v663, 0
  %v964 = vsel %vm824, %v665, 0
  %v967 = vsel %vm824, %v667, 0
  %v970 = vsel %vm824, %v669, 0
  %v973 = vsel %vm824, %v671, 0
  %v976 = vsel %vm824, %v673, 0
  %v979 = vsel %vm824, %v675, 0
  %v982 = vsel %vm824, %v677, 0
  %v985 = vsel %vm824, %v679, 0
  %v988 = vsel %vm824, %v681, 0
  %v991 = vsel %vm824, %v683, 0
  %v994 = vsel %vm824, %v685, 0
  %v997 = vsel %vm824, %v687, 0
  %v1000 = vsel %vm824, %v689, 0
  %v1003 = vsel %vm824, %v691, 0
  %v1006 = vsel %vm824, %v693, 0
  %v1009 = vsel %vm824, %v695, 0
  %v1012 = vsel %vm824, %v697, 0
  %v1015 = vsel %vm824, %v699, 0
  %1017 = vmatprep.subr.bf16.mxu0 0
  %1018 = vmatpush1.bf16.msra.mxu0 %v811
  %1019 = vmatprep.subr.bf16.mxu0 0
  %1020 = vmatpush1.bf16.msra.mxu0 %v810
  %1021 = vmatprep.subr.bf16.mxu0 0
  %1022 = vmatpush1.bf16.msra.mxu0 %v809
  %1023 = vmatprep.subr.bf16.mxu0 0
  %1024 = vmatpush1.bf16.msra.mxu0 %v808
  %1025 = vmatprep.subr.bf16.mxu0 0
  %1026 = vmatpush1.bf16.msra.mxu0 %v807
  %1027 = vmatprep.subr.bf16.mxu0 0
  %1028 = vmatpush1.bf16.msra.mxu0 %v806
  %1029 = vmatprep.subr.bf16.mxu0 0
  %1030 = vmatpush1.bf16.msra.mxu0 %v805
  %1031 = vmatprep.subr.bf16.mxu0 0
  %1032 = vmatpush1.bf16.msra.mxu0 %v804
  %1033 = vmatprep.subr.bf16.mxu0 0
  %1034 = vmatpush2.bf16.msra.mxu0 0
  %1035 = vmatprep.subr.bf16.mxu0 0
  %1036 = vmatpush2.bf16.msra.mxu0 0
  %1037 = vmatprep.subr.bf16.mxu0 0
  %1038 = vmatpush2.bf16.msra.mxu0 0
  %1039 = vmatprep.subr.bf16.mxu0 0
  %1040 = vmatpush2.bf16.msra.mxu0 0
  %1041 = vmatprep.subr.bf16.mxu0 0
  %1042 = vmatpush2.bf16.msra.mxu0 0
  %1043 = vmatprep.subr.bf16.mxu0 0
  %1044 = vmatpush2.bf16.msra.mxu0 0
  %1045 = vmatprep.subr.bf16.mxu0 0
  %1046 = vmatpush2.bf16.msra.mxu0 %v813
  %1047 = vmatprep.subr.bf16.mxu0 0
  %1048 = vmatpush2.bf16.msra.mxu0 %v812
  %1049 = vmatprep.mubr.bf16.mxu0 %v826
  %1050 = vmatmul.mubr.bf16.gmra.mxu0 %v572
  %v1051 = vpop.f32.mrf.mxu0
  %v1052 = vadd.f32 %v186, %v1051
  %v1053 = vpop.f32.mrf.mxu0
  %v1054 = vpop.f32.mrf.mxu0
  %v1055 = vadd.f32 %v186, %v1054
  %v1056 = vpop.f32.mrf.mxu0
  %1057 = vmatprep.mubr.bf16.mxu0 %v829
  %1058 = vmatmul.mubr.bf16.gmra.mxu0 %v574
  %v1059 = vpop.f32.mrf.mxu0
  %v1060 = vadd.f32 %v186, %v1059
  %v1061 = vpop.f32.mrf.mxu0
  %v1062 = vpop.f32.mrf.mxu0
  %v1063 = vadd.f32 %v186, %v1062
  %v1064 = vpop.f32.mrf.mxu0
  %1065 = vmatprep.mubr.bf16.mxu0 %v832
  %1066 = vmatmul.mubr.bf16.gmra.mxu0 %v576
  %v1067 = vpop.f32.mrf.mxu0
  %v1068 = vadd.f32 %v186, %v1067
  %v1069 = vpop.f32.mrf.mxu0
  %v1070 = vpop.f32.mrf.mxu0
  %v1071 = vadd.f32 %v186, %v1070
  %v1072 = vpop.f32.mrf.mxu0
  %1073 = vmatprep.mubr.bf16.mxu0 %v835
  %1074 = vmatmul.mubr.bf16.gmra.mxu0 %v578
  %v1075 = vpop.f32.mrf.mxu0
  %v1076 = vadd.f32 %v186, %v1075
  %v1077 = vpop.f32.mrf.mxu0
  %v1078 = vpop.f32.mrf.mxu0
  %v1079 = vadd.f32 %v186, %v1078
  %v1080 = vpop.f32.mrf.mxu0
  %1081 = vmatprep.mubr.bf16.mxu0 %v838
  %1082 = vmatmul.mubr.bf16.gmra.mxu0 %v580
  %v1083 = vpop.f32.mrf.mxu0
  %v1084 = vadd.f32 %v186, %v1083
  %v1085 = vpop.f32.mrf.mxu0
  %v1086 = vpop.f32.mrf.mxu0
  %v1087 = vadd.f32 %v186, %v1086
  %v1088 = vpop.f32.mrf.mxu0
  %1089 = vmatprep.mubr.bf16.mxu0 %v841
  %1090 = vmatmul.mubr.bf16.gmra.mxu0 %v582
  %v1091 = vpop.f32.mrf.mxu0
  %v1092 = vadd.f32 %v186, %v1091
  %v1093 = vpop.f32.mrf.mxu0
  %v1094 = vpop.f32.mrf.mxu0
  %v1095 = vadd.f32 %v186, %v1094
  %v1096 = vpop.f32.mrf.mxu0
  %1097 = vmatprep.mubr.bf16.mxu0 %v844
  %1098 = vmatmul.mubr.bf16.gmra.mxu0 %v584
  %v1099 = vpop.f32.mrf.mxu0
  %v1100 = vadd.f32 %v186, %v1099
  %v1101 = vpop.f32.mrf.mxu0
  %v1102 = vpop.f32.mrf.mxu0
  %v1103 = vadd.f32 %v186, %v1102
  %v1104 = vpop.f32.mrf.mxu0
  %1105 = vmatprep.mubr.bf16.mxu0 %v847
  %1106 = vmatmul.mubr.bf16.gmra.mxu0 %v586
  %v1107 = vpop.f32.mrf.mxu0
  %v1108 = vadd.f32 %v186, %v1107
  %v1109 = vpop.f32.mrf.mxu0
  %v1110 = vpop.f32.mrf.mxu0
  %v1111 = vadd.f32 %v186, %v1110
  %v1112 = vpop.f32.mrf.mxu0
  %1113 = vmatprep.mubr.bf16.mxu0 %v850
  %1114 = vmatmul.mubr.bf16.gmra.mxu0 %v588
  %v1115 = vpop.f32.mrf.mxu0
  %v1116 = vadd.f32 %v186, %v1115
  %v1117 = vpop.f32.mrf.mxu0
  %v1118 = vpop.f32.mrf.mxu0
  %v1119 = vadd.f32 %v186, %v1118
  %v1120 = vpop.f32.mrf.mxu0
  %1121 = vmatprep.mubr.bf16.mxu0 %v853
  %1122 = vmatmul.mubr.bf16.gmra.mxu0 %v590
  %v1123 = vpop.f32.mrf.mxu0
  %v1124 = vadd.f32 %v186, %v1123
  %v1125 = vpop.f32.mrf.mxu0
  %v1126 = vpop.f32.mrf.mxu0
  %v1127 = vadd.f32 %v186, %v1126
  %v1128 = vpop.f32.mrf.mxu0
  %1129 = vmatprep.mubr.bf16.mxu0 %v856
  %1130 = vmatmul.mubr.bf16.gmra.mxu0 %v592
  %v1131 = vpop.f32.mrf.mxu0
  %v1132 = vadd.f32 %v186, %v1131
  %v1133 = vpop.f32.mrf.mxu0
  %v1134 = vpop.f32.mrf.mxu0
  %v1135 = vadd.f32 %v186, %v1134
  %v1136 = vpop.f32.mrf.mxu0
  %1137 = vmatprep.mubr.bf16.mxu0 %v859
  %1138 = vmatmul.mubr.bf16.gmra.mxu0 %v594
  %v1139 = vpop.f32.mrf.mxu0
  %v1140 = vadd.f32 %v186, %v1139
  %v1141 = vpop.f32.mrf.mxu0
  %v1142 = vpop.f32.mrf.mxu0
  %v1143 = vadd.f32 %v186, %v1142
  %v1144 = vpop.f32.mrf.mxu0
  %1145 = vmatprep.mubr.bf16.mxu0 %v862
  %1146 = vmatmul.mubr.bf16.gmra.mxu0 %v596
  %v1147 = vpop.f32.mrf.mxu0
  %v1148 = vadd.f32 %v186, %v1147
  %v1149 = vpop.f32.mrf.mxu0
  %v1150 = vpop.f32.mrf.mxu0
  %v1151 = vadd.f32 %v186, %v1150
  %v1152 = vpop.f32.mrf.mxu0
  %1153 = vmatprep.mubr.bf16.mxu0 %v865
  %1154 = vmatmul.mubr.bf16.gmra.mxu0 %v598
  %v1155 = vpop.f32.mrf.mxu0
  %v1156 = vadd.f32 %v186, %v1155
  %v1157 = vpop.f32.mrf.mxu0
  %v1158 = vpop.f32.mrf.mxu0
  %v1159 = vadd.f32 %v186, %v1158
  %v1160 = vpop.f32.mrf.mxu0
  %1161 = vmatprep.mubr.bf16.mxu0 %v868
  %1162 = vmatmul.mubr.bf16.gmra.mxu0 %v600
  %v1163 = vpop.f32.mrf.mxu0
  %v1164 = vadd.f32 %v186, %v1163
  %v1165 = vpop.f32.mrf.mxu0
  %v1166 = vpop.f32.mrf.mxu0
  %v1167 = vadd.f32 %v186, %v1166
  %v1168 = vpop.f32.mrf.mxu0
  %1169 = vmatprep.mubr.bf16.mxu0 %v871
  %1170 = vmatmul.mubr.bf16.gmra.mxu0 %v602
  %v1171 = vpop.f32.mrf.mxu0
  %v1172 = vadd.f32 %v186, %v1171
  %v1173 = vpop.f32.mrf.mxu0
  %v1174 = vpop.f32.mrf.mxu0
  %v1175 = vadd.f32 %v186, %v1174
  %v1176 = vpop.f32.mrf.mxu0
  %1177 = vmatprep.mubr.bf16.mxu0 %v874
  %1178 = vmatmul.mubr.bf16.gmra.mxu0 %v604
  %v1179 = vpop.f32.mrf.mxu0
  %v1180 = vadd.f32 %v186, %v1179
  %v1181 = vpop.f32.mrf.mxu0
  %v1182 = vpop.f32.mrf.mxu0
  %v1183 = vadd.f32 %v186, %v1182
  %v1184 = vpop.f32.mrf.mxu0
  %1185 = vmatprep.mubr.bf16.mxu0 %v877
  %1186 = vmatmul.mubr.bf16.gmra.mxu0 %v606
  %v1187 = vpop.f32.mrf.mxu0
  %v1188 = vadd.f32 %v186, %v1187
  %v1189 = vpop.f32.mrf.mxu0
  %v1190 = vpop.f32.mrf.mxu0
  %v1191 = vadd.f32 %v186, %v1190
  %v1192 = vpop.f32.mrf.mxu0
  %1193 = vmatprep.mubr.bf16.mxu0 %v880
  %1194 = vmatmul.mubr.bf16.gmra.mxu0 %v608
  %v1195 = vpop.f32.mrf.mxu0
  %v1196 = vadd.f32 %v186, %v1195
  %v1197 = vpop.f32.mrf.mxu0
  %v1198 = vpop.f32.mrf.mxu0
  %v1199 = vadd.f32 %v186, %v1198
  %v1200 = vpop.f32.mrf.mxu0
  %1201 = vmatprep.mubr.bf16.mxu0 %v883
  %1202 = vmatmul.mubr.bf16.gmra.mxu0 %v610
  %v1203 = vpop.f32.mrf.mxu0
  %v1204 = vadd.f32 %v186, %v1203
  %v1205 = vpop.f32.mrf.mxu0
  %v1206 = vpop.f32.mrf.mxu0
  %v1207 = vadd.f32 %v186, %v1206
  %v1208 = vpop.f32.mrf.mxu0
  %1209 = vmatprep.mubr.bf16.mxu0 %v886
  %1210 = vmatmul.mubr.bf16.gmra.mxu0 %v612
  %v1211 = vpop.f32.mrf.mxu0
  %v1212 = vadd.f32 %v186, %v1211
  %v1213 = vpop.f32.mrf.mxu0
  %v1214 = vpop.f32.mrf.mxu0
  %v1215 = vadd.f32 %v186, %v1214
  %v1216 = vpop.f32.mrf.mxu0
  %1217 = vmatprep.mubr.bf16.mxu0 %v889
  %1218 = vmatmul.mubr.bf16.gmra.mxu0 %v614
  %v1219 = vpop.f32.mrf.mxu0
  %v1220 = vadd.f32 %v186, %v1219
  %v1221 = vpop.f32.mrf.mxu0
  %v1222 = vpop.f32.mrf.mxu0
  %v1223 = vadd.f32 %v186, %v1222
  %v1224 = vpop.f32.mrf.mxu0
  %1225 = vmatprep.mubr.bf16.mxu0 %v892
  %1226 = vmatmul.mubr.bf16.gmra.mxu0 %v616
  %v1227 = vpop.f32.mrf.mxu0
  %v1228 = vadd.f32 %v186, %v1227
  %v1229 = vpop.f32.mrf.mxu0
  %v1230 = vpop.f32.mrf.mxu0
  %v1231 = vadd.f32 %v186, %v1230
  %v1232 = vpop.f32.mrf.mxu0
  %1233 = vmatprep.mubr.bf16.mxu0 %v895
  %1234 = vmatmul.mubr.bf16.gmra.mxu0 %v618
  %v1235 = vpop.f32.mrf.mxu0
  %v1236 = vadd.f32 %v186, %v1235
  %v1237 = vpop.f32.mrf.mxu0
  %v1238 = vpop.f32.mrf.mxu0
  %v1239 = vadd.f32 %v186, %v1238
  %v1240 = vpop.f32.mrf.mxu0
  %1241 = vmatprep.mubr.bf16.mxu0 %v898
  %1242 = vmatmul.mubr.bf16.gmra.mxu0 %v620
  %v1243 = vpop.f32.mrf.mxu0
  %v1244 = vadd.f32 %v186, %v1243
  %v1245 = vpop.f32.mrf.mxu0
  %v1246 = vpop.f32.mrf.mxu0
  %v1247 = vadd.f32 %v186, %v1246
  %v1248 = vpop.f32.mrf.mxu0
  %1249 = vmatprep.mubr.bf16.mxu0 %v901
  %1250 = vmatmul.mubr.bf16.gmra.mxu0 %v622
  %v1251 = vpop.f32.mrf.mxu0
  %v1252 = vadd.f32 %v186, %v1251
  %v1253 = vpop.f32.mrf.mxu0
  %v1254 = vpop.f32.mrf.mxu0
  %v1255 = vadd.f32 %v186, %v1254
  %v1256 = vpop.f32.mrf.mxu0
  %1257 = vmatprep.mubr.bf16.mxu0 %v904
  %1258 = vmatmul.mubr.bf16.gmra.mxu0 %v624
  %v1259 = vpop.f32.mrf.mxu0
  %v1260 = vadd.f32 %v186, %v1259
  %v1261 = vpop.f32.mrf.mxu0
  %v1262 = vpop.f32.mrf.mxu0
  %v1263 = vadd.f32 %v186, %v1262
  %v1264 = vpop.f32.mrf.mxu0
  %1265 = vmatprep.mubr.bf16.mxu0 %v907
  %1266 = vmatmul.mubr.bf16.gmra.mxu0 %v626
  %v1267 = vpop.f32.mrf.mxu0
  %v1268 = vadd.f32 %v186, %v1267
  %v1269 = vpop.f32.mrf.mxu0
  %v1270 = vpop.f32.mrf.mxu0
  %v1271 = vadd.f32 %v186, %v1270
  %v1272 = vpop.f32.mrf.mxu0
  %1273 = vmatprep.mubr.bf16.mxu0 %v910
  %1274 = vmatmul.mubr.bf16.gmra.mxu0 %v628
  %v1275 = vpop.f32.mrf.mxu0
  %v1276 = vadd.f32 %v186, %v1275
  %v1277 = vpop.f32.mrf.mxu0
  %v1278 = vpop.f32.mrf.mxu0
  %v1279 = vadd.f32 %v186, %v1278
  %v1280 = vpop.f32.mrf.mxu0
  %1281 = vmatprep.mubr.bf16.mxu0 %v913
  %1282 = vmatmul.mubr.bf16.gmra.mxu0 %v630
  %v1283 = vpop.f32.mrf.mxu0
  %v1284 = vadd.f32 %v186, %v1283
  %v1285 = vpop.f32.mrf.mxu0
  %v1286 = vpop.f32.mrf.mxu0
  %v1287 = vadd.f32 %v186, %v1286
  %v1288 = vpop.f32.mrf.mxu0
  %1289 = vmatprep.mubr.bf16.mxu0 %v916
  %1290 = vmatmul.mubr.bf16.gmra.mxu0 %v632
  %v1291 = vpop.f32.mrf.mxu0
  %v1292 = vadd.f32 %v186, %v1291
  %v1293 = vpop.f32.mrf.mxu0
  %v1294 = vpop.f32.mrf.mxu0
  %v1295 = vadd.f32 %v186, %v1294
  %v1296 = vpop.f32.mrf.mxu0
  %1297 = vmatprep.mubr.bf16.mxu0 %v919
  %1298 = vmatmul.mubr.bf16.gmra.mxu0 %v634
  %v1299 = vpop.f32.mrf.mxu0
  %v1300 = vadd.f32 %v186, %v1299
  %v1301 = vpop.f32.mrf.mxu0
  %v1302 = vpop.f32.mrf.mxu0
  %v1303 = vadd.f32 %v186, %v1302
  %v1304 = vpop.f32.mrf.mxu0
  %1305 = vmatprep.mubr.bf16.mxu0 %v922
  %1306 = vmatmul.mubr.bf16.gmra.mxu0 %v636
  %v1307 = vpop.f32.mrf.mxu0
  %v1308 = vadd.f32 %v186, %v1307
  %v1309 = vpop.f32.mrf.mxu0
  %v1310 = vpop.f32.mrf.mxu0
  %v1311 = vadd.f32 %v186, %v1310
  %v1312 = vpop.f32.mrf.mxu0
  %1313 = vmatprep.mubr.bf16.mxu0 %v925
  %1314 = vmatmul.mubr.bf16.gmra.mxu0 %v638
  %v1315 = vpop.f32.mrf.mxu0
  %v1316 = vadd.f32 %v186, %v1315
  %v1317 = vpop.f32.mrf.mxu0
  %v1318 = vpop.f32.mrf.mxu0
  %v1319 = vadd.f32 %v186, %v1318
  %v1320 = vpop.f32.mrf.mxu0
  %1321 = vmatprep.mubr.bf16.mxu0 %v928
  %1322 = vmatmul.mubr.bf16.gmra.mxu0 %v640
  %v1323 = vpop.f32.mrf.mxu0
  %v1324 = vadd.f32 %v186, %v1323
  %v1325 = vpop.f32.mrf.mxu0
  %v1326 = vpop.f32.mrf.mxu0
  %v1327 = vadd.f32 %v186, %v1326
  %v1328 = vpop.f32.mrf.mxu0
  %1329 = vmatprep.mubr.bf16.mxu0 %v931
  %1330 = vmatmul.mubr.bf16.gmra.mxu0 %v642
  %v1331 = vpop.f32.mrf.mxu0
  %v1332 = vadd.f32 %v186, %v1331
  %v1333 = vpop.f32.mrf.mxu0
  %v1334 = vpop.f32.mrf.mxu0
  %v1335 = vadd.f32 %v186, %v1334
  %v1336 = vpop.f32.mrf.mxu0
  %1337 = vmatprep.mubr.bf16.mxu0 %v934
  %1338 = vmatmul.mubr.bf16.gmra.mxu0 %v644
  %v1339 = vpop.f32.mrf.mxu0
  %v1340 = vadd.f32 %v186, %v1339
  %v1341 = vpop.f32.mrf.mxu0
  %v1342 = vpop.f32.mrf.mxu0
  %v1343 = vadd.f32 %v186, %v1342
  %v1344 = vpop.f32.mrf.mxu0
  %1345 = vmatprep.mubr.bf16.mxu0 %v937
  %1346 = vmatmul.mubr.bf16.gmra.mxu0 %v646
  %v1347 = vpop.f32.mrf.mxu0
  %v1348 = vadd.f32 %v186, %v1347
  %v1349 = vpop.f32.mrf.mxu0
  %v1350 = vpop.f32.mrf.mxu0
  %v1351 = vadd.f32 %v186, %v1350
  %v1352 = vpop.f32.mrf.mxu0
  %1353 = vmatprep.mubr.bf16.mxu0 %v940
  %1354 = vmatmul.mubr.bf16.gmra.mxu0 %v648
  %v1355 = vpop.f32.mrf.mxu0
  %v1356 = vadd.f32 %v186, %v1355
  %v1357 = vpop.f32.mrf.mxu0
  %v1358 = vpop.f32.mrf.mxu0
  %v1359 = vadd.f32 %v186, %v1358
  %v1360 = vpop.f32.mrf.mxu0
  %1361 = vmatprep.mubr.bf16.mxu0 %v943
  %1362 = vmatmul.mubr.bf16.gmra.mxu0 %v650
  %v1363 = vpop.f32.mrf.mxu0
  %v1364 = vadd.f32 %v186, %v1363
  %v1365 = vpop.f32.mrf.mxu0
  %v1366 = vpop.f32.mrf.mxu0
  %v1367 = vadd.f32 %v186, %v1366
  %v1368 = vpop.f32.mrf.mxu0
  %1369 = vmatprep.mubr.bf16.mxu0 %v946
  %1370 = vmatmul.mubr.bf16.gmra.mxu0 %v652
  %v1371 = vpop.f32.mrf.mxu0
  %v1372 = vadd.f32 %v186, %v1371
  %v1373 = vpop.f32.mrf.mxu0
  %v1374 = vpop.f32.mrf.mxu0
  %v1375 = vadd.f32 %v186, %v1374
  %v1376 = vpop.f32.mrf.mxu0
  %1377 = vmatprep.mubr.bf16.mxu0 %v949
  %1378 = vmatmul.mubr.bf16.gmra.mxu0 %v654
  %v1379 = vpop.f32.mrf.mxu0
  %v1380 = vadd.f32 %v186, %v1379
  %v1381 = vpop.f32.mrf.mxu0
  %v1382 = vpop.f32.mrf.mxu0
  %v1383 = vadd.f32 %v186, %v1382
  %v1384 = vpop.f32.mrf.mxu0
  %1385 = vmatprep.mubr.bf16.mxu0 %v952
  %1386 = vmatmul.mubr.bf16.gmra.mxu0 %v656
  %v1387 = vpop.f32.mrf.mxu0
  %v1388 = vadd.f32 %v186, %v1387
  %v1389 = vpop.f32.mrf.mxu0
  %v1390 = vpop.f32.mrf.mxu0
  %v1391 = vadd.f32 %v186, %v1390
  %v1392 = vpop.f32.mrf.mxu0
  %1393 = vmatprep.mubr.bf16.mxu0 %v955
  %1394 = vmatmul.mubr.bf16.gmra.mxu0 %v658
  %v1395 = vpop.f32.mrf.mxu0
  %v1396 = vadd.f32 %v186, %v1395
  %v1397 = vpop.f32.mrf.mxu0
  %v1398 = vpop.f32.mrf.mxu0
  %v1399 = vadd.f32 %v186, %v1398
  %v1400 = vpop.f32.mrf.mxu0
  %1401 = vmatprep.mubr.bf16.mxu0 %v958
  %1402 = vmatmul.mubr.bf16.gmra.mxu0 %v660
  %v1403 = vpop.f32.mrf.mxu0
  %v1404 = vadd.f32 %v186, %v1403
  %v1405 = vpop.f32.mrf.mxu0
  %v1406 = vpop.f32.mrf.mxu0
  %v1407 = vadd.f32 %v186, %v1406
  %v1408 = vpop.f32.mrf.mxu0
  %1409 = vmatprep.mubr.bf16.mxu0 %v961
  %1410 = vmatmul.mubr.bf16.gmra.mxu0 %v662
  %v1411 = vpop.f32.mrf.mxu0
  %v1412 = vadd.f32 %v186, %v1411
  %v1413 = vpop.f32.mrf.mxu0
  %v1414 = vpop.f32.mrf.mxu0
  %v1415 = vadd.f32 %v186, %v1414
  %v1416 = vpop.f32.mrf.mxu0
  %1417 = vmatprep.mubr.bf16.mxu0 %v964
  %1418 = vmatmul.mubr.bf16.gmra.mxu0 %v664
  %v1419 = vpop.f32.mrf.mxu0
  %v1420 = vadd.f32 %v186, %v1419
  %v1421 = vpop.f32.mrf.mxu0
  %v1422 = vpop.f32.mrf.mxu0
  %v1423 = vadd.f32 %v186, %v1422
  %v1424 = vpop.f32.mrf.mxu0
  %1425 = vmatprep.mubr.bf16.mxu0 %v967
  %1426 = vmatmul.mubr.bf16.gmra.mxu0 %v666
  %v1427 = vpop.f32.mrf.mxu0
  %v1428 = vadd.f32 %v186, %v1427
  %v1429 = vpop.f32.mrf.mxu0
  %v1430 = vpop.f32.mrf.mxu0
  %v1431 = vadd.f32 %v186, %v1430
  %v1432 = vpop.f32.mrf.mxu0
  %1433 = vmatprep.mubr.bf16.mxu0 %v970
  %1434 = vmatmul.mubr.bf16.gmra.mxu0 %v668
  %v1435 = vpop.f32.mrf.mxu0
  %v1436 = vadd.f32 %v186, %v1435
  %v1437 = vpop.f32.mrf.mxu0
  %v1438 = vpop.f32.mrf.mxu0
  %v1439 = vadd.f32 %v186, %v1438
  %v1440 = vpop.f32.mrf.mxu0
  %1441 = vmatprep.mubr.bf16.mxu0 %v973
  %1442 = vmatmul.mubr.bf16.gmra.mxu0 %v670
  %v1443 = vpop.f32.mrf.mxu0
  %v1444 = vadd.f32 %v186, %v1443
  %v1445 = vpop.f32.mrf.mxu0
  %v1446 = vpop.f32.mrf.mxu0
  %v1447 = vadd.f32 %v186, %v1446
  %v1448 = vpop.f32.mrf.mxu0
  %1449 = vmatprep.mubr.bf16.mxu0 %v976
  %1450 = vmatmul.mubr.bf16.gmra.mxu0 %v672
  %v1451 = vpop.f32.mrf.mxu0
  %v1452 = vadd.f32 %v186, %v1451
  %v1453 = vpop.f32.mrf.mxu0
  %v1454 = vpop.f32.mrf.mxu0
  %v1455 = vadd.f32 %v186, %v1454
  %v1456 = vpop.f32.mrf.mxu0
  %1457 = vmatprep.mubr.bf16.mxu0 %v979
  %1458 = vmatmul.mubr.bf16.gmra.mxu0 %v674
  %v1459 = vpop.f32.mrf.mxu0
  %v1460 = vadd.f32 %v186, %v1459
  %v1461 = vpop.f32.mrf.mxu0
  %v1462 = vpop.f32.mrf.mxu0
  %v1463 = vadd.f32 %v186, %v1462
  %v1464 = vpop.f32.mrf.mxu0
  %1465 = vmatprep.mubr.bf16.mxu0 %v982
  %1466 = vmatmul.mubr.bf16.gmra.mxu0 %v676
  %v1467 = vpop.f32.mrf.mxu0
  %v1468 = vadd.f32 %v186, %v1467
  %v1469 = vpop.f32.mrf.mxu0
  %v1470 = vpop.f32.mrf.mxu0
  %v1471 = vadd.f32 %v186, %v1470
  %v1472 = vpop.f32.mrf.mxu0
  %1473 = vmatprep.mubr.bf16.mxu0 %v985
  %1474 = vmatmul.mubr.bf16.gmra.mxu0 %v678
  %v1475 = vpop.f32.mrf.mxu0
  %v1476 = vadd.f32 %v186, %v1475
  %v1477 = vpop.f32.mrf.mxu0
  %v1478 = vpop.f32.mrf.mxu0
  %v1479 = vadd.f32 %v186, %v1478
  %v1480 = vpop.f32.mrf.mxu0
  %1481 = vmatprep.mubr.bf16.mxu0 %v988
  %1482 = vmatmul.mubr.bf16.gmra.mxu0 %v680
  %v1483 = vpop.f32.mrf.mxu0
  %v1484 = vadd.f32 %v186, %v1483
  %v1485 = vpop.f32.mrf.mxu0
  %v1486 = vpop.f32.mrf.mxu0
  %v1487 = vadd.f32 %v186, %v1486
  %v1488 = vpop.f32.mrf.mxu0
  %1489 = vmatprep.mubr.bf16.mxu0 %v991
  %1490 = vmatmul.mubr.bf16.gmra.mxu0 %v682
  %v1491 = vpop.f32.mrf.mxu0
  %v1492 = vadd.f32 %v186, %v1491
  %v1493 = vpop.f32.mrf.mxu0
  %v1494 = vpop.f32.mrf.mxu0
  %v1495 = vadd.f32 %v186, %v1494
  %v1496 = vpop.f32.mrf.mxu0
  %1497 = vmatprep.mubr.bf16.mxu0 %v994
  %1498 = vmatmul.mubr.bf16.gmra.mxu0 %v684
  %v1499 = vpop.f32.mrf.mxu0
  %v1500 = vadd.f32 %v186, %v1499
  %v1501 = vpop.f32.mrf.mxu0
  %v1502 = vpop.f32.mrf.mxu0
  %v1503 = vadd.f32 %v186, %v1502
  %v1504 = vpop.f32.mrf.mxu0
  %1505 = vmatprep.mubr.bf16.mxu0 %v997
  %1506 = vmatmul.mubr.bf16.gmra.mxu0 %v686
  %v1507 = vpop.f32.mrf.mxu0
  %v1508 = vadd.f32 %v186, %v1507
  %v1509 = vpop.f32.mrf.mxu0
  %v1510 = vpop.f32.mrf.mxu0
  %v1511 = vadd.f32 %v186, %v1510
  %v1512 = vpop.f32.mrf.mxu0
  %1513 = vmatprep.mubr.bf16.mxu0 %v1000
  %1514 = vmatmul.mubr.bf16.gmra.mxu0 %v688
  %v1515 = vpop.f32.mrf.mxu0
  %v1516 = vadd.f32 %v186, %v1515
  %v1517 = vpop.f32.mrf.mxu0
  %v1518 = vpop.f32.mrf.mxu0
  %v1519 = vadd.f32 %v186, %v1518
  %v1520 = vpop.f32.mrf.mxu0
  %1521 = vmatprep.mubr.bf16.mxu0 %v1003
  %1522 = vmatmul.mubr.bf16.gmra.mxu0 %v690
  %v1523 = vpop.f32.mrf.mxu0
  %v1524 = vadd.f32 %v186, %v1523
  %v1525 = vpop.f32.mrf.mxu0
  %v1526 = vpop.f32.mrf.mxu0
  %v1527 = vadd.f32 %v186, %v1526
  %v1528 = vpop.f32.mrf.mxu0
  %1529 = vmatprep.mubr.bf16.mxu0 %v1006
  %1530 = vmatmul.mubr.bf16.gmra.mxu0 %v692
  %v1531 = vpop.f32.mrf.mxu0
  %v1532 = vadd.f32 %v186, %v1531
  %v1533 = vpop.f32.mrf.mxu0
  %v1534 = vpop.f32.mrf.mxu0
  %v1535 = vadd.f32 %v186, %v1534
  %v1536 = vpop.f32.mrf.mxu0
  %1537 = vmatprep.mubr.bf16.mxu0 %v1009
  %1538 = vmatmul.mubr.bf16.gmra.mxu0 %v694
  %v1539 = vpop.f32.mrf.mxu0
  %v1540 = vadd.f32 %v186, %v1539
  %v1541 = vpop.f32.mrf.mxu0
  %v1542 = vpop.f32.mrf.mxu0
  %v1543 = vadd.f32 %v186, %v1542
  %v1544 = vpop.f32.mrf.mxu0
  %1545 = vmatprep.mubr.bf16.mxu0 %v1012
  %1546 = vmatmul.mubr.bf16.gmra.mxu0 %v696
  %v1547 = vpop.f32.mrf.mxu0
  %v1548 = vadd.f32 %v186, %v1547
  %v1549 = vpop.f32.mrf.mxu0
  %v1550 = vpop.f32.mrf.mxu0
  %v1551 = vadd.f32 %v186, %v1550
  %v1552 = vpop.f32.mrf.mxu0
  %1553 = vmatprep.mubr.bf16.mxu0 %v1015
  %1554 = vmatmul.mubr.bf16.gmra.mxu0 %v698
  %v1555 = vpop.f32.mrf.mxu0
  %v1556 = vadd.f32 %v186, %v1555
  %v1557 = vpop.f32.mrf.mxu0
  %v1558 = vpop.f32.mrf.mxu0
  %v1559 = vadd.f32 %v186, %v1558
  %v1560 = vpop.f32.mrf.mxu0
  %1561 = vdwg.mxu0
  %v1562 = vmul.f32 %v1052, 0.5
  %v1563 = vmul.f32 %v1055, 0.5
  %v1564 = vmul.f32 %v1060, 0.5
  %v1565 = vmul.f32 %v1063, 0.5
  %v1566 = vmul.f32 %v1068, 0.5
  %v1567 = vmul.f32 %v1071, 0.5
  %v1568 = vmul.f32 %v1076, 0.5
  %v1569 = vmul.f32 %v1079, 0.5
  %v1570 = vmul.f32 %v1084, 0.5
  %v1571 = vmul.f32 %v1087, 0.5
  %v1572 = vmul.f32 %v1092, 0.5
  %v1573 = vmul.f32 %v1095, 0.5
  %v1574 = vmul.f32 %v1100, 0.5
  %v1575 = vmul.f32 %v1103, 0.5
  %v1576 = vmul.f32 %v1108, 0.5
  %v1577 = vmul.f32 %v1111, 0.5
  %v1578 = vmul.f32 %v1116, 0.5
  %v1579 = vmul.f32 %v1119, 0.5
  %v1580 = vmul.f32 %v1124, 0.5
  %v1581 = vmul.f32 %v1127, 0.5
  %v1582 = vmul.f32 %v1132, 0.5
  %v1583 = vmul.f32 %v1135, 0.5
  %v1584 = vmul.f32 %v1140, 0.5
  %v1585 = vmul.f32 %v1143, 0.5
  %v1586 = vmul.f32 %v1148, 0.5
  %v1587 = vmul.f32 %v1151, 0.5
  %v1588 = vmul.f32 %v1156, 0.5
  %v1589 = vmul.f32 %v1159, 0.5
  %v1590 = vmul.f32 %v1164, 0.5
  %v1591 = vmul.f32 %v1167, 0.5
  %v1592 = vmul.f32 %v1172, 0.5
  %v1593 = vmul.f32 %v1175, 0.5
  %v1594 = vmul.f32 %v1180, 0.5
  %v1595 = vmul.f32 %v1183, 0.5
  %v1596 = vmul.f32 %v1188, 0.5
  %v1597 = vmul.f32 %v1191, 0.5
  %v1598 = vmul.f32 %v1196, 0.5
  %v1599 = vmul.f32 %v1199, 0.5
  %v1600 = vmul.f32 %v1204, 0.5
  %v1601 = vmul.f32 %v1207, 0.5
  %v1602 = vmul.f32 %v1212, 0.5
  %v1603 = vmul.f32 %v1215, 0.5
  %v1604 = vmul.f32 %v1220, 0.5
  %v1605 = vmul.f32 %v1223, 0.5
  %v1606 = vmul.f32 %v1228, 0.5
  %v1607 = vmul.f32 %v1231, 0.5
  %v1608 = vmul.f32 %v1236, 0.5
  %v1609 = vmul.f32 %v1239, 0.5
  %v1610 = vmul.f32 %v1244, 0.5
  %v1611 = vmul.f32 %v1247, 0.5
  %v1612 = vmul.f32 %v1252, 0.5
  %v1613 = vmul.f32 %v1255, 0.5
  %v1614 = vmul.f32 %v1260, 0.5
  %v1615 = vmul.f32 %v1263, 0.5
  %v1616 = vmul.f32 %v1268, 0.5
  %v1617 = vmul.f32 %v1271, 0.5
  %v1618 = vmul.f32 %v1276, 0.5
  %v1619 = vmul.f32 %v1279, 0.5
  %v1620 = vmul.f32 %v1284, 0.5
  %v1621 = vmul.f32 %v1287, 0.5
  %v1622 = vmul.f32 %v1292, 0.5
  %v1623 = vmul.f32 %v1295, 0.5
  %v1624 = vmul.f32 %v1300, 0.5
  %v1625 = vmul.f32 %v1303, 0.5
  %v1626 = vmul.f32 %v1308, 0.5
  %v1627 = vmul.f32 %v1311, 0.5
  %v1628 = vmul.f32 %v1316, 0.5
  %v1629 = vmul.f32 %v1319, 0.5
  %v1630 = vmul.f32 %v1324, 0.5
  %v1631 = vmul.f32 %v1327, 0.5
  %v1632 = vmul.f32 %v1332, 0.5
  %v1633 = vmul.f32 %v1335, 0.5
  %v1634 = vmul.f32 %v1340, 0.5
  %v1635 = vmul.f32 %v1343, 0.5
  %v1636 = vmul.f32 %v1348, 0.5
  %v1637 = vmul.f32 %v1351, 0.5
  %v1638 = vmul.f32 %v1356, 0.5
  %v1639 = vmul.f32 %v1359, 0.5
  %v1640 = vmul.f32 %v1364, 0.5
  %v1641 = vmul.f32 %v1367, 0.5
  %v1642 = vmul.f32 %v1372, 0.5
  %v1643 = vmul.f32 %v1375, 0.5
  %v1644 = vmul.f32 %v1380, 0.5
  %v1645 = vmul.f32 %v1383, 0.5
  %v1646 = vmul.f32 %v1388, 0.5
  %v1647 = vmul.f32 %v1391, 0.5
  %v1648 = vmul.f32 %v1396, 0.5
  %v1649 = vmul.f32 %v1399, 0.5
  %v1650 = vmul.f32 %v1404, 0.5
  %v1651 = vmul.f32 %v1407, 0.5
  %v1652 = vmul.f32 %v1412, 0.5
  %v1653 = vmul.f32 %v1415, 0.5
  %v1654 = vmul.f32 %v1420, 0.5
  %v1655 = vmul.f32 %v1423, 0.5
  %v1656 = vmul.f32 %v1428, 0.5
  %v1657 = vmul.f32 %v1431, 0.5
  %v1658 = vmul.f32 %v1436, 0.5
  %v1659 = vmul.f32 %v1439, 0.5
  %v1660 = vmul.f32 %v1444, 0.5
  %v1661 = vmul.f32 %v1447, 0.5
  %v1662 = vmul.f32 %v1452, 0.5
  %v1663 = vmul.f32 %v1455, 0.5
  %v1664 = vmul.f32 %v1460, 0.5
  %v1665 = vmul.f32 %v1463, 0.5
  %v1666 = vmul.f32 %v1468, 0.5
  %v1667 = vmul.f32 %v1471, 0.5
  %v1668 = vmul.f32 %v1476, 0.5
  %v1669 = vmul.f32 %v1479, 0.5
  %v1670 = vmul.f32 %v1484, 0.5
  %v1671 = vmul.f32 %v1487, 0.5
  %v1672 = vmul.f32 %v1492, 0.5
  %v1673 = vmul.f32 %v1495, 0.5
  %v1674 = vmul.f32 %v1500, 0.5
  %v1675 = vmul.f32 %v1503, 0.5
  %v1676 = vmul.f32 %v1508, 0.5
  %v1677 = vmul.f32 %v1511, 0.5
  %v1678 = vmul.f32 %v1516, 0.5
  %v1679 = vmul.f32 %v1519, 0.5
  %v1680 = vmul.f32 %v1524, 0.5
  %v1681 = vmul.f32 %v1527, 0.5
  %v1682 = vmul.f32 %v1532, 0.5
  %v1683 = vmul.f32 %v1535, 0.5
  %v1684 = vmul.f32 %v1540, 0.5
  %v1685 = vmul.f32 %v1543, 0.5
  %v1686 = vmul.f32 %v1548, 0.5
  %v1687 = vmul.f32 %v1551, 0.5
  %v1688 = vmul.f32 %v1556, 0.5
  %v1689 = vmul.f32 %v1559, 0.5
  %v1690 = vtanh.pop %v1562
  %v1691 = vtanh.pop %v1563
  %v1692 = vtanh.pop %v1564
  %v1693 = vtanh.pop %v1565
  %v1694 = vtanh.pop %v1566
  %v1695 = vtanh.pop %v1567
  %v1696 = vtanh.pop %v1568
  %v1697 = vtanh.pop %v1569
  %v1698 = vtanh.pop %v1570
  %v1699 = vtanh.pop %v1571
  %v1700 = vtanh.pop %v1572
  %v1701 = vtanh.pop %v1573
  %v1702 = vtanh.pop %v1574
  %v1703 = vtanh.pop %v1575
  %v1704 = vtanh.pop %v1576
  %v1705 = vtanh.pop %v1577
  %v1706 = vtanh.pop %v1578
  %v1707 = vtanh.pop %v1579
  %v1708 = vtanh.pop %v1580
  %v1709 = vtanh.pop %v1581
  %v1710 = vtanh.pop %v1582
  %v1711 = vtanh.pop %v1583
  %v1712 = vtanh.pop %v1584
  %v1713 = vtanh.pop %v1585
  %v1714 = vtanh.pop %v1586
  %v1715 = vtanh.pop %v1587
  %v1716 = vtanh.pop %v1588
  %v1717 = vtanh.pop %v1589
  %v1718 = vtanh.pop %v1590
  %v1719 = vtanh.pop %v1591
  %v1720 = vtanh.pop %v1592
  %v1721 = vtanh.pop %v1593
  %v1722 = vtanh.pop %v1594
  %v1723 = vtanh.pop %v1595
  %v1724 = vtanh.pop %v1596
  %v1725 = vtanh.pop %v1597
  %v1726 = vtanh.pop %v1598
  %v1727 = vtanh.pop %v1599
  %v1728 = vtanh.pop %v1600
  %v1729 = vtanh.pop %v1601
  %v1730 = vtanh.pop %v1602
  %v1731 = vtanh.pop %v1603
  %v1732 = vtanh.pop %v1604
  %v1733 = vtanh.pop %v1605
  %v1734 = vtanh.pop %v1606
  %v1735 = vtanh.pop %v1607
  %v1736 = vtanh.pop %v1608
  %v1737 = vtanh.pop %v1609
  %v1738 = vtanh.pop %v1610
  %v1739 = vtanh.pop %v1611
  %v1740 = vtanh.pop %v1612
  %v1741 = vtanh.pop %v1613
  %v1742 = vtanh.pop %v1614
  %v1743 = vtanh.pop %v1615
  %v1744 = vtanh.pop %v1616
  %v1745 = vtanh.pop %v1617
  %v1746 = vtanh.pop %v1618
  %v1747 = vtanh.pop %v1619
  %v1748 = vtanh.pop %v1620
  %v1749 = vtanh.pop %v1621
  %v1750 = vtanh.pop %v1622
  %v1751 = vtanh.pop %v1623
  %v1752 = vtanh.pop %v1624
  %v1753 = vtanh.pop %v1625
  %v1754 = vtanh.pop %v1626
  %v1755 = vtanh.pop %v1627
  %v1756 = vtanh.pop %v1628
  %v1757 = vtanh.pop %v1629
  %v1758 = vtanh.pop %v1630
  %v1759 = vtanh.pop %v1631
  %v1760 = vtanh.pop %v1632
  %v1761 = vtanh.pop %v1633
  %v1762 = vtanh.pop %v1634
  %v1763 = vtanh.pop %v1635
  %v1764 = vtanh.pop %v1636
  %v1765 = vtanh.pop %v1637
  %v1766 = vtanh.pop %v1638
  %v1767 = vtanh.pop %v1639
  %v1768 = vtanh.pop %v1640
  %v1769 = vtanh.pop %v1641
  %v1770 = vtanh.pop %v1642
  %v1771 = vtanh.pop %v1643
  %v1772 = vtanh.pop %v1644
  %v1773 = vtanh.pop %v1645
  %v1774 = vtanh.pop %v1646
  %v1775 = vtanh.pop %v1647
  %v1776 = vtanh.pop %v1648
  %v1777 = vtanh.pop %v1649
  %v1778 = vtanh.pop %v1650
  %v1779 = vtanh.pop %v1651
  %v1780 = vtanh.pop %v1652
  %v1781 = vtanh.pop %v1653
  %v1782 = vtanh.pop %v1654
  %v1783 = vtanh.pop %v1655
  %v1784 = vtanh.pop %v1656
  %v1785 = vtanh.pop %v1657
  %v1786 = vtanh.pop %v1658
  %v1787 = vtanh.pop %v1659
  %v1788 = vtanh.pop %v1660
  %v1789 = vtanh.pop %v1661
  %v1790 = vtanh.pop %v1662
  %v1791 = vtanh.pop %v1663
  %v1792 = vtanh.pop %v1664
  %v1793 = vtanh.pop %v1665
  %v1794 = vtanh.pop %v1666
  %v1795 = vtanh.pop %v1667
  %v1796 = vtanh.pop %v1668
  %v1797 = vtanh.pop %v1669
  %v1798 = vtanh.pop %v1670
  %v1799 = vtanh.pop %v1671
  %v1800 = vtanh.pop %v1672
  %v1801 = vtanh.pop %v1673
  %v1802 = vtanh.pop %v1674
  %v1803 = vtanh.pop %v1675
  %v1804 = vtanh.pop %v1676
  %v1805 = vtanh.pop %v1677
  %v1806 = vtanh.pop %v1678
  %v1807 = vtanh.pop %v1679
  %v1808 = vtanh.pop %v1680
  %v1809 = vtanh.pop %v1681
  %v1810 = vtanh.pop %v1682
  %v1811 = vtanh.pop %v1683
  %v1812 = vtanh.pop %v1684
  %v1813 = vtanh.pop %v1685
  %v1814 = vtanh.pop %v1686
  %v1815 = vtanh.pop %v1687
  %v1816 = vtanh.pop %v1688
  %v1817 = vtanh.pop %v1689
  %v1818 = vmul.f32 %v1690, 0.5
  %v1819 = vmul.f32 %v1691, 0.5
  %v1820 = vmul.f32 %v1692, 0.5
  %v1821 = vmul.f32 %v1693, 0.5
  %v1822 = vmul.f32 %v1694, 0.5
  %v1823 = vmul.f32 %v1695, 0.5
  %v1824 = vmul.f32 %v1696, 0.5
  %v1825 = vmul.f32 %v1697, 0.5
  %v1826 = vmul.f32 %v1698, 0.5
  %v1827 = vmul.f32 %v1699, 0.5
  %v1828 = vmul.f32 %v1700, 0.5
  %v1829 = vmul.f32 %v1701, 0.5
  %v1830 = vmul.f32 %v1702, 0.5
  %v1831 = vmul.f32 %v1703, 0.5
  %v1832 = vmul.f32 %v1704, 0.5
  %v1833 = vmul.f32 %v1705, 0.5
  %v1834 = vmul.f32 %v1706, 0.5
  %v1835 = vmul.f32 %v1707, 0.5
  %v1836 = vmul.f32 %v1708, 0.5
  %v1837 = vmul.f32 %v1709, 0.5
  %v1838 = vmul.f32 %v1710, 0.5
  %v1839 = vmul.f32 %v1711, 0.5
  %v1840 = vmul.f32 %v1712, 0.5
  %v1841 = vmul.f32 %v1713, 0.5
  %v1842 = vmul.f32 %v1714, 0.5
  %v1843 = vmul.f32 %v1715, 0.5
  %v1844 = vmul.f32 %v1716, 0.5
  %v1845 = vmul.f32 %v1717, 0.5
  %v1846 = vmul.f32 %v1718, 0.5
  %v1847 = vmul.f32 %v1719, 0.5
  %v1848 = vmul.f32 %v1720, 0.5
  %v1849 = vmul.f32 %v1721, 0.5
  %v1850 = vmul.f32 %v1722, 0.5
  %v1851 = vmul.f32 %v1723, 0.5
  %v1852 = vmul.f32 %v1724, 0.5
  %v1853 = vmul.f32 %v1725, 0.5
  %v1854 = vmul.f32 %v1726, 0.5
  %v1855 = vmul.f32 %v1727, 0.5
  %v1856 = vmul.f32 %v1728, 0.5
  %v1857 = vmul.f32 %v1729, 0.5
  %v1858 = vmul.f32 %v1730, 0.5
  %v1859 = vmul.f32 %v1731, 0.5
  %v1860 = vmul.f32 %v1732, 0.5
  %v1861 = vmul.f32 %v1733, 0.5
  %v1862 = vmul.f32 %v1734, 0.5
  %v1863 = vmul.f32 %v1735, 0.5
  %v1864 = vmul.f32 %v1736, 0.5
  %v1865 = vmul.f32 %v1737, 0.5
  %v1866 = vmul.f32 %v1738, 0.5
  %v1867 = vmul.f32 %v1739, 0.5
  %v1868 = vmul.f32 %v1740, 0.5
  %v1869 = vmul.f32 %v1741, 0.5
  %v1870 = vmul.f32 %v1742, 0.5
  %v1871 = vmul.f32 %v1743, 0.5
  %v1872 = vmul.f32 %v1744, 0.5
  %v1873 = vmul.f32 %v1745, 0.5
  %v1874 = vmul.f32 %v1746, 0.5
  %v1875 = vmul.f32 %v1747, 0.5
  %v1876 = vmul.f32 %v1748, 0.5
  %v1877 = vmul.f32 %v1749, 0.5
  %v1878 = vmul.f32 %v1750, 0.5
  %v1879 = vmul.f32 %v1751, 0.5
  %v1880 = vmul.f32 %v1752, 0.5
  %v1881 = vmul.f32 %v1753, 0.5
  %v1882 = vmul.f32 %v1754, 0.5
  %v1883 = vmul.f32 %v1755, 0.5
  %v1884 = vmul.f32 %v1756, 0.5
  %v1885 = vmul.f32 %v1757, 0.5
  %v1886 = vmul.f32 %v1758, 0.5
  %v1887 = vmul.f32 %v1759, 0.5
  %v1888 = vmul.f32 %v1760, 0.5
  %v1889 = vmul.f32 %v1761, 0.5
  %v1890 = vmul.f32 %v1762, 0.5
  %v1891 = vmul.f32 %v1763, 0.5
  %v1892 = vmul.f32 %v1764, 0.5
  %v1893 = vmul.f32 %v1765, 0.5
  %v1894 = vmul.f32 %v1766, 0.5
  %v1895 = vmul.f32 %v1767, 0.5
  %v1896 = vmul.f32 %v1768, 0.5
  %v1897 = vmul.f32 %v1769, 0.5
  %v1898 = vmul.f32 %v1770, 0.5
  %v1899 = vmul.f32 %v1771, 0.5
  %v1900 = vmul.f32 %v1772, 0.5
  %v1901 = vmul.f32 %v1773, 0.5
  %v1902 = vmul.f32 %v1774, 0.5
  %v1903 = vmul.f32 %v1775, 0.5
  %v1904 = vmul.f32 %v1776, 0.5
  %v1905 = vmul.f32 %v1777, 0.5
  %v1906 = vmul.f32 %v1778, 0.5
  %v1907 = vmul.f32 %v1779, 0.5
  %v1908 = vmul.f32 %v1780, 0.5
  %v1909 = vmul.f32 %v1781, 0.5
  %v1910 = vmul.f32 %v1782, 0.5
  %v1911 = vmul.f32 %v1783, 0.5
  %v1912 = vmul.f32 %v1784, 0.5
  %v1913 = vmul.f32 %v1785, 0.5
  %v1914 = vmul.f32 %v1786, 0.5
  %v1915 = vmul.f32 %v1787, 0.5
  %v1916 = vmul.f32 %v1788, 0.5
  %v1917 = vmul.f32 %v1789, 0.5
  %v1918 = vmul.f32 %v1790, 0.5
  %v1919 = vmul.f32 %v1791, 0.5
  %v1920 = vmul.f32 %v1792, 0.5
  %v1921 = vmul.f32 %v1793, 0.5
  %v1922 = vmul.f32 %v1794, 0.5
  %v1923 = vmul.f32 %v1795, 0.5
  %v1924 = vmul.f32 %v1796, 0.5
  %v1925 = vmul.f32 %v1797, 0.5
  %v1926 = vmul.f32 %v1798, 0.5
  %v1927 = vmul.f32 %v1799, 0.5
  %v1928 = vmul.f32 %v1800, 0.5
  %v1929 = vmul.f32 %v1801, 0.5
  %v1930 = vmul.f32 %v1802, 0.5
  %v1931 = vmul.f32 %v1803, 0.5
  %v1932 = vmul.f32 %v1804, 0.5
  %v1933 = vmul.f32 %v1805, 0.5
  %v1934 = vmul.f32 %v1806, 0.5
  %v1935 = vmul.f32 %v1807, 0.5
  %v1936 = vmul.f32 %v1808, 0.5
  %v1937 = vmul.f32 %v1809, 0.5
  %v1938 = vmul.f32 %v1810, 0.5
  %v1939 = vmul.f32 %v1811, 0.5
  %v1940 = vmul.f32 %v1812, 0.5
  %v1941 = vmul.f32 %v1813, 0.5
  %v1942 = vmul.f32 %v1814, 0.5
  %v1943 = vmul.f32 %v1815, 0.5
  %v1944 = vmul.f32 %v1816, 0.5
  %v1945 = vmul.f32 %v1817, 0.5
  %v1946 = vadd.f32 %v1818, 0.5
  %v1947 = vadd.f32 %v1819, 0.5
  %v1948 = vadd.f32 %v1820, 0.5
  %v1949 = vadd.f32 %v1821, 0.5
  %v1950 = vadd.f32 %v1822, 0.5
  %v1951 = vadd.f32 %v1823, 0.5
  %v1952 = vadd.f32 %v1824, 0.5
  %v1953 = vadd.f32 %v1825, 0.5
  %v1954 = vadd.f32 %v1826, 0.5
  %v1955 = vadd.f32 %v1827, 0.5
  %v1956 = vadd.f32 %v1828, 0.5
  %v1957 = vadd.f32 %v1829, 0.5
  %v1958 = vadd.f32 %v1830, 0.5
  %v1959 = vadd.f32 %v1831, 0.5
  %v1960 = vadd.f32 %v1832, 0.5
  %v1961 = vadd.f32 %v1833, 0.5
  %v1962 = vadd.f32 %v1834, 0.5
  %v1963 = vadd.f32 %v1835, 0.5
  %v1964 = vadd.f32 %v1836, 0.5
  %v1965 = vadd.f32 %v1837, 0.5
  %v1966 = vadd.f32 %v1838, 0.5
  %v1967 = vadd.f32 %v1839, 0.5
  %v1968 = vadd.f32 %v1840, 0.5
  %v1969 = vadd.f32 %v1841, 0.5
  %v1970 = vadd.f32 %v1842, 0.5
  %v1971 = vadd.f32 %v1843, 0.5
  %v1972 = vadd.f32 %v1844, 0.5
  %v1973 = vadd.f32 %v1845, 0.5
  %v1974 = vadd.f32 %v1846, 0.5
  %v1975 = vadd.f32 %v1847, 0.5
  %v1976 = vadd.f32 %v1848, 0.5
  %v1977 = vadd.f32 %v1849, 0.5
  %v1978 = vadd.f32 %v1850, 0.5
  %v1979 = vadd.f32 %v1851, 0.5
  %v1980 = vadd.f32 %v1852, 0.5
  %v1981 = vadd.f32 %v1853, 0.5
  %v1982 = vadd.f32 %v1854, 0.5
  %v1983 = vadd.f32 %v1855, 0.5
  %v1984 = vadd.f32 %v1856, 0.5
  %v1985 = vadd.f32 %v1857, 0.5
  %v1986 = vadd.f32 %v1858, 0.5
  %v1987 = vadd.f32 %v1859, 0.5
  %v1988 = vadd.f32 %v1860, 0.5
  %v1989 = vadd.f32 %v1861, 0.5
  %v1990 = vadd.f32 %v1862, 0.5
  %v1991 = vadd.f32 %v1863, 0.5
  %v1992 = vadd.f32 %v1864, 0.5
  %v1993 = vadd.f32 %v1865, 0.5
  %v1994 = vadd.f32 %v1866, 0.5
  %v1995 = vadd.f32 %v1867, 0.5
  %v1996 = vadd.f32 %v1868, 0.5
  %v1997 = vadd.f32 %v1869, 0.5
  %v1998 = vadd.f32 %v1870, 0.5
  %v1999 = vadd.f32 %v1871, 0.5
  %v2000 = vadd.f32 %v1872, 0.5
  %v2001 = vadd.f32 %v1873, 0.5
  %v2002 = vadd.f32 %v1874, 0.5
  %v2003 = vadd.f32 %v1875, 0.5
  %v2004 = vadd.f32 %v1876, 0.5
  %v2005 = vadd.f32 %v1877, 0.5
  %v2006 = vadd.f32 %v1878, 0.5
  %v2007 = vadd.f32 %v1879, 0.5
  %v2008 = vadd.f32 %v1880, 0.5
  %v2009 = vadd.f32 %v1881, 0.5
  %v2010 = vadd.f32 %v1882, 0.5
  %v2011 = vadd.f32 %v1883, 0.5
  %v2012 = vadd.f32 %v1884, 0.5
  %v2013 = vadd.f32 %v1885, 0.5
  %v2014 = vadd.f32 %v1886, 0.5
  %v2015 = vadd.f32 %v1887, 0.5
  %v2016 = vadd.f32 %v1888, 0.5
  %v2017 = vadd.f32 %v1889, 0.5
  %v2018 = vadd.f32 %v1890, 0.5
  %v2019 = vadd.f32 %v1891, 0.5
  %v2020 = vadd.f32 %v1892, 0.5
  %v2021 = vadd.f32 %v1893, 0.5
  %v2022 = vadd.f32 %v1894, 0.5
  %v2023 = vadd.f32 %v1895, 0.5
  %v2024 = vadd.f32 %v1896, 0.5
  %v2025 = vadd.f32 %v1897, 0.5
  %v2026 = vadd.f32 %v1898, 0.5
  %v2027 = vadd.f32 %v1899, 0.5
  %v2028 = vadd.f32 %v1900, 0.5
  %v2029 = vadd.f32 %v1901, 0.5
  %v2030 = vadd.f32 %v1902, 0.5
  %v2031 = vadd.f32 %v1903, 0.5
  %v2032 = vadd.f32 %v1904, 0.5
  %v2033 = vadd.f32 %v1905, 0.5
  %v2034 = vadd.f32 %v1906, 0.5
  %v2035 = vadd.f32 %v1907, 0.5
  %v2036 = vadd.f32 %v1908, 0.5
  %v2037 = vadd.f32 %v1909, 0.5
  %v2038 = vadd.f32 %v1910, 0.5
  %v2039 = vadd.f32 %v1911, 0.5
  %v2040 = vadd.f32 %v1912, 0.5
  %v2041 = vadd.f32 %v1913, 0.5
  %v2042 = vadd.f32 %v1914, 0.5
  %v2043 = vadd.f32 %v1915, 0.5
  %v2044 = vadd.f32 %v1916, 0.5
  %v2045 = vadd.f32 %v1917, 0.5
  %v2046 = vadd.f32 %v1918, 0.5
  %v2047 = vadd.f32 %v1919, 0.5
  %v2048 = vadd.f32 %v1920, 0.5
  %v2049 = vadd.f32 %v1921, 0.5
  %v2050 = vadd.f32 %v1922, 0.5
  %v2051 = vadd.f32 %v1923, 0.5
  %v2052 = vadd.f32 %v1924, 0.5
  %v2053 = vadd.f32 %v1925, 0.5
  %v2054 = vadd.f32 %v1926, 0.5
  %v2055 = vadd.f32 %v1927, 0.5
  %v2056 = vadd.f32 %v1928, 0.5
  %v2057 = vadd.f32 %v1929, 0.5
  %v2058 = vadd.f32 %v1930, 0.5
  %v2059 = vadd.f32 %v1931, 0.5
  %v2060 = vadd.f32 %v1932, 0.5
  %v2061 = vadd.f32 %v1933, 0.5
  %v2062 = vadd.f32 %v1934, 0.5
  %v2063 = vadd.f32 %v1935, 0.5
  %v2064 = vadd.f32 %v1936, 0.5
  %v2065 = vadd.f32 %v1937, 0.5
  %v2066 = vadd.f32 %v1938, 0.5
  %v2067 = vadd.f32 %v1939, 0.5
  %v2068 = vadd.f32 %v1940, 0.5
  %v2069 = vadd.f32 %v1941, 0.5
  %v2070 = vadd.f32 %v1942, 0.5
  %v2071 = vadd.f32 %v1943, 0.5
  %v2072 = vadd.f32 %v1944, 0.5
  %v2073 = vadd.f32 %v1945, 0.5
  %v2074 = vadd.f32 %v1946, %v1978
  %v2075 = vadd.f32 %v1947, %v1979
  %v2076 = vadd.f32 %v1948, %v1980
  %v2077 = vadd.f32 %v1949, %v1981
  %v2078 = vadd.f32 %v1950, %v1982
  %v2079 = vadd.f32 %v1951, %v1983
  %v2080 = vadd.f32 %v1952, %v1984
  %v2081 = vadd.f32 %v1953, %v1985
  %v2082 = vadd.f32 %v1954, %v1986
  %v2083 = vadd.f32 %v1955, %v1987
  %v2084 = vadd.f32 %v1956, %v1988
  %v2085 = vadd.f32 %v1957, %v1989
  %v2086 = vadd.f32 %v1958, %v1990
  %v2087 = vadd.f32 %v1959, %v1991
  %v2088 = vadd.f32 %v1960, %v1992
  %v2089 = vadd.f32 %v1961, %v1993
  %v2090 = vadd.f32 %v1962, %v1994
  %v2091 = vadd.f32 %v1963, %v1995
  %v2092 = vadd.f32 %v1964, %v1996
  %v2093 = vadd.f32 %v1965, %v1997
  %v2094 = vadd.f32 %v1966, %v1998
  %v2095 = vadd.f32 %v1967, %v1999
  %v2096 = vadd.f32 %v1968, %v2000
  %v2097 = vadd.f32 %v1969, %v2001
  %v2098 = vadd.f32 %v1970, %v2002
  %v2099 = vadd.f32 %v1971, %v2003
  %v2100 = vadd.f32 %v1972, %v2004
  %v2101 = vadd.f32 %v1973, %v2005
  %v2102 = vadd.f32 %v1974, %v2006
  %v2103 = vadd.f32 %v1975, %v2007
  %v2104 = vadd.f32 %v1976, %v2008
  %v2105 = vadd.f32 %v1977, %v2009
  %v2106 = vadd.f32 %v2074, %v2010
  %v2107 = vadd.f32 %v2075, %v2011
  %v2108 = vadd.f32 %v2076, %v2012
  %v2109 = vadd.f32 %v2077, %v2013
  %v2110 = vadd.f32 %v2078, %v2014
  %v2111 = vadd.f32 %v2079, %v2015
  %v2112 = vadd.f32 %v2080, %v2016
  %v2113 = vadd.f32 %v2081, %v2017
  %v2114 = vadd.f32 %v2082, %v2018
  %v2115 = vadd.f32 %v2083, %v2019
  %v2116 = vadd.f32 %v2084, %v2020
  %v2117 = vadd.f32 %v2085, %v2021
  %v2118 = vadd.f32 %v2086, %v2022
  %v2119 = vadd.f32 %v2087, %v2023
  %v2120 = vadd.f32 %v2088, %v2024
  %v2121 = vadd.f32 %v2089, %v2025
  %v2122 = vadd.f32 %v2090, %v2026
  %v2123 = vadd.f32 %v2091, %v2027
  %v2124 = vadd.f32 %v2092, %v2028
  %v2125 = vadd.f32 %v2093, %v2029
  %v2126 = vadd.f32 %v2094, %v2030
  %v2127 = vadd.f32 %v2095, %v2031
  %v2128 = vadd.f32 %v2096, %v2032
  %v2129 = vadd.f32 %v2097, %v2033
  %v2130 = vadd.f32 %v2098, %v2034
  %v2131 = vadd.f32 %v2099, %v2035
  %v2132 = vadd.f32 %v2100, %v2036
  %v2133 = vadd.f32 %v2101, %v2037
  %v2134 = vadd.f32 %v2102, %v2038
  %v2135 = vadd.f32 %v2103, %v2039
  %v2136 = vadd.f32 %v2104, %v2040
  %v2137 = vadd.f32 %v2105, %v2041
  %v2138 = vadd.f32 %v2106, %v2042
  %v2139 = vadd.f32 %v2107, %v2043
  %v2140 = vadd.f32 %v2108, %v2044
  %v2141 = vadd.f32 %v2109, %v2045
  %v2142 = vadd.f32 %v2110, %v2046
  %v2143 = vadd.f32 %v2111, %v2047
  %v2144 = vadd.f32 %v2112, %v2048
  %v2145 = vadd.f32 %v2113, %v2049
  %v2146 = vadd.f32 %v2114, %v2050
  %v2147 = vadd.f32 %v2115, %v2051
  %v2148 = vadd.f32 %v2116, %v2052
  %v2149 = vadd.f32 %v2117, %v2053
  %v2150 = vadd.f32 %v2118, %v2054
  %v2151 = vadd.f32 %v2119, %v2055
  %v2152 = vadd.f32 %v2120, %v2056
  %v2153 = vadd.f32 %v2121, %v2057
  %v2154 = vadd.f32 %v2122, %v2058
  %v2155 = vadd.f32 %v2123, %v2059
  %v2156 = vadd.f32 %v2124, %v2060
  %v2157 = vadd.f32 %v2125, %v2061
  %v2158 = vadd.f32 %v2126, %v2062
  %v2159 = vadd.f32 %v2127, %v2063
  %v2160 = vadd.f32 %v2128, %v2064
  %v2161 = vadd.f32 %v2129, %v2065
  %v2162 = vadd.f32 %v2130, %v2066
  %v2163 = vadd.f32 %v2131, %v2067
  %v2164 = vadd.f32 %v2132, %v2068
  %v2165 = vadd.f32 %v2133, %v2069
  %v2166 = vadd.f32 %v2134, %v2070
  %v2167 = vadd.f32 %v2135, %v2071
  %v2168 = vadd.f32 %v2136, %v2072
  %v2169 = vadd.f32 %v2137, %v2073
  %v2170 = vmul.f32 %v2138, 0.25
  %v2171 = vmul.f32 %v2139, 0.25
  %v2172 = vmul.f32 %v2140, 0.25
  %v2173 = vmul.f32 %v2141, 0.25
  %v2174 = vmul.f32 %v2142, 0.25
  %v2175 = vmul.f32 %v2143, 0.25
  %v2176 = vmul.f32 %v2144, 0.25
  %v2177 = vmul.f32 %v2145, 0.25
  %v2178 = vmul.f32 %v2146, 0.25
  %v2179 = vmul.f32 %v2147, 0.25
  %v2180 = vmul.f32 %v2148, 0.25
  %v2181 = vmul.f32 %v2149, 0.25
  %v2182 = vmul.f32 %v2150, 0.25
  %v2183 = vmul.f32 %v2151, 0.25
  %v2184 = vmul.f32 %v2152, 0.25
  %v2185 = vmul.f32 %v2153, 0.25
  %v2186 = vmul.f32 %v2154, 0.25
  %v2187 = vmul.f32 %v2155, 0.25
  %v2188 = vmul.f32 %v2156, 0.25
  %v2189 = vmul.f32 %v2157, 0.25
  %v2190 = vmul.f32 %v2158, 0.25
  %v2191 = vmul.f32 %v2159, 0.25
  %v2192 = vmul.f32 %v2160, 0.25
  %v2193 = vmul.f32 %v2161, 0.25
  %v2194 = vmul.f32 %v2162, 0.25
  %v2195 = vmul.f32 %v2163, 0.25
  %v2196 = vmul.f32 %v2164, 0.25
  %v2197 = vmul.f32 %v2165, 0.25
  %v2198 = vmul.f32 %v2166, 0.25
  %v2199 = vmul.f32 %v2167, 0.25
  %v2200 = vmul.f32 %v2168, 0.25
  %v2201 = vmul.f32 %v2169, 0.25
  %v2202 = vpack.c.bf16 %v2171, %v2170
  %v2203 = vpack.c.bf16 %v2173, %v2172
  %v2204 = vpack.c.bf16 %v2175, %v2174
  %v2205 = vpack.c.bf16 %v2177, %v2176
  %v2206 = vpack.c.bf16 %v2179, %v2178
  %v2207 = vpack.c.bf16 %v2181, %v2180
  %v2208 = vpack.c.bf16 %v2183, %v2182
  %v2209 = vpack.c.bf16 %v2185, %v2184
  %v2210 = vpack.c.bf16 %v2187, %v2186
  %v2211 = vpack.c.bf16 %v2189, %v2188
  %v2212 = vpack.c.bf16 %v2191, %v2190
  %v2213 = vpack.c.bf16 %v2193, %v2192
  %v2214 = vpack.c.bf16 %v2195, %v2194
  %v2215 = vpack.c.bf16 %v2197, %v2196
  %v2216 = vpack.c.bf16 %v2199, %v2198
  %v2217 = vpack.c.bf16 %v2201, %v2200
  %v2218 = vld [vmem:[%s3] sm:$0xf]
  %v2219 = vld [vmem:[%s3 + $0x4] sm:$0xf]
  %v2220 = vld [vmem:[%s3 + $0x8] sm:$0xf]
  %v2221 = vld [vmem:[%s3 + $0xc] sm:$0xf]
  %v2222 = vld [vmem:[%s3 + $0x10] sm:$0xf]
  %v2223 = vld [vmem:[%s3 + $0x14] sm:$0xf]
  %v2224 = vld [vmem:[%s3 + $0x18] sm:$0xf]
  %v2225 = vld [vmem:[%s3 + $0x1c] sm:$0xf]
  %v2226 = vld [vmem:[%s3 + $0x20] sm:$0xf]
  %v2227 = vld [vmem:[%s3 + $0x24] sm:$0xf]
  %v2228 = vld [vmem:[%s3 + $0x28] sm:$0xf]
  %v2229 = vld [vmem:[%s3 + $0x2c] sm:$0xf]
  %v2230 = vld [vmem:[%s3 + $0x30] sm:$0xf]
  %v2231 = vld [vmem:[%s3 + $0x34] sm:$0xf]
  %v2232 = vld [vmem:[%s3 + $0x38] sm:$0xf]
  %v2233 = vld [vmem:[%s3 + $0x3c] sm:$0xf]
  %s2234 = scalar_lea.vmem %s3, 64
  %v2235 = vld [vmem:[%s2234] sm:$0xf]
  %v2236 = vld [vmem:[%s2234 + $0x4] sm:$0xf]
  %v2237 = vld [vmem:[%s2234 + $0x8] sm:$0xf]
  %v2238 = vld [vmem:[%s2234 + $0xc] sm:$0xf]
  %v2239 = vld [vmem:[%s2234 + $0x10] sm:$0xf]
  %v2240 = vld [vmem:[%s2234 + $0x14] sm:$0xf]
  %v2241 = vld [vmem:[%s2234 + $0x18] sm:$0xf]
  %v2242 = vld [vmem:[%s2234 + $0x1c] sm:$0xf]
  %v2243 = vld [vmem:[%s2234 + $0x20] sm:$0xf]
  %v2244 = vld [vmem:[%s2234 + $0x24] sm:$0xf]
  %v2245 = vld [vmem:[%s2234 + $0x28] sm:$0xf]
  %v2246 = vld [vmem:[%s2234 + $0x2c] sm:$0xf]
  %v2247 = vld [vmem:[%s2234 + $0x30] sm:$0xf]
  %v2248 = vld [vmem:[%s2234 + $0x34] sm:$0xf]
  %v2249 = vld [vmem:[%s2234 + $0x38] sm:$0xf]
  %v2250 = vld [vmem:[%s2234 + $0x3c] sm:$0xf]
  %v2267 = vunpack.c.l.b16 %v2235
  %v2268 = vunpack.c.l.b16 %v2236
  %v2269 = vunpack.c.l.b16 %v2237
  %v2270 = vunpack.c.l.b16 %v2238
  %v2271 = vunpack.c.l.b16 %v2239
  %v2272 = vunpack.c.l.b16 %v2240
  %v2273 = vunpack.c.l.b16 %v2241
  %v2274 = vunpack.c.l.b16 %v2242
  %v2275 = vunpack.c.l.b16 %v2243
  %v2276 = vunpack.c.l.b16 %v2244
  %v2277 = vunpack.c.l.b16 %v2245
  %v2278 = vunpack.c.l.b16 %v2246
  %v2279 = vunpack.c.l.b16 %v2247
  %v2280 = vunpack.c.l.b16 %v2248
  %v2281 = vunpack.c.l.b16 %v2249
  %v2282 = vunpack.c.l.b16 %v2250
  %v2283 = vpack.c.b16 %v2268, %v2267
  %v2284 = vpack.c.b16 %v2270, %v2269
  %v2285 = vpack.c.b16 %v2272, %v2271
  %v2286 = vpack.c.b16 %v2274, %v2273
  %v2287 = vpack.c.b16 %v2276, %v2275
  %v2288 = vpack.c.b16 %v2278, %v2277
  %v2289 = vpack.c.b16 %v2280, %v2279
  %v2290 = vpack.c.b16 %v2282, %v2281
  %2299 = vmatprep.subr.bf16.mxu0 0
  %2300 = vmatpush1.bf16.msra.mxu0 %v2290
  %2301 = vmatprep.subr.bf16.mxu0 0
  %2302 = vmatpush1.bf16.msra.mxu0 %v2289
  %2303 = vmatprep.subr.bf16.mxu0 0
  %2304 = vmatpush1.bf16.msra.mxu0 %v2288
  %2305 = vmatprep.subr.bf16.mxu0 0
  %2306 = vmatpush1.bf16.msra.mxu0 %v2287
  %2307 = vmatprep.subr.bf16.mxu0 0
  %2308 = vmatpush1.bf16.msra.mxu0 %v2286
  %2309 = vmatprep.subr.bf16.mxu0 0
  %2310 = vmatpush1.bf16.msra.mxu0 %v2285
  %2311 = vmatprep.subr.bf16.mxu0 0
  %2312 = vmatpush1.bf16.msra.mxu0 %v2284
  %2313 = vmatprep.subr.bf16.mxu0 0
  %2314 = vmatpush1.bf16.msra.mxu0 %v2283
  %2315 = vmatprep.subr.bf16.mxu0 0
  %2316 = vmatpush2.bf16.msra.mxu0 0
  %2317 = vmatprep.subr.bf16.mxu0 0
  %2318 = vmatpush2.bf16.msra.mxu0 0
  %2319 = vmatprep.subr.bf16.mxu0 0
  %2320 = vmatpush2.bf16.msra.mxu0 0
  %2321 = vmatprep.subr.bf16.mxu0 0
  %2322 = vmatpush2.bf16.msra.mxu0 0
  %2323 = vmatprep.subr.bf16.mxu0 0
  %2324 = vmatpush2.bf16.msra.mxu0 0
  %2325 = vmatprep.subr.bf16.mxu0 0
  %2326 = vmatpush2.bf16.msra.mxu0 0
  %2327 = vmatprep.subr.bf16.mxu0 0
  %2328 = vmatpush2.bf16.msra.mxu0 0
  %2329 = vmatprep.subr.bf16.mxu0 0
  %2330 = vmatpush2.bf16.msra.mxu0 0
  %2331 = vmatprep.mubr.bf16.mxu0 0
  %2332 = vmatmul.mubr.bf16.gmra.mxu0 %v2203
  %v2333 = vpop.f32.mrf.mxu0
  %v2334 = vadd.f32 0.0, %v2333
  %v2335 = vpop.f32.mrf.mxu0
  %v2336 = vpop.f32.mrf.mxu0
  %v2337 = vadd.f32 0.0, %v2336
  %v2338 = vpop.f32.mrf.mxu0
  %2339 = vdwg.mxu0
  %v2356 = vunpack.c.l.b16 %v2218
  %v2357 = vunpack.c.l.b16 %v2219
  %v2358 = vunpack.c.l.b16 %v2220
  %v2359 = vunpack.c.l.b16 %v2221
  %v2360 = vunpack.c.l.b16 %v2222
  %v2361 = vunpack.c.l.b16 %v2223
  %v2362 = vunpack.c.l.b16 %v2224
  %v2363 = vunpack.c.l.b16 %v2225
  %v2364 = vunpack.c.l.b16 %v2226
  %v2365 = vunpack.c.l.b16 %v2227
  %v2366 = vunpack.c.l.b16 %v2228
  %v2367 = vunpack.c.l.b16 %v2229
  %v2368 = vunpack.c.l.b16 %v2230
  %v2369 = vunpack.c.l.b16 %v2231
  %v2370 = vunpack.c.l.b16 %v2232
  %v2371 = vunpack.c.l.b16 %v2233
  %v2372 = vpack.c.b16 %v2357, %v2356
  %v2373 = vpack.c.b16 %v2359, %v2358
  %v2374 = vpack.c.b16 %v2361, %v2360
  %v2375 = vpack.c.b16 %v2363, %v2362
  %v2376 = vpack.c.b16 %v2365, %v2364
  %v2377 = vpack.c.b16 %v2367, %v2366
  %v2378 = vpack.c.b16 %v2369, %v2368
  %v2379 = vpack.c.b16 %v2371, %v2370
  %2388 = vmatprep.subr.bf16.mxu0 0
  %2389 = vmatpush1.bf16.msra.mxu0 %v2379
  %2390 = vmatprep.subr.bf16.mxu0 0
  %2391 = vmatpush1.bf16.msra.mxu0 %v2378
  %2392 = vmatprep.subr.bf16.mxu0 0
  %2393 = vmatpush1.bf16.msra.mxu0 %v2377
  %2394 = vmatprep.subr.bf16.mxu0 0
  %2395 = vmatpush1.bf16.msra.mxu0 %v2376
  %2396 = vmatprep.subr.bf16.mxu0 0
  %2397 = vmatpush1.bf16.msra.mxu0 %v2375
  %2398 = vmatprep.subr.bf16.mxu0 0
  %2399 = vmatpush1.bf16.msra.mxu0 %v2374
  %2400 = vmatprep.subr.bf16.mxu0 0
  %2401 = vmatpush1.bf16.msra.mxu0 %v2373
  %2402 = vmatprep.subr.bf16.mxu0 0
  %2403 = vmatpush1.bf16.msra.mxu0 %v2372
  %2404 = vmatprep.subr.bf16.mxu0 0
  %2405 = vmatpush2.bf16.msra.mxu0 0
  %2406 = vmatprep.subr.bf16.mxu0 0
  %2407 = vmatpush2.bf16.msra.mxu0 0
  %2408 = vmatprep.subr.bf16.mxu0 0
  %2409 = vmatpush2.bf16.msra.mxu0 0
  %2410 = vmatprep.subr.bf16.mxu0 0
  %2411 = vmatpush2.bf16.msra.mxu0 0
  %2412 = vmatprep.subr.bf16.mxu0 0
  %2413 = vmatpush2.bf16.msra.mxu0 0
  %2414 = vmatprep.subr.bf16.mxu0 0
  %2415 = vmatpush2.bf16.msra.mxu0 0
  %2416 = vmatprep.subr.bf16.mxu0 0
  %2417 = vmatpush2.bf16.msra.mxu0 0
  %2418 = vmatprep.subr.bf16.mxu0 0
  %2419 = vmatpush2.bf16.msra.mxu0 0
  %2420 = vmatprep.mubr.bf16.mxu0 0
  %2421 = vmatmul.mubr.bf16.gmra.mxu0 %v2202
  %v2422 = vpop.f32.mrf.mxu0
  %v2423 = vadd.f32 %v2334, %v2422
  %v2424 = vpop.f32.mrf.mxu0
  %v2425 = vpop.f32.mrf.mxu0
  %v2426 = vadd.f32 %v2337, %v2425
  %v2427 = vpop.f32.mrf.mxu0
  %2428 = vdwg.mxu0
  %s2429 = scalar_lea.vmem %s3, 128
  %v2430 = vld [vmem:[%s2429] sm:$0xf]
  %v2431 = vld [vmem:[%s2429 + $0x4] sm:$0xf]
  %v2432 = vld [vmem:[%s2429 + $0x8] sm:$0xf]
  %v2433 = vld [vmem:[%s2429 + $0xc] sm:$0xf]
  %v2434 = vld [vmem:[%s2429 + $0x10] sm:$0xf]
  %v2435 = vld [vmem:[%s2429 + $0x14] sm:$0xf]
  %v2436 = vld [vmem:[%s2429 + $0x18] sm:$0xf]
  %v2437 = vld [vmem:[%s2429 + $0x1c] sm:$0xf]
  %v2438 = vld [vmem:[%s2429 + $0x20] sm:$0xf]
  %v2439 = vld [vmem:[%s2429 + $0x24] sm:$0xf]
  %v2440 = vld [vmem:[%s2429 + $0x28] sm:$0xf]
  %v2441 = vld [vmem:[%s2429 + $0x2c] sm:$0xf]
  %v2442 = vld [vmem:[%s2429 + $0x30] sm:$0xf]
  %v2443 = vld [vmem:[%s2429 + $0x34] sm:$0xf]
  %v2444 = vld [vmem:[%s2429 + $0x38] sm:$0xf]
  %v2445 = vld [vmem:[%s2429 + $0x3c] sm:$0xf]
  %v2462 = vunpack.c.l.b16 %v2430
  %v2463 = vunpack.c.l.b16 %v2431
  %v2464 = vunpack.c.l.b16 %v2432
  %v2465 = vunpack.c.l.b16 %v2433
  %v2466 = vunpack.c.l.b16 %v2434
  %v2467 = vunpack.c.l.b16 %v2435
  %v2468 = vunpack.c.l.b16 %v2436
  %v2469 = vunpack.c.l.b16 %v2437
  %v2470 = vunpack.c.l.b16 %v2438
  %v2471 = vunpack.c.l.b16 %v2439
  %v2472 = vunpack.c.l.b16 %v2440
  %v2473 = vunpack.c.l.b16 %v2441
  %v2474 = vunpack.c.l.b16 %v2442
  %v2475 = vunpack.c.l.b16 %v2443
  %v2476 = vunpack.c.l.b16 %v2444
  %v2477 = vunpack.c.l.b16 %v2445
  %v2478 = vpack.c.b16 %v2463, %v2462
  %v2479 = vpack.c.b16 %v2465, %v2464
  %v2480 = vpack.c.b16 %v2467, %v2466
  %v2481 = vpack.c.b16 %v2469, %v2468
  %v2482 = vpack.c.b16 %v2471, %v2470
  %v2483 = vpack.c.b16 %v2473, %v2472
  %v2484 = vpack.c.b16 %v2475, %v2474
  %v2485 = vpack.c.b16 %v2477, %v2476
  %2494 = vmatprep.subr.bf16.mxu0 0
  %2495 = vmatpush1.bf16.msra.mxu0 %v2485
  %2496 = vmatprep.subr.bf16.mxu0 0
  %2497 = vmatpush1.bf16.msra.mxu0 %v2484
  %2498 = vmatprep.subr.bf16.mxu0 0
  %2499 = vmatpush1.bf16.msra.mxu0 %v2483
  %2500 = vmatprep.subr.bf16.mxu0 0
  %2501 = vmatpush1.bf16.msra.mxu0 %v2482
  %2502 = vmatprep.subr.bf16.mxu0 0
  %2503 = vmatpush1.bf16.msra.mxu0 %v2481
  %2504 = vmatprep.subr.bf16.mxu0 0
  %2505 = vmatpush1.bf16.msra.mxu0 %v2480
  %2506 = vmatprep.subr.bf16.mxu0 0
  %2507 = vmatpush1.bf16.msra.mxu0 %v2479
  %2508 = vmatprep.subr.bf16.mxu0 0
  %2509 = vmatpush1.bf16.msra.mxu0 %v2478
  %2510 = vmatprep.subr.bf16.mxu0 0
  %2511 = vmatpush2.bf16.msra.mxu0 0
  %2512 = vmatprep.subr.bf16.mxu0 0
  %2513 = vmatpush2.bf16.msra.mxu0 0
  %2514 = vmatprep.subr.bf16.mxu0 0
  %2515 = vmatpush2.bf16.msra.mxu0 0
  %2516 = vmatprep.subr.bf16.mxu0 0
  %2517 = vmatpush2.bf16.msra.mxu0 0
  %2518 = vmatprep.subr.bf16.mxu0 0
  %2519 = vmatpush2.bf16.msra.mxu0 0
  %2520 = vmatprep.subr.bf16.mxu0 0
  %2521 = vmatpush2.bf16.msra.mxu0 0
  %2522 = vmatprep.subr.bf16.mxu0 0
  %2523 = vmatpush2.bf16.msra.mxu0 0
  %2524 = vmatprep.subr.bf16.mxu0 0
  %2525 = vmatpush2.bf16.msra.mxu0 0
  %2526 = vmatprep.mubr.bf16.mxu0 0
  %2527 = vmatmul.mubr.bf16.gmra.mxu0 %v2204
  %v2528 = vpop.f32.mrf.mxu0
  %v2529 = vadd.f32 0.0, %v2528
  %v2530 = vpop.f32.mrf.mxu0
  %v2531 = vpop.f32.mrf.mxu0
  %v2532 = vadd.f32 0.0, %v2531
  %v2533 = vpop.f32.mrf.mxu0
  %2534 = vdwg.mxu0
  %v2535 = vadd.f32 %v2423, %v2529
  %v2536 = vadd.f32 %v2426, %v2532
  %s2537 = scalar_lea.vmem %s3, 192
  %v2538 = vld [vmem:[%s2537] sm:$0xf]
  %v2539 = vld [vmem:[%s2537 + $0x4] sm:$0xf]
  %v2540 = vld [vmem:[%s2537 + $0x8] sm:$0xf]
  %v2541 = vld [vmem:[%s2537 + $0xc] sm:$0xf]
  %v2542 = vld [vmem:[%s2537 + $0x10] sm:$0xf]
  %v2543 = vld [vmem:[%s2537 + $0x14] sm:$0xf]
  %v2544 = vld [vmem:[%s2537 + $0x18] sm:$0xf]
  %v2545 = vld [vmem:[%s2537 + $0x1c] sm:$0xf]
  %v2546 = vld [vmem:[%s2537 + $0x20] sm:$0xf]
  %v2547 = vld [vmem:[%s2537 + $0x24] sm:$0xf]
  %v2548 = vld [vmem:[%s2537 + $0x28] sm:$0xf]
  %v2549 = vld [vmem:[%s2537 + $0x2c] sm:$0xf]
  %v2550 = vld [vmem:[%s2537 + $0x30] sm:$0xf]
  %v2551 = vld [vmem:[%s2537 + $0x34] sm:$0xf]
  %v2552 = vld [vmem:[%s2537 + $0x38] sm:$0xf]
  %v2553 = vld [vmem:[%s2537 + $0x3c] sm:$0xf]
  %v2570 = vunpack.c.l.b16 %v2538
  %v2571 = vunpack.c.l.b16 %v2539
  %v2572 = vunpack.c.l.b16 %v2540
  %v2573 = vunpack.c.l.b16 %v2541
  %v2574 = vunpack.c.l.b16 %v2542
  %v2575 = vunpack.c.l.b16 %v2543
  %v2576 = vunpack.c.l.b16 %v2544
  %v2577 = vunpack.c.l.b16 %v2545
  %v2578 = vunpack.c.l.b16 %v2546
  %v2579 = vunpack.c.l.b16 %v2547
  %v2580 = vunpack.c.l.b16 %v2548
  %v2581 = vunpack.c.l.b16 %v2549
  %v2582 = vunpack.c.l.b16 %v2550
  %v2583 = vunpack.c.l.b16 %v2551
  %v2584 = vunpack.c.l.b16 %v2552
  %v2585 = vunpack.c.l.b16 %v2553
  %v2586 = vpack.c.b16 %v2571, %v2570
  %v2587 = vpack.c.b16 %v2573, %v2572
  %v2588 = vpack.c.b16 %v2575, %v2574
  %v2589 = vpack.c.b16 %v2577, %v2576
  %v2590 = vpack.c.b16 %v2579, %v2578
  %v2591 = vpack.c.b16 %v2581, %v2580
  %v2592 = vpack.c.b16 %v2583, %v2582
  %v2593 = vpack.c.b16 %v2585, %v2584
  %2602 = vmatprep.subr.bf16.mxu0 0
  %2603 = vmatpush1.bf16.msra.mxu0 %v2593
  %2604 = vmatprep.subr.bf16.mxu0 0
  %2605 = vmatpush1.bf16.msra.mxu0 %v2592
  %2606 = vmatprep.subr.bf16.mxu0 0
  %2607 = vmatpush1.bf16.msra.mxu0 %v2591
  %2608 = vmatprep.subr.bf16.mxu0 0
  %2609 = vmatpush1.bf16.msra.mxu0 %v2590
  %2610 = vmatprep.subr.bf16.mxu0 0
  %2611 = vmatpush1.bf16.msra.mxu0 %v2589
  %2612 = vmatprep.subr.bf16.mxu0 0
  %2613 = vmatpush1.bf16.msra.mxu0 %v2588
  %2614 = vmatprep.subr.bf16.mxu0 0
  %2615 = vmatpush1.bf16.msra.mxu0 %v2587
  %2616 = vmatprep.subr.bf16.mxu0 0
  %2617 = vmatpush1.bf16.msra.mxu0 %v2586
  %2618 = vmatprep.subr.bf16.mxu0 0
  %2619 = vmatpush2.bf16.msra.mxu0 0
  %2620 = vmatprep.subr.bf16.mxu0 0
  %2621 = vmatpush2.bf16.msra.mxu0 0
  %2622 = vmatprep.subr.bf16.mxu0 0
  %2623 = vmatpush2.bf16.msra.mxu0 0
  %2624 = vmatprep.subr.bf16.mxu0 0
  %2625 = vmatpush2.bf16.msra.mxu0 0
  %2626 = vmatprep.subr.bf16.mxu0 0
  %2627 = vmatpush2.bf16.msra.mxu0 0
  %2628 = vmatprep.subr.bf16.mxu0 0
  %2629 = vmatpush2.bf16.msra.mxu0 0
  %2630 = vmatprep.subr.bf16.mxu0 0
  %2631 = vmatpush2.bf16.msra.mxu0 0
  %2632 = vmatprep.subr.bf16.mxu0 0
  %2633 = vmatpush2.bf16.msra.mxu0 0
  %2634 = vmatprep.mubr.bf16.mxu0 0
  %2635 = vmatmul.mubr.bf16.gmra.mxu0 %v2205
  %v2636 = vpop.f32.mrf.mxu0
  %v2637 = vadd.f32 0.0, %v2636
  %v2638 = vpop.f32.mrf.mxu0
  %v2639 = vpop.f32.mrf.mxu0
  %v2640 = vadd.f32 0.0, %v2639
  %v2641 = vpop.f32.mrf.mxu0
  %2642 = vdwg.mxu0
  %v2643 = vadd.f32 %v2535, %v2637
  %v2644 = vadd.f32 %v2536, %v2640
  %s2645 = scalar_lea.vmem %s3, 256
  %v2646 = vld [vmem:[%s2645] sm:$0xf]
  %v2647 = vld [vmem:[%s2645 + $0x4] sm:$0xf]
  %v2648 = vld [vmem:[%s2645 + $0x8] sm:$0xf]
  %v2649 = vld [vmem:[%s2645 + $0xc] sm:$0xf]
  %v2650 = vld [vmem:[%s2645 + $0x10] sm:$0xf]
  %v2651 = vld [vmem:[%s2645 + $0x14] sm:$0xf]
  %v2652 = vld [vmem:[%s2645 + $0x18] sm:$0xf]
  %v2653 = vld [vmem:[%s2645 + $0x1c] sm:$0xf]
  %v2654 = vld [vmem:[%s2645 + $0x20] sm:$0xf]
  %v2655 = vld [vmem:[%s2645 + $0x24] sm:$0xf]
  %v2656 = vld [vmem:[%s2645 + $0x28] sm:$0xf]
  %v2657 = vld [vmem:[%s2645 + $0x2c] sm:$0xf]
  %v2658 = vld [vmem:[%s2645 + $0x30] sm:$0xf]
  %v2659 = vld [vmem:[%s2645 + $0x34] sm:$0xf]
  %v2660 = vld [vmem:[%s2645 + $0x38] sm:$0xf]
  %v2661 = vld [vmem:[%s2645 + $0x3c] sm:$0xf]
  %v2678 = vunpack.c.l.b16 %v2646
  %v2679 = vunpack.c.l.b16 %v2647
  %v2680 = vunpack.c.l.b16 %v2648
  %v2681 = vunpack.c.l.b16 %v2649
  %v2682 = vunpack.c.l.b16 %v2650
  %v2683 = vunpack.c.l.b16 %v2651
  %v2684 = vunpack.c.l.b16 %v2652
  %v2685 = vunpack.c.l.b16 %v2653
  %v2686 = vunpack.c.l.b16 %v2654
  %v2687 = vunpack.c.l.b16 %v2655
  %v2688 = vunpack.c.l.b16 %v2656
  %v2689 = vunpack.c.l.b16 %v2657
  %v2690 = vunpack.c.l.b16 %v2658
  %v2691 = vunpack.c.l.b16 %v2659
  %v2692 = vunpack.c.l.b16 %v2660
  %v2693 = vunpack.c.l.b16 %v2661
  %v2694 = vpack.c.b16 %v2679, %v2678
  %v2695 = vpack.c.b16 %v2681, %v2680
  %v2696 = vpack.c.b16 %v2683, %v2682
  %v2697 = vpack.c.b16 %v2685, %v2684
  %v2698 = vpack.c.b16 %v2687, %v2686
  %v2699 = vpack.c.b16 %v2689, %v2688
  %v2700 = vpack.c.b16 %v2691, %v2690
  %v2701 = vpack.c.b16 %v2693, %v2692
  %2710 = vmatprep.subr.bf16.mxu0 0
  %2711 = vmatpush1.bf16.msra.mxu0 %v2701
  %2712 = vmatprep.subr.bf16.mxu0 0
  %2713 = vmatpush1.bf16.msra.mxu0 %v2700
  %2714 = vmatprep.subr.bf16.mxu0 0
  %2715 = vmatpush1.bf16.msra.mxu0 %v2699
  %2716 = vmatprep.subr.bf16.mxu0 0
  %2717 = vmatpush1.bf16.msra.mxu0 %v2698
  %2718 = vmatprep.subr.bf16.mxu0 0
  %2719 = vmatpush1.bf16.msra.mxu0 %v2697
  %2720 = vmatprep.subr.bf16.mxu0 0
  %2721 = vmatpush1.bf16.msra.mxu0 %v2696
  %2722 = vmatprep.subr.bf16.mxu0 0
  %2723 = vmatpush1.bf16.msra.mxu0 %v2695
  %2724 = vmatprep.subr.bf16.mxu0 0
  %2725 = vmatpush1.bf16.msra.mxu0 %v2694
  %2726 = vmatprep.subr.bf16.mxu0 0
  %2727 = vmatpush2.bf16.msra.mxu0 0
  %2728 = vmatprep.subr.bf16.mxu0 0
  %2729 = vmatpush2.bf16.msra.mxu0 0
  %2730 = vmatprep.subr.bf16.mxu0 0
  %2731 = vmatpush2.bf16.msra.mxu0 0
  %2732 = vmatprep.subr.bf16.mxu0 0
  %2733 = vmatpush2.bf16.msra.mxu0 0
  %2734 = vmatprep.subr.bf16.mxu0 0
  %2735 = vmatpush2.bf16.msra.mxu0 0
  %2736 = vmatprep.subr.bf16.mxu0 0
  %2737 = vmatpush2.bf16.msra.mxu0 0
  %2738 = vmatprep.subr.bf16.mxu0 0
  %2739 = vmatpush2.bf16.msra.mxu0 0
  %2740 = vmatprep.subr.bf16.mxu0 0
  %2741 = vmatpush2.bf16.msra.mxu0 0
  %2742 = vmatprep.mubr.bf16.mxu0 0
  %2743 = vmatmul.mubr.bf16.gmra.mxu0 %v2206
  %v2744 = vpop.f32.mrf.mxu0
  %v2745 = vadd.f32 0.0, %v2744
  %v2746 = vpop.f32.mrf.mxu0
  %v2747 = vpop.f32.mrf.mxu0
  %v2748 = vadd.f32 0.0, %v2747
  %v2749 = vpop.f32.mrf.mxu0
  %2750 = vdwg.mxu0
  %v2751 = vadd.f32 %v2643, %v2745
  %v2752 = vadd.f32 %v2644, %v2748
  %s2753 = scalar_lea.vmem %s3, 320
  %v2754 = vld [vmem:[%s2753] sm:$0xf]
  %v2755 = vld [vmem:[%s2753 + $0x4] sm:$0xf]
  %v2756 = vld [vmem:[%s2753 + $0x8] sm:$0xf]
  %v2757 = vld [vmem:[%s2753 + $0xc] sm:$0xf]
  %v2758 = vld [vmem:[%s2753 + $0x10] sm:$0xf]
  %v2759 = vld [vmem:[%s2753 + $0x14] sm:$0xf]
  %v2760 = vld [vmem:[%s2753 + $0x18] sm:$0xf]
  %v2761 = vld [vmem:[%s2753 + $0x1c] sm:$0xf]
  %v2762 = vld [vmem:[%s2753 + $0x20] sm:$0xf]
  %v2763 = vld [vmem:[%s2753 + $0x24] sm:$0xf]
  %v2764 = vld [vmem:[%s2753 + $0x28] sm:$0xf]
  %v2765 = vld [vmem:[%s2753 + $0x2c] sm:$0xf]
  %v2766 = vld [vmem:[%s2753 + $0x30] sm:$0xf]
  %v2767 = vld [vmem:[%s2753 + $0x34] sm:$0xf]
  %v2768 = vld [vmem:[%s2753 + $0x38] sm:$0xf]
  %v2769 = vld [vmem:[%s2753 + $0x3c] sm:$0xf]
  %v2786 = vunpack.c.l.b16 %v2754
  %v2787 = vunpack.c.l.b16 %v2755
  %v2788 = vunpack.c.l.b16 %v2756
  %v2789 = vunpack.c.l.b16 %v2757
  %v2790 = vunpack.c.l.b16 %v2758
  %v2791 = vunpack.c.l.b16 %v2759
  %v2792 = vunpack.c.l.b16 %v2760
  %v2793 = vunpack.c.l.b16 %v2761
  %v2794 = vunpack.c.l.b16 %v2762
  %v2795 = vunpack.c.l.b16 %v2763
  %v2796 = vunpack.c.l.b16 %v2764
  %v2797 = vunpack.c.l.b16 %v2765
  %v2798 = vunpack.c.l.b16 %v2766
  %v2799 = vunpack.c.l.b16 %v2767
  %v2800 = vunpack.c.l.b16 %v2768
  %v2801 = vunpack.c.l.b16 %v2769
  %v2802 = vpack.c.b16 %v2787, %v2786
  %v2803 = vpack.c.b16 %v2789, %v2788
  %v2804 = vpack.c.b16 %v2791, %v2790
  %v2805 = vpack.c.b16 %v2793, %v2792
  %v2806 = vpack.c.b16 %v2795, %v2794
  %v2807 = vpack.c.b16 %v2797, %v2796
  %v2808 = vpack.c.b16 %v2799, %v2798
  %v2809 = vpack.c.b16 %v2801, %v2800
  %2818 = vmatprep.subr.bf16.mxu0 0
  %2819 = vmatpush1.bf16.msra.mxu0 %v2809
  %2820 = vmatprep.subr.bf16.mxu0 0
  %2821 = vmatpush1.bf16.msra.mxu0 %v2808
  %2822 = vmatprep.subr.bf16.mxu0 0
  %2823 = vmatpush1.bf16.msra.mxu0 %v2807
  %2824 = vmatprep.subr.bf16.mxu0 0
  %2825 = vmatpush1.bf16.msra.mxu0 %v2806
  %2826 = vmatprep.subr.bf16.mxu0 0
  %2827 = vmatpush1.bf16.msra.mxu0 %v2805
  %2828 = vmatprep.subr.bf16.mxu0 0
  %2829 = vmatpush1.bf16.msra.mxu0 %v2804
  %2830 = vmatprep.subr.bf16.mxu0 0
  %2831 = vmatpush1.bf16.msra.mxu0 %v2803
  %2832 = vmatprep.subr.bf16.mxu0 0
  %2833 = vmatpush1.bf16.msra.mxu0 %v2802
  %2834 = vmatprep.subr.bf16.mxu0 0
  %2835 = vmatpush2.bf16.msra.mxu0 0
  %2836 = vmatprep.subr.bf16.mxu0 0
  %2837 = vmatpush2.bf16.msra.mxu0 0
  %2838 = vmatprep.subr.bf16.mxu0 0
  %2839 = vmatpush2.bf16.msra.mxu0 0
  %2840 = vmatprep.subr.bf16.mxu0 0
  %2841 = vmatpush2.bf16.msra.mxu0 0
  %2842 = vmatprep.subr.bf16.mxu0 0
  %2843 = vmatpush2.bf16.msra.mxu0 0
  %2844 = vmatprep.subr.bf16.mxu0 0
  %2845 = vmatpush2.bf16.msra.mxu0 0
  %2846 = vmatprep.subr.bf16.mxu0 0
  %2847 = vmatpush2.bf16.msra.mxu0 0
  %2848 = vmatprep.subr.bf16.mxu0 0
  %2849 = vmatpush2.bf16.msra.mxu0 0
  %2850 = vmatprep.mubr.bf16.mxu0 0
  %2851 = vmatmul.mubr.bf16.gmra.mxu0 %v2207
  %v2852 = vpop.f32.mrf.mxu0
  %v2853 = vadd.f32 0.0, %v2852
  %v2854 = vpop.f32.mrf.mxu0
  %v2855 = vpop.f32.mrf.mxu0
  %v2856 = vadd.f32 0.0, %v2855
  %v2857 = vpop.f32.mrf.mxu0
  %2858 = vdwg.mxu0
  %v2859 = vadd.f32 %v2751, %v2853
  %v2860 = vadd.f32 %v2752, %v2856
  %s2861 = scalar_lea.vmem %s3, 384
  %v2862 = vld [vmem:[%s2861] sm:$0xf]
  %v2863 = vld [vmem:[%s2861 + $0x4] sm:$0xf]
  %v2864 = vld [vmem:[%s2861 + $0x8] sm:$0xf]
  %v2865 = vld [vmem:[%s2861 + $0xc] sm:$0xf]
  %v2866 = vld [vmem:[%s2861 + $0x10] sm:$0xf]
  %v2867 = vld [vmem:[%s2861 + $0x14] sm:$0xf]
  %v2868 = vld [vmem:[%s2861 + $0x18] sm:$0xf]
  %v2869 = vld [vmem:[%s2861 + $0x1c] sm:$0xf]
  %v2870 = vld [vmem:[%s2861 + $0x20] sm:$0xf]
  %v2871 = vld [vmem:[%s2861 + $0x24] sm:$0xf]
  %v2872 = vld [vmem:[%s2861 + $0x28] sm:$0xf]
  %v2873 = vld [vmem:[%s2861 + $0x2c] sm:$0xf]
  %v2874 = vld [vmem:[%s2861 + $0x30] sm:$0xf]
  %v2875 = vld [vmem:[%s2861 + $0x34] sm:$0xf]
  %v2876 = vld [vmem:[%s2861 + $0x38] sm:$0xf]
  %v2877 = vld [vmem:[%s2861 + $0x3c] sm:$0xf]
  %v2894 = vunpack.c.l.b16 %v2862
  %v2895 = vunpack.c.l.b16 %v2863
  %v2896 = vunpack.c.l.b16 %v2864
  %v2897 = vunpack.c.l.b16 %v2865
  %v2898 = vunpack.c.l.b16 %v2866
  %v2899 = vunpack.c.l.b16 %v2867
  %v2900 = vunpack.c.l.b16 %v2868
  %v2901 = vunpack.c.l.b16 %v2869
  %v2902 = vunpack.c.l.b16 %v2870
  %v2903 = vunpack.c.l.b16 %v2871
  %v2904 = vunpack.c.l.b16 %v2872
  %v2905 = vunpack.c.l.b16 %v2873
  %v2906 = vunpack.c.l.b16 %v2874
  %v2907 = vunpack.c.l.b16 %v2875
  %v2908 = vunpack.c.l.b16 %v2876
  %v2909 = vunpack.c.l.b16 %v2877
  %v2910 = vpack.c.b16 %v2895, %v2894
  %v2911 = vpack.c.b16 %v2897, %v2896
  %v2912 = vpack.c.b16 %v2899, %v2898
  %v2913 = vpack.c.b16 %v2901, %v2900
  %v2914 = vpack.c.b16 %v2903, %v2902
  %v2915 = vpack.c.b16 %v2905, %v2904
  %v2916 = vpack.c.b16 %v2907, %v2906
  %v2917 = vpack.c.b16 %v2909, %v2908
  %2926 = vmatprep.subr.bf16.mxu0 0
  %2927 = vmatpush1.bf16.msra.mxu0 %v2917
  %2928 = vmatprep.subr.bf16.mxu0 0
  %2929 = vmatpush1.bf16.msra.mxu0 %v2916
  %2930 = vmatprep.subr.bf16.mxu0 0
  %2931 = vmatpush1.bf16.msra.mxu0 %v2915
  %2932 = vmatprep.subr.bf16.mxu0 0
  %2933 = vmatpush1.bf16.msra.mxu0 %v2914
  %2934 = vmatprep.subr.bf16.mxu0 0
  %2935 = vmatpush1.bf16.msra.mxu0 %v2913
  %2936 = vmatprep.subr.bf16.mxu0 0
  %2937 = vmatpush1.bf16.msra.mxu0 %v2912
  %2938 = vmatprep.subr.bf16.mxu0 0
  %2939 = vmatpush1.bf16.msra.mxu0 %v2911
  %2940 = vmatprep.subr.bf16.mxu0 0
  %2941 = vmatpush1.bf16.msra.mxu0 %v2910
  %2942 = vmatprep.subr.bf16.mxu0 0
  %2943 = vmatpush2.bf16.msra.mxu0 0
  %2944 = vmatprep.subr.bf16.mxu0 0
  %2945 = vmatpush2.bf16.msra.mxu0 0
  %2946 = vmatprep.subr.bf16.mxu0 0
  %2947 = vmatpush2.bf16.msra.mxu0 0
  %2948 = vmatprep.subr.bf16.mxu0 0
  %2949 = vmatpush2.bf16.msra.mxu0 0
  %2950 = vmatprep.subr.bf16.mxu0 0
  %2951 = vmatpush2.bf16.msra.mxu0 0
  %2952 = vmatprep.subr.bf16.mxu0 0
  %2953 = vmatpush2.bf16.msra.mxu0 0
  %2954 = vmatprep.subr.bf16.mxu0 0
  %2955 = vmatpush2.bf16.msra.mxu0 0
  %2956 = vmatprep.subr.bf16.mxu0 0
  %2957 = vmatpush2.bf16.msra.mxu0 0
  %2958 = vmatprep.mubr.bf16.mxu0 0
  %2959 = vmatmul.mubr.bf16.gmra.mxu0 %v2208
  %v2960 = vpop.f32.mrf.mxu0
  %v2961 = vadd.f32 0.0, %v2960
  %v2962 = vpop.f32.mrf.mxu0
  %v2963 = vpop.f32.mrf.mxu0
  %v2964 = vadd.f32 0.0, %v2963
  %v2965 = vpop.f32.mrf.mxu0
  %2966 = vdwg.mxu0
  %v2967 = vadd.f32 %v2859, %v2961
  %v2968 = vadd.f32 %v2860, %v2964
  %s2969 = scalar_lea.vmem %s3, 448
  %v2970 = vld [vmem:[%s2969] sm:$0xf]
  %v2971 = vld [vmem:[%s2969 + $0x4] sm:$0xf]
  %v2972 = vld [vmem:[%s2969 + $0x8] sm:$0xf]
  %v2973 = vld [vmem:[%s2969 + $0xc] sm:$0xf]
  %v2974 = vld [vmem:[%s2969 + $0x10] sm:$0xf]
  %v2975 = vld [vmem:[%s2969 + $0x14] sm:$0xf]
  %v2976 = vld [vmem:[%s2969 + $0x18] sm:$0xf]
  %v2977 = vld [vmem:[%s2969 + $0x1c] sm:$0xf]
  %v2978 = vld [vmem:[%s2969 + $0x20] sm:$0xf]
  %v2979 = vld [vmem:[%s2969 + $0x24] sm:$0xf]
  %v2980 = vld [vmem:[%s2969 + $0x28] sm:$0xf]
  %v2981 = vld [vmem:[%s2969 + $0x2c] sm:$0xf]
  %v2982 = vld [vmem:[%s2969 + $0x30] sm:$0xf]
  %v2983 = vld [vmem:[%s2969 + $0x34] sm:$0xf]
  %v2984 = vld [vmem:[%s2969 + $0x38] sm:$0xf]
  %v2985 = vld [vmem:[%s2969 + $0x3c] sm:$0xf]
  %v3002 = vunpack.c.l.b16 %v2970
  %v3003 = vunpack.c.l.b16 %v2971
  %v3004 = vunpack.c.l.b16 %v2972
  %v3005 = vunpack.c.l.b16 %v2973
  %v3006 = vunpack.c.l.b16 %v2974
  %v3007 = vunpack.c.l.b16 %v2975
  %v3008 = vunpack.c.l.b16 %v2976
  %v3009 = vunpack.c.l.b16 %v2977
  %v3010 = vunpack.c.l.b16 %v2978
  %v3011 = vunpack.c.l.b16 %v2979
  %v3012 = vunpack.c.l.b16 %v2980
  %v3013 = vunpack.c.l.b16 %v2981
  %v3014 = vunpack.c.l.b16 %v2982
  %v3015 = vunpack.c.l.b16 %v2983
  %v3016 = vunpack.c.l.b16 %v2984
  %v3017 = vunpack.c.l.b16 %v2985
  %v3018 = vpack.c.b16 %v3003, %v3002
  %v3019 = vpack.c.b16 %v3005, %v3004
  %v3020 = vpack.c.b16 %v3007, %v3006
  %v3021 = vpack.c.b16 %v3009, %v3008
  %v3022 = vpack.c.b16 %v3011, %v3010
  %v3023 = vpack.c.b16 %v3013, %v3012
  %v3024 = vpack.c.b16 %v3015, %v3014
  %v3025 = vpack.c.b16 %v3017, %v3016
  %3034 = vmatprep.subr.bf16.mxu0 0
  %3035 = vmatpush1.bf16.msra.mxu0 %v3025
  %3036 = vmatprep.subr.bf16.mxu0 0
  %3037 = vmatpush1.bf16.msra.mxu0 %v3024
  %3038 = vmatprep.subr.bf16.mxu0 0
  %3039 = vmatpush1.bf16.msra.mxu0 %v3023
  %3040 = vmatprep.subr.bf16.mxu0 0
  %3041 = vmatpush1.bf16.msra.mxu0 %v3022
  %3042 = vmatprep.subr.bf16.mxu0 0
  %3043 = vmatpush1.bf16.msra.mxu0 %v3021
  %3044 = vmatprep.subr.bf16.mxu0 0
  %3045 = vmatpush1.bf16.msra.mxu0 %v3020
  %3046 = vmatprep.subr.bf16.mxu0 0
  %3047 = vmatpush1.bf16.msra.mxu0 %v3019
  %3048 = vmatprep.subr.bf16.mxu0 0
  %3049 = vmatpush1.bf16.msra.mxu0 %v3018
  %3050 = vmatprep.subr.bf16.mxu0 0
  %3051 = vmatpush2.bf16.msra.mxu0 0
  %3052 = vmatprep.subr.bf16.mxu0 0
  %3053 = vmatpush2.bf16.msra.mxu0 0
  %3054 = vmatprep.subr.bf16.mxu0 0
  %3055 = vmatpush2.bf16.msra.mxu0 0
  %3056 = vmatprep.subr.bf16.mxu0 0
  %3057 = vmatpush2.bf16.msra.mxu0 0
  %3058 = vmatprep.subr.bf16.mxu0 0
  %3059 = vmatpush2.bf16.msra.mxu0 0
  %3060 = vmatprep.subr.bf16.mxu0 0
  %3061 = vmatpush2.bf16.msra.mxu0 0
  %3062 = vmatprep.subr.bf16.mxu0 0
  %3063 = vmatpush2.bf16.msra.mxu0 0
  %3064 = vmatprep.subr.bf16.mxu0 0
  %3065 = vmatpush2.bf16.msra.mxu0 0
  %3066 = vmatprep.mubr.bf16.mxu0 0
  %3067 = vmatmul.mubr.bf16.gmra.mxu0 %v2209
  %v3068 = vpop.f32.mrf.mxu0
  %v3069 = vadd.f32 0.0, %v3068
  %v3070 = vpop.f32.mrf.mxu0
  %v3071 = vpop.f32.mrf.mxu0
  %v3072 = vadd.f32 0.0, %v3071
  %v3073 = vpop.f32.mrf.mxu0
  %3074 = vdwg.mxu0
  %v3075 = vadd.f32 %v2967, %v3069
  %v3076 = vadd.f32 %v2968, %v3072
  %s3077 = scalar_lea.vmem %s3, 512
  %v3078 = vld [vmem:[%s3077] sm:$0xf]
  %v3079 = vld [vmem:[%s3077 + $0x4] sm:$0xf]
  %v3080 = vld [vmem:[%s3077 + $0x8] sm:$0xf]
  %v3081 = vld [vmem:[%s3077 + $0xc] sm:$0xf]
  %v3082 = vld [vmem:[%s3077 + $0x10] sm:$0xf]
  %v3083 = vld [vmem:[%s3077 + $0x14] sm:$0xf]
  %v3084 = vld [vmem:[%s3077 + $0x18] sm:$0xf]
  %v3085 = vld [vmem:[%s3077 + $0x1c] sm:$0xf]
  %v3086 = vld [vmem:[%s3077 + $0x20] sm:$0xf]
  %v3087 = vld [vmem:[%s3077 + $0x24] sm:$0xf]
  %v3088 = vld [vmem:[%s3077 + $0x28] sm:$0xf]
  %v3089 = vld [vmem:[%s3077 + $0x2c] sm:$0xf]
  %v3090 = vld [vmem:[%s3077 + $0x30] sm:$0xf]
  %v3091 = vld [vmem:[%s3077 + $0x34] sm:$0xf]
  %v3092 = vld [vmem:[%s3077 + $0x38] sm:$0xf]
  %v3093 = vld [vmem:[%s3077 + $0x3c] sm:$0xf]
  %v3110 = vunpack.c.l.b16 %v3078
  %v3111 = vunpack.c.l.b16 %v3079
  %v3112 = vunpack.c.l.b16 %v3080
  %v3113 = vunpack.c.l.b16 %v3081
  %v3114 = vunpack.c.l.b16 %v3082
  %v3115 = vunpack.c.l.b16 %v3083
  %v3116 = vunpack.c.l.b16 %v3084
  %v3117 = vunpack.c.l.b16 %v3085
  %v3118 = vunpack.c.l.b16 %v3086
  %v3119 = vunpack.c.l.b16 %v3087
  %v3120 = vunpack.c.l.b16 %v3088
  %v3121 = vunpack.c.l.b16 %v3089
  %v3122 = vunpack.c.l.b16 %v3090
  %v3123 = vunpack.c.l.b16 %v3091
  %v3124 = vunpack.c.l.b16 %v3092
  %v3125 = vunpack.c.l.b16 %v3093
  %v3126 = vpack.c.b16 %v3111, %v3110
  %v3127 = vpack.c.b16 %v3113, %v3112
  %v3128 = vpack.c.b16 %v3115, %v3114
  %v3129 = vpack.c.b16 %v3117, %v3116
  %v3130 = vpack.c.b16 %v3119, %v3118
  %v3131 = vpack.c.b16 %v3121, %v3120
  %v3132 = vpack.c.b16 %v3123, %v3122
  %v3133 = vpack.c.b16 %v3125, %v3124
  %3142 = vmatprep.subr.bf16.mxu0 0
  %3143 = vmatpush1.bf16.msra.mxu0 %v3133
  %3144 = vmatprep.subr.bf16.mxu0 0
  %3145 = vmatpush1.bf16.msra.mxu0 %v3132
  %3146 = vmatprep.subr.bf16.mxu0 0
  %3147 = vmatpush1.bf16.msra.mxu0 %v3131
  %3148 = vmatprep.subr.bf16.mxu0 0
  %3149 = vmatpush1.bf16.msra.mxu0 %v3130
  %3150 = vmatprep.subr.bf16.mxu0 0
  %3151 = vmatpush1.bf16.msra.mxu0 %v3129
  %3152 = vmatprep.subr.bf16.mxu0 0
  %3153 = vmatpush1.bf16.msra.mxu0 %v3128
  %3154 = vmatprep.subr.bf16.mxu0 0
  %3155 = vmatpush1.bf16.msra.mxu0 %v3127
  %3156 = vmatprep.subr.bf16.mxu0 0
  %3157 = vmatpush1.bf16.msra.mxu0 %v3126
  %3158 = vmatprep.subr.bf16.mxu0 0
  %3159 = vmatpush2.bf16.msra.mxu0 0
  %3160 = vmatprep.subr.bf16.mxu0 0
  %3161 = vmatpush2.bf16.msra.mxu0 0
  %3162 = vmatprep.subr.bf16.mxu0 0
  %3163 = vmatpush2.bf16.msra.mxu0 0
  %3164 = vmatprep.subr.bf16.mxu0 0
  %3165 = vmatpush2.bf16.msra.mxu0 0
  %3166 = vmatprep.subr.bf16.mxu0 0
  %3167 = vmatpush2.bf16.msra.mxu0 0
  %3168 = vmatprep.subr.bf16.mxu0 0
  %3169 = vmatpush2.bf16.msra.mxu0 0
  %3170 = vmatprep.subr.bf16.mxu0 0
  %3171 = vmatpush2.bf16.msra.mxu0 0
  %3172 = vmatprep.subr.bf16.mxu0 0
  %3173 = vmatpush2.bf16.msra.mxu0 0
  %3174 = vmatprep.mubr.bf16.mxu0 0
  %3175 = vmatmul.mubr.bf16.gmra.mxu0 %v2210
  %v3176 = vpop.f32.mrf.mxu0
  %v3177 = vadd.f32 0.0, %v3176
  %v3178 = vpop.f32.mrf.mxu0
  %v3179 = vpop.f32.mrf.mxu0
  %v3180 = vadd.f32 0.0, %v3179
  %v3181 = vpop.f32.mrf.mxu0
  %3182 = vdwg.mxu0
  %v3183 = vadd.f32 %v3075, %v3177
  %v3184 = vadd.f32 %v3076, %v3180
  %s3185 = scalar_lea.vmem %s3, 576
  %v3186 = vld [vmem:[%s3185] sm:$0xf]
  %v3187 = vld [vmem:[%s3185 + $0x4] sm:$0xf]
  %v3188 = vld [vmem:[%s3185 + $0x8] sm:$0xf]
  %v3189 = vld [vmem:[%s3185 + $0xc] sm:$0xf]
  %v3190 = vld [vmem:[%s3185 + $0x10] sm:$0xf]
  %v3191 = vld [vmem:[%s3185 + $0x14] sm:$0xf]
  %v3192 = vld [vmem:[%s3185 + $0x18] sm:$0xf]
  %v3193 = vld [vmem:[%s3185 + $0x1c] sm:$0xf]
  %v3194 = vld [vmem:[%s3185 + $0x20] sm:$0xf]
  %v3195 = vld [vmem:[%s3185 + $0x24] sm:$0xf]
  %v3196 = vld [vmem:[%s3185 + $0x28] sm:$0xf]
  %v3197 = vld [vmem:[%s3185 + $0x2c] sm:$0xf]
  %v3198 = vld [vmem:[%s3185 + $0x30] sm:$0xf]
  %v3199 = vld [vmem:[%s3185 + $0x34] sm:$0xf]
  %v3200 = vld [vmem:[%s3185 + $0x38] sm:$0xf]
  %v3201 = vld [vmem:[%s3185 + $0x3c] sm:$0xf]
  %v3218 = vunpack.c.l.b16 %v3186
  %v3219 = vunpack.c.l.b16 %v3187
  %v3220 = vunpack.c.l.b16 %v3188
  %v3221 = vunpack.c.l.b16 %v3189
  %v3222 = vunpack.c.l.b16 %v3190
  %v3223 = vunpack.c.l.b16 %v3191
  %v3224 = vunpack.c.l.b16 %v3192
  %v3225 = vunpack.c.l.b16 %v3193
  %v3226 = vunpack.c.l.b16 %v3194
  %v3227 = vunpack.c.l.b16 %v3195
  %v3228 = vunpack.c.l.b16 %v3196
  %v3229 = vunpack.c.l.b16 %v3197
  %v3230 = vunpack.c.l.b16 %v3198
  %v3231 = vunpack.c.l.b16 %v3199
  %v3232 = vunpack.c.l.b16 %v3200
  %v3233 = vunpack.c.l.b16 %v3201
  %v3234 = vpack.c.b16 %v3219, %v3218
  %v3235 = vpack.c.b16 %v3221, %v3220
  %v3236 = vpack.c.b16 %v3223, %v3222
  %v3237 = vpack.c.b16 %v3225, %v3224
  %v3238 = vpack.c.b16 %v3227, %v3226
  %v3239 = vpack.c.b16 %v3229, %v3228
  %v3240 = vpack.c.b16 %v3231, %v3230
  %v3241 = vpack.c.b16 %v3233, %v3232
  %3250 = vmatprep.subr.bf16.mxu0 0
  %3251 = vmatpush1.bf16.msra.mxu0 %v3241
  %3252 = vmatprep.subr.bf16.mxu0 0
  %3253 = vmatpush1.bf16.msra.mxu0 %v3240
  %3254 = vmatprep.subr.bf16.mxu0 0
  %3255 = vmatpush1.bf16.msra.mxu0 %v3239
  %3256 = vmatprep.subr.bf16.mxu0 0
  %3257 = vmatpush1.bf16.msra.mxu0 %v3238
  %3258 = vmatprep.subr.bf16.mxu0 0
  %3259 = vmatpush1.bf16.msra.mxu0 %v3237
  %3260 = vmatprep.subr.bf16.mxu0 0
  %3261 = vmatpush1.bf16.msra.mxu0 %v3236
  %3262 = vmatprep.subr.bf16.mxu0 0
  %3263 = vmatpush1.bf16.msra.mxu0 %v3235
  %3264 = vmatprep.subr.bf16.mxu0 0
  %3265 = vmatpush1.bf16.msra.mxu0 %v3234
  %3266 = vmatprep.subr.bf16.mxu0 0
  %3267 = vmatpush2.bf16.msra.mxu0 0
  %3268 = vmatprep.subr.bf16.mxu0 0
  %3269 = vmatpush2.bf16.msra.mxu0 0
  %3270 = vmatprep.subr.bf16.mxu0 0
  %3271 = vmatpush2.bf16.msra.mxu0 0
  %3272 = vmatprep.subr.bf16.mxu0 0
  %3273 = vmatpush2.bf16.msra.mxu0 0
  %3274 = vmatprep.subr.bf16.mxu0 0
  %3275 = vmatpush2.bf16.msra.mxu0 0
  %3276 = vmatprep.subr.bf16.mxu0 0
  %3277 = vmatpush2.bf16.msra.mxu0 0
  %3278 = vmatprep.subr.bf16.mxu0 0
  %3279 = vmatpush2.bf16.msra.mxu0 0
  %3280 = vmatprep.subr.bf16.mxu0 0
  %3281 = vmatpush2.bf16.msra.mxu0 0
  %3282 = vmatprep.mubr.bf16.mxu0 0
  %3283 = vmatmul.mubr.bf16.gmra.mxu0 %v2211
  %v3284 = vpop.f32.mrf.mxu0
  %v3285 = vadd.f32 0.0, %v3284
  %v3286 = vpop.f32.mrf.mxu0
  %v3287 = vpop.f32.mrf.mxu0
  %v3288 = vadd.f32 0.0, %v3287
  %v3289 = vpop.f32.mrf.mxu0
  %3290 = vdwg.mxu0
  %v3291 = vadd.f32 %v3183, %v3285
  %v3292 = vadd.f32 %v3184, %v3288
  %s3293 = scalar_lea.vmem %s3, 640
  %v3294 = vld [vmem:[%s3293] sm:$0xf]
  %v3295 = vld [vmem:[%s3293 + $0x4] sm:$0xf]
  %v3296 = vld [vmem:[%s3293 + $0x8] sm:$0xf]
  %v3297 = vld [vmem:[%s3293 + $0xc] sm:$0xf]
  %v3298 = vld [vmem:[%s3293 + $0x10] sm:$0xf]
  %v3299 = vld [vmem:[%s3293 + $0x14] sm:$0xf]
  %v3300 = vld [vmem:[%s3293 + $0x18] sm:$0xf]
  %v3301 = vld [vmem:[%s3293 + $0x1c] sm:$0xf]
  %v3302 = vld [vmem:[%s3293 + $0x20] sm:$0xf]
  %v3303 = vld [vmem:[%s3293 + $0x24] sm:$0xf]
  %v3304 = vld [vmem:[%s3293 + $0x28] sm:$0xf]
  %v3305 = vld [vmem:[%s3293 + $0x2c] sm:$0xf]
  %v3306 = vld [vmem:[%s3293 + $0x30] sm:$0xf]
  %v3307 = vld [vmem:[%s3293 + $0x34] sm:$0xf]
  %v3308 = vld [vmem:[%s3293 + $0x38] sm:$0xf]
  %v3309 = vld [vmem:[%s3293 + $0x3c] sm:$0xf]
  %v3326 = vunpack.c.l.b16 %v3294
  %v3327 = vunpack.c.l.b16 %v3295
  %v3328 = vunpack.c.l.b16 %v3296
  %v3329 = vunpack.c.l.b16 %v3297
  %v3330 = vunpack.c.l.b16 %v3298
  %v3331 = vunpack.c.l.b16 %v3299
  %v3332 = vunpack.c.l.b16 %v3300
  %v3333 = vunpack.c.l.b16 %v3301
  %v3334 = vunpack.c.l.b16 %v3302
  %v3335 = vunpack.c.l.b16 %v3303
  %v3336 = vunpack.c.l.b16 %v3304
  %v3337 = vunpack.c.l.b16 %v3305
  %v3338 = vunpack.c.l.b16 %v3306
  %v3339 = vunpack.c.l.b16 %v3307
  %v3340 = vunpack.c.l.b16 %v3308
  %v3341 = vunpack.c.l.b16 %v3309
  %v3342 = vpack.c.b16 %v3327, %v3326
  %v3343 = vpack.c.b16 %v3329, %v3328
  %v3344 = vpack.c.b16 %v3331, %v3330
  %v3345 = vpack.c.b16 %v3333, %v3332
  %v3346 = vpack.c.b16 %v3335, %v3334
  %v3347 = vpack.c.b16 %v3337, %v3336
  %v3348 = vpack.c.b16 %v3339, %v3338
  %v3349 = vpack.c.b16 %v3341, %v3340
  %3358 = vmatprep.subr.bf16.mxu0 0
  %3359 = vmatpush1.bf16.msra.mxu0 %v3349
  %3360 = vmatprep.subr.bf16.mxu0 0
  %3361 = vmatpush1.bf16.msra.mxu0 %v3348
  %3362 = vmatprep.subr.bf16.mxu0 0
  %3363 = vmatpush1.bf16.msra.mxu0 %v3347
  %3364 = vmatprep.subr.bf16.mxu0 0
  %3365 = vmatpush1.bf16.msra.mxu0 %v3346
  %3366 = vmatprep.subr.bf16.mxu0 0
  %3367 = vmatpush1.bf16.msra.mxu0 %v3345
  %3368 = vmatprep.subr.bf16.mxu0 0
  %3369 = vmatpush1.bf16.msra.mxu0 %v3344
  %3370 = vmatprep.subr.bf16.mxu0 0
  %3371 = vmatpush1.bf16.msra.mxu0 %v3343
  %3372 = vmatprep.subr.bf16.mxu0 0
  %3373 = vmatpush1.bf16.msra.mxu0 %v3342
  %3374 = vmatprep.subr.bf16.mxu0 0
  %3375 = vmatpush2.bf16.msra.mxu0 0
  %3376 = vmatprep.subr.bf16.mxu0 0
  %3377 = vmatpush2.bf16.msra.mxu0 0
  %3378 = vmatprep.subr.bf16.mxu0 0
  %3379 = vmatpush2.bf16.msra.mxu0 0
  %3380 = vmatprep.subr.bf16.mxu0 0
  %3381 = vmatpush2.bf16.msra.mxu0 0
  %3382 = vmatprep.subr.bf16.mxu0 0
  %3383 = vmatpush2.bf16.msra.mxu0 0
  %3384 = vmatprep.subr.bf16.mxu0 0
  %3385 = vmatpush2.bf16.msra.mxu0 0
  %3386 = vmatprep.subr.bf16.mxu0 0
  %3387 = vmatpush2.bf16.msra.mxu0 0
  %3388 = vmatprep.subr.bf16.mxu0 0
  %3389 = vmatpush2.bf16.msra.mxu0 0
  %3390 = vmatprep.mubr.bf16.mxu0 0
  %3391 = vmatmul.mubr.bf16.gmra.mxu0 %v2212
  %v3392 = vpop.f32.mrf.mxu0
  %v3393 = vadd.f32 0.0, %v3392
  %v3394 = vpop.f32.mrf.mxu0
  %v3395 = vpop.f32.mrf.mxu0
  %v3396 = vadd.f32 0.0, %v3395
  %v3397 = vpop.f32.mrf.mxu0
  %3398 = vdwg.mxu0
  %v3399 = vadd.f32 %v3291, %v3393
  %v3400 = vadd.f32 %v3292, %v3396
  %s3401 = scalar_lea.vmem %s3, 704
  %v3402 = vld [vmem:[%s3401] sm:$0xf]
  %v3403 = vld [vmem:[%s3401 + $0x4] sm:$0xf]
  %v3404 = vld [vmem:[%s3401 + $0x8] sm:$0xf]
  %v3405 = vld [vmem:[%s3401 + $0xc] sm:$0xf]
  %v3406 = vld [vmem:[%s3401 + $0x10] sm:$0xf]
  %v3407 = vld [vmem:[%s3401 + $0x14] sm:$0xf]
  %v3408 = vld [vmem:[%s3401 + $0x18] sm:$0xf]
  %v3409 = vld [vmem:[%s3401 + $0x1c] sm:$0xf]
  %v3410 = vld [vmem:[%s3401 + $0x20] sm:$0xf]
  %v3411 = vld [vmem:[%s3401 + $0x24] sm:$0xf]
  %v3412 = vld [vmem:[%s3401 + $0x28] sm:$0xf]
  %v3413 = vld [vmem:[%s3401 + $0x2c] sm:$0xf]
  %v3414 = vld [vmem:[%s3401 + $0x30] sm:$0xf]
  %v3415 = vld [vmem:[%s3401 + $0x34] sm:$0xf]
  %v3416 = vld [vmem:[%s3401 + $0x38] sm:$0xf]
  %v3417 = vld [vmem:[%s3401 + $0x3c] sm:$0xf]
  %v3434 = vunpack.c.l.b16 %v3402
  %v3435 = vunpack.c.l.b16 %v3403
  %v3436 = vunpack.c.l.b16 %v3404
  %v3437 = vunpack.c.l.b16 %v3405
  %v3438 = vunpack.c.l.b16 %v3406
  %v3439 = vunpack.c.l.b16 %v3407
  %v3440 = vunpack.c.l.b16 %v3408
  %v3441 = vunpack.c.l.b16 %v3409
  %v3442 = vunpack.c.l.b16 %v3410
  %v3443 = vunpack.c.l.b16 %v3411
  %v3444 = vunpack.c.l.b16 %v3412
  %v3445 = vunpack.c.l.b16 %v3413
  %v3446 = vunpack.c.l.b16 %v3414
  %v3447 = vunpack.c.l.b16 %v3415
  %v3448 = vunpack.c.l.b16 %v3416
  %v3449 = vunpack.c.l.b16 %v3417
  %v3450 = vpack.c.b16 %v3435, %v3434
  %v3451 = vpack.c.b16 %v3437, %v3436
  %v3452 = vpack.c.b16 %v3439, %v3438
  %v3453 = vpack.c.b16 %v3441, %v3440
  %v3454 = vpack.c.b16 %v3443, %v3442
  %v3455 = vpack.c.b16 %v3445, %v3444
  %v3456 = vpack.c.b16 %v3447, %v3446
  %v3457 = vpack.c.b16 %v3449, %v3448
  %3466 = vmatprep.subr.bf16.mxu0 0
  %3467 = vmatpush1.bf16.msra.mxu0 %v3457
  %3468 = vmatprep.subr.bf16.mxu0 0
  %3469 = vmatpush1.bf16.msra.mxu0 %v3456
  %3470 = vmatprep.subr.bf16.mxu0 0
  %3471 = vmatpush1.bf16.msra.mxu0 %v3455
  %3472 = vmatprep.subr.bf16.mxu0 0
  %3473 = vmatpush1.bf16.msra.mxu0 %v3454
  %3474 = vmatprep.subr.bf16.mxu0 0
  %3475 = vmatpush1.bf16.msra.mxu0 %v3453
  %3476 = vmatprep.subr.bf16.mxu0 0
  %3477 = vmatpush1.bf16.msra.mxu0 %v3452
  %3478 = vmatprep.subr.bf16.mxu0 0
  %3479 = vmatpush1.bf16.msra.mxu0 %v3451
  %3480 = vmatprep.subr.bf16.mxu0 0
  %3481 = vmatpush1.bf16.msra.mxu0 %v3450
  %3482 = vmatprep.subr.bf16.mxu0 0
  %3483 = vmatpush2.bf16.msra.mxu0 0
  %3484 = vmatprep.subr.bf16.mxu0 0
  %3485 = vmatpush2.bf16.msra.mxu0 0
  %3486 = vmatprep.subr.bf16.mxu0 0
  %3487 = vmatpush2.bf16.msra.mxu0 0
  %3488 = vmatprep.subr.bf16.mxu0 0
  %3489 = vmatpush2.bf16.msra.mxu0 0
  %3490 = vmatprep.subr.bf16.mxu0 0
  %3491 = vmatpush2.bf16.msra.mxu0 0
  %3492 = vmatprep.subr.bf16.mxu0 0
  %3493 = vmatpush2.bf16.msra.mxu0 0
  %3494 = vmatprep.subr.bf16.mxu0 0
  %3495 = vmatpush2.bf16.msra.mxu0 0
  %3496 = vmatprep.subr.bf16.mxu0 0
  %3497 = vmatpush2.bf16.msra.mxu0 0
  %3498 = vmatprep.mubr.bf16.mxu0 0
  %3499 = vmatmul.mubr.bf16.gmra.mxu0 %v2213
  %v3500 = vpop.f32.mrf.mxu0
  %v3501 = vadd.f32 0.0, %v3500
  %v3502 = vpop.f32.mrf.mxu0
  %v3503 = vpop.f32.mrf.mxu0
  %v3504 = vadd.f32 0.0, %v3503
  %v3505 = vpop.f32.mrf.mxu0
  %3506 = vdwg.mxu0
  %v3507 = vadd.f32 %v3399, %v3501
  %v3508 = vadd.f32 %v3400, %v3504
  %s3509 = scalar_lea.vmem %s3, 768
  %v3510 = vld [vmem:[%s3509] sm:$0xf]
  %v3511 = vld [vmem:[%s3509 + $0x4] sm:$0xf]
  %v3512 = vld [vmem:[%s3509 + $0x8] sm:$0xf]
  %v3513 = vld [vmem:[%s3509 + $0xc] sm:$0xf]
  %v3514 = vld [vmem:[%s3509 + $0x10] sm:$0xf]
  %v3515 = vld [vmem:[%s3509 + $0x14] sm:$0xf]
  %v3516 = vld [vmem:[%s3509 + $0x18] sm:$0xf]
  %v3517 = vld [vmem:[%s3509 + $0x1c] sm:$0xf]
  %v3518 = vld [vmem:[%s3509 + $0x20] sm:$0xf]
  %v3519 = vld [vmem:[%s3509 + $0x24] sm:$0xf]
  %v3520 = vld [vmem:[%s3509 + $0x28] sm:$0xf]
  %v3521 = vld [vmem:[%s3509 + $0x2c] sm:$0xf]
  %v3522 = vld [vmem:[%s3509 + $0x30] sm:$0xf]
  %v3523 = vld [vmem:[%s3509 + $0x34] sm:$0xf]
  %v3524 = vld [vmem:[%s3509 + $0x38] sm:$0xf]
  %v3525 = vld [vmem:[%s3509 + $0x3c] sm:$0xf]
  %v3542 = vunpack.c.l.b16 %v3510
  %v3543 = vunpack.c.l.b16 %v3511
  %v3544 = vunpack.c.l.b16 %v3512
  %v3545 = vunpack.c.l.b16 %v3513
  %v3546 = vunpack.c.l.b16 %v3514
  %v3547 = vunpack.c.l.b16 %v3515
  %v3548 = vunpack.c.l.b16 %v3516
  %v3549 = vunpack.c.l.b16 %v3517
  %v3550 = vunpack.c.l.b16 %v3518
  %v3551 = vunpack.c.l.b16 %v3519
  %v3552 = vunpack.c.l.b16 %v3520
  %v3553 = vunpack.c.l.b16 %v3521
  %v3554 = vunpack.c.l.b16 %v3522
  %v3555 = vunpack.c.l.b16 %v3523
  %v3556 = vunpack.c.l.b16 %v3524
  %v3557 = vunpack.c.l.b16 %v3525
  %v3558 = vpack.c.b16 %v3543, %v3542
  %v3559 = vpack.c.b16 %v3545, %v3544
  %v3560 = vpack.c.b16 %v3547, %v3546
  %v3561 = vpack.c.b16 %v3549, %v3548
  %v3562 = vpack.c.b16 %v3551, %v3550
  %v3563 = vpack.c.b16 %v3553, %v3552
  %v3564 = vpack.c.b16 %v3555, %v3554
  %v3565 = vpack.c.b16 %v3557, %v3556
  %3574 = vmatprep.subr.bf16.mxu0 0
  %3575 = vmatpush1.bf16.msra.mxu0 %v3565
  %3576 = vmatprep.subr.bf16.mxu0 0
  %3577 = vmatpush1.bf16.msra.mxu0 %v3564
  %3578 = vmatprep.subr.bf16.mxu0 0
  %3579 = vmatpush1.bf16.msra.mxu0 %v3563
  %3580 = vmatprep.subr.bf16.mxu0 0
  %3581 = vmatpush1.bf16.msra.mxu0 %v3562
  %3582 = vmatprep.subr.bf16.mxu0 0
  %3583 = vmatpush1.bf16.msra.mxu0 %v3561
  %3584 = vmatprep.subr.bf16.mxu0 0
  %3585 = vmatpush1.bf16.msra.mxu0 %v3560
  %3586 = vmatprep.subr.bf16.mxu0 0
  %3587 = vmatpush1.bf16.msra.mxu0 %v3559
  %3588 = vmatprep.subr.bf16.mxu0 0
  %3589 = vmatpush1.bf16.msra.mxu0 %v3558
  %3590 = vmatprep.subr.bf16.mxu0 0
  %3591 = vmatpush2.bf16.msra.mxu0 0
  %3592 = vmatprep.subr.bf16.mxu0 0
  %3593 = vmatpush2.bf16.msra.mxu0 0
  %3594 = vmatprep.subr.bf16.mxu0 0
  %3595 = vmatpush2.bf16.msra.mxu0 0
  %3596 = vmatprep.subr.bf16.mxu0 0
  %3597 = vmatpush2.bf16.msra.mxu0 0
  %3598 = vmatprep.subr.bf16.mxu0 0
  %3599 = vmatpush2.bf16.msra.mxu0 0
  %3600 = vmatprep.subr.bf16.mxu0 0
  %3601 = vmatpush2.bf16.msra.mxu0 0
  %3602 = vmatprep.subr.bf16.mxu0 0
  %3603 = vmatpush2.bf16.msra.mxu0 0
  %3604 = vmatprep.subr.bf16.mxu0 0
  %3605 = vmatpush2.bf16.msra.mxu0 0
  %3606 = vmatprep.mubr.bf16.mxu0 0
  %3607 = vmatmul.mubr.bf16.gmra.mxu0 %v2214
  %v3608 = vpop.f32.mrf.mxu0
  %v3609 = vadd.f32 0.0, %v3608
  %v3610 = vpop.f32.mrf.mxu0
  %v3611 = vpop.f32.mrf.mxu0
  %v3612 = vadd.f32 0.0, %v3611
  %v3613 = vpop.f32.mrf.mxu0
  %3614 = vdwg.mxu0
  %v3615 = vadd.f32 %v3507, %v3609
  %v3616 = vadd.f32 %v3508, %v3612
  %s3617 = scalar_lea.vmem %s3, 832
  %v3618 = vld [vmem:[%s3617] sm:$0xf]
  %v3619 = vld [vmem:[%s3617 + $0x4] sm:$0xf]
  %v3620 = vld [vmem:[%s3617 + $0x8] sm:$0xf]
  %v3621 = vld [vmem:[%s3617 + $0xc] sm:$0xf]
  %v3622 = vld [vmem:[%s3617 + $0x10] sm:$0xf]
  %v3623 = vld [vmem:[%s3617 + $0x14] sm:$0xf]
  %v3624 = vld [vmem:[%s3617 + $0x18] sm:$0xf]
  %v3625 = vld [vmem:[%s3617 + $0x1c] sm:$0xf]
  %v3626 = vld [vmem:[%s3617 + $0x20] sm:$0xf]
  %v3627 = vld [vmem:[%s3617 + $0x24] sm:$0xf]
  %v3628 = vld [vmem:[%s3617 + $0x28] sm:$0xf]
  %v3629 = vld [vmem:[%s3617 + $0x2c] sm:$0xf]
  %v3630 = vld [vmem:[%s3617 + $0x30] sm:$0xf]
  %v3631 = vld [vmem:[%s3617 + $0x34] sm:$0xf]
  %v3632 = vld [vmem:[%s3617 + $0x38] sm:$0xf]
  %v3633 = vld [vmem:[%s3617 + $0x3c] sm:$0xf]
  %v3650 = vunpack.c.l.b16 %v3618
  %v3651 = vunpack.c.l.b16 %v3619
  %v3652 = vunpack.c.l.b16 %v3620
  %v3653 = vunpack.c.l.b16 %v3621
  %v3654 = vunpack.c.l.b16 %v3622
  %v3655 = vunpack.c.l.b16 %v3623
  %v3656 = vunpack.c.l.b16 %v3624
  %v3657 = vunpack.c.l.b16 %v3625
  %v3658 = vunpack.c.l.b16 %v3626
  %v3659 = vunpack.c.l.b16 %v3627
  %v3660 = vunpack.c.l.b16 %v3628
  %v3661 = vunpack.c.l.b16 %v3629
  %v3662 = vunpack.c.l.b16 %v3630
  %v3663 = vunpack.c.l.b16 %v3631
  %v3664 = vunpack.c.l.b16 %v3632
  %v3665 = vunpack.c.l.b16 %v3633
  %v3666 = vpack.c.b16 %v3651, %v3650
  %v3667 = vpack.c.b16 %v3653, %v3652
  %v3668 = vpack.c.b16 %v3655, %v3654
  %v3669 = vpack.c.b16 %v3657, %v3656
  %v3670 = vpack.c.b16 %v3659, %v3658
  %v3671 = vpack.c.b16 %v3661, %v3660
  %v3672 = vpack.c.b16 %v3663, %v3662
  %v3673 = vpack.c.b16 %v3665, %v3664
  %3682 = vmatprep.subr.bf16.mxu0 0
  %3683 = vmatpush1.bf16.msra.mxu0 %v3673
  %3684 = vmatprep.subr.bf16.mxu0 0
  %3685 = vmatpush1.bf16.msra.mxu0 %v3672
  %3686 = vmatprep.subr.bf16.mxu0 0
  %3687 = vmatpush1.bf16.msra.mxu0 %v3671
  %3688 = vmatprep.subr.bf16.mxu0 0
  %3689 = vmatpush1.bf16.msra.mxu0 %v3670
  %3690 = vmatprep.subr.bf16.mxu0 0
  %3691 = vmatpush1.bf16.msra.mxu0 %v3669
  %3692 = vmatprep.subr.bf16.mxu0 0
  %3693 = vmatpush1.bf16.msra.mxu0 %v3668
  %3694 = vmatprep.subr.bf16.mxu0 0
  %3695 = vmatpush1.bf16.msra.mxu0 %v3667
  %3696 = vmatprep.subr.bf16.mxu0 0
  %3697 = vmatpush1.bf16.msra.mxu0 %v3666
  %3698 = vmatprep.subr.bf16.mxu0 0
  %3699 = vmatpush2.bf16.msra.mxu0 0
  %3700 = vmatprep.subr.bf16.mxu0 0
  %3701 = vmatpush2.bf16.msra.mxu0 0
  %3702 = vmatprep.subr.bf16.mxu0 0
  %3703 = vmatpush2.bf16.msra.mxu0 0
  %3704 = vmatprep.subr.bf16.mxu0 0
  %3705 = vmatpush2.bf16.msra.mxu0 0
  %3706 = vmatprep.subr.bf16.mxu0 0
  %3707 = vmatpush2.bf16.msra.mxu0 0
  %3708 = vmatprep.subr.bf16.mxu0 0
  %3709 = vmatpush2.bf16.msra.mxu0 0
  %3710 = vmatprep.subr.bf16.mxu0 0
  %3711 = vmatpush2.bf16.msra.mxu0 0
  %3712 = vmatprep.subr.bf16.mxu0 0
  %3713 = vmatpush2.bf16.msra.mxu0 0
  %3714 = vmatprep.mubr.bf16.mxu0 0
  %3715 = vmatmul.mubr.bf16.gmra.mxu0 %v2215
  %v3716 = vpop.f32.mrf.mxu0
  %v3717 = vadd.f32 0.0, %v3716
  %v3718 = vpop.f32.mrf.mxu0
  %v3719 = vpop.f32.mrf.mxu0
  %v3720 = vadd.f32 0.0, %v3719
  %v3721 = vpop.f32.mrf.mxu0
  %3722 = vdwg.mxu0
  %v3723 = vadd.f32 %v3615, %v3717
  %v3724 = vadd.f32 %v3616, %v3720
  %s3725 = scalar_lea.vmem %s3, 896
  %v3726 = vld [vmem:[%s3725] sm:$0xf]
  %v3727 = vld [vmem:[%s3725 + $0x4] sm:$0xf]
  %v3728 = vld [vmem:[%s3725 + $0x8] sm:$0xf]
  %v3729 = vld [vmem:[%s3725 + $0xc] sm:$0xf]
  %v3730 = vld [vmem:[%s3725 + $0x10] sm:$0xf]
  %v3731 = vld [vmem:[%s3725 + $0x14] sm:$0xf]
  %v3732 = vld [vmem:[%s3725 + $0x18] sm:$0xf]
  %v3733 = vld [vmem:[%s3725 + $0x1c] sm:$0xf]
  %v3734 = vld [vmem:[%s3725 + $0x20] sm:$0xf]
  %v3735 = vld [vmem:[%s3725 + $0x24] sm:$0xf]
  %v3736 = vld [vmem:[%s3725 + $0x28] sm:$0xf]
  %v3737 = vld [vmem:[%s3725 + $0x2c] sm:$0xf]
  %v3738 = vld [vmem:[%s3725 + $0x30] sm:$0xf]
  %v3739 = vld [vmem:[%s3725 + $0x34] sm:$0xf]
  %v3740 = vld [vmem:[%s3725 + $0x38] sm:$0xf]
  %v3741 = vld [vmem:[%s3725 + $0x3c] sm:$0xf]
  %v3758 = vunpack.c.l.b16 %v3726
  %v3759 = vunpack.c.l.b16 %v3727
  %v3760 = vunpack.c.l.b16 %v3728
  %v3761 = vunpack.c.l.b16 %v3729
  %v3762 = vunpack.c.l.b16 %v3730
  %v3763 = vunpack.c.l.b16 %v3731
  %v3764 = vunpack.c.l.b16 %v3732
  %v3765 = vunpack.c.l.b16 %v3733
  %v3766 = vunpack.c.l.b16 %v3734
  %v3767 = vunpack.c.l.b16 %v3735
  %v3768 = vunpack.c.l.b16 %v3736
  %v3769 = vunpack.c.l.b16 %v3737
  %v3770 = vunpack.c.l.b16 %v3738
  %v3771 = vunpack.c.l.b16 %v3739
  %v3772 = vunpack.c.l.b16 %v3740
  %v3773 = vunpack.c.l.b16 %v3741
  %v3774 = vpack.c.b16 %v3759, %v3758
  %v3775 = vpack.c.b16 %v3761, %v3760
  %v3776 = vpack.c.b16 %v3763, %v3762
  %v3777 = vpack.c.b16 %v3765, %v3764
  %v3778 = vpack.c.b16 %v3767, %v3766
  %v3779 = vpack.c.b16 %v3769, %v3768
  %v3780 = vpack.c.b16 %v3771, %v3770
  %v3781 = vpack.c.b16 %v3773, %v3772
  %3790 = vmatprep.subr.bf16.mxu0 0
  %3791 = vmatpush1.bf16.msra.mxu0 %v3781
  %3792 = vmatprep.subr.bf16.mxu0 0
  %3793 = vmatpush1.bf16.msra.mxu0 %v3780
  %3794 = vmatprep.subr.bf16.mxu0 0
  %3795 = vmatpush1.bf16.msra.mxu0 %v3779
  %3796 = vmatprep.subr.bf16.mxu0 0
  %3797 = vmatpush1.bf16.msra.mxu0 %v3778
  %3798 = vmatprep.subr.bf16.mxu0 0
  %3799 = vmatpush1.bf16.msra.mxu0 %v3777
  %3800 = vmatprep.subr.bf16.mxu0 0
  %3801 = vmatpush1.bf16.msra.mxu0 %v3776
  %3802 = vmatprep.subr.bf16.mxu0 0
  %3803 = vmatpush1.bf16.msra.mxu0 %v3775
  %3804 = vmatprep.subr.bf16.mxu0 0
  %3805 = vmatpush1.bf16.msra.mxu0 %v3774
  %3806 = vmatprep.subr.bf16.mxu0 0
  %3807 = vmatpush2.bf16.msra.mxu0 0
  %3808 = vmatprep.subr.bf16.mxu0 0
  %3809 = vmatpush2.bf16.msra.mxu0 0
  %3810 = vmatprep.subr.bf16.mxu0 0
  %3811 = vmatpush2.bf16.msra.mxu0 0
  %3812 = vmatprep.subr.bf16.mxu0 0
  %3813 = vmatpush2.bf16.msra.mxu0 0
  %3814 = vmatprep.subr.bf16.mxu0 0
  %3815 = vmatpush2.bf16.msra.mxu0 0
  %3816 = vmatprep.subr.bf16.mxu0 0
  %3817 = vmatpush2.bf16.msra.mxu0 0
  %3818 = vmatprep.subr.bf16.mxu0 0
  %3819 = vmatpush2.bf16.msra.mxu0 0
  %3820 = vmatprep.subr.bf16.mxu0 0
  %3821 = vmatpush2.bf16.msra.mxu0 0
  %3822 = vmatprep.mubr.bf16.mxu0 0
  %3823 = vmatmul.mubr.bf16.gmra.mxu0 %v2216
  %v3824 = vpop.f32.mrf.mxu0
  %v3825 = vadd.f32 0.0, %v3824
  %v3826 = vpop.f32.mrf.mxu0
  %v3827 = vpop.f32.mrf.mxu0
  %v3828 = vadd.f32 0.0, %v3827
  %v3829 = vpop.f32.mrf.mxu0
  %3830 = vdwg.mxu0
  %v3831 = vadd.f32 %v3723, %v3825
  %v3832 = vadd.f32 %v3724, %v3828
  %s3833 = scalar_lea.vmem %s3, 960
  %v3834 = vld [vmem:[%s3833] sm:$0xf]
  %v3835 = vld [vmem:[%s3833 + $0x4] sm:$0xf]
  %v3836 = vld [vmem:[%s3833 + $0x8] sm:$0xf]
  %v3837 = vld [vmem:[%s3833 + $0xc] sm:$0xf]
  %v3838 = vld [vmem:[%s3833 + $0x10] sm:$0xf]
  %v3839 = vld [vmem:[%s3833 + $0x14] sm:$0xf]
  %v3840 = vld [vmem:[%s3833 + $0x18] sm:$0xf]
  %v3841 = vld [vmem:[%s3833 + $0x1c] sm:$0xf]
  %v3842 = vld [vmem:[%s3833 + $0x20] sm:$0xf]
  %v3843 = vld [vmem:[%s3833 + $0x24] sm:$0xf]
  %v3844 = vld [vmem:[%s3833 + $0x28] sm:$0xf]
  %v3845 = vld [vmem:[%s3833 + $0x2c] sm:$0xf]
  %v3846 = vld [vmem:[%s3833 + $0x30] sm:$0xf]
  %v3847 = vld [vmem:[%s3833 + $0x34] sm:$0xf]
  %v3848 = vld [vmem:[%s3833 + $0x38] sm:$0xf]
  %v3849 = vld [vmem:[%s3833 + $0x3c] sm:$0xf]
  %v3866 = vunpack.c.l.b16 %v3834
  %v3867 = vunpack.c.l.b16 %v3835
  %v3868 = vunpack.c.l.b16 %v3836
  %v3869 = vunpack.c.l.b16 %v3837
  %v3870 = vunpack.c.l.b16 %v3838
  %v3871 = vunpack.c.l.b16 %v3839
  %v3872 = vunpack.c.l.b16 %v3840
  %v3873 = vunpack.c.l.b16 %v3841
  %v3874 = vunpack.c.l.b16 %v3842
  %v3875 = vunpack.c.l.b16 %v3843
  %v3876 = vunpack.c.l.b16 %v3844
  %v3877 = vunpack.c.l.b16 %v3845
  %v3878 = vunpack.c.l.b16 %v3846
  %v3879 = vunpack.c.l.b16 %v3847
  %v3880 = vunpack.c.l.b16 %v3848
  %v3881 = vunpack.c.l.b16 %v3849
  %v3882 = vpack.c.b16 %v3867, %v3866
  %v3883 = vpack.c.b16 %v3869, %v3868
  %v3884 = vpack.c.b16 %v3871, %v3870
  %v3885 = vpack.c.b16 %v3873, %v3872
  %v3886 = vpack.c.b16 %v3875, %v3874
  %v3887 = vpack.c.b16 %v3877, %v3876
  %v3888 = vpack.c.b16 %v3879, %v3878
  %v3889 = vpack.c.b16 %v3881, %v3880
  %3898 = vmatprep.subr.bf16.mxu0 0
  %3899 = vmatpush1.bf16.msra.mxu0 %v3889
  %3900 = vmatprep.subr.bf16.mxu0 0
  %3901 = vmatpush1.bf16.msra.mxu0 %v3888
  %3902 = vmatprep.subr.bf16.mxu0 0
  %3903 = vmatpush1.bf16.msra.mxu0 %v3887
  %3904 = vmatprep.subr.bf16.mxu0 0
  %3905 = vmatpush1.bf16.msra.mxu0 %v3886
  %3906 = vmatprep.subr.bf16.mxu0 0
  %3907 = vmatpush1.bf16.msra.mxu0 %v3885
  %3908 = vmatprep.subr.bf16.mxu0 0
  %3909 = vmatpush1.bf16.msra.mxu0 %v3884
  %3910 = vmatprep.subr.bf16.mxu0 0
  %3911 = vmatpush1.bf16.msra.mxu0 %v3883
  %3912 = vmatprep.subr.bf16.mxu0 0
  %3913 = vmatpush1.bf16.msra.mxu0 %v3882
  %3914 = vmatprep.subr.bf16.mxu0 0
  %3915 = vmatpush2.bf16.msra.mxu0 0
  %3916 = vmatprep.subr.bf16.mxu0 0
  %3917 = vmatpush2.bf16.msra.mxu0 0
  %3918 = vmatprep.subr.bf16.mxu0 0
  %3919 = vmatpush2.bf16.msra.mxu0 0
  %3920 = vmatprep.subr.bf16.mxu0 0
  %3921 = vmatpush2.bf16.msra.mxu0 0
  %3922 = vmatprep.subr.bf16.mxu0 0
  %3923 = vmatpush2.bf16.msra.mxu0 0
  %3924 = vmatprep.subr.bf16.mxu0 0
  %3925 = vmatpush2.bf16.msra.mxu0 0
  %3926 = vmatprep.subr.bf16.mxu0 0
  %3927 = vmatpush2.bf16.msra.mxu0 0
  %3928 = vmatprep.subr.bf16.mxu0 0
  %3929 = vmatpush2.bf16.msra.mxu0 0
  %3930 = vmatprep.mubr.bf16.mxu0 0
  %3931 = vmatmul.mubr.bf16.gmra.mxu0 %v2217
  %v3932 = vpop.f32.mrf.mxu0
  %v3933 = vadd.f32 0.0, %v3932
  %v3934 = vpop.f32.mrf.mxu0
  %v3935 = vpop.f32.mrf.mxu0
  %v3936 = vadd.f32 0.0, %v3935
  %v3937 = vpop.f32.mrf.mxu0
  %3938 = vdwg.mxu0
  %v3939 = vadd.f32 %v3831, %v3933
  %v3940 = vadd.f32 %v3832, %v3936
  %v3941 = vld [vmem:[%s4] sm:$0x1]
  %v3943 = vlaneseq
  %v3944 = vshrl.u32 %v3943, 7
  %v3945 = vsub.s32 0, %v3944
  %v3946 = vrot.slane %v3941, %v3945
  %v3948 = vadd.f32 %v3939, %v3946
  %v3949 = vadd.f32 %v3940, %v3946
  %v3950 = vmul.f32 %v3948, 0.5
  %v3951 = vmul.f32 %v3949, 0.5
  %v3952 = vtanh.pop %v3950
  %v3953 = vtanh.pop %v3951
  %v3954 = vmul.f32 %v3952, 0.5
  %v3955 = vmul.f32 %v3953, 0.5
  %v3956 = vadd.f32 %v3954, 0.5
  %v3957 = vadd.f32 %v3955, 0.5
  %v3958 = vpack.c.bf16 %v3957, %v3956
  %v3959 = vld [vmem:[%s5] sm:$0xf]
  %v3960 = vld [vmem:[%s5 + $0x4] sm:$0xf]
  %v3961 = vld [vmem:[%s5 + $0x8] sm:$0xf]
  %v3962 = vld [vmem:[%s5 + $0xc] sm:$0xf]
  %v3963 = vld [vmem:[%s5 + $0x10] sm:$0xf]
  %v3964 = vld [vmem:[%s5 + $0x14] sm:$0xf]
  %v3965 = vld [vmem:[%s5 + $0x18] sm:$0xf]
  %v3966 = vld [vmem:[%s5 + $0x1c] sm:$0xf]
  %v3967 = vld [vmem:[%s5 + $0x20] sm:$0xf]
  %v3968 = vld [vmem:[%s5 + $0x24] sm:$0xf]
  %v3969 = vld [vmem:[%s5 + $0x28] sm:$0xf]
  %v3970 = vld [vmem:[%s5 + $0x2c] sm:$0xf]
  %v3971 = vld [vmem:[%s5 + $0x30] sm:$0xf]
  %v3972 = vld [vmem:[%s5 + $0x34] sm:$0xf]
  %v3973 = vld [vmem:[%s5 + $0x38] sm:$0xf]
  %v3974 = vld [vmem:[%s5 + $0x3c] sm:$0xf]
  %v3975 = vld [vmem:[%s6] sm:$0x1]
  %v3977 = vlaneseq
  %v3978 = vshrl.u32 %v3977, 7
  %v3979 = vsub.s32 0, %v3978
  %v3980 = vrot.slane %v3975, %v3979
  %v3998 = vunpack.c.l.b16 %v3959
  %v3999 = vunpack.c.l.b16 %v3960
  %v4000 = vunpack.c.l.b16 %v3961
  %v4001 = vunpack.c.l.b16 %v3962
  %v4002 = vunpack.c.l.b16 %v3963
  %v4003 = vunpack.c.l.b16 %v3964
  %v4004 = vunpack.c.l.b16 %v3965
  %v4005 = vunpack.c.l.b16 %v3966
  %v4006 = vunpack.c.l.b16 %v3967
  %v4007 = vunpack.c.l.b16 %v3968
  %v4008 = vunpack.c.l.b16 %v3969
  %v4009 = vunpack.c.l.b16 %v3970
  %v4010 = vunpack.c.l.b16 %v3971
  %v4011 = vunpack.c.l.b16 %v3972
  %v4012 = vunpack.c.l.b16 %v3973
  %v4013 = vunpack.c.l.b16 %v3974
  %v4014 = vpack.c.b16 %v3999, %v3998
  %v4015 = vpack.c.b16 %v4001, %v4000
  %v4016 = vpack.c.b16 %v4003, %v4002
  %v4017 = vpack.c.b16 %v4005, %v4004
  %v4018 = vpack.c.b16 %v4007, %v4006
  %v4019 = vpack.c.b16 %v4009, %v4008
  %v4020 = vpack.c.b16 %v4011, %v4010
  %v4021 = vpack.c.b16 %v4013, %v4012
  %4030 = vmatprep.subr.bf16.mxu0 0
  %4031 = vmatpush1.bf16.msra.mxu0 %v4021
  %4032 = vmatprep.subr.bf16.mxu0 0
  %4033 = vmatpush1.bf16.msra.mxu0 %v4020
  %4034 = vmatprep.subr.bf16.mxu0 0
  %4035 = vmatpush1.bf16.msra.mxu0 %v4019
  %4036 = vmatprep.subr.bf16.mxu0 0
  %4037 = vmatpush1.bf16.msra.mxu0 %v4018
  %4038 = vmatprep.subr.bf16.mxu0 0
  %4039 = vmatpush1.bf16.msra.mxu0 %v4017
  %4040 = vmatprep.subr.bf16.mxu0 0
  %4041 = vmatpush1.bf16.msra.mxu0 %v4016
  %4042 = vmatprep.subr.bf16.mxu0 0
  %4043 = vmatpush1.bf16.msra.mxu0 %v4015
  %4044 = vmatprep.subr.bf16.mxu0 0
  %4045 = vmatpush1.bf16.msra.mxu0 %v4014
  %4046 = vmatprep.subr.bf16.mxu0 0
  %4047 = vmatpush2.bf16.msra.mxu0 0
  %4048 = vmatprep.subr.bf16.mxu0 0
  %4049 = vmatpush2.bf16.msra.mxu0 0
  %4050 = vmatprep.subr.bf16.mxu0 0
  %4051 = vmatpush2.bf16.msra.mxu0 0
  %4052 = vmatprep.subr.bf16.mxu0 0
  %4053 = vmatpush2.bf16.msra.mxu0 0
  %4054 = vmatprep.subr.bf16.mxu0 0
  %4055 = vmatpush2.bf16.msra.mxu0 0
  %4056 = vmatprep.subr.bf16.mxu0 0
  %4057 = vmatpush2.bf16.msra.mxu0 0
  %4058 = vmatprep.subr.bf16.mxu0 0
  %4059 = vmatpush2.bf16.msra.mxu0 0
  %4060 = vmatprep.subr.bf16.mxu0 0
  %4061 = vmatpush2.bf16.msra.mxu0 0
  %4062 = vmatprep.mubr.bf16.mxu0 0
  %4063 = vmatmul.mubr.bf16.gmra.mxu0 %v3958
  %v4064 = vpop.f32.mrf.mxu0
  %v4065 = vadd.f32 %v3980, %v4064
  %v4066 = vpop.f32.mrf.mxu0
  %v4067 = vpop.f32.mrf.mxu0
  %v4068 = vadd.f32 %v3980, %v4067
  %v4069 = vpop.f32.mrf.mxu0
  %4070 = vdwg.mxu0
  %v4071 = vmul.f32 %v4065, 0.5
  %v4072 = vmul.f32 %v4068, 0.5
  %v4073 = vtanh.pop %v4071
  %v4074 = vtanh.pop %v4072
  %v4075 = vmul.f32 %v4073, 0.5
  %v4076 = vmul.f32 %v4074, 0.5
  %v4077 = vadd.f32 %v4075, 0.5
  %v4078 = vadd.f32 %v4076, 0.5
  %v4079 = vpack.c.bf16 %v4078, %v4077
  %v4080 = vld [vmem:[%s7] sm:$0xf]
  %v4081 = vld [vmem:[%s7 + $0x4] sm:$0xf]
  %v4082 = vld [vmem:[%s7 + $0x8] sm:$0xf]
  %v4083 = vld [vmem:[%s7 + $0xc] sm:$0xf]
  %v4084 = vld [vmem:[%s7 + $0x10] sm:$0xf]
  %v4085 = vld [vmem:[%s7 + $0x14] sm:$0xf]
  %v4086 = vld [vmem:[%s7 + $0x18] sm:$0xf]
  %v4087 = vld [vmem:[%s7 + $0x1c] sm:$0xf]
  %v4088 = vld [vmem:[%s7 + $0x20] sm:$0xf]
  %v4089 = vld [vmem:[%s7 + $0x24] sm:$0xf]
  %v4090 = vld [vmem:[%s7 + $0x28] sm:$0xf]
  %v4091 = vld [vmem:[%s7 + $0x2c] sm:$0xf]
  %v4092 = vld [vmem:[%s7 + $0x30] sm:$0xf]
  %v4093 = vld [vmem:[%s7 + $0x34] sm:$0xf]
  %v4094 = vld [vmem:[%s7 + $0x38] sm:$0xf]
  %v4095 = vld [vmem:[%s7 + $0x3c] sm:$0xf]
  %v4096 = vld [vmem:[%s8] sm:$0x1]
  %v4098 = vlaneseq
  %v4099 = vshrl.u32 %v4098, 7
  %v4100 = vsub.s32 0, %v4099
  %v4101 = vrot.slane %v4096, %v4100
  %v4119 = vunpack.c.l.b16 %v4080
  %v4120 = vunpack.c.l.b16 %v4081
  %v4121 = vunpack.c.l.b16 %v4082
  %v4122 = vunpack.c.l.b16 %v4083
  %v4123 = vunpack.c.l.b16 %v4084
  %v4124 = vunpack.c.l.b16 %v4085
  %v4125 = vunpack.c.l.b16 %v4086
  %v4126 = vunpack.c.l.b16 %v4087
  %v4127 = vunpack.c.l.b16 %v4088
  %v4128 = vunpack.c.l.b16 %v4089
  %v4129 = vunpack.c.l.b16 %v4090
  %v4130 = vunpack.c.l.b16 %v4091
  %v4131 = vunpack.c.l.b16 %v4092
  %v4132 = vunpack.c.l.b16 %v4093
  %v4133 = vunpack.c.l.b16 %v4094
  %v4134 = vunpack.c.l.b16 %v4095
  %v4135 = vpack.c.b16 %v4120, %v4119
  %v4136 = vpack.c.b16 %v4122, %v4121
  %v4137 = vpack.c.b16 %v4124, %v4123
  %v4138 = vpack.c.b16 %v4126, %v4125
  %v4139 = vpack.c.b16 %v4128, %v4127
  %v4140 = vpack.c.b16 %v4130, %v4129
  %v4141 = vpack.c.b16 %v4132, %v4131
  %v4142 = vpack.c.b16 %v4134, %v4133
  %4151 = vmatprep.subr.bf16.mxu0 0
  %4152 = vmatpush1.bf16.msra.mxu0 %v4142
  %4153 = vmatprep.subr.bf16.mxu0 0
  %4154 = vmatpush1.bf16.msra.mxu0 %v4141
  %4155 = vmatprep.subr.bf16.mxu0 0
  %4156 = vmatpush1.bf16.msra.mxu0 %v4140
  %4157 = vmatprep.subr.bf16.mxu0 0
  %4158 = vmatpush1.bf16.msra.mxu0 %v4139
  %4159 = vmatprep.subr.bf16.mxu0 0
  %4160 = vmatpush1.bf16.msra.mxu0 %v4138
  %4161 = vmatprep.subr.bf16.mxu0 0
  %4162 = vmatpush1.bf16.msra.mxu0 %v4137
  %4163 = vmatprep.subr.bf16.mxu0 0
  %4164 = vmatpush1.bf16.msra.mxu0 %v4136
  %4165 = vmatprep.subr.bf16.mxu0 0
  %4166 = vmatpush1.bf16.msra.mxu0 %v4135
  %4167 = vmatprep.subr.bf16.mxu0 0
  %4168 = vmatpush2.bf16.msra.mxu0 0
  %4169 = vmatprep.subr.bf16.mxu0 0
  %4170 = vmatpush2.bf16.msra.mxu0 0
  %4171 = vmatprep.subr.bf16.mxu0 0
  %4172 = vmatpush2.bf16.msra.mxu0 0
  %4173 = vmatprep.subr.bf16.mxu0 0
  %4174 = vmatpush2.bf16.msra.mxu0 0
  %4175 = vmatprep.subr.bf16.mxu0 0
  %4176 = vmatpush2.bf16.msra.mxu0 0
  %4177 = vmatprep.subr.bf16.mxu0 0
  %4178 = vmatpush2.bf16.msra.mxu0 0
  %4179 = vmatprep.subr.bf16.mxu0 0
  %4180 = vmatpush2.bf16.msra.mxu0 0
  %4181 = vmatprep.subr.bf16.mxu0 0
  %4182 = vmatpush2.bf16.msra.mxu0 0
  %4183 = vmatprep.mubr.bf16.mxu0 0
  %4184 = vmatmul.mubr.bf16.gmra.mxu0 %v4079
  %v4185 = vpop.f32.mrf.mxu0
  %v4186 = vadd.f32 %v4101, %v4185
  %v4187 = vpop.f32.mrf.mxu0
  %v4188 = vpop.f32.mrf.mxu0
  %v4189 = vadd.f32 %v4101, %v4188
  %v4190 = vpop.f32.mrf.mxu0
  %4191 = vdwg.mxu0
  %4192 = vst [vmem:[%s9] sm:$0xff] %v4186
  %4193 = vst [vmem:[%s9 + $0x8] sm:$0xff] %v4189
  // Predicated region
  $region38: #{lenet_forward.3} parent=0 // pred_check
    _
  $region39: #{lenet_forward.3} parent=0 // pred_check_branch
    %4195 = sbr.rel (0) target = $region41
  $region40: #{lenet_forward.3} parent=0 // pred_region
    _
  $region41: #{lenet_forward.3} parent=0 // pred_fallthru
    _
  // Predicated region
  $region42: #{lenet_forward.3} parent=0 // pred_check
    _
  $region43: #{lenet_forward.3} parent=0 // pred_check_branch
    %4197 = sbr.rel (0) target = $region45
  $region44: #{lenet_forward.3} parent=0 // pred_region
    _
  $region45: #{lenet_forward.3} parent=0 // pred_fallthru
    _

</llo_original>
